<compile_context>
chip_gen: v6e
topology: v6e:2x2x1
jax: 0.10.0
libtpu: 0.0.40
codegen_flags: <defaults>
</compile_context>

<pallas_src>
import functools

import jax
import jax.numpy as jnp
from jax import lax
from jax.experimental import pallas as pl
from jax.experimental.pallas import tpu as pltpu

# ----------------------------- configuration --------------------------------
FEAT_CHANNELS = 4                      # conf['feature_extractor']['out_channels']
LAT_CHANNELS = 8                       # conf['lateral_model']['channels']
N_ALT_CELLS = 1                        # conf['n_alternative_cells']
OUT_CHANNELS = LAT_CHANNELS * N_ALT_CELLS
IN_CHANNELS = FEAT_CHANNELS + OUT_CHANNELS
IN_FEATURE_CHANNELS = IN_CHANNELS - OUT_CHANNELS
LOCALITY = 2
K = 2 * LOCALITY + 1                   # 5x5 neighbourhood
SUPPORT_FACTOR = 1.3
SQUARE_FACTOR = [1.2]                  # indexed by timestep
ACT_THRESHOLD = 0.5                    # float branch (deterministic)
TS = 0
PAD = LOCALITY + 1                     # vertical zero-pad rows; +1 guard row keeps every
                                       # shifted flattened window inside the array

B, H, W = 2, 16, 16                    # small example shapes


# --------------------- deterministic parameter init -------------------------
def init_lateral_weights():
    """Replicates LateralLayer._init_lateral_weights (n_alternative_cells <= 1).

    Returns the flattened weight of shape (C_out, C_in*K*K) with column order
    cii = ci*K*K + j*K + k (same as the PyTorch 1x1-conv weight squeezed)."""
    w = jnp.zeros((OUT_CHANNELS, IN_CHANNELS * K * K), jnp.float32)
    for co in range(OUT_CHANNELS):
        for ci in range(IN_CHANNELS):
            if ci == co or ci + IN_FEATURE_CHANNELS == co:
                cii = ci * K * K + LOCALITY * K + LOCALITY
                w = w.at[co, cii].set(1.0)
    return w


# ------------------------------ Pallas kernel --------------------------------
def lateral_kernel(w_ref, xp_ref, norm_ref, bin_ref, *, img_w,
                   max_support, bin_threshold):
    # w_ref:    (K*K, C_out, C_in)        f32 lateral weights, kernel-position-major
    # xp_ref:   (n_b, C_in, (H+2*PAD)*W)  bf16 binarized input, H zero-padded, flattened
    # norm_ref: (n_b, C_out, H*W)         f32  x_lateral_norm (lane-dense)
    # bin_ref:  (n_b, C_out, H*W)         bf16 x_lateral_bin  (0/1, lane-dense)
    n_b, c_in, _ = xp_ref.shape
    _, c_out, hw = norm_ref.shape

    w_all = w_ref[...]                                    # (K*K, C_out, C_in) f32
    xflat = xp_ref[...]                                   # (n_b, C_in, flat)  bf16

    # x = p mod W for every output pixel p (lane position inside its 16-wide image
    # row).  Used to zero lanes whose horizontal neighbour falls outside the image
    # (the contiguous flattened slice would otherwise wrap into the adjacent row).
    # Hoisted out of the unrolled loops (no per-iteration broadcast rebuild).
    col = lax.broadcasted_iota(jnp.int32, (c_in, hw), 1) % img_w
    masks = {dk: (col + dk >= 0) & (col + dk < img_w)
             for dk in range(-LOCALITY, LOCALITY + 1) if dk != 0}

    # 5x5 "rearrange + 1x1 conv" == 25 accumulated small matmuls over shifted views.
    accs = [jnp.zeros((c_out, hw), jnp.float32) for _ in range(n_b)]
    for jk in range(K * K):
        j, k = jk // K, jk % K
        dk = k - LOCALITY
        # flat(y + dj + PAD, x + dk) = (y*W + x) + (dj + PAD)*W + dk  (dj = j - LOCALITY)
        start = (j - LOCALITY + PAD) * img_w + dk         # static, always in-bounds
        w_jk = w_all[jk]                                  # (C_out, C_in) f32
        for b in range(n_b):
            slab = xflat[b, :, start:start + hw]          # (C_in, H*W) shifted view
            if dk != 0:
                slab = jnp.where(masks[dk], slab, 0.0)    # zero horizontal wrap lanes
            accs[b] = accs[b] + jnp.dot(w_jk, slab.astype(jnp.float32),
                                        preferred_element_type=jnp.float32)

    for b in range(n_b):
        x_lat = accs[b]                                   # (C_out, H*W) support, f32
        # soft clip of the support
        x_norm = jnp.where(x_lat < max_support, x_lat,
                           max_support - 0.5 * (x_lat - max_support))
        # per-(batch, channel) spatial max normalization:
        # approx reciprocal (EUP slot) + one Newton-Raphson step (~1e-7 rel error)
        ch_max = jnp.max(x_norm, axis=1, keepdims=True)   # (C_out, 1)
        denom = 1e-10 + ch_max
        inv = pl.reciprocal(denom, approx=True)
        inv = inv * (2.0 - denom * inv)
        x_norm = x_norm * inv
        # power nonlinearity folded into the threshold:
        #   x_norm ** sf >= thr  <=>  x_norm >= thr ** (1/sf)   (x_norm >= 0, sf > 0)
        norm_ref[b] = x_norm
        bin_ref[b] = (x_norm >= bin_threshold).astype(jnp.bfloat16)


# ------------------------------- wrapper --------------------------------------
def _num_grid_blocks(batch):
    """B grid blocks (one batch per 'parallel' step) on multi-TensorCore chips so
    both cores are used; 1 block (batch folded, single step) on single-TC chips."""
    try:
        kind = jax.devices()[0].device_kind.lower()
    except Exception:
        kind = ""
    multi_tc = any(tag in kind for tag in ("v4", "v5p", "v7", "7x"))
    return batch if (multi_tc and batch > 1) else 1


def lateral_forward(x_nchw, w_flat):
    """Forward of LateralLayerEfficientNetwork1L: returns (act, act_bin) in NCHW."""
    b, c_in, h, w = x_nchw.shape
    c_out = w_flat.shape[0]
    hw = h * w
    flat = (h + 2 * PAD) * w

    # Binarize BEFORE the rearrange (exact: the rearrange conv is a pure 0/1
    # selection with zero padding, and where(0 > 0.5) == 0), zero-pad the H axis
    # and flatten spatially.  bf16 is exact for 0/1 and halves the input bytes.
    xb = jnp.where(x_nchw > 0.5, 1.0, 0.0).astype(jnp.bfloat16)
    xp = jnp.pad(xb, ((0, 0), (0, 0), (PAD, PAD), (0, 0))).reshape(b, c_in, flat)

    # (C_out, C_in*K*K) -> (K*K, C_out, C_in): kernel-position-major so every
    # unrolled step reads one contiguous (C_out, C_in) slab.  Kept in float32 so
    # trained (non-binary) Hebbian weights stay exact.
    w_kernel = (w_flat.astype(jnp.float32)
                .reshape(c_out, c_in, K, K)
                .transpose(2, 3, 0, 1)
                .reshape(K * K, c_out, c_in))

    num_blocks = _num_grid_blocks(b)     # B on multi-TC chips, 1 on v5e/v6e
    n_b = b // num_blocks                # batches handled per grid step

    kern = functools.partial(
        lateral_kernel,
        img_w=w,
        max_support=float(SUPPORT_FACTOR * K),
        bin_threshold=float(ACT_THRESHOLD ** (1.0 / SQUARE_FACTOR[TS])),
    )

    norm_flat, bin_flat = pl.pallas_call(
        kern,
        out_shape=(jax.ShapeDtypeStruct((b, c_out, hw), jnp.float32),
                   jax.ShapeDtypeStruct((b, c_out, hw), jnp.bfloat16)),
        grid_spec=pltpu.PrefetchScalarGridSpec(
            num_scalar_prefetch=0,
            grid=(num_blocks,),
            in_specs=[
                # constant index_map -> weight block stays VMEM-resident
                pl.BlockSpec((K * K, c_out, c_in), lambda i: (0, 0, 0)),
                pl.BlockSpec((n_b, c_in, flat), lambda i: (i, 0, 0)),
            ],
            out_specs=[
                pl.BlockSpec((n_b, c_out, hw), lambda i: (i, 0, 0)),
                pl.BlockSpec((n_b, c_out, hw), lambda i: (i, 0, 0)),
            ],
        ),
        compiler_params=pltpu.CompilerParams(dimension_semantics=("parallel",)),
    )(w_kernel, xp)

    # lane-dense (B, C_out, H*W) -> NCHW is a pure reshape (no transpose).
    # act_bin is cast to f32 only because the module's API returns float tensors.
    act = norm_flat.reshape(b, c_out, h, w)
    act_bin = bin_flat.astype(jnp.float32).reshape(b, c_out, h, w)
    return act, act_bin


# ------------------------- pure-JAX reference --------------------------------
def reference_forward(x_nchw, w_flat):
    w4d = w_flat.reshape(OUT_CHANNELS, IN_CHANNELS, K, K)        # == get_weights()
    xb = jnp.where(x_nchw > 0.5, 1.0, 0.0).astype(jnp.float32)
    x_lat = jax.lax.conv_general_dilated(
        xb, w4d, window_strides=(1, 1), padding="SAME",
        dimension_numbers=("NCHW", "OIHW", "NCHW"))
    ms = SUPPORT_FACTOR * K
    x_norm = jnp.where(x_lat < ms, x_lat, ms - 0.5 * (x_lat - ms))
    mx = jnp.max(x_norm.reshape(x_norm.shape[0], x_norm.shape[1], -1), axis=2)
    x_norm = x_norm / (1e-10 + mx[:, :, None, None])
    x_bin = (jnp.power(x_norm, SQUARE_FACTOR[TS]) >= ACT_THRESHOLD).astype(jnp.float32)
    return x_norm, x_bin


# ---------------------------------- main --------------------------------------
if __name__ == "__main__":
    key = jax.random.PRNGKey(0)
    x = jax.random.uniform(key, (B, IN_CHANNELS, H, W), dtype=jnp.float32)

    w_flat = init_lateral_weights()

    act, act_bin = lateral_forward(x, w_flat)
    act = jax.block_until_ready(act)
    act_bin = jax.block_until_ready(act_bin)

    ref_act, ref_bin = reference_forward(x, w_flat)
    assert act.shape == (B, OUT_CHANNELS, H, W)
    assert act_bin.shape == (B, OUT_CHANNELS, H, W)
    assert jnp.allclose(act, ref_act, atol=1e-5, rtol=1e-5), "x_lateral_norm mismatch"

    # The folded threshold / reciprocal-multiply is monotone-equivalent to
    # pow + divide; only elements essentially on the decision boundary may flip.
    boundary = ACT_THRESHOLD ** (1.0 / SQUARE_FACTOR[TS])
    disagree = act_bin != ref_bin
    near_boundary = jnp.abs(ref_act - boundary) < 1e-4
    assert bool(jnp.all(~disagree | near_boundary)), "x_lateral_bin mismatch"
    assert bool(jnp.all((act_bin == 0.0) | (act_bin == 1.0)))

    print("KERNEL_OK")
</pallas_src>

<mosaic_0001>
module attributes {stable_mosaic.version = 11 : i64} {
  func.func @lateral_kernel(%arg0: i32, %arg1: memref<25x8x12xf32, #tpu.memory_space<vmem>>, %arg2: memref<2x12x352xbf16, #tpu.memory_space<vmem>>, %arg3: memref<2x8x256xf32, #tpu.memory_space<vmem>>, %arg4: memref<2x8x256xbf16, #tpu.memory_space<vmem>>) attributes {dimension_semantics = [#tpu.dimension_semantics<parallel>], iteration_bounds = array<i64: 1>, scalar_prefetch = 0 : i64, scratch_operands = 0 : i64, tpu.core_type = #tpu.core_type<tc>, window_params = [{pipeline_mode = #tpu.pipeline_mode<synchronous>, transform_indices = @transform_0, window_bounds = array<i64: 25, 8, 12>}, {transform_indices = @transform_1, window_bounds = array<i64: 2, 12, 352>}, {transform_indices = @transform_2, window_bounds = array<i64: 2, 8, 256>}, {transform_indices = @transform_3, window_bounds = array<i64: 2, 8, 256>}]} {
    %c0 = arith.constant 0 : index
    %c0_0 = arith.constant 0 : index
    %c0_1 = arith.constant 0 : index
    %0 = vector.load %arg1[%c0, %c0_0, %c0_1] : memref<25x8x12xf32, #tpu.memory_space<vmem>>, vector<25x8x12xf32>
    %c0_2 = arith.constant 0 : index
    %c0_3 = arith.constant 0 : index
    %c0_4 = arith.constant 0 : index
    %1 = vector.load %arg2[%c0_2, %c0_3, %c0_4] : memref<2x12x352xbf16, #tpu.memory_space<vmem>>, vector<2x12x352xbf16>
    %2 = tpu.iota {dimensions = array<i32: 1>} : vector<12x256xi32>
    %c16_i32 = arith.constant 16 : i32
    %c0_i32 = arith.constant 0 : i32
    %3 = arith.cmpi eq, %c16_i32, %c0_i32 : i32
    %c1_i32 = arith.constant 1 : i32
    %4 = arith.select %3, %c1_i32, %c16_i32 : i32
    %5 = vector.broadcast %4 : i32 to vector<12x256xi32>
    %6 = arith.remsi %2, %5 : vector<12x256xi32>
    %c0_i32_5 = arith.constant 0 : i32
    %7 = vector.broadcast %c0_i32_5 : i32 to vector<12x256xi32>
    %8 = arith.cmpi ne, %6, %7 : vector<12x256xi32>
    %c0_i32_6 = arith.constant 0 : i32
    %9 = vector.broadcast %c0_i32_6 : i32 to vector<12x256xi32>
    %10 = arith.cmpi slt, %6, %9 : vector<12x256xi32>
    %c0_i32_7 = arith.constant 0 : i32
    %11 = arith.cmpi slt, %4, %c0_i32_7 : i32
    %12 = vector.broadcast %11 : i1 to vector<12x256xi1>
    %13 = vector.broadcast %12 : vector<12x256xi1> to vector<12x256xi1>
    %14 = arith.xori %10, %13 : vector<12x256xi1>
    %15 = arith.andi %14, %8 : vector<12x256xi1>
    %16 = vector.broadcast %4 : i32 to vector<12x256xi32>
    %17 = arith.addi %6, %16 : vector<12x256xi32>
    %18 = arith.select %15, %17, %6 : vector<12x256xi1>, vector<12x256xi32>
    %c-2_i32 = arith.constant -2 : i32
    %19 = vector.broadcast %c-2_i32 : i32 to vector<12x256xi32>
    %20 = arith.addi %18, %19 : vector<12x256xi32>
    %c0_i32_8 = arith.constant 0 : i32
    %21 = vector.broadcast %c0_i32_8 : i32 to vector<12x256xi32>
    %22 = arith.cmpi sge, %20, %21 : vector<12x256xi32>
    %c-2_i32_9 = arith.constant -2 : i32
    %23 = vector.broadcast %c-2_i32_9 : i32 to vector<12x256xi32>
    %24 = arith.addi %18, %23 : vector<12x256xi32>
    %c16_i32_10 = arith.constant 16 : i32
    %25 = vector.broadcast %c16_i32_10 : i32 to vector<12x256xi32>
    %26 = arith.cmpi slt, %24, %25 : vector<12x256xi32>
    %27 = arith.andi %22, %26 : vector<12x256xi1>
    %c-1_i32 = arith.constant -1 : i32
    %28 = vector.broadcast %c-1_i32 : i32 to vector<12x256xi32>
    %29 = arith.addi %18, %28 : vector<12x256xi32>
    %c0_i32_11 = arith.constant 0 : i32
    %30 = vector.broadcast %c0_i32_11 : i32 to vector<12x256xi32>
    %31 = arith.cmpi sge, %29, %30 : vector<12x256xi32>
    %c-1_i32_12 = arith.constant -1 : i32
    %32 = vector.broadcast %c-1_i32_12 : i32 to vector<12x256xi32>
    %33 = arith.addi %18, %32 : vector<12x256xi32>
    %c16_i32_13 = arith.constant 16 : i32
    %34 = vector.broadcast %c16_i32_13 : i32 to vector<12x256xi32>
    %35 = arith.cmpi slt, %33, %34 : vector<12x256xi32>
    %36 = arith.andi %31, %35 : vector<12x256xi1>
    %c1_i32_14 = arith.constant 1 : i32
    %37 = vector.broadcast %c1_i32_14 : i32 to vector<12x256xi32>
    %38 = arith.addi %18, %37 : vector<12x256xi32>
    %c0_i32_15 = arith.constant 0 : i32
    %39 = vector.broadcast %c0_i32_15 : i32 to vector<12x256xi32>
    %40 = arith.cmpi sge, %38, %39 : vector<12x256xi32>
    %c1_i32_16 = arith.constant 1 : i32
    %41 = vector.broadcast %c1_i32_16 : i32 to vector<12x256xi32>
    %42 = arith.addi %18, %41 : vector<12x256xi32>
    %c16_i32_17 = arith.constant 16 : i32
    %43 = vector.broadcast %c16_i32_17 : i32 to vector<12x256xi32>
    %44 = arith.cmpi slt, %42, %43 : vector<12x256xi32>
    %45 = arith.andi %40, %44 : vector<12x256xi1>
    %c2_i32 = arith.constant 2 : i32
    %46 = vector.broadcast %c2_i32 : i32 to vector<12x256xi32>
    %47 = arith.addi %18, %46 : vector<12x256xi32>
    %c0_i32_18 = arith.constant 0 : i32
    %48 = vector.broadcast %c0_i32_18 : i32 to vector<12x256xi32>
    %49 = arith.cmpi sge, %47, %48 : vector<12x256xi32>
    %c2_i32_19 = arith.constant 2 : i32
    %50 = vector.broadcast %c2_i32_19 : i32 to vector<12x256xi32>
    %51 = arith.addi %18, %50 : vector<12x256xi32>
    %c16_i32_20 = arith.constant 16 : i32
    %52 = vector.broadcast %c16_i32_20 : i32 to vector<12x256xi32>
    %53 = arith.cmpi slt, %51, %52 : vector<12x256xi32>
    %54 = arith.andi %49, %53 : vector<12x256xi1>
    %cst = arith.constant 0.000000e+00 : f32
    %55 = vector.broadcast %cst : f32 to vector<8x256xf32>
    %cst_21 = arith.constant 0.000000e+00 : f32
    %56 = vector.broadcast %cst_21 : f32 to vector<8x256xf32>
    %57 = vector.extract_strided_slice %0 {offsets = [0, 0, 0], sizes = [1, 8, 12], strides = [1, 1, 1]} : vector<25x8x12xf32> to vector<1x8x12xf32>
    %58 = vector.shape_cast %57 : vector<1x8x12xf32> to vector<8x12xf32>
    %59 = vector.extract_strided_slice %1 {offsets = [0, 0, 14], sizes = [1, 12, 256], strides = [1, 1, 1]} : vector<2x12x352xbf16> to vector<1x12x256xbf16>
    %60 = vector.shape_cast %59 : vector<1x12x256xbf16> to vector<12x256xbf16>
    %cst_22 = arith.constant 0.000000e+00 : f32
    %61 = arith.truncf %cst_22 : f32 to bf16
    %62 = vector.broadcast %61 : bf16 to vector<12x256xbf16>
    %63 = arith.select %27, %60, %62 : vector<12x256xi1>, vector<12x256xbf16>
    %64 = arith.extf %63 : vector<12x256xbf16> to vector<12x256xf32>
    %cst_23 = arith.constant dense<0.000000e+00> : vector<8x256xf32>
    %65 = tpu.matmul %58, %64, %cst_23 {dimension_numbers = #tpu.dot_dimension_numbers<[1], [0], [0], [1], [0, 0, 1, 1], [], []>} : vector<8x12xf32>, vector<12x256xf32>, vector<8x256xf32> -> vector<8x256xf32>
    %66 = arith.addf %55, %65 : vector<8x256xf32>
    %67 = vector.extract_strided_slice %1 {offsets = [1, 0, 14], sizes = [1, 12, 256], strides = [1, 1, 1]} : vector<2x12x352xbf16> to vector<1x12x256xbf16>
    %68 = vector.shape_cast %67 : vector<1x12x256xbf16> to vector<12x256xbf16>
    %cst_24 = arith.constant 0.000000e+00 : f32
    %69 = arith.truncf %cst_24 : f32 to bf16
    %70 = vector.broadcast %69 : bf16 to vector<12x256xbf16>
    %71 = arith.select %27, %68, %70 : vector<12x256xi1>, vector<12x256xbf16>
    %72 = arith.extf %71 : vector<12x256xbf16> to vector<12x256xf32>
    %cst_25 = arith.constant dense<0.000000e+00> : vector<8x256xf32>
    %73 = tpu.matmul %58, %72, %cst_25 {dimension_numbers = #tpu.dot_dimension_numbers<[1], [0], [0], [1], [0, 0, 1, 1], [], []>} : vector<8x12xf32>, vector<12x256xf32>, vector<8x256xf32> -> vector<8x256xf32>
    %74 = arith.addf %56, %73 : vector<8x256xf32>
    %75 = vector.extract_strided_slice %0 {offsets = [1, 0, 0], sizes = [1, 8, 12], strides = [1, 1, 1]} : vector<25x8x12xf32> to vector<1x8x12xf32>
    %76 = vector.shape_cast %75 : vector<1x8x12xf32> to vector<8x12xf32>
    %77 = vector.extract_strided_slice %1 {offsets = [0, 0, 15], sizes = [1, 12, 256], strides = [1, 1, 1]} : vector<2x12x352xbf16> to vector<1x12x256xbf16>
    %78 = vector.shape_cast %77 : vector<1x12x256xbf16> to vector<12x256xbf16>
    %cst_26 = arith.constant 0.000000e+00 : f32
    %79 = arith.truncf %cst_26 : f32 to bf16
    %80 = vector.broadcast %79 : bf16 to vector<12x256xbf16>
    %81 = arith.select %36, %78, %80 : vector<12x256xi1>, vector<12x256xbf16>
    %82 = arith.extf %81 : vector<12x256xbf16> to vector<12x256xf32>
    %cst_27 = arith.constant dense<0.000000e+00> : vector<8x256xf32>
    %83 = tpu.matmul %76, %82, %cst_27 {dimension_numbers = #tpu.dot_dimension_numbers<[1], [0], [0], [1], [0, 0, 1, 1], [], []>} : vector<8x12xf32>, vector<12x256xf32>, vector<8x256xf32> -> vector<8x256xf32>
    %84 = arith.addf %66, %83 : vector<8x256xf32>
    %85 = vector.extract_strided_slice %1 {offsets = [1, 0, 15], sizes = [1, 12, 256], strides = [1, 1, 1]} : vector<2x12x352xbf16> to vector<1x12x256xbf16>
    %86 = vector.shape_cast %85 : vector<1x12x256xbf16> to vector<12x256xbf16>
    %cst_28 = arith.constant 0.000000e+00 : f32
    %87 = arith.truncf %cst_28 : f32 to bf16
    %88 = vector.broadcast %87 : bf16 to vector<12x256xbf16>
    %89 = arith.select %36, %86, %88 : vector<12x256xi1>, vector<12x256xbf16>
    %90 = arith.extf %89 : vector<12x256xbf16> to vector<12x256xf32>
    %cst_29 = arith.constant dense<0.000000e+00> : vector<8x256xf32>
    %91 = tpu.matmul %76, %90, %cst_29 {dimension_numbers = #tpu.dot_dimension_numbers<[1], [0], [0], [1], [0, 0, 1, 1], [], []>} : vector<8x12xf32>, vector<12x256xf32>, vector<8x256xf32> -> vector<8x256xf32>
    %92 = arith.addf %74, %91 : vector<8x256xf32>
    %93 = vector.extract_strided_slice %0 {offsets = [2, 0, 0], sizes = [1, 8, 12], strides = [1, 1, 1]} : vector<25x8x12xf32> to vector<1x8x12xf32>
    %94 = vector.shape_cast %93 : vector<1x8x12xf32> to vector<8x12xf32>
    %95 = vector.extract_strided_slice %1 {offsets = [0, 0, 16], sizes = [1, 12, 256], strides = [1, 1, 1]} : vector<2x12x352xbf16> to vector<1x12x256xbf16>
    %96 = vector.shape_cast %95 : vector<1x12x256xbf16> to vector<12x256xbf16>
    %97 = arith.extf %96 : vector<12x256xbf16> to vector<12x256xf32>
    %cst_30 = arith.constant dense<0.000000e+00> : vector<8x256xf32>
    %98 = tpu.matmul %94, %97, %cst_30 {dimension_numbers = #tpu.dot_dimension_numbers<[1], [0], [0], [1], [0, 0, 1, 1], [], []>} : vector<8x12xf32>, vector<12x256xf32>, vector<8x256xf32> -> vector<8x256xf32>
    %99 = arith.addf %84, %98 : vector<8x256xf32>
    %100 = vector.extract_strided_slice %1 {offsets = [1, 0, 16], sizes = [1, 12, 256], strides = [1, 1, 1]} : vector<2x12x352xbf16> to vector<1x12x256xbf16>
    %101 = vector.shape_cast %100 : vector<1x12x256xbf16> to vector<12x256xbf16>
    %102 = arith.extf %101 : vector<12x256xbf16> to vector<12x256xf32>
    %cst_31 = arith.constant dense<0.000000e+00> : vector<8x256xf32>
    %103 = tpu.matmul %94, %102, %cst_31 {dimension_numbers = #tpu.dot_dimension_numbers<[1], [0], [0], [1], [0, 0, 1, 1], [], []>} : vector<8x12xf32>, vector<12x256xf32>, vector<8x256xf32> -> vector<8x256xf32>
    %104 = arith.addf %92, %103 : vector<8x256xf32>
    %105 = vector.extract_strided_slice %0 {offsets = [3, 0, 0], sizes = [1, 8, 12], strides = [1, 1, 1]} : vector<25x8x12xf32> to vector<1x8x12xf32>
    %106 = vector.shape_cast %105 : vector<1x8x12xf32> to vector<8x12xf32>
    %107 = vector.extract_strided_slice %1 {offsets = [0, 0, 17], sizes = [1, 12, 256], strides = [1, 1, 1]} : vector<2x12x352xbf16> to vector<1x12x256xbf16>
    %108 = vector.shape_cast %107 : vector<1x12x256xbf16> to vector<12x256xbf16>
    %cst_32 = arith.constant 0.000000e+00 : f32
    %109 = arith.truncf %cst_32 : f32 to bf16
    %110 = vector.broadcast %109 : bf16 to vector<12x256xbf16>
    %111 = arith.select %45, %108, %110 : vector<12x256xi1>, vector<12x256xbf16>
    %112 = arith.extf %111 : vector<12x256xbf16> to vector<12x256xf32>
    %cst_33 = arith.constant dense<0.000000e+00> : vector<8x256xf32>
    %113 = tpu.matmul %106, %112, %cst_33 {dimension_numbers = #tpu.dot_dimension_numbers<[1], [0], [0], [1], [0, 0, 1, 1], [], []>} : vector<8x12xf32>, vector<12x256xf32>, vector<8x256xf32> -> vector<8x256xf32>
    %114 = arith.addf %99, %113 : vector<8x256xf32>
    %115 = vector.extract_strided_slice %1 {offsets = [1, 0, 17], sizes = [1, 12, 256], strides = [1, 1, 1]} : vector<2x12x352xbf16> to vector<1x12x256xbf16>
    %116 = vector.shape_cast %115 : vector<1x12x256xbf16> to vector<12x256xbf16>
    %cst_34 = arith.constant 0.000000e+00 : f32
    %117 = arith.truncf %cst_34 : f32 to bf16
    %118 = vector.broadcast %117 : bf16 to vector<12x256xbf16>
    %119 = arith.select %45, %116, %118 : vector<12x256xi1>, vector<12x256xbf16>
    %120 = arith.extf %119 : vector<12x256xbf16> to vector<12x256xf32>
    %cst_35 = arith.constant dense<0.000000e+00> : vector<8x256xf32>
    %121 = tpu.matmul %106, %120, %cst_35 {dimension_numbers = #tpu.dot_dimension_numbers<[1], [0], [0], [1], [0, 0, 1, 1], [], []>} : vector<8x12xf32>, vector<12x256xf32>, vector<8x256xf32> -> vector<8x256xf32>
    %122 = arith.addf %104, %121 : vector<8x256xf32>
    %123 = vector.extract_strided_slice %0 {offsets = [4, 0, 0], sizes = [1, 8, 12], strides = [1, 1, 1]} : vector<25x8x12xf32> to vector<1x8x12xf32>
    %124 = vector.shape_cast %123 : vector<1x8x12xf32> to vector<8x12xf32>
    %125 = vector.extract_strided_slice %1 {offsets = [0, 0, 18], sizes = [1, 12, 256], strides = [1, 1, 1]} : vector<2x12x352xbf16> to vector<1x12x256xbf16>
    %126 = vector.shape_cast %125 : vector<1x12x256xbf16> to vector<12x256xbf16>
    %cst_36 = arith.constant 0.000000e+00 : f32
    %127 = arith.truncf %cst_36 : f32 to bf16
    %128 = vector.broadcast %127 : bf16 to vector<12x256xbf16>
    %129 = arith.select %54, %126, %128 : vector<12x256xi1>, vector<12x256xbf16>
    %130 = arith.extf %129 : vector<12x256xbf16> to vector<12x256xf32>
    %cst_37 = arith.constant dense<0.000000e+00> : vector<8x256xf32>
    %131 = tpu.matmul %124, %130, %cst_37 {dimension_numbers = #tpu.dot_dimension_numbers<[1], [0], [0], [1], [0, 0, 1, 1], [], []>} : vector<8x12xf32>, vector<12x256xf32>, vector<8x256xf32> -> vector<8x256xf32>
    %132 = arith.addf %114, %131 : vector<8x256xf32>
    %133 = vector.extract_strided_slice %1 {offsets = [1, 0, 18], sizes = [1, 12, 256], strides = [1, 1, 1]} : vector<2x12x352xbf16> to vector<1x12x256xbf16>
    %134 = vector.shape_cast %133 : vector<1x12x256xbf16> to vector<12x256xbf16>
    %cst_38 = arith.constant 0.000000e+00 : f32
    %135 = arith.truncf %cst_38 : f32 to bf16
    %136 = vector.broadcast %135 : bf16 to vector<12x256xbf16>
    %137 = arith.select %54, %134, %136 : vector<12x256xi1>, vector<12x256xbf16>
    %138 = arith.extf %137 : vector<12x256xbf16> to vector<12x256xf32>
    %cst_39 = arith.constant dense<0.000000e+00> : vector<8x256xf32>
    %139 = tpu.matmul %124, %138, %cst_39 {dimension_numbers = #tpu.dot_dimension_numbers<[1], [0], [0], [1], [0, 0, 1, 1], [], []>} : vector<8x12xf32>, vector<12x256xf32>, vector<8x256xf32> -> vector<8x256xf32>
    %140 = arith.addf %122, %139 : vector<8x256xf32>
    %141 = vector.extract_strided_slice %0 {offsets = [5, 0, 0], sizes = [1, 8, 12], strides = [1, 1, 1]} : vector<25x8x12xf32> to vector<1x8x12xf32>
    %142 = vector.shape_cast %141 : vector<1x8x12xf32> to vector<8x12xf32>
    %143 = vector.extract_strided_slice %1 {offsets = [0, 0, 30], sizes = [1, 12, 256], strides = [1, 1, 1]} : vector<2x12x352xbf16> to vector<1x12x256xbf16>
    %144 = vector.shape_cast %143 : vector<1x12x256xbf16> to vector<12x256xbf16>
    %cst_40 = arith.constant 0.000000e+00 : f32
    %145 = arith.truncf %cst_40 : f32 to bf16
    %146 = vector.broadcast %145 : bf16 to vector<12x256xbf16>
    %147 = arith.select %27, %144, %146 : vector<12x256xi1>, vector<12x256xbf16>
    %148 = arith.extf %147 : vector<12x256xbf16> to vector<12x256xf32>
    %cst_41 = arith.constant dense<0.000000e+00> : vector<8x256xf32>
    %149 = tpu.matmul %142, %148, %cst_41 {dimension_numbers = #tpu.dot_dimension_numbers<[1], [0], [0], [1], [0, 0, 1, 1], [], []>} : vector<8x12xf32>, vector<12x256xf32>, vector<8x256xf32> -> vector<8x256xf32>
    %150 = arith.addf %132, %149 : vector<8x256xf32>
    %151 = vector.extract_strided_slice %1 {offsets = [1, 0, 30], sizes = [1, 12, 256], strides = [1, 1, 1]} : vector<2x12x352xbf16> to vector<1x12x256xbf16>
    %152 = vector.shape_cast %151 : vector<1x12x256xbf16> to vector<12x256xbf16>
    %cst_42 = arith.constant 0.000000e+00 : f32
    %153 = arith.truncf %cst_42 : f32 to bf16
    %154 = vector.broadcast %153 : bf16 to vector<12x256xbf16>
    %155 = arith.select %27, %152, %154 : vector<12x256xi1>, vector<12x256xbf16>
    %156 = arith.extf %155 : vector<12x256xbf16> to vector<12x256xf32>
    %cst_43 = arith.constant dense<0.000000e+00> : vector<8x256xf32>
    %157 = tpu.matmul %142, %156, %cst_43 {dimension_numbers = #tpu.dot_dimension_numbers<[1], [0], [0], [1], [0, 0, 1, 1], [], []>} : vector<8x12xf32>, vector<12x256xf32>, vector<8x256xf32> -> vector<8x256xf32>
    %158 = arith.addf %140, %157 : vector<8x256xf32>
    %159 = vector.extract_strided_slice %0 {offsets = [6, 0, 0], sizes = [1, 8, 12], strides = [1, 1, 1]} : vector<25x8x12xf32> to vector<1x8x12xf32>
    %160 = vector.shape_cast %159 : vector<1x8x12xf32> to vector<8x12xf32>
    %161 = vector.extract_strided_slice %1 {offsets = [0, 0, 31], sizes = [1, 12, 256], strides = [1, 1, 1]} : vector<2x12x352xbf16> to vector<1x12x256xbf16>
    %162 = vector.shape_cast %161 : vector<1x12x256xbf16> to vector<12x256xbf16>
    %cst_44 = arith.constant 0.000000e+00 : f32
    %163 = arith.truncf %cst_44 : f32 to bf16
    %164 = vector.broadcast %163 : bf16 to vector<12x256xbf16>
    %165 = arith.select %36, %162, %164 : vector<12x256xi1>, vector<12x256xbf16>
    %166 = arith.extf %165 : vector<12x256xbf16> to vector<12x256xf32>
    %cst_45 = arith.constant dense<0.000000e+00> : vector<8x256xf32>
    %167 = tpu.matmul %160, %166, %cst_45 {dimension_numbers = #tpu.dot_dimension_numbers<[1], [0], [0], [1], [0, 0, 1, 1], [], []>} : vector<8x12xf32>, vector<12x256xf32>, vector<8x256xf32> -> vector<8x256xf32>
    %168 = arith.addf %150, %167 : vector<8x256xf32>
    %169 = vector.extract_strided_slice %1 {offsets = [1, 0, 31], sizes = [1, 12, 256], strides = [1, 1, 1]} : vector<2x12x352xbf16> to vector<1x12x256xbf16>
    %170 = vector.shape_cast %169 : vector<1x12x256xbf16> to vector<12x256xbf16>
    %cst_46 = arith.constant 0.000000e+00 : f32
    %171 = arith.truncf %cst_46 : f32 to bf16
    %172 = vector.broadcast %171 : bf16 to vector<12x256xbf16>
    %173 = arith.select %36, %170, %172 : vector<12x256xi1>, vector<12x256xbf16>
    %174 = arith.extf %173 : vector<12x256xbf16> to vector<12x256xf32>
    %cst_47 = arith.constant dense<0.000000e+00> : vector<8x256xf32>
    %175 = tpu.matmul %160, %174, %cst_47 {dimension_numbers = #tpu.dot_dimension_numbers<[1], [0], [0], [1], [0, 0, 1, 1], [], []>} : vector<8x12xf32>, vector<12x256xf32>, vector<8x256xf32> -> vector<8x256xf32>
    %176 = arith.addf %158, %175 : vector<8x256xf32>
    %177 = vector.extract_strided_slice %0 {offsets = [7, 0, 0], sizes = [1, 8, 12], strides = [1, 1, 1]} : vector<25x8x12xf32> to vector<1x8x12xf32>
    %178 = vector.shape_cast %177 : vector<1x8x12xf32> to vector<8x12xf32>
    %179 = vector.extract_strided_slice %1 {offsets = [0, 0, 32], sizes = [1, 12, 256], strides = [1, 1, 1]} : vector<2x12x352xbf16> to vector<1x12x256xbf16>
    %180 = vector.shape_cast %179 : vector<1x12x256xbf16> to vector<12x256xbf16>
    %181 = arith.extf %180 : vector<12x256xbf16> to vector<12x256xf32>
    %cst_48 = arith.constant dense<0.000000e+00> : vector<8x256xf32>
    %182 = tpu.matmul %178, %181, %cst_48 {dimension_numbers = #tpu.dot_dimension_numbers<[1], [0], [0], [1], [0, 0, 1, 1], [], []>} : vector<8x12xf32>, vector<12x256xf32>, vector<8x256xf32> -> vector<8x256xf32>
    %183 = arith.addf %168, %182 : vector<8x256xf32>
    %184 = vector.extract_strided_slice %1 {offsets = [1, 0, 32], sizes = [1, 12, 256], strides = [1, 1, 1]} : vector<2x12x352xbf16> to vector<1x12x256xbf16>
    %185 = vector.shape_cast %184 : vector<1x12x256xbf16> to vector<12x256xbf16>
    %186 = arith.extf %185 : vector<12x256xbf16> to vector<12x256xf32>
    %cst_49 = arith.constant dense<0.000000e+00> : vector<8x256xf32>
    %187 = tpu.matmul %178, %186, %cst_49 {dimension_numbers = #tpu.dot_dimension_numbers<[1], [0], [0], [1], [0, 0, 1, 1], [], []>} : vector<8x12xf32>, vector<12x256xf32>, vector<8x256xf32> -> vector<8x256xf32>
    %188 = arith.addf %176, %187 : vector<8x256xf32>
    %189 = vector.extract_strided_slice %0 {offsets = [8, 0, 0], sizes = [1, 8, 12], strides = [1, 1, 1]} : vector<25x8x12xf32> to vector<1x8x12xf32>
    %190 = vector.shape_cast %189 : vector<1x8x12xf32> to vector<8x12xf32>
    %191 = vector.extract_strided_slice %1 {offsets = [0, 0, 33], sizes = [1, 12, 256], strides = [1, 1, 1]} : vector<2x12x352xbf16> to vector<1x12x256xbf16>
    %192 = vector.shape_cast %191 : vector<1x12x256xbf16> to vector<12x256xbf16>
    %cst_50 = arith.constant 0.000000e+00 : f32
    %193 = arith.truncf %cst_50 : f32 to bf16
    %194 = vector.broadcast %193 : bf16 to vector<12x256xbf16>
    %195 = arith.select %45, %192, %194 : vector<12x256xi1>, vector<12x256xbf16>
    %196 = arith.extf %195 : vector<12x256xbf16> to vector<12x256xf32>
    %cst_51 = arith.constant dense<0.000000e+00> : vector<8x256xf32>
    %197 = tpu.matmul %190, %196, %cst_51 {dimension_numbers = #tpu.dot_dimension_numbers<[1], [0], [0], [1], [0, 0, 1, 1], [], []>} : vector<8x12xf32>, vector<12x256xf32>, vector<8x256xf32> -> vector<8x256xf32>
    %198 = arith.addf %183, %197 : vector<8x256xf32>
    %199 = vector.extract_strided_slice %1 {offsets = [1, 0, 33], sizes = [1, 12, 256], strides = [1, 1, 1]} : vector<2x12x352xbf16> to vector<1x12x256xbf16>
    %200 = vector.shape_cast %199 : vector<1x12x256xbf16> to vector<12x256xbf16>
    %cst_52 = arith.constant 0.000000e+00 : f32
    %201 = arith.truncf %cst_52 : f32 to bf16
    %202 = vector.broadcast %201 : bf16 to vector<12x256xbf16>
    %203 = arith.select %45, %200, %202 : vector<12x256xi1>, vector<12x256xbf16>
    %204 = arith.extf %203 : vector<12x256xbf16> to vector<12x256xf32>
    %cst_53 = arith.constant dense<0.000000e+00> : vector<8x256xf32>
    %205 = tpu.matmul %190, %204, %cst_53 {dimension_numbers = #tpu.dot_dimension_numbers<[1], [0], [0], [1], [0, 0, 1, 1], [], []>} : vector<8x12xf32>, vector<12x256xf32>, vector<8x256xf32> -> vector<8x256xf32>
    %206 = arith.addf %188, %205 : vector<8x256xf32>
    %207 = vector.extract_strided_slice %0 {offsets = [9, 0, 0], sizes = [1, 8, 12], strides = [1, 1, 1]} : vector<25x8x12xf32> to vector<1x8x12xf32>
    %208 = vector.shape_cast %207 : vector<1x8x12xf32> to vector<8x12xf32>
    %209 = vector.extract_strided_slice %1 {offsets = [0, 0, 34], sizes = [1, 12, 256], strides = [1, 1, 1]} : vector<2x12x352xbf16> to vector<1x12x256xbf16>
    %210 = vector.shape_cast %209 : vector<1x12x256xbf16> to vector<12x256xbf16>
    %cst_54 = arith.constant 0.000000e+00 : f32
    %211 = arith.truncf %cst_54 : f32 to bf16
    %212 = vector.broadcast %211 : bf16 to vector<12x256xbf16>
    %213 = arith.select %54, %210, %212 : vector<12x256xi1>, vector<12x256xbf16>
    %214 = arith.extf %213 : vector<12x256xbf16> to vector<12x256xf32>
    %cst_55 = arith.constant dense<0.000000e+00> : vector<8x256xf32>
    %215 = tpu.matmul %208, %214, %cst_55 {dimension_numbers = #tpu.dot_dimension_numbers<[1], [0], [0], [1], [0, 0, 1, 1], [], []>} : vector<8x12xf32>, vector<12x256xf32>, vector<8x256xf32> -> vector<8x256xf32>
    %216 = arith.addf %198, %215 : vector<8x256xf32>
    %217 = vector.extract_strided_slice %1 {offsets = [1, 0, 34], sizes = [1, 12, 256], strides = [1, 1, 1]} : vector<2x12x352xbf16> to vector<1x12x256xbf16>
    %218 = vector.shape_cast %217 : vector<1x12x256xbf16> to vector<12x256xbf16>
    %cst_56 = arith.constant 0.000000e+00 : f32
    %219 = arith.truncf %cst_56 : f32 to bf16
    %220 = vector.broadcast %219 : bf16 to vector<12x256xbf16>
    %221 = arith.select %54, %218, %220 : vector<12x256xi1>, vector<12x256xbf16>
    %222 = arith.extf %221 : vector<12x256xbf16> to vector<12x256xf32>
    %cst_57 = arith.constant dense<0.000000e+00> : vector<8x256xf32>
    %223 = tpu.matmul %208, %222, %cst_57 {dimension_numbers = #tpu.dot_dimension_numbers<[1], [0], [0], [1], [0, 0, 1, 1], [], []>} : vector<8x12xf32>, vector<12x256xf32>, vector<8x256xf32> -> vector<8x256xf32>
    %224 = arith.addf %206, %223 : vector<8x256xf32>
    %225 = vector.extract_strided_slice %0 {offsets = [10, 0, 0], sizes = [1, 8, 12], strides = [1, 1, 1]} : vector<25x8x12xf32> to vector<1x8x12xf32>
    %226 = vector.shape_cast %225 : vector<1x8x12xf32> to vector<8x12xf32>
    %227 = vector.extract_strided_slice %1 {offsets = [0, 0, 46], sizes = [1, 12, 256], strides = [1, 1, 1]} : vector<2x12x352xbf16> to vector<1x12x256xbf16>
    %228 = vector.shape_cast %227 : vector<1x12x256xbf16> to vector<12x256xbf16>
    %cst_58 = arith.constant 0.000000e+00 : f32
    %229 = arith.truncf %cst_58 : f32 to bf16
    %230 = vector.broadcast %229 : bf16 to vector<12x256xbf16>
    %231 = arith.select %27, %228, %230 : vector<12x256xi1>, vector<12x256xbf16>
    %232 = arith.extf %231 : vector<12x256xbf16> to vector<12x256xf32>
    %cst_59 = arith.constant dense<0.000000e+00> : vector<8x256xf32>
    %233 = tpu.matmul %226, %232, %cst_59 {dimension_numbers = #tpu.dot_dimension_numbers<[1], [0], [0], [1], [0, 0, 1, 1], [], []>} : vector<8x12xf32>, vector<12x256xf32>, vector<8x256xf32> -> vector<8x256xf32>
    %234 = arith.addf %216, %233 : vector<8x256xf32>
    %235 = vector.extract_strided_slice %1 {offsets = [1, 0, 46], sizes = [1, 12, 256], strides = [1, 1, 1]} : vector<2x12x352xbf16> to vector<1x12x256xbf16>
    %236 = vector.shape_cast %235 : vector<1x12x256xbf16> to vector<12x256xbf16>
    %cst_60 = arith.constant 0.000000e+00 : f32
    %237 = arith.truncf %cst_60 : f32 to bf16
    %238 = vector.broadcast %237 : bf16 to vector<12x256xbf16>
    %239 = arith.select %27, %236, %238 : vector<12x256xi1>, vector<12x256xbf16>
    %240 = arith.extf %239 : vector<12x256xbf16> to vector<12x256xf32>
    %cst_61 = arith.constant dense<0.000000e+00> : vector<8x256xf32>
    %241 = tpu.matmul %226, %240, %cst_61 {dimension_numbers = #tpu.dot_dimension_numbers<[1], [0], [0], [1], [0, 0, 1, 1], [], []>} : vector<8x12xf32>, vector<12x256xf32>, vector<8x256xf32> -> vector<8x256xf32>
    %242 = arith.addf %224, %241 : vector<8x256xf32>
    %243 = vector.extract_strided_slice %0 {offsets = [11, 0, 0], sizes = [1, 8, 12], strides = [1, 1, 1]} : vector<25x8x12xf32> to vector<1x8x12xf32>
    %244 = vector.shape_cast %243 : vector<1x8x12xf32> to vector<8x12xf32>
    %245 = vector.extract_strided_slice %1 {offsets = [0, 0, 47], sizes = [1, 12, 256], strides = [1, 1, 1]} : vector<2x12x352xbf16> to vector<1x12x256xbf16>
    %246 = vector.shape_cast %245 : vector<1x12x256xbf16> to vector<12x256xbf16>
    %cst_62 = arith.constant 0.000000e+00 : f32
    %247 = arith.truncf %cst_62 : f32 to bf16
    %248 = vector.broadcast %247 : bf16 to vector<12x256xbf16>
    %249 = arith.select %36, %246, %248 : vector<12x256xi1>, vector<12x256xbf16>
    %250 = arith.extf %249 : vector<12x256xbf16> to vector<12x256xf32>
    %cst_63 = arith.constant dense<0.000000e+00> : vector<8x256xf32>
    %251 = tpu.matmul %244, %250, %cst_63 {dimension_numbers = #tpu.dot_dimension_numbers<[1], [0], [0], [1], [0, 0, 1, 1], [], []>} : vector<8x12xf32>, vector<12x256xf32>, vector<8x256xf32> -> vector<8x256xf32>
    %252 = arith.addf %234, %251 : vector<8x256xf32>
    %253 = vector.extract_strided_slice %1 {offsets = [1, 0, 47], sizes = [1, 12, 256], strides = [1, 1, 1]} : vector<2x12x352xbf16> to vector<1x12x256xbf16>
    %254 = vector.shape_cast %253 : vector<1x12x256xbf16> to vector<12x256xbf16>
    %cst_64 = arith.constant 0.000000e+00 : f32
    %255 = arith.truncf %cst_64 : f32 to bf16
    %256 = vector.broadcast %255 : bf16 to vector<12x256xbf16>
    %257 = arith.select %36, %254, %256 : vector<12x256xi1>, vector<12x256xbf16>
    %258 = arith.extf %257 : vector<12x256xbf16> to vector<12x256xf32>
    %cst_65 = arith.constant dense<0.000000e+00> : vector<8x256xf32>
    %259 = tpu.matmul %244, %258, %cst_65 {dimension_numbers = #tpu.dot_dimension_numbers<[1], [0], [0], [1], [0, 0, 1, 1], [], []>} : vector<8x12xf32>, vector<12x256xf32>, vector<8x256xf32> -> vector<8x256xf32>
    %260 = arith.addf %242, %259 : vector<8x256xf32>
    %261 = vector.extract_strided_slice %0 {offsets = [12, 0, 0], sizes = [1, 8, 12], strides = [1, 1, 1]} : vector<25x8x12xf32> to vector<1x8x12xf32>
    %262 = vector.shape_cast %261 : vector<1x8x12xf32> to vector<8x12xf32>
    %263 = vector.extract_strided_slice %1 {offsets = [0, 0, 48], sizes = [1, 12, 256], strides = [1, 1, 1]} : vector<2x12x352xbf16> to vector<1x12x256xbf16>
    %264 = vector.shape_cast %263 : vector<1x12x256xbf16> to vector<12x256xbf16>
    %265 = arith.extf %264 : vector<12x256xbf16> to vector<12x256xf32>
    %cst_66 = arith.constant dense<0.000000e+00> : vector<8x256xf32>
    %266 = tpu.matmul %262, %265, %cst_66 {dimension_numbers = #tpu.dot_dimension_numbers<[1], [0], [0], [1], [0, 0, 1, 1], [], []>} : vector<8x12xf32>, vector<12x256xf32>, vector<8x256xf32> -> vector<8x256xf32>
    %267 = arith.addf %252, %266 : vector<8x256xf32>
    %268 = vector.extract_strided_slice %1 {offsets = [1, 0, 48], sizes = [1, 12, 256], strides = [1, 1, 1]} : vector<2x12x352xbf16> to vector<1x12x256xbf16>
    %269 = vector.shape_cast %268 : vector<1x12x256xbf16> to vector<12x256xbf16>
    %270 = arith.extf %269 : vector<12x256xbf16> to vector<12x256xf32>
    %cst_67 = arith.constant dense<0.000000e+00> : vector<8x256xf32>
    %271 = tpu.matmul %262, %270, %cst_67 {dimension_numbers = #tpu.dot_dimension_numbers<[1], [0], [0], [1], [0, 0, 1, 1], [], []>} : vector<8x12xf32>, vector<12x256xf32>, vector<8x256xf32> -> vector<8x256xf32>
    %272 = arith.addf %260, %271 : vector<8x256xf32>
    %273 = vector.extract_strided_slice %0 {offsets = [13, 0, 0], sizes = [1, 8, 12], strides = [1, 1, 1]} : vector<25x8x12xf32> to vector<1x8x12xf32>
    %274 = vector.shape_cast %273 : vector<1x8x12xf32> to vector<8x12xf32>
    %275 = vector.extract_strided_slice %1 {offsets = [0, 0, 49], sizes = [1, 12, 256], strides = [1, 1, 1]} : vector<2x12x352xbf16> to vector<1x12x256xbf16>
    %276 = vector.shape_cast %275 : vector<1x12x256xbf16> to vector<12x256xbf16>
    %cst_68 = arith.constant 0.000000e+00 : f32
    %277 = arith.truncf %cst_68 : f32 to bf16
    %278 = vector.broadcast %277 : bf16 to vector<12x256xbf16>
    %279 = arith.select %45, %276, %278 : vector<12x256xi1>, vector<12x256xbf16>
    %280 = arith.extf %279 : vector<12x256xbf16> to vector<12x256xf32>
    %cst_69 = arith.constant dense<0.000000e+00> : vector<8x256xf32>
    %281 = tpu.matmul %274, %280, %cst_69 {dimension_numbers = #tpu.dot_dimension_numbers<[1], [0], [0], [1], [0, 0, 1, 1], [], []>} : vector<8x12xf32>, vector<12x256xf32>, vector<8x256xf32> -> vector<8x256xf32>
    %282 = arith.addf %267, %281 : vector<8x256xf32>
    %283 = vector.extract_strided_slice %1 {offsets = [1, 0, 49], sizes = [1, 12, 256], strides = [1, 1, 1]} : vector<2x12x352xbf16> to vector<1x12x256xbf16>
    %284 = vector.shape_cast %283 : vector<1x12x256xbf16> to vector<12x256xbf16>
    %cst_70 = arith.constant 0.000000e+00 : f32
    %285 = arith.truncf %cst_70 : f32 to bf16
    %286 = vector.broadcast %285 : bf16 to vector<12x256xbf16>
    %287 = arith.select %45, %284, %286 : vector<12x256xi1>, vector<12x256xbf16>
    %288 = arith.extf %287 : vector<12x256xbf16> to vector<12x256xf32>
    %cst_71 = arith.constant dense<0.000000e+00> : vector<8x256xf32>
    %289 = tpu.matmul %274, %288, %cst_71 {dimension_numbers = #tpu.dot_dimension_numbers<[1], [0], [0], [1], [0, 0, 1, 1], [], []>} : vector<8x12xf32>, vector<12x256xf32>, vector<8x256xf32> -> vector<8x256xf32>
    %290 = arith.addf %272, %289 : vector<8x256xf32>
    %291 = vector.extract_strided_slice %0 {offsets = [14, 0, 0], sizes = [1, 8, 12], strides = [1, 1, 1]} : vector<25x8x12xf32> to vector<1x8x12xf32>
    %292 = vector.shape_cast %291 : vector<1x8x12xf32> to vector<8x12xf32>
    %293 = vector.extract_strided_slice %1 {offsets = [0, 0, 50], sizes = [1, 12, 256], strides = [1, 1, 1]} : vector<2x12x352xbf16> to vector<1x12x256xbf16>
    %294 = vector.shape_cast %293 : vector<1x12x256xbf16> to vector<12x256xbf16>
    %cst_72 = arith.constant 0.000000e+00 : f32
    %295 = arith.truncf %cst_72 : f32 to bf16
    %296 = vector.broadcast %295 : bf16 to vector<12x256xbf16>
    %297 = arith.select %54, %294, %296 : vector<12x256xi1>, vector<12x256xbf16>
    %298 = arith.extf %297 : vector<12x256xbf16> to vector<12x256xf32>
    %cst_73 = arith.constant dense<0.000000e+00> : vector<8x256xf32>
    %299 = tpu.matmul %292, %298, %cst_73 {dimension_numbers = #tpu.dot_dimension_numbers<[1], [0], [0], [1], [0, 0, 1, 1], [], []>} : vector<8x12xf32>, vector<12x256xf32>, vector<8x256xf32> -> vector<8x256xf32>
    %300 = arith.addf %282, %299 : vector<8x256xf32>
    %301 = vector.extract_strided_slice %1 {offsets = [1, 0, 50], sizes = [1, 12, 256], strides = [1, 1, 1]} : vector<2x12x352xbf16> to vector<1x12x256xbf16>
    %302 = vector.shape_cast %301 : vector<1x12x256xbf16> to vector<12x256xbf16>
    %cst_74 = arith.constant 0.000000e+00 : f32
    %303 = arith.truncf %cst_74 : f32 to bf16
    %304 = vector.broadcast %303 : bf16 to vector<12x256xbf16>
    %305 = arith.select %54, %302, %304 : vector<12x256xi1>, vector<12x256xbf16>
    %306 = arith.extf %305 : vector<12x256xbf16> to vector<12x256xf32>
    %cst_75 = arith.constant dense<0.000000e+00> : vector<8x256xf32>
    %307 = tpu.matmul %292, %306, %cst_75 {dimension_numbers = #tpu.dot_dimension_numbers<[1], [0], [0], [1], [0, 0, 1, 1], [], []>} : vector<8x12xf32>, vector<12x256xf32>, vector<8x256xf32> -> vector<8x256xf32>
    %308 = arith.addf %290, %307 : vector<8x256xf32>
    %309 = vector.extract_strided_slice %0 {offsets = [15, 0, 0], sizes = [1, 8, 12], strides = [1, 1, 1]} : vector<25x8x12xf32> to vector<1x8x12xf32>
    %310 = vector.shape_cast %309 : vector<1x8x12xf32> to vector<8x12xf32>
    %311 = vector.extract_strided_slice %1 {offsets = [0, 0, 62], sizes = [1, 12, 256], strides = [1, 1, 1]} : vector<2x12x352xbf16> to vector<1x12x256xbf16>
    %312 = vector.shape_cast %311 : vector<1x12x256xbf16> to vector<12x256xbf16>
    %cst_76 = arith.constant 0.000000e+00 : f32
    %313 = arith.truncf %cst_76 : f32 to bf16
    %314 = vector.broadcast %313 : bf16 to vector<12x256xbf16>
    %315 = arith.select %27, %312, %314 : vector<12x256xi1>, vector<12x256xbf16>
    %316 = arith.extf %315 : vector<12x256xbf16> to vector<12x256xf32>
    %cst_77 = arith.constant dense<0.000000e+00> : vector<8x256xf32>
    %317 = tpu.matmul %310, %316, %cst_77 {dimension_numbers = #tpu.dot_dimension_numbers<[1], [0], [0], [1], [0, 0, 1, 1], [], []>} : vector<8x12xf32>, vector<12x256xf32>, vector<8x256xf32> -> vector<8x256xf32>
    %318 = arith.addf %300, %317 : vector<8x256xf32>
    %319 = vector.extract_strided_slice %1 {offsets = [1, 0, 62], sizes = [1, 12, 256], strides = [1, 1, 1]} : vector<2x12x352xbf16> to vector<1x12x256xbf16>
    %320 = vector.shape_cast %319 : vector<1x12x256xbf16> to vector<12x256xbf16>
    %cst_78 = arith.constant 0.000000e+00 : f32
    %321 = arith.truncf %cst_78 : f32 to bf16
    %322 = vector.broadcast %321 : bf16 to vector<12x256xbf16>
    %323 = arith.select %27, %320, %322 : vector<12x256xi1>, vector<12x256xbf16>
    %324 = arith.extf %323 : vector<12x256xbf16> to vector<12x256xf32>
    %cst_79 = arith.constant dense<0.000000e+00> : vector<8x256xf32>
    %325 = tpu.matmul %310, %324, %cst_79 {dimension_numbers = #tpu.dot_dimension_numbers<[1], [0], [0], [1], [0, 0, 1, 1], [], []>} : vector<8x12xf32>, vector<12x256xf32>, vector<8x256xf32> -> vector<8x256xf32>
    %326 = arith.addf %308, %325 : vector<8x256xf32>
    %327 = vector.extract_strided_slice %0 {offsets = [16, 0, 0], sizes = [1, 8, 12], strides = [1, 1, 1]} : vector<25x8x12xf32> to vector<1x8x12xf32>
    %328 = vector.shape_cast %327 : vector<1x8x12xf32> to vector<8x12xf32>
    %329 = vector.extract_strided_slice %1 {offsets = [0, 0, 63], sizes = [1, 12, 256], strides = [1, 1, 1]} : vector<2x12x352xbf16> to vector<1x12x256xbf16>
    %330 = vector.shape_cast %329 : vector<1x12x256xbf16> to vector<12x256xbf16>
    %cst_80 = arith.constant 0.000000e+00 : f32
    %331 = arith.truncf %cst_80 : f32 to bf16
    %332 = vector.broadcast %331 : bf16 to vector<12x256xbf16>
    %333 = arith.select %36, %330, %332 : vector<12x256xi1>, vector<12x256xbf16>
    %334 = arith.extf %333 : vector<12x256xbf16> to vector<12x256xf32>
    %cst_81 = arith.constant dense<0.000000e+00> : vector<8x256xf32>
    %335 = tpu.matmul %328, %334, %cst_81 {dimension_numbers = #tpu.dot_dimension_numbers<[1], [0], [0], [1], [0, 0, 1, 1], [], []>} : vector<8x12xf32>, vector<12x256xf32>, vector<8x256xf32> -> vector<8x256xf32>
    %336 = arith.addf %318, %335 : vector<8x256xf32>
    %337 = vector.extract_strided_slice %1 {offsets = [1, 0, 63], sizes = [1, 12, 256], strides = [1, 1, 1]} : vector<2x12x352xbf16> to vector<1x12x256xbf16>
    %338 = vector.shape_cast %337 : vector<1x12x256xbf16> to vector<12x256xbf16>
    %cst_82 = arith.constant 0.000000e+00 : f32
    %339 = arith.truncf %cst_82 : f32 to bf16
    %340 = vector.broadcast %339 : bf16 to vector<12x256xbf16>
    %341 = arith.select %36, %338, %340 : vector<12x256xi1>, vector<12x256xbf16>
    %342 = arith.extf %341 : vector<12x256xbf16> to vector<12x256xf32>
    %cst_83 = arith.constant dense<0.000000e+00> : vector<8x256xf32>
    %343 = tpu.matmul %328, %342, %cst_83 {dimension_numbers = #tpu.dot_dimension_numbers<[1], [0], [0], [1], [0, 0, 1, 1], [], []>} : vector<8x12xf32>, vector<12x256xf32>, vector<8x256xf32> -> vector<8x256xf32>
    %344 = arith.addf %326, %343 : vector<8x256xf32>
    %345 = vector.extract_strided_slice %0 {offsets = [17, 0, 0], sizes = [1, 8, 12], strides = [1, 1, 1]} : vector<25x8x12xf32> to vector<1x8x12xf32>
    %346 = vector.shape_cast %345 : vector<1x8x12xf32> to vector<8x12xf32>
    %347 = vector.extract_strided_slice %1 {offsets = [0, 0, 64], sizes = [1, 12, 256], strides = [1, 1, 1]} : vector<2x12x352xbf16> to vector<1x12x256xbf16>
    %348 = vector.shape_cast %347 : vector<1x12x256xbf16> to vector<12x256xbf16>
    %349 = arith.extf %348 : vector<12x256xbf16> to vector<12x256xf32>
    %cst_84 = arith.constant dense<0.000000e+00> : vector<8x256xf32>
    %350 = tpu.matmul %346, %349, %cst_84 {dimension_numbers = #tpu.dot_dimension_numbers<[1], [0], [0], [1], [0, 0, 1, 1], [], []>} : vector<8x12xf32>, vector<12x256xf32>, vector<8x256xf32> -> vector<8x256xf32>
    %351 = arith.addf %336, %350 : vector<8x256xf32>
    %352 = vector.extract_strided_slice %1 {offsets = [1, 0, 64], sizes = [1, 12, 256], strides = [1, 1, 1]} : vector<2x12x352xbf16> to vector<1x12x256xbf16>
    %353 = vector.shape_cast %352 : vector<1x12x256xbf16> to vector<12x256xbf16>
    %354 = arith.extf %353 : vector<12x256xbf16> to vector<12x256xf32>
    %cst_85 = arith.constant dense<0.000000e+00> : vector<8x256xf32>
    %355 = tpu.matmul %346, %354, %cst_85 {dimension_numbers = #tpu.dot_dimension_numbers<[1], [0], [0], [1], [0, 0, 1, 1], [], []>} : vector<8x12xf32>, vector<12x256xf32>, vector<8x256xf32> -> vector<8x256xf32>
    %356 = arith.addf %344, %355 : vector<8x256xf32>
    %357 = vector.extract_strided_slice %0 {offsets = [18, 0, 0], sizes = [1, 8, 12], strides = [1, 1, 1]} : vector<25x8x12xf32> to vector<1x8x12xf32>
    %358 = vector.shape_cast %357 : vector<1x8x12xf32> to vector<8x12xf32>
    %359 = vector.extract_strided_slice %1 {offsets = [0, 0, 65], sizes = [1, 12, 256], strides = [1, 1, 1]} : vector<2x12x352xbf16> to vector<1x12x256xbf16>
    %360 = vector.shape_cast %359 : vector<1x12x256xbf16> to vector<12x256xbf16>
    %cst_86 = arith.constant 0.000000e+00 : f32
    %361 = arith.truncf %cst_86 : f32 to bf16
    %362 = vector.broadcast %361 : bf16 to vector<12x256xbf16>
    %363 = arith.select %45, %360, %362 : vector<12x256xi1>, vector<12x256xbf16>
    %364 = arith.extf %363 : vector<12x256xbf16> to vector<12x256xf32>
    %cst_87 = arith.constant dense<0.000000e+00> : vector<8x256xf32>
    %365 = tpu.matmul %358, %364, %cst_87 {dimension_numbers = #tpu.dot_dimension_numbers<[1], [0], [0], [1], [0, 0, 1, 1], [], []>} : vector<8x12xf32>, vector<12x256xf32>, vector<8x256xf32> -> vector<8x256xf32>
    %366 = arith.addf %351, %365 : vector<8x256xf32>
    %367 = vector.extract_strided_slice %1 {offsets = [1, 0, 65], sizes = [1, 12, 256], strides = [1, 1, 1]} : vector<2x12x352xbf16> to vector<1x12x256xbf16>
    %368 = vector.shape_cast %367 : vector<1x12x256xbf16> to vector<12x256xbf16>
    %cst_88 = arith.constant 0.000000e+00 : f32
    %369 = arith.truncf %cst_88 : f32 to bf16
    %370 = vector.broadcast %369 : bf16 to vector<12x256xbf16>
    %371 = arith.select %45, %368, %370 : vector<12x256xi1>, vector<12x256xbf16>
    %372 = arith.extf %371 : vector<12x256xbf16> to vector<12x256xf32>
    %cst_89 = arith.constant dense<0.000000e+00> : vector<8x256xf32>
    %373 = tpu.matmul %358, %372, %cst_89 {dimension_numbers = #tpu.dot_dimension_numbers<[1], [0], [0], [1], [0, 0, 1, 1], [], []>} : vector<8x12xf32>, vector<12x256xf32>, vector<8x256xf32> -> vector<8x256xf32>
    %374 = arith.addf %356, %373 : vector<8x256xf32>
    %375 = vector.extract_strided_slice %0 {offsets = [19, 0, 0], sizes = [1, 8, 12], strides = [1, 1, 1]} : vector<25x8x12xf32> to vector<1x8x12xf32>
    %376 = vector.shape_cast %375 : vector<1x8x12xf32> to vector<8x12xf32>
    %377 = vector.extract_strided_slice %1 {offsets = [0, 0, 66], sizes = [1, 12, 256], strides = [1, 1, 1]} : vector<2x12x352xbf16> to vector<1x12x256xbf16>
    %378 = vector.shape_cast %377 : vector<1x12x256xbf16> to vector<12x256xbf16>
    %cst_90 = arith.constant 0.000000e+00 : f32
    %379 = arith.truncf %cst_90 : f32 to bf16
    %380 = vector.broadcast %379 : bf16 to vector<12x256xbf16>
    %381 = arith.select %54, %378, %380 : vector<12x256xi1>, vector<12x256xbf16>
    %382 = arith.extf %381 : vector<12x256xbf16> to vector<12x256xf32>
    %cst_91 = arith.constant dense<0.000000e+00> : vector<8x256xf32>
    %383 = tpu.matmul %376, %382, %cst_91 {dimension_numbers = #tpu.dot_dimension_numbers<[1], [0], [0], [1], [0, 0, 1, 1], [], []>} : vector<8x12xf32>, vector<12x256xf32>, vector<8x256xf32> -> vector<8x256xf32>
    %384 = arith.addf %366, %383 : vector<8x256xf32>
    %385 = vector.extract_strided_slice %1 {offsets = [1, 0, 66], sizes = [1, 12, 256], strides = [1, 1, 1]} : vector<2x12x352xbf16> to vector<1x12x256xbf16>
    %386 = vector.shape_cast %385 : vector<1x12x256xbf16> to vector<12x256xbf16>
    %cst_92 = arith.constant 0.000000e+00 : f32
    %387 = arith.truncf %cst_92 : f32 to bf16
    %388 = vector.broadcast %387 : bf16 to vector<12x256xbf16>
    %389 = arith.select %54, %386, %388 : vector<12x256xi1>, vector<12x256xbf16>
    %390 = arith.extf %389 : vector<12x256xbf16> to vector<12x256xf32>
    %cst_93 = arith.constant dense<0.000000e+00> : vector<8x256xf32>
    %391 = tpu.matmul %376, %390, %cst_93 {dimension_numbers = #tpu.dot_dimension_numbers<[1], [0], [0], [1], [0, 0, 1, 1], [], []>} : vector<8x12xf32>, vector<12x256xf32>, vector<8x256xf32> -> vector<8x256xf32>
    %392 = arith.addf %374, %391 : vector<8x256xf32>
    %393 = vector.extract_strided_slice %0 {offsets = [20, 0, 0], sizes = [1, 8, 12], strides = [1, 1, 1]} : vector<25x8x12xf32> to vector<1x8x12xf32>
    %394 = vector.shape_cast %393 : vector<1x8x12xf32> to vector<8x12xf32>
    %395 = vector.extract_strided_slice %1 {offsets = [0, 0, 78], sizes = [1, 12, 256], strides = [1, 1, 1]} : vector<2x12x352xbf16> to vector<1x12x256xbf16>
    %396 = vector.shape_cast %395 : vector<1x12x256xbf16> to vector<12x256xbf16>
    %cst_94 = arith.constant 0.000000e+00 : f32
    %397 = arith.truncf %cst_94 : f32 to bf16
    %398 = vector.broadcast %397 : bf16 to vector<12x256xbf16>
    %399 = arith.select %27, %396, %398 : vector<12x256xi1>, vector<12x256xbf16>
    %400 = arith.extf %399 : vector<12x256xbf16> to vector<12x256xf32>
    %cst_95 = arith.constant dense<0.000000e+00> : vector<8x256xf32>
    %401 = tpu.matmul %394, %400, %cst_95 {dimension_numbers = #tpu.dot_dimension_numbers<[1], [0], [0], [1], [0, 0, 1, 1], [], []>} : vector<8x12xf32>, vector<12x256xf32>, vector<8x256xf32> -> vector<8x256xf32>
    %402 = arith.addf %384, %401 : vector<8x256xf32>
    %403 = vector.extract_strided_slice %1 {offsets = [1, 0, 78], sizes = [1, 12, 256], strides = [1, 1, 1]} : vector<2x12x352xbf16> to vector<1x12x256xbf16>
    %404 = vector.shape_cast %403 : vector<1x12x256xbf16> to vector<12x256xbf16>
    %cst_96 = arith.constant 0.000000e+00 : f32
    %405 = arith.truncf %cst_96 : f32 to bf16
    %406 = vector.broadcast %405 : bf16 to vector<12x256xbf16>
    %407 = arith.select %27, %404, %406 : vector<12x256xi1>, vector<12x256xbf16>
    %408 = arith.extf %407 : vector<12x256xbf16> to vector<12x256xf32>
    %cst_97 = arith.constant dense<0.000000e+00> : vector<8x256xf32>
    %409 = tpu.matmul %394, %408, %cst_97 {dimension_numbers = #tpu.dot_dimension_numbers<[1], [0], [0], [1], [0, 0, 1, 1], [], []>} : vector<8x12xf32>, vector<12x256xf32>, vector<8x256xf32> -> vector<8x256xf32>
    %410 = arith.addf %392, %409 : vector<8x256xf32>
    %411 = vector.extract_strided_slice %0 {offsets = [21, 0, 0], sizes = [1, 8, 12], strides = [1, 1, 1]} : vector<25x8x12xf32> to vector<1x8x12xf32>
    %412 = vector.shape_cast %411 : vector<1x8x12xf32> to vector<8x12xf32>
    %413 = vector.extract_strided_slice %1 {offsets = [0, 0, 79], sizes = [1, 12, 256], strides = [1, 1, 1]} : vector<2x12x352xbf16> to vector<1x12x256xbf16>
    %414 = vector.shape_cast %413 : vector<1x12x256xbf16> to vector<12x256xbf16>
    %cst_98 = arith.constant 0.000000e+00 : f32
    %415 = arith.truncf %cst_98 : f32 to bf16
    %416 = vector.broadcast %415 : bf16 to vector<12x256xbf16>
    %417 = arith.select %36, %414, %416 : vector<12x256xi1>, vector<12x256xbf16>
    %418 = arith.extf %417 : vector<12x256xbf16> to vector<12x256xf32>
    %cst_99 = arith.constant dense<0.000000e+00> : vector<8x256xf32>
    %419 = tpu.matmul %412, %418, %cst_99 {dimension_numbers = #tpu.dot_dimension_numbers<[1], [0], [0], [1], [0, 0, 1, 1], [], []>} : vector<8x12xf32>, vector<12x256xf32>, vector<8x256xf32> -> vector<8x256xf32>
    %420 = arith.addf %402, %419 : vector<8x256xf32>
    %421 = vector.extract_strided_slice %1 {offsets = [1, 0, 79], sizes = [1, 12, 256], strides = [1, 1, 1]} : vector<2x12x352xbf16> to vector<1x12x256xbf16>
    %422 = vector.shape_cast %421 : vector<1x12x256xbf16> to vector<12x256xbf16>
    %cst_100 = arith.constant 0.000000e+00 : f32
    %423 = arith.truncf %cst_100 : f32 to bf16
    %424 = vector.broadcast %423 : bf16 to vector<12x256xbf16>
    %425 = arith.select %36, %422, %424 : vector<12x256xi1>, vector<12x256xbf16>
    %426 = arith.extf %425 : vector<12x256xbf16> to vector<12x256xf32>
    %cst_101 = arith.constant dense<0.000000e+00> : vector<8x256xf32>
    %427 = tpu.matmul %412, %426, %cst_101 {dimension_numbers = #tpu.dot_dimension_numbers<[1], [0], [0], [1], [0, 0, 1, 1], [], []>} : vector<8x12xf32>, vector<12x256xf32>, vector<8x256xf32> -> vector<8x256xf32>
    %428 = arith.addf %410, %427 : vector<8x256xf32>
    %429 = vector.extract_strided_slice %0 {offsets = [22, 0, 0], sizes = [1, 8, 12], strides = [1, 1, 1]} : vector<25x8x12xf32> to vector<1x8x12xf32>
    %430 = vector.shape_cast %429 : vector<1x8x12xf32> to vector<8x12xf32>
    %431 = vector.extract_strided_slice %1 {offsets = [0, 0, 80], sizes = [1, 12, 256], strides = [1, 1, 1]} : vector<2x12x352xbf16> to vector<1x12x256xbf16>
    %432 = vector.shape_cast %431 : vector<1x12x256xbf16> to vector<12x256xbf16>
    %433 = arith.extf %432 : vector<12x256xbf16> to vector<12x256xf32>
    %cst_102 = arith.constant dense<0.000000e+00> : vector<8x256xf32>
    %434 = tpu.matmul %430, %433, %cst_102 {dimension_numbers = #tpu.dot_dimension_numbers<[1], [0], [0], [1], [0, 0, 1, 1], [], []>} : vector<8x12xf32>, vector<12x256xf32>, vector<8x256xf32> -> vector<8x256xf32>
    %435 = arith.addf %420, %434 : vector<8x256xf32>
    %436 = vector.extract_strided_slice %1 {offsets = [1, 0, 80], sizes = [1, 12, 256], strides = [1, 1, 1]} : vector<2x12x352xbf16> to vector<1x12x256xbf16>
    %437 = vector.shape_cast %436 : vector<1x12x256xbf16> to vector<12x256xbf16>
    %438 = arith.extf %437 : vector<12x256xbf16> to vector<12x256xf32>
    %cst_103 = arith.constant dense<0.000000e+00> : vector<8x256xf32>
    %439 = tpu.matmul %430, %438, %cst_103 {dimension_numbers = #tpu.dot_dimension_numbers<[1], [0], [0], [1], [0, 0, 1, 1], [], []>} : vector<8x12xf32>, vector<12x256xf32>, vector<8x256xf32> -> vector<8x256xf32>
    %440 = arith.addf %428, %439 : vector<8x256xf32>
    %441 = vector.extract_strided_slice %0 {offsets = [23, 0, 0], sizes = [1, 8, 12], strides = [1, 1, 1]} : vector<25x8x12xf32> to vector<1x8x12xf32>
    %442 = vector.shape_cast %441 : vector<1x8x12xf32> to vector<8x12xf32>
    %443 = vector.extract_strided_slice %1 {offsets = [0, 0, 81], sizes = [1, 12, 256], strides = [1, 1, 1]} : vector<2x12x352xbf16> to vector<1x12x256xbf16>
    %444 = vector.shape_cast %443 : vector<1x12x256xbf16> to vector<12x256xbf16>
    %cst_104 = arith.constant 0.000000e+00 : f32
    %445 = arith.truncf %cst_104 : f32 to bf16
    %446 = vector.broadcast %445 : bf16 to vector<12x256xbf16>
    %447 = arith.select %45, %444, %446 : vector<12x256xi1>, vector<12x256xbf16>
    %448 = arith.extf %447 : vector<12x256xbf16> to vector<12x256xf32>
    %cst_105 = arith.constant dense<0.000000e+00> : vector<8x256xf32>
    %449 = tpu.matmul %442, %448, %cst_105 {dimension_numbers = #tpu.dot_dimension_numbers<[1], [0], [0], [1], [0, 0, 1, 1], [], []>} : vector<8x12xf32>, vector<12x256xf32>, vector<8x256xf32> -> vector<8x256xf32>
    %450 = arith.addf %435, %449 : vector<8x256xf32>
    %451 = vector.extract_strided_slice %1 {offsets = [1, 0, 81], sizes = [1, 12, 256], strides = [1, 1, 1]} : vector<2x12x352xbf16> to vector<1x12x256xbf16>
    %452 = vector.shape_cast %451 : vector<1x12x256xbf16> to vector<12x256xbf16>
    %cst_106 = arith.constant 0.000000e+00 : f32
    %453 = arith.truncf %cst_106 : f32 to bf16
    %454 = vector.broadcast %453 : bf16 to vector<12x256xbf16>
    %455 = arith.select %45, %452, %454 : vector<12x256xi1>, vector<12x256xbf16>
    %456 = arith.extf %455 : vector<12x256xbf16> to vector<12x256xf32>
    %cst_107 = arith.constant dense<0.000000e+00> : vector<8x256xf32>
    %457 = tpu.matmul %442, %456, %cst_107 {dimension_numbers = #tpu.dot_dimension_numbers<[1], [0], [0], [1], [0, 0, 1, 1], [], []>} : vector<8x12xf32>, vector<12x256xf32>, vector<8x256xf32> -> vector<8x256xf32>
    %458 = arith.addf %440, %457 : vector<8x256xf32>
    %459 = vector.extract_strided_slice %0 {offsets = [24, 0, 0], sizes = [1, 8, 12], strides = [1, 1, 1]} : vector<25x8x12xf32> to vector<1x8x12xf32>
    %460 = vector.shape_cast %459 : vector<1x8x12xf32> to vector<8x12xf32>
    %461 = vector.extract_strided_slice %1 {offsets = [0, 0, 82], sizes = [1, 12, 256], strides = [1, 1, 1]} : vector<2x12x352xbf16> to vector<1x12x256xbf16>
    %462 = vector.shape_cast %461 : vector<1x12x256xbf16> to vector<12x256xbf16>
    %cst_108 = arith.constant 0.000000e+00 : f32
    %463 = arith.truncf %cst_108 : f32 to bf16
    %464 = vector.broadcast %463 : bf16 to vector<12x256xbf16>
    %465 = arith.select %54, %462, %464 : vector<12x256xi1>, vector<12x256xbf16>
    %466 = arith.extf %465 : vector<12x256xbf16> to vector<12x256xf32>
    %cst_109 = arith.constant dense<0.000000e+00> : vector<8x256xf32>
    %467 = tpu.matmul %460, %466, %cst_109 {dimension_numbers = #tpu.dot_dimension_numbers<[1], [0], [0], [1], [0, 0, 1, 1], [], []>} : vector<8x12xf32>, vector<12x256xf32>, vector<8x256xf32> -> vector<8x256xf32>
    %468 = arith.addf %450, %467 : vector<8x256xf32>
    %469 = vector.extract_strided_slice %1 {offsets = [1, 0, 82], sizes = [1, 12, 256], strides = [1, 1, 1]} : vector<2x12x352xbf16> to vector<1x12x256xbf16>
    %470 = vector.shape_cast %469 : vector<1x12x256xbf16> to vector<12x256xbf16>
    %cst_110 = arith.constant 0.000000e+00 : f32
    %471 = arith.truncf %cst_110 : f32 to bf16
    %472 = vector.broadcast %471 : bf16 to vector<12x256xbf16>
    %473 = arith.select %54, %470, %472 : vector<12x256xi1>, vector<12x256xbf16>
    %474 = arith.extf %473 : vector<12x256xbf16> to vector<12x256xf32>
    %cst_111 = arith.constant dense<0.000000e+00> : vector<8x256xf32>
    %475 = tpu.matmul %460, %474, %cst_111 {dimension_numbers = #tpu.dot_dimension_numbers<[1], [0], [0], [1], [0, 0, 1, 1], [], []>} : vector<8x12xf32>, vector<12x256xf32>, vector<8x256xf32> -> vector<8x256xf32>
    %476 = arith.addf %458, %475 : vector<8x256xf32>
    %cst_112 = arith.constant 6.500000e+00 : f32
    %477 = vector.broadcast %cst_112 : f32 to vector<8x256xf32>
    %478 = arith.cmpf olt, %468, %477 : vector<8x256xf32>
    %cst_113 = arith.constant 6.500000e+00 : f32
    %479 = vector.broadcast %cst_113 : f32 to vector<8x256xf32>
    %480 = arith.subf %468, %479 : vector<8x256xf32>
    %cst_114 = arith.constant 5.000000e-01 : f32
    %481 = vector.broadcast %cst_114 : f32 to vector<8x256xf32>
    %482 = arith.mulf %481, %480 : vector<8x256xf32>
    %cst_115 = arith.constant 6.500000e+00 : f32
    %483 = vector.broadcast %cst_115 : f32 to vector<8x256xf32>
    %484 = arith.subf %483, %482 : vector<8x256xf32>
    %485 = arith.select %478, %468, %484 : vector<8x256xi1>, vector<8x256xf32>
    %cst_116 = arith.constant dense<0xFF800000> : vector<8xf32>
    %486 = vector.multi_reduction <maximumf>, %485, %cst_116 [1] : vector<8x256xf32> to vector<8xf32>
    %487 = vector.shape_cast %486 : vector<8xf32> to vector<8x1xf32>
    %cst_117 = arith.constant 1.000000e-10 : f32
    %488 = vector.broadcast %cst_117 : f32 to vector<8x1xf32>
    %489 = arith.addf %488, %487 : vector<8x1xf32>
    %490 = tpu.reciprocal %489 {approx = true} : vector<8x1xf32> -> vector<8x1xf32>
    %491 = arith.mulf %489, %490 : vector<8x1xf32>
    %cst_118 = arith.constant 2.000000e+00 : f32
    %492 = vector.broadcast %cst_118 : f32 to vector<8x1xf32>
    %493 = arith.subf %492, %491 : vector<8x1xf32>
    %494 = arith.mulf %490, %493 : vector<8x1xf32>
    %495 = vector.broadcast %494 : vector<8x1xf32> to vector<8x256xf32>
    %496 = arith.mulf %485, %495 : vector<8x256xf32>
    %c0_119 = arith.constant 0 : index
    %c0_120 = arith.constant 0 : index
    %c0_121 = arith.constant 0 : index
    %497 = vector.load %arg3[%c0_119, %c0_120, %c0_121] : memref<2x8x256xf32, #tpu.memory_space<vmem>>, vector<1x8x256xf32>
    %498 = vector.shape_cast %497 : vector<1x8x256xf32> to vector<8x256xf32>
    %499 = vector.shape_cast %496 : vector<8x256xf32> to vector<1x8x256xf32>
    tpu.vector_store %arg3[%c0_119, %c0_120, %c0_121], %499 {strides = array<i32>} : memref<2x8x256xf32, #tpu.memory_space<vmem>>, vector<1x8x256xf32>,
    %cst_122 = arith.constant 5.612310e-01 : f32
    %500 = vector.broadcast %cst_122 : f32 to vector<8x256xf32>
    %501 = arith.cmpf oge, %496, %500 : vector<8x256xf32>
    %502 = arith.extui %501 : vector<8x256xi1> to vector<8x256xi32>
    %503 = arith.sitofp %502 : vector<8x256xi32> to vector<8x256xf32>
    %504 = arith.truncf %503 : vector<8x256xf32> to vector<8x256xbf16>
    %c0_123 = arith.constant 0 : index
    %c0_124 = arith.constant 0 : index
    %c0_125 = arith.constant 0 : index
    %505 = vector.load %arg4[%c0_123, %c0_124, %c0_125] : memref<2x8x256xbf16, #tpu.memory_space<vmem>>, vector<1x8x256xbf16>
    %506 = vector.shape_cast %505 : vector<1x8x256xbf16> to vector<8x256xbf16>
    %507 = vector.shape_cast %504 : vector<8x256xbf16> to vector<1x8x256xbf16>
    tpu.vector_store %arg4[%c0_123, %c0_124, %c0_125], %507 {strides = array<i32>} : memref<2x8x256xbf16, #tpu.memory_space<vmem>>, vector<1x8x256xbf16>,
    %cst_126 = arith.constant 6.500000e+00 : f32
    %508 = vector.broadcast %cst_126 : f32 to vector<8x256xf32>
    %509 = arith.cmpf olt, %476, %508 : vector<8x256xf32>
    %cst_127 = arith.constant 6.500000e+00 : f32
    %510 = vector.broadcast %cst_127 : f32 to vector<8x256xf32>
    %511 = arith.subf %476, %510 : vector<8x256xf32>
    %cst_128 = arith.constant 5.000000e-01 : f32
    %512 = vector.broadcast %cst_128 : f32 to vector<8x256xf32>
    %513 = arith.mulf %512, %511 : vector<8x256xf32>
    %cst_129 = arith.constant 6.500000e+00 : f32
    %514 = vector.broadcast %cst_129 : f32 to vector<8x256xf32>
    %515 = arith.subf %514, %513 : vector<8x256xf32>
    %516 = arith.select %509, %476, %515 : vector<8x256xi1>, vector<8x256xf32>
    %cst_130 = arith.constant dense<0xFF800000> : vector<8xf32>
    %517 = vector.multi_reduction <maximumf>, %516, %cst_130 [1] : vector<8x256xf32> to vector<8xf32>
    %518 = vector.shape_cast %517 : vector<8xf32> to vector<8x1xf32>
    %cst_131 = arith.constant 1.000000e-10 : f32
    %519 = vector.broadcast %cst_131 : f32 to vector<8x1xf32>
    %520 = arith.addf %519, %518 : vector<8x1xf32>
    %521 = tpu.reciprocal %520 {approx = true} : vector<8x1xf32> -> vector<8x1xf32>
    %522 = arith.mulf %520, %521 : vector<8x1xf32>
    %cst_132 = arith.constant 2.000000e+00 : f32
    %523 = vector.broadcast %cst_132 : f32 to vector<8x1xf32>
    %524 = arith.subf %523, %522 : vector<8x1xf32>
    %525 = arith.mulf %521, %524 : vector<8x1xf32>
    %526 = vector.broadcast %525 : vector<8x1xf32> to vector<8x256xf32>
    %527 = arith.mulf %516, %526 : vector<8x256xf32>
    %c1 = arith.constant 1 : index
    %c0_133 = arith.constant 0 : index
    %c0_134 = arith.constant 0 : index
    %528 = vector.load %arg3[%c1, %c0_133, %c0_134] : memref<2x8x256xf32, #tpu.memory_space<vmem>>, vector<1x8x256xf32>
    %529 = vector.shape_cast %528 : vector<1x8x256xf32> to vector<8x256xf32>
    %530 = vector.shape_cast %527 : vector<8x256xf32> to vector<1x8x256xf32>
    tpu.vector_store %arg3[%c1, %c0_133, %c0_134], %530 {strides = array<i32>} : memref<2x8x256xf32, #tpu.memory_space<vmem>>, vector<1x8x256xf32>,
    %cst_135 = arith.constant 5.612310e-01 : f32
    %531 = vector.broadcast %cst_135 : f32 to vector<8x256xf32>
    %532 = arith.cmpf oge, %527, %531 : vector<8x256xf32>
    %533 = arith.extui %532 : vector<8x256xi1> to vector<8x256xi32>
    %534 = arith.sitofp %533 : vector<8x256xi32> to vector<8x256xf32>
    %535 = arith.truncf %534 : vector<8x256xf32> to vector<8x256xbf16>
    %c1_136 = arith.constant 1 : index
    %c0_137 = arith.constant 0 : index
    %c0_138 = arith.constant 0 : index
    %536 = vector.load %arg4[%c1_136, %c0_137, %c0_138] : memref<2x8x256xbf16, #tpu.memory_space<vmem>>, vector<1x8x256xbf16>
    %537 = vector.shape_cast %536 : vector<1x8x256xbf16> to vector<8x256xbf16>
    %538 = vector.shape_cast %535 : vector<8x256xbf16> to vector<1x8x256xbf16>
    tpu.vector_store %arg4[%c1_136, %c0_137, %c0_138], %538 {strides = array<i32>} : memref<2x8x256xbf16, #tpu.memory_space<vmem>>, vector<1x8x256xbf16>,
    return
  }
  func.func @transform_0(%arg0: i32) -> (i32, i32, i32) {
    %c0_i32 = arith.constant 0 : i32
    %c0_i32_0 = arith.constant 0 : i32
    %c0_i32_1 = arith.constant 0 : i32
    %c0_i32_2 = arith.constant 0 : i32
    return %c0_i32, %c0_i32_0, %c0_i32_1 : i32, i32, i32
  }
  func.func @transform_1(%arg0: i32) -> (i32, i32, i32) {
    %c0_i32 = arith.constant 0 : i32
    %c0_i32_0 = arith.constant 0 : i32
    %c0_i32_1 = arith.constant 0 : i32
    return %arg0, %c0_i32, %c0_i32_0 : i32, i32, i32
  }
  func.func @transform_2(%arg0: i32) -> (i32, i32, i32) {
    %c0_i32 = arith.constant 0 : i32
    %c0_i32_0 = arith.constant 0 : i32
    %c0_i32_1 = arith.constant 0 : i32
    return %arg0, %c0_i32, %c0_i32_0 : i32, i32, i32
  }
  func.func @transform_3(%arg0: i32) -> (i32, i32, i32) {
    %c0_i32 = arith.constant 0 : i32
    %c0_i32_0 = arith.constant 0 : i32
    %c0_i32_1 = arith.constant 0 : i32
    return %arg0, %c0_i32, %c0_i32_0 : i32, i32, i32
  }
}

</mosaic_0001>

<llo_original>
// kernel: tpu_custom_call.1
$region0: #{tpu_custom_call.1}
  #allocation0 [shape = 'u32[]', space=smem, size = 0x4, offset = 0x4, fixed_abs, tag = 'smem constant byte address 0x4 - core index']
  #allocation1 [shape = 'u32[144,128]{1,0:T(1,128)}', space=vmem, size = 0x12000, scoped, tag = 'internal scratch']
  %s0 = inlined_call_operand.vmem [shape: f32[25,8,12], index: 0, kind: input, shape index: {}]
  %s1 = inlined_call_operand.vmem [shape: bf16[2,12,352], index: 1, kind: input, shape index: {}]
  %s2 = inlined_call_operand.hbm [shape: f32[2,8,256], index: 2, kind: output, shape index: {0}]
  %s3 = inlined_call_operand.hbm [shape: bf16[2,8,256], index: 3, kind: output, shape index: {1}]
  %4 = xla_tuple %s2, %s3
  %s5 = sld [smem:[#allocation0]]
  $region26: #{tpu_custom_call.1} parent=0
    _
  %s7 = ssub.s32 1, %s5
  %s8 = scalar_select 0, %s7, %s5
  $region1: #{tpu_custom_call.1} parent=0
    #allocation2 [shape = 'u8[16384]{0}', space=vmem, size = 0x4000, scoped, tag = 'output window, operand 0, single buffered']
    #allocation3 [shape = 's32[1]{0}', space=sflag, size = 0x4, scoped, tag = 'scoped memory for tpu_custom_call.1']
    #allocation4 [shape = 'u8[8192]{0}', space=vmem, size = 0x2000, scoped, tag = 'output window, operand 1, single buffered']
    #allocation5 [shape = 's32[1]{0}', space=sflag, size = 0x4, scoped, tag = 'scoped memory for tpu_custom_call.1']
    %9 = vsyncpa [#allocation3], 0
    %10 = vsyncpa [#allocation5], 0
    // Predicated region
    $region2: #{tpu_custom_call.1} parent=1 // pred_check
      _
    $region3: #{tpu_custom_call.1} parent=1 // pred_check_branch
      %12 = sbr.rel (0) target = $region5
    $region4: #{tpu_custom_call.1} parent=1 // pred_region
      _
    $region5: #{tpu_custom_call.1} parent=1 // pred_fallthru
      _
    // Predicated region
    $region6: #{tpu_custom_call.1} parent=1 // pred_check
      _
    $region7: #{tpu_custom_call.1} parent=1 // pred_check_branch
      %14 = sbr.rel (0) target = $region9
    $region8: #{tpu_custom_call.1} parent=1 // pred_region
      _
    $region9: #{tpu_custom_call.1} parent=1 // pred_fallthru
      _
    %v18 = vld [vmem:[%s0] sm:$0xff]
    %v19 = vld [vmem:[%s0 + $0x8] sm:$0xff]
    %v20 = vld [vmem:[%s0 + $0x10] sm:$0xff]
    %v21 = vld [vmem:[%s0 + $0x18] sm:$0xff]
    %v22 = vld [vmem:[%s0 + $0x20] sm:$0xff]
    %v23 = vld [vmem:[%s0 + $0x28] sm:$0xff]
    %v24 = vld [vmem:[%s0 + $0x30] sm:$0xff]
    %v25 = vld [vmem:[%s0 + $0x38] sm:$0xff]
    %v26 = vld [vmem:[%s0 + $0x40] sm:$0xff]
    %v27 = vld [vmem:[%s0 + $0x48] sm:$0xff]
    %v28 = vld [vmem:[%s0 + $0x50] sm:$0xff]
    %v29 = vld [vmem:[%s0 + $0x58] sm:$0xff]
    %v30 = vld [vmem:[%s0 + $0x60] sm:$0xff]
    %v31 = vld [vmem:[%s0 + $0x68] sm:$0xff]
    %v32 = vld [vmem:[%s0 + $0x70] sm:$0xff]
    %v33 = vld [vmem:[%s0 + $0x78] sm:$0xff]
    %v34 = vld [vmem:[%s0 + $0x80] sm:$0xff]
    %v35 = vld [vmem:[%s0 + $0x88] sm:$0xff]
    %v36 = vld [vmem:[%s0 + $0x90] sm:$0xff]
    %v37 = vld [vmem:[%s0 + $0x98] sm:$0xff]
    %v38 = vld [vmem:[%s0 + $0xa0] sm:$0xff]
    %v39 = vld [vmem:[%s0 + $0xa8] sm:$0xff]
    %v40 = vld [vmem:[%s0 + $0xb0] sm:$0xff]
    %v41 = vld [vmem:[%s0 + $0xb8] sm:$0xff]
    %v42 = vld [vmem:[%s0 + $0xc0] sm:$0xff]
    %v43 = vld [vmem:[%s1] sm:$0xff]
    %v44 = vld [vmem:[%s1 + $0x8] sm:$0xf]
    %v45 = vld [vmem:[%s1 + $0xc] sm:$0x33]
    %v46 = vld [vmem:[%s1 + $0x14] sm:$0x3]
    %v47 = vld [vmem:[%s1 + $0x18] sm:$0xff]
    %v48 = vld [vmem:[%s1 + $0x20] sm:$0xf]
    %v49 = vld [vmem:[%s1 + $0x24] sm:$0x33]
    %v50 = vld [vmem:[%s1 + $0x2c] sm:$0x3]
    %v51 = vlaneseq
    %v52 = vand.u32 %v51, 127
    %v53 = vadd.s32 %v52, 128
    %vm54 = vcmp.lt.s32.totalorder %v52, 0
    %v55 = vsub.s32 0, %v52
    %v56 = vsel %vm54, %v55, %v52
    %v57 = vshrl.u32 %v56, 4
    %v58 = vand.u32 %v56, 15
    %v59 = vsub.s32 0, %v58
    %v60 = vsel %vm54, %v59, %v58
    %vm61 = vcmp.lt.s32.totalorder %v53, 0
    %v62 = vsub.s32 0, %v53
    %v63 = vsel %vm61, %v62, %v53
    %v64 = vshrl.u32 %v63, 4
    %v65 = vand.u32 %v63, 15
    %v66 = vsub.s32 0, %v65
    %v67 = vsel %vm61, %v66, %v65
    %vm68 = vcmp.ne.s32.totalorder %v60, 0
    %vm69 = vcmp.ne.s32.totalorder %v67, 0
    %vm70 = vcmp.lt.s32.totalorder %v60, 0
    %vm71 = vcmp.lt.s32.totalorder %v67, 0
    %vm72 = vmand %vm70, %vm68
    %vm73 = vmand %vm71, %vm69
    %v74 = vadd.s32 %v60, 16
    %v75 = vadd.s32 %v67, 16
    %v76 = vsel %vm72, %v74, %v60
    %v77 = vsel %vm73, %v75, %v67
    %v78 = vadd.s32 %v76, 4294967294
    %v79 = vadd.s32 %v77, 4294967294
    %vm80 = vcmp.ge.s32.totalorder %v78, 0
    %vm81 = vcmp.ge.s32.totalorder %v79, 0
    %vm82 = vcmp.lt.s32.totalorder %v78, 16
    %vm83 = vcmp.lt.s32.totalorder %v79, 16
    %vm84 = vmand %vm80, %vm82
    %vm85 = vmand %vm81, %vm83
    %v86 = vadd.s32 %v76, 4294967295
    %v87 = vadd.s32 %v77, 4294967295
    %vm88 = vcmp.ge.s32.totalorder %v86, 0
    %vm89 = vcmp.ge.s32.totalorder %v87, 0
    %vm90 = vcmp.lt.s32.totalorder %v86, 16
    %vm91 = vcmp.lt.s32.totalorder %v87, 16
    %vm92 = vmand %vm88, %vm90
    %vm93 = vmand %vm89, %vm91
    %v94 = vadd.s32 %v76, 1
    %v95 = vadd.s32 %v77, 1
    %vm96 = vcmp.ge.s32.totalorder %v94, 0
    %vm97 = vcmp.ge.s32.totalorder %v95, 0
    %vm98 = vcmp.lt.s32.totalorder %v94, 16
    %vm99 = vcmp.lt.s32.totalorder %v95, 16
    %vm100 = vmand %vm96, %vm98
    %vm101 = vmand %vm97, %vm99
    %v102 = vadd.s32 %v76, 2
    %v103 = vadd.s32 %v77, 2
    %vm104 = vcmp.ge.s32.totalorder %v102, 0
    %vm105 = vcmp.ge.s32.totalorder %v103, 0
    %vm106 = vcmp.lt.s32.totalorder %v102, 16
    %vm107 = vcmp.lt.s32.totalorder %v103, 16
    %vm108 = vmand %vm104, %vm106
    %vm109 = vmand %vm105, %vm107
    %vm110 = vmpackc.low %vm85, %vm84
    %v111 = vsel %vm110, 65537, 0
    %112 = vrot.lane.b32.xlu0 %v111, 14
    %v113 = vpop.permute.xlu0 %112
    %v114 = vrot.slane %v113, 4
    %vm115 = vcmask 113664
    %v116 = vsel %vm115, %v114, %v113
    %vm117 = vcmp.ne.s16.totalorder %v116, 0
    %vm118 = vcmp.ne.s16.totalorder %v114, 0
    %v119 = vsel %vm117, %v43, 0
    %v120 = vsel %vm118, %v44, 0
    %v121 = vsel %vm117, %v45, 0
    %v122 = vsel %vm118, %v46, 0
    %v123 = vunpack.c.l.bf16 %v119
    %v124 = vunpack.c.h.bf16 %v119
    %v125 = vunpack.c.l.bf16 %v120
    %v126 = vunpack.c.l.bf16 %v121
    %v127 = vunpack.c.h.bf16 %v121
    %v128 = vunpack.c.l.bf16 %v122
    %v129 = vsel %vm117, %v47, 0
    %v130 = vsel %vm118, %v48, 0
    %v131 = vsel %vm117, %v49, 0
    %v132 = vsel %vm118, %v50, 0
    %v133 = vunpack.c.l.bf16 %v129
    %v134 = vunpack.c.h.bf16 %v129
    %v135 = vunpack.c.l.bf16 %v130
    %v136 = vunpack.c.l.bf16 %v131
    %v137 = vunpack.c.h.bf16 %v131
    %v138 = vunpack.c.l.bf16 %v132
    %vm139 = vmpackc.low %vm93, %vm92
    %v140 = vsel %vm139, 65537, 0
    %141 = vrot.lane.b32.xlu0 %v140, 15
    %v142 = vpop.permute.xlu0 %141
    %v143 = vrot.slane %v142, 4
    %vm144 = vcmask 121856
    %v145 = vsel %vm144, %v143, %v142
    %vm146 = vcmp.ne.s16.totalorder %v145, 0
    %vm147 = vcmp.ne.s16.totalorder %v143, 0
    %v148 = vsel %vm146, %v43, 0
    %v149 = vsel %vm147, %v44, 0
    %v150 = vsel %vm146, %v45, 0
    %v151 = vsel %vm147, %v46, 0
    %v152 = vunpack.c.l.bf16 %v148
    %v153 = vunpack.c.h.bf16 %v148
    %v154 = vunpack.c.l.bf16 %v149
    %v155 = vunpack.c.l.bf16 %v150
    %v156 = vunpack.c.h.bf16 %v150
    %v157 = vunpack.c.l.bf16 %v151
    %164 = vrot.lane.b32.xlu0 %v152, 113
    %v165 = vpop.permute.xlu0 %164
    %166 = vrot.lane.b32.xlu0 %v153, 113
    %v167 = vpop.permute.xlu0 %166
    %168 = vrot.lane.b32.xlu0 %v154, 113
    %v169 = vpop.permute.xlu0 %168
    %170 = vrot.lane.b32.xlu0 %v155, 113
    %v171 = vpop.permute.xlu0 %170
    %172 = vrot.lane.b32.xlu0 %v156, 113
    %v173 = vpop.permute.xlu0 %172
    %174 = vrot.lane.b32.xlu0 %v157, 113
    %v175 = vpop.permute.xlu0 %174
    %vm176 = vcmask 924672
    %v177 = vsel %vm176, %v165, %v167
    %v178 = vsel %vm176, %v167, %v169
    %v179 = vsel %vm176, %v171, %v173
    %v180 = vsel %vm176, %v173, %v175
    %vm183 = vcmask 97280
    %v185 = vsel %vm183, %v19, 0
    %vm187 = vcmask 1043456
    %v188 = vsel %vm187, %v179, 0
    %v190 = vsel %vm187, %v180, 0
    %192 = vmatprep.subr.mxu0 0.0
    %193 = vmatpush1.msra.mxu0 0.0
    %194 = vmatprep.subr.mxu0 0.0
    %195 = vmatpush1.msra.mxu0 0.0
    %196 = vmatprep.subr.mxu0 0.0
    %197 = vmatpush1.msra.mxu0 0.0
    %198 = vmatprep.subr.mxu0 0.0
    %199 = vmatpush1.msra.mxu0 0.0
    %200 = vmatprep.subr.mxu0 0.0
    %201 = vmatpush1.msra.mxu0 0.0
    %202 = vmatprep.subr.mxu0 0.0
    %203 = vmatpush1.msra.mxu0 0.0
    %204 = vmatprep.subr.mxu0 0.0
    %205 = vmatpush1.msra.mxu0 0.0
    %206 = vmatprep.subr.mxu0 0.0
    %207 = vmatpush1.msra.mxu0 0.0
    %208 = vmatprep.subr.mxu0 0.0
    %209 = vmatpush1.msra.mxu0 0.0
    %210 = vmatprep.subr.mxu0 0.0
    %211 = vmatpush1.msra.mxu0 0.0
    %212 = vmatprep.subr.mxu0 0.0
    %213 = vmatpush1.msra.mxu0 0.0
    %214 = vmatprep.subr.mxu0 0.0
    %215 = vmatpush1.msra.mxu0 0.0
    %216 = vmatprep.subr.mxu0 0.0
    %217 = vmatpush1.msra.mxu0 0.0
    %218 = vmatprep.subr.mxu0 0.0
    %219 = vmatpush1.msra.mxu0 0.0
    %220 = vmatprep.subr.mxu0 %v190
    %221 = vmatpush1.msra.mxu0 %v188
    %222 = vmatprep.subr.mxu0 %v178
    %223 = vmatpush1.msra.mxu0 %v177
    %224 = vmatprep.subr.mxu0 0.0
    %225 = vmatpush2.msra.mxu0 0.0
    %226 = vmatprep.subr.mxu0 0.0
    %227 = vmatpush2.msra.mxu0 0.0
    %228 = vmatprep.subr.mxu0 0.0
    %229 = vmatpush2.msra.mxu0 0.0
    %230 = vmatprep.subr.mxu0 0.0
    %231 = vmatpush2.msra.mxu0 0.0
    %232 = vmatprep.subr.mxu0 0.0
    %233 = vmatpush2.msra.mxu0 0.0
    %234 = vmatprep.subr.mxu0 0.0
    %235 = vmatpush2.msra.mxu0 0.0
    %236 = vmatprep.subr.mxu0 0.0
    %237 = vmatpush2.msra.mxu0 0.0
    %238 = vmatprep.subr.mxu0 0.0
    %239 = vmatpush2.msra.mxu0 0.0
    %240 = vmatprep.subr.mxu0 0.0
    %241 = vmatpush2.msra.mxu0 0.0
    %242 = vmatprep.subr.mxu0 0.0
    %243 = vmatpush2.msra.mxu0 0.0
    %244 = vmatprep.subr.mxu0 0.0
    %245 = vmatpush2.msra.mxu0 0.0
    %246 = vmatprep.subr.mxu0 0.0
    %247 = vmatpush2.msra.mxu0 0.0
    %248 = vmatprep.subr.mxu0 0.0
    %249 = vmatpush2.msra.mxu0 0.0
    %250 = vmatprep.subr.mxu0 0.0
    %251 = vmatpush2.msra.mxu0 0.0
    %252 = vmatprep.subr.mxu0 0.0
    %253 = vmatpush2.msra.mxu0 0.0
    %254 = vmatprep.subr.mxu0 0.0
    %255 = vmatpush2.msra.mxu0 0.0
    %256 = vmatprep.mubr.f32.mxu0 0.0
    %257 = vmatmul.mubr.f32.gmra.mxu0 %v185
    %v258 = vpop.f32.mrf.mxu0
    %v259 = vadd.f32 0.0, %v258
    %v260 = vpop.f32.mrf.mxu0
    %v261 = vadd.f32 0.0, %v260
    %262 = vdwg.mxu0
    %269 = vrot.lane.b32.xlu0 %v123, 114
    %v270 = vpop.permute.xlu0 %269
    %271 = vrot.lane.b32.xlu0 %v124, 114
    %v272 = vpop.permute.xlu0 %271
    %273 = vrot.lane.b32.xlu0 %v125, 114
    %v274 = vpop.permute.xlu0 %273
    %275 = vrot.lane.b32.xlu0 %v126, 114
    %v276 = vpop.permute.xlu0 %275
    %277 = vrot.lane.b32.xlu0 %v127, 114
    %v278 = vpop.permute.xlu0 %277
    %279 = vrot.lane.b32.xlu0 %v128, 114
    %v280 = vpop.permute.xlu0 %279
    %vm281 = vcmask 932864
    %v282 = vsel %vm281, %v270, %v272
    %v283 = vsel %vm281, %v272, %v274
    %v284 = vsel %vm281, %v276, %v278
    %v285 = vsel %vm281, %v278, %v280
    %v289 = vsel %vm183, %v18, 0
    %v291 = vsel %vm187, %v284, 0
    %v293 = vsel %vm187, %v285, 0
    %295 = vmatprep.subr.mxu0 0.0
    %296 = vmatpush1.msra.mxu0 0.0
    %297 = vmatprep.subr.mxu0 0.0
    %298 = vmatpush1.msra.mxu0 0.0
    %299 = vmatprep.subr.mxu0 0.0
    %300 = vmatpush1.msra.mxu0 0.0
    %301 = vmatprep.subr.mxu0 0.0
    %302 = vmatpush1.msra.mxu0 0.0
    %303 = vmatprep.subr.mxu0 0.0
    %304 = vmatpush1.msra.mxu0 0.0
    %305 = vmatprep.subr.mxu0 0.0
    %306 = vmatpush1.msra.mxu0 0.0
    %307 = vmatprep.subr.mxu0 0.0
    %308 = vmatpush1.msra.mxu0 0.0
    %309 = vmatprep.subr.mxu0 0.0
    %310 = vmatpush1.msra.mxu0 0.0
    %311 = vmatprep.subr.mxu0 0.0
    %312 = vmatpush1.msra.mxu0 0.0
    %313 = vmatprep.subr.mxu0 0.0
    %314 = vmatpush1.msra.mxu0 0.0
    %315 = vmatprep.subr.mxu0 0.0
    %316 = vmatpush1.msra.mxu0 0.0
    %317 = vmatprep.subr.mxu0 0.0
    %318 = vmatpush1.msra.mxu0 0.0
    %319 = vmatprep.subr.mxu0 0.0
    %320 = vmatpush1.msra.mxu0 0.0
    %321 = vmatprep.subr.mxu0 0.0
    %322 = vmatpush1.msra.mxu0 0.0
    %323 = vmatprep.subr.mxu0 %v293
    %324 = vmatpush1.msra.mxu0 %v291
    %325 = vmatprep.subr.mxu0 %v283
    %326 = vmatpush1.msra.mxu0 %v282
    %327 = vmatprep.subr.mxu0 0.0
    %328 = vmatpush2.msra.mxu0 0.0
    %329 = vmatprep.subr.mxu0 0.0
    %330 = vmatpush2.msra.mxu0 0.0
    %331 = vmatprep.subr.mxu0 0.0
    %332 = vmatpush2.msra.mxu0 0.0
    %333 = vmatprep.subr.mxu0 0.0
    %334 = vmatpush2.msra.mxu0 0.0
    %335 = vmatprep.subr.mxu0 0.0
    %336 = vmatpush2.msra.mxu0 0.0
    %337 = vmatprep.subr.mxu0 0.0
    %338 = vmatpush2.msra.mxu0 0.0
    %339 = vmatprep.subr.mxu0 0.0
    %340 = vmatpush2.msra.mxu0 0.0
    %341 = vmatprep.subr.mxu0 0.0
    %342 = vmatpush2.msra.mxu0 0.0
    %343 = vmatprep.subr.mxu0 0.0
    %344 = vmatpush2.msra.mxu0 0.0
    %345 = vmatprep.subr.mxu0 0.0
    %346 = vmatpush2.msra.mxu0 0.0
    %347 = vmatprep.subr.mxu0 0.0
    %348 = vmatpush2.msra.mxu0 0.0
    %349 = vmatprep.subr.mxu0 0.0
    %350 = vmatpush2.msra.mxu0 0.0
    %351 = vmatprep.subr.mxu0 0.0
    %352 = vmatpush2.msra.mxu0 0.0
    %353 = vmatprep.subr.mxu0 0.0
    %354 = vmatpush2.msra.mxu0 0.0
    %355 = vmatprep.subr.mxu0 0.0
    %356 = vmatpush2.msra.mxu0 0.0
    %357 = vmatprep.subr.mxu0 0.0
    %358 = vmatpush2.msra.mxu0 0.0
    %359 = vmatprep.mubr.f32.mxu0 0.0
    %360 = vmatmul.mubr.f32.gmra.mxu0 %v289
    %v361 = vpop.f32.mrf.mxu0
    %v362 = vadd.f32 %v259, %v361
    %v363 = vpop.f32.mrf.mxu0
    %v364 = vadd.f32 %v261, %v363
    %365 = vdwg.mxu0
    %v366 = vsel %vm146, %v47, 0
    %v367 = vsel %vm147, %v48, 0
    %v368 = vsel %vm146, %v49, 0
    %v369 = vsel %vm147, %v50, 0
    %v370 = vunpack.c.l.bf16 %v366
    %v371 = vunpack.c.h.bf16 %v366
    %v372 = vunpack.c.l.bf16 %v367
    %v373 = vunpack.c.l.bf16 %v368
    %v374 = vunpack.c.h.bf16 %v368
    %v375 = vunpack.c.l.bf16 %v369
    %382 = vrot.lane.b32.xlu0 %v370, 113
    %v383 = vpop.permute.xlu0 %382
    %384 = vrot.lane.b32.xlu0 %v371, 113
    %v385 = vpop.permute.xlu0 %384
    %386 = vrot.lane.b32.xlu0 %v372, 113
    %v387 = vpop.permute.xlu0 %386
    %388 = vrot.lane.b32.xlu0 %v373, 113
    %v389 = vpop.permute.xlu0 %388
    %390 = vrot.lane.b32.xlu0 %v374, 113
    %v391 = vpop.permute.xlu0 %390
    %392 = vrot.lane.b32.xlu0 %v375, 113
    %v393 = vpop.permute.xlu0 %392
    %v394 = vsel %vm176, %v383, %v385
    %v395 = vsel %vm176, %v385, %v387
    %v396 = vsel %vm176, %v389, %v391
    %v397 = vsel %vm176, %v391, %v393
    %v400 = vsel %vm187, %v396, 0
    %v402 = vsel %vm187, %v397, 0
    %404 = vmatprep.subr.mxu0 0.0
    %405 = vmatpush1.msra.mxu0 0.0
    %406 = vmatprep.subr.mxu0 0.0
    %407 = vmatpush1.msra.mxu0 0.0
    %408 = vmatprep.subr.mxu0 0.0
    %409 = vmatpush1.msra.mxu0 0.0
    %410 = vmatprep.subr.mxu0 0.0
    %411 = vmatpush1.msra.mxu0 0.0
    %412 = vmatprep.subr.mxu0 0.0
    %413 = vmatpush1.msra.mxu0 0.0
    %414 = vmatprep.subr.mxu0 0.0
    %415 = vmatpush1.msra.mxu0 0.0
    %416 = vmatprep.subr.mxu0 0.0
    %417 = vmatpush1.msra.mxu0 0.0
    %418 = vmatprep.subr.mxu0 0.0
    %419 = vmatpush1.msra.mxu0 0.0
    %420 = vmatprep.subr.mxu0 0.0
    %421 = vmatpush1.msra.mxu0 0.0
    %422 = vmatprep.subr.mxu0 0.0
    %423 = vmatpush1.msra.mxu0 0.0
    %424 = vmatprep.subr.mxu0 0.0
    %425 = vmatpush1.msra.mxu0 0.0
    %426 = vmatprep.subr.mxu0 0.0
    %427 = vmatpush1.msra.mxu0 0.0
    %428 = vmatprep.subr.mxu0 0.0
    %429 = vmatpush1.msra.mxu0 0.0
    %430 = vmatprep.subr.mxu0 0.0
    %431 = vmatpush1.msra.mxu0 0.0
    %432 = vmatprep.subr.mxu0 %v402
    %433 = vmatpush1.msra.mxu0 %v400
    %434 = vmatprep.subr.mxu0 %v395
    %435 = vmatpush1.msra.mxu0 %v394
    %436 = vmatprep.subr.mxu0 0.0
    %437 = vmatpush2.msra.mxu0 0.0
    %438 = vmatprep.subr.mxu0 0.0
    %439 = vmatpush2.msra.mxu0 0.0
    %440 = vmatprep.subr.mxu0 0.0
    %441 = vmatpush2.msra.mxu0 0.0
    %442 = vmatprep.subr.mxu0 0.0
    %443 = vmatpush2.msra.mxu0 0.0
    %444 = vmatprep.subr.mxu0 0.0
    %445 = vmatpush2.msra.mxu0 0.0
    %446 = vmatprep.subr.mxu0 0.0
    %447 = vmatpush2.msra.mxu0 0.0
    %448 = vmatprep.subr.mxu0 0.0
    %449 = vmatpush2.msra.mxu0 0.0
    %450 = vmatprep.subr.mxu0 0.0
    %451 = vmatpush2.msra.mxu0 0.0
    %452 = vmatprep.subr.mxu0 0.0
    %453 = vmatpush2.msra.mxu0 0.0
    %454 = vmatprep.subr.mxu0 0.0
    %455 = vmatpush2.msra.mxu0 0.0
    %456 = vmatprep.subr.mxu0 0.0
    %457 = vmatpush2.msra.mxu0 0.0
    %458 = vmatprep.subr.mxu0 0.0
    %459 = vmatpush2.msra.mxu0 0.0
    %460 = vmatprep.subr.mxu0 0.0
    %461 = vmatpush2.msra.mxu0 0.0
    %462 = vmatprep.subr.mxu0 0.0
    %463 = vmatpush2.msra.mxu0 0.0
    %464 = vmatprep.subr.mxu0 0.0
    %465 = vmatpush2.msra.mxu0 0.0
    %466 = vmatprep.subr.mxu0 0.0
    %467 = vmatpush2.msra.mxu0 0.0
    %468 = vmatprep.mubr.f32.mxu0 0.0
    %469 = vmatmul.mubr.f32.gmra.mxu0 %v185
    %v470 = vpop.f32.mrf.mxu0
    %v471 = vadd.f32 0.0, %v470
    %v472 = vpop.f32.mrf.mxu0
    %v473 = vadd.f32 0.0, %v472
    %474 = vdwg.mxu0
    %481 = vrot.lane.b32.xlu0 %v133, 114
    %v482 = vpop.permute.xlu0 %481
    %483 = vrot.lane.b32.xlu0 %v134, 114
    %v484 = vpop.permute.xlu0 %483
    %485 = vrot.lane.b32.xlu0 %v135, 114
    %v486 = vpop.permute.xlu0 %485
    %487 = vrot.lane.b32.xlu0 %v136, 114
    %v488 = vpop.permute.xlu0 %487
    %489 = vrot.lane.b32.xlu0 %v137, 114
    %v490 = vpop.permute.xlu0 %489
    %491 = vrot.lane.b32.xlu0 %v138, 114
    %v492 = vpop.permute.xlu0 %491
    %v493 = vsel %vm281, %v482, %v484
    %v494 = vsel %vm281, %v484, %v486
    %v495 = vsel %vm281, %v488, %v490
    %v496 = vsel %vm281, %v490, %v492
    %v499 = vsel %vm187, %v495, 0
    %v501 = vsel %vm187, %v496, 0
    %503 = vmatprep.subr.mxu0 0.0
    %504 = vmatpush1.msra.mxu0 0.0
    %505 = vmatprep.subr.mxu0 0.0
    %506 = vmatpush1.msra.mxu0 0.0
    %507 = vmatprep.subr.mxu0 0.0
    %508 = vmatpush1.msra.mxu0 0.0
    %509 = vmatprep.subr.mxu0 0.0
    %510 = vmatpush1.msra.mxu0 0.0
    %511 = vmatprep.subr.mxu0 0.0
    %512 = vmatpush1.msra.mxu0 0.0
    %513 = vmatprep.subr.mxu0 0.0
    %514 = vmatpush1.msra.mxu0 0.0
    %515 = vmatprep.subr.mxu0 0.0
    %516 = vmatpush1.msra.mxu0 0.0
    %517 = vmatprep.subr.mxu0 0.0
    %518 = vmatpush1.msra.mxu0 0.0
    %519 = vmatprep.subr.mxu0 0.0
    %520 = vmatpush1.msra.mxu0 0.0
    %521 = vmatprep.subr.mxu0 0.0
    %522 = vmatpush1.msra.mxu0 0.0
    %523 = vmatprep.subr.mxu0 0.0
    %524 = vmatpush1.msra.mxu0 0.0
    %525 = vmatprep.subr.mxu0 0.0
    %526 = vmatpush1.msra.mxu0 0.0
    %527 = vmatprep.subr.mxu0 0.0
    %528 = vmatpush1.msra.mxu0 0.0
    %529 = vmatprep.subr.mxu0 0.0
    %530 = vmatpush1.msra.mxu0 0.0
    %531 = vmatprep.subr.mxu0 %v501
    %532 = vmatpush1.msra.mxu0 %v499
    %533 = vmatprep.subr.mxu0 %v494
    %534 = vmatpush1.msra.mxu0 %v493
    %535 = vmatprep.subr.mxu0 0.0
    %536 = vmatpush2.msra.mxu0 0.0
    %537 = vmatprep.subr.mxu0 0.0
    %538 = vmatpush2.msra.mxu0 0.0
    %539 = vmatprep.subr.mxu0 0.0
    %540 = vmatpush2.msra.mxu0 0.0
    %541 = vmatprep.subr.mxu0 0.0
    %542 = vmatpush2.msra.mxu0 0.0
    %543 = vmatprep.subr.mxu0 0.0
    %544 = vmatpush2.msra.mxu0 0.0
    %545 = vmatprep.subr.mxu0 0.0
    %546 = vmatpush2.msra.mxu0 0.0
    %547 = vmatprep.subr.mxu0 0.0
    %548 = vmatpush2.msra.mxu0 0.0
    %549 = vmatprep.subr.mxu0 0.0
    %550 = vmatpush2.msra.mxu0 0.0
    %551 = vmatprep.subr.mxu0 0.0
    %552 = vmatpush2.msra.mxu0 0.0
    %553 = vmatprep.subr.mxu0 0.0
    %554 = vmatpush2.msra.mxu0 0.0
    %555 = vmatprep.subr.mxu0 0.0
    %556 = vmatpush2.msra.mxu0 0.0
    %557 = vmatprep.subr.mxu0 0.0
    %558 = vmatpush2.msra.mxu0 0.0
    %559 = vmatprep.subr.mxu0 0.0
    %560 = vmatpush2.msra.mxu0 0.0
    %561 = vmatprep.subr.mxu0 0.0
    %562 = vmatpush2.msra.mxu0 0.0
    %563 = vmatprep.subr.mxu0 0.0
    %564 = vmatpush2.msra.mxu0 0.0
    %565 = vmatprep.subr.mxu0 0.0
    %566 = vmatpush2.msra.mxu0 0.0
    %567 = vmatprep.mubr.f32.mxu0 0.0
    %568 = vmatmul.mubr.f32.gmra.mxu0 %v289
    %v569 = vpop.f32.mrf.mxu0
    %v570 = vadd.f32 %v471, %v569
    %v571 = vpop.f32.mrf.mxu0
    %v572 = vadd.f32 %v473, %v571
    %573 = vdwg.mxu0
    %v574 = vunpack.c.l.bf16 %v43
    %v575 = vunpack.c.h.bf16 %v43
    %v576 = vunpack.c.l.bf16 %v44
    %v577 = vunpack.c.l.bf16 %v45
    %v578 = vunpack.c.h.bf16 %v45
    %v579 = vunpack.c.l.bf16 %v46
    %586 = vrot.lane.b32.xlu0 %v574, 112
    %v587 = vpop.permute.xlu0 %586
    %588 = vrot.lane.b32.xlu0 %v575, 112
    %v589 = vpop.permute.xlu0 %588
    %590 = vrot.lane.b32.xlu0 %v576, 112
    %v591 = vpop.permute.xlu0 %590
    %592 = vrot.lane.b32.xlu0 %v577, 112
    %v593 = vpop.permute.xlu0 %592
    %594 = vrot.lane.b32.xlu0 %v578, 112
    %v595 = vpop.permute.xlu0 %594
    %596 = vrot.lane.b32.xlu0 %v579, 112
    %v597 = vpop.permute.xlu0 %596
    %vm598 = vcmask 916480
    %v599 = vsel %vm598, %v587, %v589
    %v600 = vsel %vm598, %v589, %v591
    %v601 = vsel %vm598, %v593, %v595
    %v602 = vsel %vm598, %v595, %v597
    %v606 = vsel %vm183, %v20, 0
    %v608 = vsel %vm187, %v601, 0
    %v610 = vsel %vm187, %v602, 0
    %612 = vmatprep.subr.mxu0 0.0
    %613 = vmatpush1.msra.mxu0 0.0
    %614 = vmatprep.subr.mxu0 0.0
    %615 = vmatpush1.msra.mxu0 0.0
    %616 = vmatprep.subr.mxu0 0.0
    %617 = vmatpush1.msra.mxu0 0.0
    %618 = vmatprep.subr.mxu0 0.0
    %619 = vmatpush1.msra.mxu0 0.0
    %620 = vmatprep.subr.mxu0 0.0
    %621 = vmatpush1.msra.mxu0 0.0
    %622 = vmatprep.subr.mxu0 0.0
    %623 = vmatpush1.msra.mxu0 0.0
    %624 = vmatprep.subr.mxu0 0.0
    %625 = vmatpush1.msra.mxu0 0.0
    %626 = vmatprep.subr.mxu0 0.0
    %627 = vmatpush1.msra.mxu0 0.0
    %628 = vmatprep.subr.mxu0 0.0
    %629 = vmatpush1.msra.mxu0 0.0
    %630 = vmatprep.subr.mxu0 0.0
    %631 = vmatpush1.msra.mxu0 0.0
    %632 = vmatprep.subr.mxu0 0.0
    %633 = vmatpush1.msra.mxu0 0.0
    %634 = vmatprep.subr.mxu0 0.0
    %635 = vmatpush1.msra.mxu0 0.0
    %636 = vmatprep.subr.mxu0 0.0
    %637 = vmatpush1.msra.mxu0 0.0
    %638 = vmatprep.subr.mxu0 0.0
    %639 = vmatpush1.msra.mxu0 0.0
    %640 = vmatprep.subr.mxu0 %v610
    %641 = vmatpush1.msra.mxu0 %v608
    %642 = vmatprep.subr.mxu0 %v600
    %643 = vmatpush1.msra.mxu0 %v599
    %644 = vmatprep.subr.mxu0 0.0
    %645 = vmatpush2.msra.mxu0 0.0
    %646 = vmatprep.subr.mxu0 0.0
    %647 = vmatpush2.msra.mxu0 0.0
    %648 = vmatprep.subr.mxu0 0.0
    %649 = vmatpush2.msra.mxu0 0.0
    %650 = vmatprep.subr.mxu0 0.0
    %651 = vmatpush2.msra.mxu0 0.0
    %652 = vmatprep.subr.mxu0 0.0
    %653 = vmatpush2.msra.mxu0 0.0
    %654 = vmatprep.subr.mxu0 0.0
    %655 = vmatpush2.msra.mxu0 0.0
    %656 = vmatprep.subr.mxu0 0.0
    %657 = vmatpush2.msra.mxu0 0.0
    %658 = vmatprep.subr.mxu0 0.0
    %659 = vmatpush2.msra.mxu0 0.0
    %660 = vmatprep.subr.mxu0 0.0
    %661 = vmatpush2.msra.mxu0 0.0
    %662 = vmatprep.subr.mxu0 0.0
    %663 = vmatpush2.msra.mxu0 0.0
    %664 = vmatprep.subr.mxu0 0.0
    %665 = vmatpush2.msra.mxu0 0.0
    %666 = vmatprep.subr.mxu0 0.0
    %667 = vmatpush2.msra.mxu0 0.0
    %668 = vmatprep.subr.mxu0 0.0
    %669 = vmatpush2.msra.mxu0 0.0
    %670 = vmatprep.subr.mxu0 0.0
    %671 = vmatpush2.msra.mxu0 0.0
    %672 = vmatprep.subr.mxu0 0.0
    %673 = vmatpush2.msra.mxu0 0.0
    %674 = vmatprep.subr.mxu0 0.0
    %675 = vmatpush2.msra.mxu0 0.0
    %676 = vmatprep.mubr.f32.mxu0 0.0
    %677 = vmatmul.mubr.f32.gmra.mxu0 %v606
    %v678 = vpop.f32.mrf.mxu0
    %v679 = vadd.f32 0.0, %v678
    %v680 = vpop.f32.mrf.mxu0
    %v681 = vadd.f32 0.0, %v680
    %682 = vdwg.mxu0
    %v683 = vadd.f32 %v362, %v679
    %v684 = vadd.f32 %v364, %v681
    %v685 = vunpack.c.l.bf16 %v47
    %v686 = vunpack.c.h.bf16 %v47
    %v687 = vunpack.c.l.bf16 %v48
    %v688 = vunpack.c.l.bf16 %v49
    %v689 = vunpack.c.h.bf16 %v49
    %v690 = vunpack.c.l.bf16 %v50
    %697 = vrot.lane.b32.xlu0 %v685, 112
    %v698 = vpop.permute.xlu0 %697
    %699 = vrot.lane.b32.xlu0 %v686, 112
    %v700 = vpop.permute.xlu0 %699
    %701 = vrot.lane.b32.xlu0 %v687, 112
    %v702 = vpop.permute.xlu0 %701
    %703 = vrot.lane.b32.xlu0 %v688, 112
    %v704 = vpop.permute.xlu0 %703
    %705 = vrot.lane.b32.xlu0 %v689, 112
    %v706 = vpop.permute.xlu0 %705
    %707 = vrot.lane.b32.xlu0 %v690, 112
    %v708 = vpop.permute.xlu0 %707
    %v709 = vsel %vm598, %v698, %v700
    %v710 = vsel %vm598, %v700, %v702
    %v711 = vsel %vm598, %v704, %v706
    %v712 = vsel %vm598, %v706, %v708
    %v715 = vsel %vm187, %v711, 0
    %v717 = vsel %vm187, %v712, 0
    %719 = vmatprep.subr.mxu0 0.0
    %720 = vmatpush1.msra.mxu0 0.0
    %721 = vmatprep.subr.mxu0 0.0
    %722 = vmatpush1.msra.mxu0 0.0
    %723 = vmatprep.subr.mxu0 0.0
    %724 = vmatpush1.msra.mxu0 0.0
    %725 = vmatprep.subr.mxu0 0.0
    %726 = vmatpush1.msra.mxu0 0.0
    %727 = vmatprep.subr.mxu0 0.0
    %728 = vmatpush1.msra.mxu0 0.0
    %729 = vmatprep.subr.mxu0 0.0
    %730 = vmatpush1.msra.mxu0 0.0
    %731 = vmatprep.subr.mxu0 0.0
    %732 = vmatpush1.msra.mxu0 0.0
    %733 = vmatprep.subr.mxu0 0.0
    %734 = vmatpush1.msra.mxu0 0.0
    %735 = vmatprep.subr.mxu0 0.0
    %736 = vmatpush1.msra.mxu0 0.0
    %737 = vmatprep.subr.mxu0 0.0
    %738 = vmatpush1.msra.mxu0 0.0
    %739 = vmatprep.subr.mxu0 0.0
    %740 = vmatpush1.msra.mxu0 0.0
    %741 = vmatprep.subr.mxu0 0.0
    %742 = vmatpush1.msra.mxu0 0.0
    %743 = vmatprep.subr.mxu0 0.0
    %744 = vmatpush1.msra.mxu0 0.0
    %745 = vmatprep.subr.mxu0 0.0
    %746 = vmatpush1.msra.mxu0 0.0
    %747 = vmatprep.subr.mxu0 %v717
    %748 = vmatpush1.msra.mxu0 %v715
    %749 = vmatprep.subr.mxu0 %v710
    %750 = vmatpush1.msra.mxu0 %v709
    %751 = vmatprep.subr.mxu0 0.0
    %752 = vmatpush2.msra.mxu0 0.0
    %753 = vmatprep.subr.mxu0 0.0
    %754 = vmatpush2.msra.mxu0 0.0
    %755 = vmatprep.subr.mxu0 0.0
    %756 = vmatpush2.msra.mxu0 0.0
    %757 = vmatprep.subr.mxu0 0.0
    %758 = vmatpush2.msra.mxu0 0.0
    %759 = vmatprep.subr.mxu0 0.0
    %760 = vmatpush2.msra.mxu0 0.0
    %761 = vmatprep.subr.mxu0 0.0
    %762 = vmatpush2.msra.mxu0 0.0
    %763 = vmatprep.subr.mxu0 0.0
    %764 = vmatpush2.msra.mxu0 0.0
    %765 = vmatprep.subr.mxu0 0.0
    %766 = vmatpush2.msra.mxu0 0.0
    %767 = vmatprep.subr.mxu0 0.0
    %768 = vmatpush2.msra.mxu0 0.0
    %769 = vmatprep.subr.mxu0 0.0
    %770 = vmatpush2.msra.mxu0 0.0
    %771 = vmatprep.subr.mxu0 0.0
    %772 = vmatpush2.msra.mxu0 0.0
    %773 = vmatprep.subr.mxu0 0.0
    %774 = vmatpush2.msra.mxu0 0.0
    %775 = vmatprep.subr.mxu0 0.0
    %776 = vmatpush2.msra.mxu0 0.0
    %777 = vmatprep.subr.mxu0 0.0
    %778 = vmatpush2.msra.mxu0 0.0
    %779 = vmatprep.subr.mxu0 0.0
    %780 = vmatpush2.msra.mxu0 0.0
    %781 = vmatprep.subr.mxu0 0.0
    %782 = vmatpush2.msra.mxu0 0.0
    %783 = vmatprep.mubr.f32.mxu0 0.0
    %784 = vmatmul.mubr.f32.gmra.mxu0 %v606
    %v785 = vpop.f32.mrf.mxu0
    %v786 = vadd.f32 0.0, %v785
    %v787 = vpop.f32.mrf.mxu0
    %v788 = vadd.f32 0.0, %v787
    %789 = vdwg.mxu0
    %v790 = vadd.f32 %v570, %v786
    %v791 = vadd.f32 %v572, %v788
    %vm792 = vmpackc.low %vm101, %vm100
    %v793 = vsel %vm792, 65537, 0
    %794 = vrot.lane.b32.xlu0 %v793, 17
    %v795 = vpop.permute.xlu0 %794
    %v796 = vrot.slane %v795, 4
    %vm797 = vcmask 138240
    %v798 = vsel %vm797, %v796, %v795
    %vm799 = vcmp.ne.s16.totalorder %v798, 0
    %vm800 = vcmp.ne.s16.totalorder %v796, 0
    %v801 = vsel %vm799, %v43, 0
    %v802 = vsel %vm800, %v44, 0
    %v803 = vsel %vm799, %v45, 0
    %v804 = vsel %vm800, %v46, 0
    %v805 = vunpack.c.l.bf16 %v801
    %v806 = vunpack.c.h.bf16 %v801
    %v807 = vunpack.c.l.bf16 %v802
    %v808 = vunpack.c.l.bf16 %v803
    %v809 = vunpack.c.h.bf16 %v803
    %v810 = vunpack.c.l.bf16 %v804
    %817 = vrot.lane.b32.xlu0 %v805, 111
    %v818 = vpop.permute.xlu0 %817
    %819 = vrot.lane.b32.xlu0 %v806, 111
    %v820 = vpop.permute.xlu0 %819
    %821 = vrot.lane.b32.xlu0 %v807, 111
    %v822 = vpop.permute.xlu0 %821
    %823 = vrot.lane.b32.xlu0 %v808, 111
    %v824 = vpop.permute.xlu0 %823
    %825 = vrot.lane.b32.xlu0 %v809, 111
    %v826 = vpop.permute.xlu0 %825
    %827 = vrot.lane.b32.xlu0 %v810, 111
    %v828 = vpop.permute.xlu0 %827
    %vm829 = vcmask 908288
    %v830 = vsel %vm829, %v818, %v820
    %v831 = vsel %vm829, %v820, %v822
    %v832 = vsel %vm829, %v824, %v826
    %v833 = vsel %vm829, %v826, %v828
    %v837 = vsel %vm183, %v21, 0
    %v839 = vsel %vm187, %v832, 0
    %v841 = vsel %vm187, %v833, 0
    %843 = vmatprep.subr.mxu0 0.0
    %844 = vmatpush1.msra.mxu0 0.0
    %845 = vmatprep.subr.mxu0 0.0
    %846 = vmatpush1.msra.mxu0 0.0
    %847 = vmatprep.subr.mxu0 0.0
    %848 = vmatpush1.msra.mxu0 0.0
    %849 = vmatprep.subr.mxu0 0.0
    %850 = vmatpush1.msra.mxu0 0.0
    %851 = vmatprep.subr.mxu0 0.0
    %852 = vmatpush1.msra.mxu0 0.0
    %853 = vmatprep.subr.mxu0 0.0
    %854 = vmatpush1.msra.mxu0 0.0
    %855 = vmatprep.subr.mxu0 0.0
    %856 = vmatpush1.msra.mxu0 0.0
    %857 = vmatprep.subr.mxu0 0.0
    %858 = vmatpush1.msra.mxu0 0.0
    %859 = vmatprep.subr.mxu0 0.0
    %860 = vmatpush1.msra.mxu0 0.0
    %861 = vmatprep.subr.mxu0 0.0
    %862 = vmatpush1.msra.mxu0 0.0
    %863 = vmatprep.subr.mxu0 0.0
    %864 = vmatpush1.msra.mxu0 0.0
    %865 = vmatprep.subr.mxu0 0.0
    %866 = vmatpush1.msra.mxu0 0.0
    %867 = vmatprep.subr.mxu0 0.0
    %868 = vmatpush1.msra.mxu0 0.0
    %869 = vmatprep.subr.mxu0 0.0
    %870 = vmatpush1.msra.mxu0 0.0
    %871 = vmatprep.subr.mxu0 %v841
    %872 = vmatpush1.msra.mxu0 %v839
    %873 = vmatprep.subr.mxu0 %v831
    %874 = vmatpush1.msra.mxu0 %v830
    %875 = vmatprep.subr.mxu0 0.0
    %876 = vmatpush2.msra.mxu0 0.0
    %877 = vmatprep.subr.mxu0 0.0
    %878 = vmatpush2.msra.mxu0 0.0
    %879 = vmatprep.subr.mxu0 0.0
    %880 = vmatpush2.msra.mxu0 0.0
    %881 = vmatprep.subr.mxu0 0.0
    %882 = vmatpush2.msra.mxu0 0.0
    %883 = vmatprep.subr.mxu0 0.0
    %884 = vmatpush2.msra.mxu0 0.0
    %885 = vmatprep.subr.mxu0 0.0
    %886 = vmatpush2.msra.mxu0 0.0
    %887 = vmatprep.subr.mxu0 0.0
    %888 = vmatpush2.msra.mxu0 0.0
    %889 = vmatprep.subr.mxu0 0.0
    %890 = vmatpush2.msra.mxu0 0.0
    %891 = vmatprep.subr.mxu0 0.0
    %892 = vmatpush2.msra.mxu0 0.0
    %893 = vmatprep.subr.mxu0 0.0
    %894 = vmatpush2.msra.mxu0 0.0
    %895 = vmatprep.subr.mxu0 0.0
    %896 = vmatpush2.msra.mxu0 0.0
    %897 = vmatprep.subr.mxu0 0.0
    %898 = vmatpush2.msra.mxu0 0.0
    %899 = vmatprep.subr.mxu0 0.0
    %900 = vmatpush2.msra.mxu0 0.0
    %901 = vmatprep.subr.mxu0 0.0
    %902 = vmatpush2.msra.mxu0 0.0
    %903 = vmatprep.subr.mxu0 0.0
    %904 = vmatpush2.msra.mxu0 0.0
    %905 = vmatprep.subr.mxu0 0.0
    %906 = vmatpush2.msra.mxu0 0.0
    %907 = vmatprep.mubr.f32.mxu0 0.0
    %908 = vmatmul.mubr.f32.gmra.mxu0 %v837
    %v909 = vpop.f32.mrf.mxu0
    %v910 = vadd.f32 0.0, %v909
    %v911 = vpop.f32.mrf.mxu0
    %v912 = vadd.f32 0.0, %v911
    %913 = vdwg.mxu0
    %v914 = vadd.f32 %v683, %v910
    %v915 = vadd.f32 %v684, %v912
    %v916 = vsel %vm799, %v47, 0
    %v917 = vsel %vm800, %v48, 0
    %v918 = vsel %vm799, %v49, 0
    %v919 = vsel %vm800, %v50, 0
    %v920 = vunpack.c.l.bf16 %v916
    %v921 = vunpack.c.h.bf16 %v916
    %v922 = vunpack.c.l.bf16 %v917
    %v923 = vunpack.c.l.bf16 %v918
    %v924 = vunpack.c.h.bf16 %v918
    %v925 = vunpack.c.l.bf16 %v919
    %932 = vrot.lane.b32.xlu0 %v920, 111
    %v933 = vpop.permute.xlu0 %932
    %934 = vrot.lane.b32.xlu0 %v921, 111
    %v935 = vpop.permute.xlu0 %934
    %936 = vrot.lane.b32.xlu0 %v922, 111
    %v937 = vpop.permute.xlu0 %936
    %938 = vrot.lane.b32.xlu0 %v923, 111
    %v939 = vpop.permute.xlu0 %938
    %940 = vrot.lane.b32.xlu0 %v924, 111
    %v941 = vpop.permute.xlu0 %940
    %942 = vrot.lane.b32.xlu0 %v925, 111
    %v943 = vpop.permute.xlu0 %942
    %v944 = vsel %vm829, %v933, %v935
    %v945 = vsel %vm829, %v935, %v937
    %v946 = vsel %vm829, %v939, %v941
    %v947 = vsel %vm829, %v941, %v943
    %v950 = vsel %vm187, %v946, 0
    %v952 = vsel %vm187, %v947, 0
    %954 = vmatprep.subr.mxu0 0.0
    %955 = vmatpush1.msra.mxu0 0.0
    %956 = vmatprep.subr.mxu0 0.0
    %957 = vmatpush1.msra.mxu0 0.0
    %958 = vmatprep.subr.mxu0 0.0
    %959 = vmatpush1.msra.mxu0 0.0
    %960 = vmatprep.subr.mxu0 0.0
    %961 = vmatpush1.msra.mxu0 0.0
    %962 = vmatprep.subr.mxu0 0.0
    %963 = vmatpush1.msra.mxu0 0.0
    %964 = vmatprep.subr.mxu0 0.0
    %965 = vmatpush1.msra.mxu0 0.0
    %966 = vmatprep.subr.mxu0 0.0
    %967 = vmatpush1.msra.mxu0 0.0
    %968 = vmatprep.subr.mxu0 0.0
    %969 = vmatpush1.msra.mxu0 0.0
    %970 = vmatprep.subr.mxu0 0.0
    %971 = vmatpush1.msra.mxu0 0.0
    %972 = vmatprep.subr.mxu0 0.0
    %973 = vmatpush1.msra.mxu0 0.0
    %974 = vmatprep.subr.mxu0 0.0
    %975 = vmatpush1.msra.mxu0 0.0
    %976 = vmatprep.subr.mxu0 0.0
    %977 = vmatpush1.msra.mxu0 0.0
    %978 = vmatprep.subr.mxu0 0.0
    %979 = vmatpush1.msra.mxu0 0.0
    %980 = vmatprep.subr.mxu0 0.0
    %981 = vmatpush1.msra.mxu0 0.0
    %982 = vmatprep.subr.mxu0 %v952
    %983 = vmatpush1.msra.mxu0 %v950
    %984 = vmatprep.subr.mxu0 %v945
    %985 = vmatpush1.msra.mxu0 %v944
    %986 = vmatprep.subr.mxu0 0.0
    %987 = vmatpush2.msra.mxu0 0.0
    %988 = vmatprep.subr.mxu0 0.0
    %989 = vmatpush2.msra.mxu0 0.0
    %990 = vmatprep.subr.mxu0 0.0
    %991 = vmatpush2.msra.mxu0 0.0
    %992 = vmatprep.subr.mxu0 0.0
    %993 = vmatpush2.msra.mxu0 0.0
    %994 = vmatprep.subr.mxu0 0.0
    %995 = vmatpush2.msra.mxu0 0.0
    %996 = vmatprep.subr.mxu0 0.0
    %997 = vmatpush2.msra.mxu0 0.0
    %998 = vmatprep.subr.mxu0 0.0
    %999 = vmatpush2.msra.mxu0 0.0
    %1000 = vmatprep.subr.mxu0 0.0
    %1001 = vmatpush2.msra.mxu0 0.0
    %1002 = vmatprep.subr.mxu0 0.0
    %1003 = vmatpush2.msra.mxu0 0.0
    %1004 = vmatprep.subr.mxu0 0.0
    %1005 = vmatpush2.msra.mxu0 0.0
    %1006 = vmatprep.subr.mxu0 0.0
    %1007 = vmatpush2.msra.mxu0 0.0
    %1008 = vmatprep.subr.mxu0 0.0
    %1009 = vmatpush2.msra.mxu0 0.0
    %1010 = vmatprep.subr.mxu0 0.0
    %1011 = vmatpush2.msra.mxu0 0.0
    %1012 = vmatprep.subr.mxu0 0.0
    %1013 = vmatpush2.msra.mxu0 0.0
    %1014 = vmatprep.subr.mxu0 0.0
    %1015 = vmatpush2.msra.mxu0 0.0
    %1016 = vmatprep.subr.mxu0 0.0
    %1017 = vmatpush2.msra.mxu0 0.0
    %1018 = vmatprep.mubr.f32.mxu0 0.0
    %1019 = vmatmul.mubr.f32.gmra.mxu0 %v837
    %v1020 = vpop.f32.mrf.mxu0
    %v1021 = vadd.f32 0.0, %v1020
    %v1022 = vpop.f32.mrf.mxu0
    %v1023 = vadd.f32 0.0, %v1022
    %1024 = vdwg.mxu0
    %v1025 = vadd.f32 %v790, %v1021
    %v1026 = vadd.f32 %v791, %v1023
    %vm1027 = vmpackc.low %vm109, %vm108
    %v1028 = vsel %vm1027, 65537, 0
    %1029 = vrot.lane.b32.xlu0 %v1028, 18
    %v1030 = vpop.permute.xlu0 %1029
    %v1031 = vrot.slane %v1030, 4
    %vm1032 = vcmask 146432
    %v1033 = vsel %vm1032, %v1031, %v1030
    %vm1034 = vcmp.ne.s16.totalorder %v1033, 0
    %vm1035 = vcmp.ne.s16.totalorder %v1031, 0
    %v1036 = vsel %vm1034, %v43, 0
    %v1037 = vsel %vm1035, %v44, 0
    %v1038 = vsel %vm1034, %v45, 0
    %v1039 = vsel %vm1035, %v46, 0
    %v1040 = vunpack.c.l.bf16 %v1036
    %v1041 = vunpack.c.h.bf16 %v1036
    %v1042 = vunpack.c.l.bf16 %v1037
    %v1043 = vunpack.c.l.bf16 %v1038
    %v1044 = vunpack.c.h.bf16 %v1038
    %v1045 = vunpack.c.l.bf16 %v1039
    %1052 = vrot.lane.b32.xlu0 %v1040, 110
    %v1053 = vpop.permute.xlu0 %1052
    %1054 = vrot.lane.b32.xlu0 %v1041, 110
    %v1055 = vpop.permute.xlu0 %1054
    %1056 = vrot.lane.b32.xlu0 %v1042, 110
    %v1057 = vpop.permute.xlu0 %1056
    %1058 = vrot.lane.b32.xlu0 %v1043, 110
    %v1059 = vpop.permute.xlu0 %1058
    %1060 = vrot.lane.b32.xlu0 %v1044, 110
    %v1061 = vpop.permute.xlu0 %1060
    %1062 = vrot.lane.b32.xlu0 %v1045, 110
    %v1063 = vpop.permute.xlu0 %1062
    %vm1064 = vcmask 900096
    %v1065 = vsel %vm1064, %v1053, %v1055
    %v1066 = vsel %vm1064, %v1055, %v1057
    %v1067 = vsel %vm1064, %v1059, %v1061
    %v1068 = vsel %vm1064, %v1061, %v1063
    %v1072 = vsel %vm183, %v22, 0
    %v1074 = vsel %vm187, %v1067, 0
    %v1076 = vsel %vm187, %v1068, 0
    %1078 = vmatprep.subr.mxu0 0.0
    %1079 = vmatpush1.msra.mxu0 0.0
    %1080 = vmatprep.subr.mxu0 0.0
    %1081 = vmatpush1.msra.mxu0 0.0
    %1082 = vmatprep.subr.mxu0 0.0
    %1083 = vmatpush1.msra.mxu0 0.0
    %1084 = vmatprep.subr.mxu0 0.0
    %1085 = vmatpush1.msra.mxu0 0.0
    %1086 = vmatprep.subr.mxu0 0.0
    %1087 = vmatpush1.msra.mxu0 0.0
    %1088 = vmatprep.subr.mxu0 0.0
    %1089 = vmatpush1.msra.mxu0 0.0
    %1090 = vmatprep.subr.mxu0 0.0
    %1091 = vmatpush1.msra.mxu0 0.0
    %1092 = vmatprep.subr.mxu0 0.0
    %1093 = vmatpush1.msra.mxu0 0.0
    %1094 = vmatprep.subr.mxu0 0.0
    %1095 = vmatpush1.msra.mxu0 0.0
    %1096 = vmatprep.subr.mxu0 0.0
    %1097 = vmatpush1.msra.mxu0 0.0
    %1098 = vmatprep.subr.mxu0 0.0
    %1099 = vmatpush1.msra.mxu0 0.0
    %1100 = vmatprep.subr.mxu0 0.0
    %1101 = vmatpush1.msra.mxu0 0.0
    %1102 = vmatprep.subr.mxu0 0.0
    %1103 = vmatpush1.msra.mxu0 0.0
    %1104 = vmatprep.subr.mxu0 0.0
    %1105 = vmatpush1.msra.mxu0 0.0
    %1106 = vmatprep.subr.mxu0 %v1076
    %1107 = vmatpush1.msra.mxu0 %v1074
    %1108 = vmatprep.subr.mxu0 %v1066
    %1109 = vmatpush1.msra.mxu0 %v1065
    %1110 = vmatprep.subr.mxu0 0.0
    %1111 = vmatpush2.msra.mxu0 0.0
    %1112 = vmatprep.subr.mxu0 0.0
    %1113 = vmatpush2.msra.mxu0 0.0
    %1114 = vmatprep.subr.mxu0 0.0
    %1115 = vmatpush2.msra.mxu0 0.0
    %1116 = vmatprep.subr.mxu0 0.0
    %1117 = vmatpush2.msra.mxu0 0.0
    %1118 = vmatprep.subr.mxu0 0.0
    %1119 = vmatpush2.msra.mxu0 0.0
    %1120 = vmatprep.subr.mxu0 0.0
    %1121 = vmatpush2.msra.mxu0 0.0
    %1122 = vmatprep.subr.mxu0 0.0
    %1123 = vmatpush2.msra.mxu0 0.0
    %1124 = vmatprep.subr.mxu0 0.0
    %1125 = vmatpush2.msra.mxu0 0.0
    %1126 = vmatprep.subr.mxu0 0.0
    %1127 = vmatpush2.msra.mxu0 0.0
    %1128 = vmatprep.subr.mxu0 0.0
    %1129 = vmatpush2.msra.mxu0 0.0
    %1130 = vmatprep.subr.mxu0 0.0
    %1131 = vmatpush2.msra.mxu0 0.0
    %1132 = vmatprep.subr.mxu0 0.0
    %1133 = vmatpush2.msra.mxu0 0.0
    %1134 = vmatprep.subr.mxu0 0.0
    %1135 = vmatpush2.msra.mxu0 0.0
    %1136 = vmatprep.subr.mxu0 0.0
    %1137 = vmatpush2.msra.mxu0 0.0
    %1138 = vmatprep.subr.mxu0 0.0
    %1139 = vmatpush2.msra.mxu0 0.0
    %1140 = vmatprep.subr.mxu0 0.0
    %1141 = vmatpush2.msra.mxu0 0.0
    %1142 = vmatprep.mubr.f32.mxu0 0.0
    %1143 = vmatmul.mubr.f32.gmra.mxu0 %v1072
    %v1144 = vpop.f32.mrf.mxu0
    %v1145 = vadd.f32 0.0, %v1144
    %v1146 = vpop.f32.mrf.mxu0
    %v1147 = vadd.f32 0.0, %v1146
    %1148 = vdwg.mxu0
    %v1149 = vadd.f32 %v914, %v1145
    %v1150 = vadd.f32 %v915, %v1147
    %v1151 = vsel %vm1034, %v47, 0
    %v1152 = vsel %vm1035, %v48, 0
    %v1153 = vsel %vm1034, %v49, 0
    %v1154 = vsel %vm1035, %v50, 0
    %v1155 = vunpack.c.l.bf16 %v1151
    %v1156 = vunpack.c.h.bf16 %v1151
    %v1157 = vunpack.c.l.bf16 %v1152
    %v1158 = vunpack.c.l.bf16 %v1153
    %v1159 = vunpack.c.h.bf16 %v1153
    %v1160 = vunpack.c.l.bf16 %v1154
    %1167 = vrot.lane.b32.xlu0 %v1155, 110
    %v1168 = vpop.permute.xlu0 %1167
    %1169 = vrot.lane.b32.xlu0 %v1156, 110
    %v1170 = vpop.permute.xlu0 %1169
    %1171 = vrot.lane.b32.xlu0 %v1157, 110
    %v1172 = vpop.permute.xlu0 %1171
    %1173 = vrot.lane.b32.xlu0 %v1158, 110
    %v1174 = vpop.permute.xlu0 %1173
    %1175 = vrot.lane.b32.xlu0 %v1159, 110
    %v1176 = vpop.permute.xlu0 %1175
    %1177 = vrot.lane.b32.xlu0 %v1160, 110
    %v1178 = vpop.permute.xlu0 %1177
    %v1179 = vsel %vm1064, %v1168, %v1170
    %v1180 = vsel %vm1064, %v1170, %v1172
    %v1181 = vsel %vm1064, %v1174, %v1176
    %v1182 = vsel %vm1064, %v1176, %v1178
    %v1185 = vsel %vm187, %v1181, 0
    %v1187 = vsel %vm187, %v1182, 0
    %1189 = vmatprep.subr.mxu0 0.0
    %1190 = vmatpush1.msra.mxu0 0.0
    %1191 = vmatprep.subr.mxu0 0.0
    %1192 = vmatpush1.msra.mxu0 0.0
    %1193 = vmatprep.subr.mxu0 0.0
    %1194 = vmatpush1.msra.mxu0 0.0
    %1195 = vmatprep.subr.mxu0 0.0
    %1196 = vmatpush1.msra.mxu0 0.0
    %1197 = vmatprep.subr.mxu0 0.0
    %1198 = vmatpush1.msra.mxu0 0.0
    %1199 = vmatprep.subr.mxu0 0.0
    %1200 = vmatpush1.msra.mxu0 0.0
    %1201 = vmatprep.subr.mxu0 0.0
    %1202 = vmatpush1.msra.mxu0 0.0
    %1203 = vmatprep.subr.mxu0 0.0
    %1204 = vmatpush1.msra.mxu0 0.0
    %1205 = vmatprep.subr.mxu0 0.0
    %1206 = vmatpush1.msra.mxu0 0.0
    %1207 = vmatprep.subr.mxu0 0.0
    %1208 = vmatpush1.msra.mxu0 0.0
    %1209 = vmatprep.subr.mxu0 0.0
    %1210 = vmatpush1.msra.mxu0 0.0
    %1211 = vmatprep.subr.mxu0 0.0
    %1212 = vmatpush1.msra.mxu0 0.0
    %1213 = vmatprep.subr.mxu0 0.0
    %1214 = vmatpush1.msra.mxu0 0.0
    %1215 = vmatprep.subr.mxu0 0.0
    %1216 = vmatpush1.msra.mxu0 0.0
    %1217 = vmatprep.subr.mxu0 %v1187
    %1218 = vmatpush1.msra.mxu0 %v1185
    %1219 = vmatprep.subr.mxu0 %v1180
    %1220 = vmatpush1.msra.mxu0 %v1179
    %1221 = vmatprep.subr.mxu0 0.0
    %1222 = vmatpush2.msra.mxu0 0.0
    %1223 = vmatprep.subr.mxu0 0.0
    %1224 = vmatpush2.msra.mxu0 0.0
    %1225 = vmatprep.subr.mxu0 0.0
    %1226 = vmatpush2.msra.mxu0 0.0
    %1227 = vmatprep.subr.mxu0 0.0
    %1228 = vmatpush2.msra.mxu0 0.0
    %1229 = vmatprep.subr.mxu0 0.0
    %1230 = vmatpush2.msra.mxu0 0.0
    %1231 = vmatprep.subr.mxu0 0.0
    %1232 = vmatpush2.msra.mxu0 0.0
    %1233 = vmatprep.subr.mxu0 0.0
    %1234 = vmatpush2.msra.mxu0 0.0
    %1235 = vmatprep.subr.mxu0 0.0
    %1236 = vmatpush2.msra.mxu0 0.0
    %1237 = vmatprep.subr.mxu0 0.0
    %1238 = vmatpush2.msra.mxu0 0.0
    %1239 = vmatprep.subr.mxu0 0.0
    %1240 = vmatpush2.msra.mxu0 0.0
    %1241 = vmatprep.subr.mxu0 0.0
    %1242 = vmatpush2.msra.mxu0 0.0
    %1243 = vmatprep.subr.mxu0 0.0
    %1244 = vmatpush2.msra.mxu0 0.0
    %1245 = vmatprep.subr.mxu0 0.0
    %1246 = vmatpush2.msra.mxu0 0.0
    %1247 = vmatprep.subr.mxu0 0.0
    %1248 = vmatpush2.msra.mxu0 0.0
    %1249 = vmatprep.subr.mxu0 0.0
    %1250 = vmatpush2.msra.mxu0 0.0
    %1251 = vmatprep.subr.mxu0 0.0
    %1252 = vmatpush2.msra.mxu0 0.0
    %1253 = vmatprep.mubr.f32.mxu0 0.0
    %1254 = vmatmul.mubr.f32.gmra.mxu0 %v1072
    %v1255 = vpop.f32.mrf.mxu0
    %v1256 = vadd.f32 0.0, %v1255
    %v1257 = vpop.f32.mrf.mxu0
    %v1258 = vadd.f32 0.0, %v1257
    %1259 = vdwg.mxu0
    %v1260 = vadd.f32 %v1025, %v1256
    %v1261 = vadd.f32 %v1026, %v1258
    %1262 = vrot.lane.b32.xlu0 %v111, 30
    %v1263 = vpop.permute.xlu0 %1262
    %v1264 = vrot.slane %v1263, 4
    %vm1265 = vcmask 244736
    %v1266 = vsel %vm1265, %v1264, %v1263
    %vm1267 = vcmp.ne.s16.totalorder %v1266, 0
    %vm1268 = vcmp.ne.s16.totalorder %v1264, 0
    %v1269 = vsel %vm1267, %v43, 0
    %v1270 = vsel %vm1268, %v44, 0
    %v1271 = vsel %vm1267, %v45, 0
    %v1272 = vsel %vm1268, %v46, 0
    %v1273 = vunpack.c.l.bf16 %v1269
    %v1274 = vunpack.c.h.bf16 %v1269
    %v1275 = vunpack.c.l.bf16 %v1270
    %v1276 = vunpack.c.l.bf16 %v1271
    %v1277 = vunpack.c.h.bf16 %v1271
    %v1278 = vunpack.c.l.bf16 %v1272
    %1285 = vrot.lane.b32.xlu0 %v1273, 98
    %v1286 = vpop.permute.xlu0 %1285
    %1287 = vrot.lane.b32.xlu0 %v1274, 98
    %v1288 = vpop.permute.xlu0 %1287
    %1289 = vrot.lane.b32.xlu0 %v1275, 98
    %v1290 = vpop.permute.xlu0 %1289
    %1291 = vrot.lane.b32.xlu0 %v1276, 98
    %v1292 = vpop.permute.xlu0 %1291
    %1293 = vrot.lane.b32.xlu0 %v1277, 98
    %v1294 = vpop.permute.xlu0 %1293
    %1295 = vrot.lane.b32.xlu0 %v1278, 98
    %v1296 = vpop.permute.xlu0 %1295
    %vm1297 = vcmask 801792
    %v1298 = vsel %vm1297, %v1286, %v1288
    %v1299 = vsel %vm1297, %v1288, %v1290
    %v1300 = vsel %vm1297, %v1292, %v1294
    %v1301 = vsel %vm1297, %v1294, %v1296
    %v1305 = vsel %vm183, %v23, 0
    %v1307 = vsel %vm187, %v1300, 0
    %v1309 = vsel %vm187, %v1301, 0
    %1311 = vmatprep.subr.mxu0 0.0
    %1312 = vmatpush1.msra.mxu0 0.0
    %1313 = vmatprep.subr.mxu0 0.0
    %1314 = vmatpush1.msra.mxu0 0.0
    %1315 = vmatprep.subr.mxu0 0.0
    %1316 = vmatpush1.msra.mxu0 0.0
    %1317 = vmatprep.subr.mxu0 0.0
    %1318 = vmatpush1.msra.mxu0 0.0
    %1319 = vmatprep.subr.mxu0 0.0
    %1320 = vmatpush1.msra.mxu0 0.0
    %1321 = vmatprep.subr.mxu0 0.0
    %1322 = vmatpush1.msra.mxu0 0.0
    %1323 = vmatprep.subr.mxu0 0.0
    %1324 = vmatpush1.msra.mxu0 0.0
    %1325 = vmatprep.subr.mxu0 0.0
    %1326 = vmatpush1.msra.mxu0 0.0
    %1327 = vmatprep.subr.mxu0 0.0
    %1328 = vmatpush1.msra.mxu0 0.0
    %1329 = vmatprep.subr.mxu0 0.0
    %1330 = vmatpush1.msra.mxu0 0.0
    %1331 = vmatprep.subr.mxu0 0.0
    %1332 = vmatpush1.msra.mxu0 0.0
    %1333 = vmatprep.subr.mxu0 0.0
    %1334 = vmatpush1.msra.mxu0 0.0
    %1335 = vmatprep.subr.mxu0 0.0
    %1336 = vmatpush1.msra.mxu0 0.0
    %1337 = vmatprep.subr.mxu0 0.0
    %1338 = vmatpush1.msra.mxu0 0.0
    %1339 = vmatprep.subr.mxu0 %v1309
    %1340 = vmatpush1.msra.mxu0 %v1307
    %1341 = vmatprep.subr.mxu0 %v1299
    %1342 = vmatpush1.msra.mxu0 %v1298
    %1343 = vmatprep.subr.mxu0 0.0
    %1344 = vmatpush2.msra.mxu0 0.0
    %1345 = vmatprep.subr.mxu0 0.0
    %1346 = vmatpush2.msra.mxu0 0.0
    %1347 = vmatprep.subr.mxu0 0.0
    %1348 = vmatpush2.msra.mxu0 0.0
    %1349 = vmatprep.subr.mxu0 0.0
    %1350 = vmatpush2.msra.mxu0 0.0
    %1351 = vmatprep.subr.mxu0 0.0
    %1352 = vmatpush2.msra.mxu0 0.0
    %1353 = vmatprep.subr.mxu0 0.0
    %1354 = vmatpush2.msra.mxu0 0.0
    %1355 = vmatprep.subr.mxu0 0.0
    %1356 = vmatpush2.msra.mxu0 0.0
    %1357 = vmatprep.subr.mxu0 0.0
    %1358 = vmatpush2.msra.mxu0 0.0
    %1359 = vmatprep.subr.mxu0 0.0
    %1360 = vmatpush2.msra.mxu0 0.0
    %1361 = vmatprep.subr.mxu0 0.0
    %1362 = vmatpush2.msra.mxu0 0.0
    %1363 = vmatprep.subr.mxu0 0.0
    %1364 = vmatpush2.msra.mxu0 0.0
    %1365 = vmatprep.subr.mxu0 0.0
    %1366 = vmatpush2.msra.mxu0 0.0
    %1367 = vmatprep.subr.mxu0 0.0
    %1368 = vmatpush2.msra.mxu0 0.0
    %1369 = vmatprep.subr.mxu0 0.0
    %1370 = vmatpush2.msra.mxu0 0.0
    %1371 = vmatprep.subr.mxu0 0.0
    %1372 = vmatpush2.msra.mxu0 0.0
    %1373 = vmatprep.subr.mxu0 0.0
    %1374 = vmatpush2.msra.mxu0 0.0
    %1375 = vmatprep.mubr.f32.mxu0 0.0
    %1376 = vmatmul.mubr.f32.gmra.mxu0 %v1305
    %v1377 = vpop.f32.mrf.mxu0
    %v1378 = vadd.f32 0.0, %v1377
    %v1379 = vpop.f32.mrf.mxu0
    %v1380 = vadd.f32 0.0, %v1379
    %1381 = vdwg.mxu0
    %v1382 = vadd.f32 %v1149, %v1378
    %v1383 = vadd.f32 %v1150, %v1380
    %v1384 = vsel %vm1267, %v47, 0
    %v1385 = vsel %vm1268, %v48, 0
    %v1386 = vsel %vm1267, %v49, 0
    %v1387 = vsel %vm1268, %v50, 0
    %v1388 = vunpack.c.l.bf16 %v1384
    %v1389 = vunpack.c.h.bf16 %v1384
    %v1390 = vunpack.c.l.bf16 %v1385
    %v1391 = vunpack.c.l.bf16 %v1386
    %v1392 = vunpack.c.h.bf16 %v1386
    %v1393 = vunpack.c.l.bf16 %v1387
    %1400 = vrot.lane.b32.xlu0 %v1388, 98
    %v1401 = vpop.permute.xlu0 %1400
    %1402 = vrot.lane.b32.xlu0 %v1389, 98
    %v1403 = vpop.permute.xlu0 %1402
    %1404 = vrot.lane.b32.xlu0 %v1390, 98
    %v1405 = vpop.permute.xlu0 %1404
    %1406 = vrot.lane.b32.xlu0 %v1391, 98
    %v1407 = vpop.permute.xlu0 %1406
    %1408 = vrot.lane.b32.xlu0 %v1392, 98
    %v1409 = vpop.permute.xlu0 %1408
    %1410 = vrot.lane.b32.xlu0 %v1393, 98
    %v1411 = vpop.permute.xlu0 %1410
    %v1412 = vsel %vm1297, %v1401, %v1403
    %v1413 = vsel %vm1297, %v1403, %v1405
    %v1414 = vsel %vm1297, %v1407, %v1409
    %v1415 = vsel %vm1297, %v1409, %v1411
    %v1418 = vsel %vm187, %v1414, 0
    %v1420 = vsel %vm187, %v1415, 0
    %1422 = vmatprep.subr.mxu0 0.0
    %1423 = vmatpush1.msra.mxu0 0.0
    %1424 = vmatprep.subr.mxu0 0.0
    %1425 = vmatpush1.msra.mxu0 0.0
    %1426 = vmatprep.subr.mxu0 0.0
    %1427 = vmatpush1.msra.mxu0 0.0
    %1428 = vmatprep.subr.mxu0 0.0
    %1429 = vmatpush1.msra.mxu0 0.0
    %1430 = vmatprep.subr.mxu0 0.0
    %1431 = vmatpush1.msra.mxu0 0.0
    %1432 = vmatprep.subr.mxu0 0.0
    %1433 = vmatpush1.msra.mxu0 0.0
    %1434 = vmatprep.subr.mxu0 0.0
    %1435 = vmatpush1.msra.mxu0 0.0
    %1436 = vmatprep.subr.mxu0 0.0
    %1437 = vmatpush1.msra.mxu0 0.0
    %1438 = vmatprep.subr.mxu0 0.0
    %1439 = vmatpush1.msra.mxu0 0.0
    %1440 = vmatprep.subr.mxu0 0.0
    %1441 = vmatpush1.msra.mxu0 0.0
    %1442 = vmatprep.subr.mxu0 0.0
    %1443 = vmatpush1.msra.mxu0 0.0
    %1444 = vmatprep.subr.mxu0 0.0
    %1445 = vmatpush1.msra.mxu0 0.0
    %1446 = vmatprep.subr.mxu0 0.0
    %1447 = vmatpush1.msra.mxu0 0.0
    %1448 = vmatprep.subr.mxu0 0.0
    %1449 = vmatpush1.msra.mxu0 0.0
    %1450 = vmatprep.subr.mxu0 %v1420
    %1451 = vmatpush1.msra.mxu0 %v1418
    %1452 = vmatprep.subr.mxu0 %v1413
    %1453 = vmatpush1.msra.mxu0 %v1412
    %1454 = vmatprep.subr.mxu0 0.0
    %1455 = vmatpush2.msra.mxu0 0.0
    %1456 = vmatprep.subr.mxu0 0.0
    %1457 = vmatpush2.msra.mxu0 0.0
    %1458 = vmatprep.subr.mxu0 0.0
    %1459 = vmatpush2.msra.mxu0 0.0
    %1460 = vmatprep.subr.mxu0 0.0
    %1461 = vmatpush2.msra.mxu0 0.0
    %1462 = vmatprep.subr.mxu0 0.0
    %1463 = vmatpush2.msra.mxu0 0.0
    %1464 = vmatprep.subr.mxu0 0.0
    %1465 = vmatpush2.msra.mxu0 0.0
    %1466 = vmatprep.subr.mxu0 0.0
    %1467 = vmatpush2.msra.mxu0 0.0
    %1468 = vmatprep.subr.mxu0 0.0
    %1469 = vmatpush2.msra.mxu0 0.0
    %1470 = vmatprep.subr.mxu0 0.0
    %1471 = vmatpush2.msra.mxu0 0.0
    %1472 = vmatprep.subr.mxu0 0.0
    %1473 = vmatpush2.msra.mxu0 0.0
    %1474 = vmatprep.subr.mxu0 0.0
    %1475 = vmatpush2.msra.mxu0 0.0
    %1476 = vmatprep.subr.mxu0 0.0
    %1477 = vmatpush2.msra.mxu0 0.0
    %1478 = vmatprep.subr.mxu0 0.0
    %1479 = vmatpush2.msra.mxu0 0.0
    %1480 = vmatprep.subr.mxu0 0.0
    %1481 = vmatpush2.msra.mxu0 0.0
    %1482 = vmatprep.subr.mxu0 0.0
    %1483 = vmatpush2.msra.mxu0 0.0
    %1484 = vmatprep.subr.mxu0 0.0
    %1485 = vmatpush2.msra.mxu0 0.0
    %1486 = vmatprep.mubr.f32.mxu0 0.0
    %1487 = vmatmul.mubr.f32.gmra.mxu0 %v1305
    %v1488 = vpop.f32.mrf.mxu0
    %v1489 = vadd.f32 0.0, %v1488
    %v1490 = vpop.f32.mrf.mxu0
    %v1491 = vadd.f32 0.0, %v1490
    %1492 = vdwg.mxu0
    %v1493 = vadd.f32 %v1260, %v1489
    %v1494 = vadd.f32 %v1261, %v1491
    %1495 = vrot.lane.b32.xlu0 %v140, 31
    %v1496 = vpop.permute.xlu0 %1495
    %v1497 = vrot.slane %v1496, 4
    %vm1498 = vcmask 252928
    %v1499 = vsel %vm1498, %v1497, %v1496
    %vm1500 = vcmp.ne.s16.totalorder %v1499, 0
    %vm1501 = vcmp.ne.s16.totalorder %v1497, 0
    %v1502 = vsel %vm1500, %v43, 0
    %v1503 = vsel %vm1501, %v44, 0
    %v1504 = vsel %vm1500, %v45, 0
    %v1505 = vsel %vm1501, %v46, 0
    %v1506 = vunpack.c.l.bf16 %v1502
    %v1507 = vunpack.c.h.bf16 %v1502
    %v1508 = vunpack.c.l.bf16 %v1503
    %v1509 = vunpack.c.l.bf16 %v1504
    %v1510 = vunpack.c.h.bf16 %v1504
    %v1511 = vunpack.c.l.bf16 %v1505
    %1518 = vrot.lane.b32.xlu0 %v1506, 97
    %v1519 = vpop.permute.xlu0 %1518
    %1520 = vrot.lane.b32.xlu0 %v1507, 97
    %v1521 = vpop.permute.xlu0 %1520
    %1522 = vrot.lane.b32.xlu0 %v1508, 97
    %v1523 = vpop.permute.xlu0 %1522
    %1524 = vrot.lane.b32.xlu0 %v1509, 97
    %v1525 = vpop.permute.xlu0 %1524
    %1526 = vrot.lane.b32.xlu0 %v1510, 97
    %v1527 = vpop.permute.xlu0 %1526
    %1528 = vrot.lane.b32.xlu0 %v1511, 97
    %v1529 = vpop.permute.xlu0 %1528
    %vm1530 = vcmask 793600
    %v1531 = vsel %vm1530, %v1519, %v1521
    %v1532 = vsel %vm1530, %v1521, %v1523
    %v1533 = vsel %vm1530, %v1525, %v1527
    %v1534 = vsel %vm1530, %v1527, %v1529
    %v1538 = vsel %vm183, %v24, 0
    %v1540 = vsel %vm187, %v1533, 0
    %v1542 = vsel %vm187, %v1534, 0
    %1544 = vmatprep.subr.mxu0 0.0
    %1545 = vmatpush1.msra.mxu0 0.0
    %1546 = vmatprep.subr.mxu0 0.0
    %1547 = vmatpush1.msra.mxu0 0.0
    %1548 = vmatprep.subr.mxu0 0.0
    %1549 = vmatpush1.msra.mxu0 0.0
    %1550 = vmatprep.subr.mxu0 0.0
    %1551 = vmatpush1.msra.mxu0 0.0
    %1552 = vmatprep.subr.mxu0 0.0
    %1553 = vmatpush1.msra.mxu0 0.0
    %1554 = vmatprep.subr.mxu0 0.0
    %1555 = vmatpush1.msra.mxu0 0.0
    %1556 = vmatprep.subr.mxu0 0.0
    %1557 = vmatpush1.msra.mxu0 0.0
    %1558 = vmatprep.subr.mxu0 0.0
    %1559 = vmatpush1.msra.mxu0 0.0
    %1560 = vmatprep.subr.mxu0 0.0
    %1561 = vmatpush1.msra.mxu0 0.0
    %1562 = vmatprep.subr.mxu0 0.0
    %1563 = vmatpush1.msra.mxu0 0.0
    %1564 = vmatprep.subr.mxu0 0.0
    %1565 = vmatpush1.msra.mxu0 0.0
    %1566 = vmatprep.subr.mxu0 0.0
    %1567 = vmatpush1.msra.mxu0 0.0
    %1568 = vmatprep.subr.mxu0 0.0
    %1569 = vmatpush1.msra.mxu0 0.0
    %1570 = vmatprep.subr.mxu0 0.0
    %1571 = vmatpush1.msra.mxu0 0.0
    %1572 = vmatprep.subr.mxu0 %v1542
    %1573 = vmatpush1.msra.mxu0 %v1540
    %1574 = vmatprep.subr.mxu0 %v1532
    %1575 = vmatpush1.msra.mxu0 %v1531
    %1576 = vmatprep.subr.mxu0 0.0
    %1577 = vmatpush2.msra.mxu0 0.0
    %1578 = vmatprep.subr.mxu0 0.0
    %1579 = vmatpush2.msra.mxu0 0.0
    %1580 = vmatprep.subr.mxu0 0.0
    %1581 = vmatpush2.msra.mxu0 0.0
    %1582 = vmatprep.subr.mxu0 0.0
    %1583 = vmatpush2.msra.mxu0 0.0
    %1584 = vmatprep.subr.mxu0 0.0
    %1585 = vmatpush2.msra.mxu0 0.0
    %1586 = vmatprep.subr.mxu0 0.0
    %1587 = vmatpush2.msra.mxu0 0.0
    %1588 = vmatprep.subr.mxu0 0.0
    %1589 = vmatpush2.msra.mxu0 0.0
    %1590 = vmatprep.subr.mxu0 0.0
    %1591 = vmatpush2.msra.mxu0 0.0
    %1592 = vmatprep.subr.mxu0 0.0
    %1593 = vmatpush2.msra.mxu0 0.0
    %1594 = vmatprep.subr.mxu0 0.0
    %1595 = vmatpush2.msra.mxu0 0.0
    %1596 = vmatprep.subr.mxu0 0.0
    %1597 = vmatpush2.msra.mxu0 0.0
    %1598 = vmatprep.subr.mxu0 0.0
    %1599 = vmatpush2.msra.mxu0 0.0
    %1600 = vmatprep.subr.mxu0 0.0
    %1601 = vmatpush2.msra.mxu0 0.0
    %1602 = vmatprep.subr.mxu0 0.0
    %1603 = vmatpush2.msra.mxu0 0.0
    %1604 = vmatprep.subr.mxu0 0.0
    %1605 = vmatpush2.msra.mxu0 0.0
    %1606 = vmatprep.subr.mxu0 0.0
    %1607 = vmatpush2.msra.mxu0 0.0
    %1608 = vmatprep.mubr.f32.mxu0 0.0
    %1609 = vmatmul.mubr.f32.gmra.mxu0 %v1538
    %v1610 = vpop.f32.mrf.mxu0
    %v1611 = vadd.f32 0.0, %v1610
    %v1612 = vpop.f32.mrf.mxu0
    %v1613 = vadd.f32 0.0, %v1612
    %1614 = vdwg.mxu0
    %v1615 = vadd.f32 %v1382, %v1611
    %v1616 = vadd.f32 %v1383, %v1613
    %v1617 = vsel %vm1500, %v47, 0
    %v1618 = vsel %vm1501, %v48, 0
    %v1619 = vsel %vm1500, %v49, 0
    %v1620 = vsel %vm1501, %v50, 0
    %v1621 = vunpack.c.l.bf16 %v1617
    %v1622 = vunpack.c.h.bf16 %v1617
    %v1623 = vunpack.c.l.bf16 %v1618
    %v1624 = vunpack.c.l.bf16 %v1619
    %v1625 = vunpack.c.h.bf16 %v1619
    %v1626 = vunpack.c.l.bf16 %v1620
    %1633 = vrot.lane.b32.xlu0 %v1621, 97
    %v1634 = vpop.permute.xlu0 %1633
    %1635 = vrot.lane.b32.xlu0 %v1622, 97
    %v1636 = vpop.permute.xlu0 %1635
    %1637 = vrot.lane.b32.xlu0 %v1623, 97
    %v1638 = vpop.permute.xlu0 %1637
    %1639 = vrot.lane.b32.xlu0 %v1624, 97
    %v1640 = vpop.permute.xlu0 %1639
    %1641 = vrot.lane.b32.xlu0 %v1625, 97
    %v1642 = vpop.permute.xlu0 %1641
    %1643 = vrot.lane.b32.xlu0 %v1626, 97
    %v1644 = vpop.permute.xlu0 %1643
    %v1645 = vsel %vm1530, %v1634, %v1636
    %v1646 = vsel %vm1530, %v1636, %v1638
    %v1647 = vsel %vm1530, %v1640, %v1642
    %v1648 = vsel %vm1530, %v1642, %v1644
    %v1651 = vsel %vm187, %v1647, 0
    %v1653 = vsel %vm187, %v1648, 0
    %1655 = vmatprep.subr.mxu0 0.0
    %1656 = vmatpush1.msra.mxu0 0.0
    %1657 = vmatprep.subr.mxu0 0.0
    %1658 = vmatpush1.msra.mxu0 0.0
    %1659 = vmatprep.subr.mxu0 0.0
    %1660 = vmatpush1.msra.mxu0 0.0
    %1661 = vmatprep.subr.mxu0 0.0
    %1662 = vmatpush1.msra.mxu0 0.0
    %1663 = vmatprep.subr.mxu0 0.0
    %1664 = vmatpush1.msra.mxu0 0.0
    %1665 = vmatprep.subr.mxu0 0.0
    %1666 = vmatpush1.msra.mxu0 0.0
    %1667 = vmatprep.subr.mxu0 0.0
    %1668 = vmatpush1.msra.mxu0 0.0
    %1669 = vmatprep.subr.mxu0 0.0
    %1670 = vmatpush1.msra.mxu0 0.0
    %1671 = vmatprep.subr.mxu0 0.0
    %1672 = vmatpush1.msra.mxu0 0.0
    %1673 = vmatprep.subr.mxu0 0.0
    %1674 = vmatpush1.msra.mxu0 0.0
    %1675 = vmatprep.subr.mxu0 0.0
    %1676 = vmatpush1.msra.mxu0 0.0
    %1677 = vmatprep.subr.mxu0 0.0
    %1678 = vmatpush1.msra.mxu0 0.0
    %1679 = vmatprep.subr.mxu0 0.0
    %1680 = vmatpush1.msra.mxu0 0.0
    %1681 = vmatprep.subr.mxu0 0.0
    %1682 = vmatpush1.msra.mxu0 0.0
    %1683 = vmatprep.subr.mxu0 %v1653
    %1684 = vmatpush1.msra.mxu0 %v1651
    %1685 = vmatprep.subr.mxu0 %v1646
    %1686 = vmatpush1.msra.mxu0 %v1645
    %1687 = vmatprep.subr.mxu0 0.0
    %1688 = vmatpush2.msra.mxu0 0.0
    %1689 = vmatprep.subr.mxu0 0.0
    %1690 = vmatpush2.msra.mxu0 0.0
    %1691 = vmatprep.subr.mxu0 0.0
    %1692 = vmatpush2.msra.mxu0 0.0
    %1693 = vmatprep.subr.mxu0 0.0
    %1694 = vmatpush2.msra.mxu0 0.0
    %1695 = vmatprep.subr.mxu0 0.0
    %1696 = vmatpush2.msra.mxu0 0.0
    %1697 = vmatprep.subr.mxu0 0.0
    %1698 = vmatpush2.msra.mxu0 0.0
    %1699 = vmatprep.subr.mxu0 0.0
    %1700 = vmatpush2.msra.mxu0 0.0
    %1701 = vmatprep.subr.mxu0 0.0
    %1702 = vmatpush2.msra.mxu0 0.0
    %1703 = vmatprep.subr.mxu0 0.0
    %1704 = vmatpush2.msra.mxu0 0.0
    %1705 = vmatprep.subr.mxu0 0.0
    %1706 = vmatpush2.msra.mxu0 0.0
    %1707 = vmatprep.subr.mxu0 0.0
    %1708 = vmatpush2.msra.mxu0 0.0
    %1709 = vmatprep.subr.mxu0 0.0
    %1710 = vmatpush2.msra.mxu0 0.0
    %1711 = vmatprep.subr.mxu0 0.0
    %1712 = vmatpush2.msra.mxu0 0.0
    %1713 = vmatprep.subr.mxu0 0.0
    %1714 = vmatpush2.msra.mxu0 0.0
    %1715 = vmatprep.subr.mxu0 0.0
    %1716 = vmatpush2.msra.mxu0 0.0
    %1717 = vmatprep.subr.mxu0 0.0
    %1718 = vmatpush2.msra.mxu0 0.0
    %1719 = vmatprep.mubr.f32.mxu0 0.0
    %1720 = vmatmul.mubr.f32.gmra.mxu0 %v1538
    %v1721 = vpop.f32.mrf.mxu0
    %v1722 = vadd.f32 0.0, %v1721
    %v1723 = vpop.f32.mrf.mxu0
    %v1724 = vadd.f32 0.0, %v1723
    %1725 = vdwg.mxu0
    %v1726 = vadd.f32 %v1493, %v1722
    %v1727 = vadd.f32 %v1494, %v1724
    %1728 = vrot.lane.b32.xlu0 %v574, 96
    %v1729 = vpop.permute.xlu0 %1728
    %1730 = vrot.lane.b32.xlu0 %v575, 96
    %v1731 = vpop.permute.xlu0 %1730
    %1732 = vrot.lane.b32.xlu0 %v576, 96
    %v1733 = vpop.permute.xlu0 %1732
    %1734 = vrot.lane.b32.xlu0 %v577, 96
    %v1735 = vpop.permute.xlu0 %1734
    %1736 = vrot.lane.b32.xlu0 %v578, 96
    %v1737 = vpop.permute.xlu0 %1736
    %1738 = vrot.lane.b32.xlu0 %v579, 96
    %v1739 = vpop.permute.xlu0 %1738
    %vm1740 = vcmask 785408
    %v1741 = vsel %vm1740, %v1729, %v1731
    %v1742 = vsel %vm1740, %v1731, %v1733
    %v1743 = vsel %vm1740, %v1735, %v1737
    %v1744 = vsel %vm1740, %v1737, %v1739
    %v1748 = vsel %vm183, %v25, 0
    %v1750 = vsel %vm187, %v1743, 0
    %v1752 = vsel %vm187, %v1744, 0
    %1754 = vmatprep.subr.mxu0 0.0
    %1755 = vmatpush1.msra.mxu0 0.0
    %1756 = vmatprep.subr.mxu0 0.0
    %1757 = vmatpush1.msra.mxu0 0.0
    %1758 = vmatprep.subr.mxu0 0.0
    %1759 = vmatpush1.msra.mxu0 0.0
    %1760 = vmatprep.subr.mxu0 0.0
    %1761 = vmatpush1.msra.mxu0 0.0
    %1762 = vmatprep.subr.mxu0 0.0
    %1763 = vmatpush1.msra.mxu0 0.0
    %1764 = vmatprep.subr.mxu0 0.0
    %1765 = vmatpush1.msra.mxu0 0.0
    %1766 = vmatprep.subr.mxu0 0.0
    %1767 = vmatpush1.msra.mxu0 0.0
    %1768 = vmatprep.subr.mxu0 0.0
    %1769 = vmatpush1.msra.mxu0 0.0
    %1770 = vmatprep.subr.mxu0 0.0
    %1771 = vmatpush1.msra.mxu0 0.0
    %1772 = vmatprep.subr.mxu0 0.0
    %1773 = vmatpush1.msra.mxu0 0.0
    %1774 = vmatprep.subr.mxu0 0.0
    %1775 = vmatpush1.msra.mxu0 0.0
    %1776 = vmatprep.subr.mxu0 0.0
    %1777 = vmatpush1.msra.mxu0 0.0
    %1778 = vmatprep.subr.mxu0 0.0
    %1779 = vmatpush1.msra.mxu0 0.0
    %1780 = vmatprep.subr.mxu0 0.0
    %1781 = vmatpush1.msra.mxu0 0.0
    %1782 = vmatprep.subr.mxu0 %v1752
    %1783 = vmatpush1.msra.mxu0 %v1750
    %1784 = vmatprep.subr.mxu0 %v1742
    %1785 = vmatpush1.msra.mxu0 %v1741
    %1786 = vmatprep.subr.mxu0 0.0
    %1787 = vmatpush2.msra.mxu0 0.0
    %1788 = vmatprep.subr.mxu0 0.0
    %1789 = vmatpush2.msra.mxu0 0.0
    %1790 = vmatprep.subr.mxu0 0.0
    %1791 = vmatpush2.msra.mxu0 0.0
    %1792 = vmatprep.subr.mxu0 0.0
    %1793 = vmatpush2.msra.mxu0 0.0
    %1794 = vmatprep.subr.mxu0 0.0
    %1795 = vmatpush2.msra.mxu0 0.0
    %1796 = vmatprep.subr.mxu0 0.0
    %1797 = vmatpush2.msra.mxu0 0.0
    %1798 = vmatprep.subr.mxu0 0.0
    %1799 = vmatpush2.msra.mxu0 0.0
    %1800 = vmatprep.subr.mxu0 0.0
    %1801 = vmatpush2.msra.mxu0 0.0
    %1802 = vmatprep.subr.mxu0 0.0
    %1803 = vmatpush2.msra.mxu0 0.0
    %1804 = vmatprep.subr.mxu0 0.0
    %1805 = vmatpush2.msra.mxu0 0.0
    %1806 = vmatprep.subr.mxu0 0.0
    %1807 = vmatpush2.msra.mxu0 0.0
    %1808 = vmatprep.subr.mxu0 0.0
    %1809 = vmatpush2.msra.mxu0 0.0
    %1810 = vmatprep.subr.mxu0 0.0
    %1811 = vmatpush2.msra.mxu0 0.0
    %1812 = vmatprep.subr.mxu0 0.0
    %1813 = vmatpush2.msra.mxu0 0.0
    %1814 = vmatprep.subr.mxu0 0.0
    %1815 = vmatpush2.msra.mxu0 0.0
    %1816 = vmatprep.subr.mxu0 0.0
    %1817 = vmatpush2.msra.mxu0 0.0
    %1818 = vmatprep.mubr.f32.mxu0 0.0
    %1819 = vmatmul.mubr.f32.gmra.mxu0 %v1748
    %v1820 = vpop.f32.mrf.mxu0
    %v1821 = vadd.f32 0.0, %v1820
    %v1822 = vpop.f32.mrf.mxu0
    %v1823 = vadd.f32 0.0, %v1822
    %1824 = vdwg.mxu0
    %v1825 = vadd.f32 %v1615, %v1821
    %v1826 = vadd.f32 %v1616, %v1823
    %1827 = vrot.lane.b32.xlu0 %v685, 96
    %v1828 = vpop.permute.xlu0 %1827
    %1829 = vrot.lane.b32.xlu0 %v686, 96
    %v1830 = vpop.permute.xlu0 %1829
    %1831 = vrot.lane.b32.xlu0 %v687, 96
    %v1832 = vpop.permute.xlu0 %1831
    %1833 = vrot.lane.b32.xlu0 %v688, 96
    %v1834 = vpop.permute.xlu0 %1833
    %1835 = vrot.lane.b32.xlu0 %v689, 96
    %v1836 = vpop.permute.xlu0 %1835
    %1837 = vrot.lane.b32.xlu0 %v690, 96
    %v1838 = vpop.permute.xlu0 %1837
    %v1839 = vsel %vm1740, %v1828, %v1830
    %v1840 = vsel %vm1740, %v1830, %v1832
    %v1841 = vsel %vm1740, %v1834, %v1836
    %v1842 = vsel %vm1740, %v1836, %v1838
    %v1845 = vsel %vm187, %v1841, 0
    %v1847 = vsel %vm187, %v1842, 0
    %1849 = vmatprep.subr.mxu0 0.0
    %1850 = vmatpush1.msra.mxu0 0.0
    %1851 = vmatprep.subr.mxu0 0.0
    %1852 = vmatpush1.msra.mxu0 0.0
    %1853 = vmatprep.subr.mxu0 0.0
    %1854 = vmatpush1.msra.mxu0 0.0
    %1855 = vmatprep.subr.mxu0 0.0
    %1856 = vmatpush1.msra.mxu0 0.0
    %1857 = vmatprep.subr.mxu0 0.0
    %1858 = vmatpush1.msra.mxu0 0.0
    %1859 = vmatprep.subr.mxu0 0.0
    %1860 = vmatpush1.msra.mxu0 0.0
    %1861 = vmatprep.subr.mxu0 0.0
    %1862 = vmatpush1.msra.mxu0 0.0
    %1863 = vmatprep.subr.mxu0 0.0
    %1864 = vmatpush1.msra.mxu0 0.0
    %1865 = vmatprep.subr.mxu0 0.0
    %1866 = vmatpush1.msra.mxu0 0.0
    %1867 = vmatprep.subr.mxu0 0.0
    %1868 = vmatpush1.msra.mxu0 0.0
    %1869 = vmatprep.subr.mxu0 0.0
    %1870 = vmatpush1.msra.mxu0 0.0
    %1871 = vmatprep.subr.mxu0 0.0
    %1872 = vmatpush1.msra.mxu0 0.0
    %1873 = vmatprep.subr.mxu0 0.0
    %1874 = vmatpush1.msra.mxu0 0.0
    %1875 = vmatprep.subr.mxu0 0.0
    %1876 = vmatpush1.msra.mxu0 0.0
    %1877 = vmatprep.subr.mxu0 %v1847
    %1878 = vmatpush1.msra.mxu0 %v1845
    %1879 = vmatprep.subr.mxu0 %v1840
    %1880 = vmatpush1.msra.mxu0 %v1839
    %1881 = vmatprep.subr.mxu0 0.0
    %1882 = vmatpush2.msra.mxu0 0.0
    %1883 = vmatprep.subr.mxu0 0.0
    %1884 = vmatpush2.msra.mxu0 0.0
    %1885 = vmatprep.subr.mxu0 0.0
    %1886 = vmatpush2.msra.mxu0 0.0
    %1887 = vmatprep.subr.mxu0 0.0
    %1888 = vmatpush2.msra.mxu0 0.0
    %1889 = vmatprep.subr.mxu0 0.0
    %1890 = vmatpush2.msra.mxu0 0.0
    %1891 = vmatprep.subr.mxu0 0.0
    %1892 = vmatpush2.msra.mxu0 0.0
    %1893 = vmatprep.subr.mxu0 0.0
    %1894 = vmatpush2.msra.mxu0 0.0
    %1895 = vmatprep.subr.mxu0 0.0
    %1896 = vmatpush2.msra.mxu0 0.0
    %1897 = vmatprep.subr.mxu0 0.0
    %1898 = vmatpush2.msra.mxu0 0.0
    %1899 = vmatprep.subr.mxu0 0.0
    %1900 = vmatpush2.msra.mxu0 0.0
    %1901 = vmatprep.subr.mxu0 0.0
    %1902 = vmatpush2.msra.mxu0 0.0
    %1903 = vmatprep.subr.mxu0 0.0
    %1904 = vmatpush2.msra.mxu0 0.0
    %1905 = vmatprep.subr.mxu0 0.0
    %1906 = vmatpush2.msra.mxu0 0.0
    %1907 = vmatprep.subr.mxu0 0.0
    %1908 = vmatpush2.msra.mxu0 0.0
    %1909 = vmatprep.subr.mxu0 0.0
    %1910 = vmatpush2.msra.mxu0 0.0
    %1911 = vmatprep.subr.mxu0 0.0
    %1912 = vmatpush2.msra.mxu0 0.0
    %1913 = vmatprep.mubr.f32.mxu0 0.0
    %1914 = vmatmul.mubr.f32.gmra.mxu0 %v1748
    %v1915 = vpop.f32.mrf.mxu0
    %v1916 = vadd.f32 0.0, %v1915
    %v1917 = vpop.f32.mrf.mxu0
    %v1918 = vadd.f32 0.0, %v1917
    %1919 = vdwg.mxu0
    %v1920 = vadd.f32 %v1726, %v1916
    %v1921 = vadd.f32 %v1727, %v1918
    %1922 = vrot.lane.b32.xlu0 %v793, 33
    %v1923 = vpop.permute.xlu0 %1922
    %v1924 = vrot.slane %v1923, 4
    %vm1925 = vcmask 269312
    %v1926 = vsel %vm1925, %v1924, %v1923
    %vm1927 = vcmp.ne.s16.totalorder %v1926, 0
    %vm1928 = vcmp.ne.s16.totalorder %v1924, 0
    %v1929 = vsel %vm1927, %v43, 0
    %v1930 = vsel %vm1928, %v44, 0
    %v1931 = vsel %vm1927, %v45, 0
    %v1932 = vsel %vm1928, %v46, 0
    %v1933 = vunpack.c.l.bf16 %v1929
    %v1934 = vunpack.c.h.bf16 %v1929
    %v1935 = vunpack.c.l.bf16 %v1930
    %v1936 = vunpack.c.l.bf16 %v1931
    %v1937 = vunpack.c.h.bf16 %v1931
    %v1938 = vunpack.c.l.bf16 %v1932
    %1945 = vrot.lane.b32.xlu0 %v1933, 95
    %v1946 = vpop.permute.xlu0 %1945
    %1947 = vrot.lane.b32.xlu0 %v1934, 95
    %v1948 = vpop.permute.xlu0 %1947
    %1949 = vrot.lane.b32.xlu0 %v1935, 95
    %v1950 = vpop.permute.xlu0 %1949
    %1951 = vrot.lane.b32.xlu0 %v1936, 95
    %v1952 = vpop.permute.xlu0 %1951
    %1953 = vrot.lane.b32.xlu0 %v1937, 95
    %v1954 = vpop.permute.xlu0 %1953
    %1955 = vrot.lane.b32.xlu0 %v1938, 95
    %v1956 = vpop.permute.xlu0 %1955
    %vm1957 = vcmask 777216
    %v1958 = vsel %vm1957, %v1946, %v1948
    %v1959 = vsel %vm1957, %v1948, %v1950
    %v1960 = vsel %vm1957, %v1952, %v1954
    %v1961 = vsel %vm1957, %v1954, %v1956
    %v1965 = vsel %vm183, %v26, 0
    %v1967 = vsel %vm187, %v1960, 0
    %v1969 = vsel %vm187, %v1961, 0
    %1971 = vmatprep.subr.mxu0 0.0
    %1972 = vmatpush1.msra.mxu0 0.0
    %1973 = vmatprep.subr.mxu0 0.0
    %1974 = vmatpush1.msra.mxu0 0.0
    %1975 = vmatprep.subr.mxu0 0.0
    %1976 = vmatpush1.msra.mxu0 0.0
    %1977 = vmatprep.subr.mxu0 0.0
    %1978 = vmatpush1.msra.mxu0 0.0
    %1979 = vmatprep.subr.mxu0 0.0
    %1980 = vmatpush1.msra.mxu0 0.0
    %1981 = vmatprep.subr.mxu0 0.0
    %1982 = vmatpush1.msra.mxu0 0.0
    %1983 = vmatprep.subr.mxu0 0.0
    %1984 = vmatpush1.msra.mxu0 0.0
    %1985 = vmatprep.subr.mxu0 0.0
    %1986 = vmatpush1.msra.mxu0 0.0
    %1987 = vmatprep.subr.mxu0 0.0
    %1988 = vmatpush1.msra.mxu0 0.0
    %1989 = vmatprep.subr.mxu0 0.0
    %1990 = vmatpush1.msra.mxu0 0.0
    %1991 = vmatprep.subr.mxu0 0.0
    %1992 = vmatpush1.msra.mxu0 0.0
    %1993 = vmatprep.subr.mxu0 0.0
    %1994 = vmatpush1.msra.mxu0 0.0
    %1995 = vmatprep.subr.mxu0 0.0
    %1996 = vmatpush1.msra.mxu0 0.0
    %1997 = vmatprep.subr.mxu0 0.0
    %1998 = vmatpush1.msra.mxu0 0.0
    %1999 = vmatprep.subr.mxu0 %v1969
    %2000 = vmatpush1.msra.mxu0 %v1967
    %2001 = vmatprep.subr.mxu0 %v1959
    %2002 = vmatpush1.msra.mxu0 %v1958
    %2003 = vmatprep.subr.mxu0 0.0
    %2004 = vmatpush2.msra.mxu0 0.0
    %2005 = vmatprep.subr.mxu0 0.0
    %2006 = vmatpush2.msra.mxu0 0.0
    %2007 = vmatprep.subr.mxu0 0.0
    %2008 = vmatpush2.msra.mxu0 0.0
    %2009 = vmatprep.subr.mxu0 0.0
    %2010 = vmatpush2.msra.mxu0 0.0
    %2011 = vmatprep.subr.mxu0 0.0
    %2012 = vmatpush2.msra.mxu0 0.0
    %2013 = vmatprep.subr.mxu0 0.0
    %2014 = vmatpush2.msra.mxu0 0.0
    %2015 = vmatprep.subr.mxu0 0.0
    %2016 = vmatpush2.msra.mxu0 0.0
    %2017 = vmatprep.subr.mxu0 0.0
    %2018 = vmatpush2.msra.mxu0 0.0
    %2019 = vmatprep.subr.mxu0 0.0
    %2020 = vmatpush2.msra.mxu0 0.0
    %2021 = vmatprep.subr.mxu0 0.0
    %2022 = vmatpush2.msra.mxu0 0.0
    %2023 = vmatprep.subr.mxu0 0.0
    %2024 = vmatpush2.msra.mxu0 0.0
    %2025 = vmatprep.subr.mxu0 0.0
    %2026 = vmatpush2.msra.mxu0 0.0
    %2027 = vmatprep.subr.mxu0 0.0
    %2028 = vmatpush2.msra.mxu0 0.0
    %2029 = vmatprep.subr.mxu0 0.0
    %2030 = vmatpush2.msra.mxu0 0.0
    %2031 = vmatprep.subr.mxu0 0.0
    %2032 = vmatpush2.msra.mxu0 0.0
    %2033 = vmatprep.subr.mxu0 0.0
    %2034 = vmatpush2.msra.mxu0 0.0
    %2035 = vmatprep.mubr.f32.mxu0 0.0
    %2036 = vmatmul.mubr.f32.gmra.mxu0 %v1965
    %v2037 = vpop.f32.mrf.mxu0
    %v2038 = vadd.f32 0.0, %v2037
    %v2039 = vpop.f32.mrf.mxu0
    %v2040 = vadd.f32 0.0, %v2039
    %2041 = vdwg.mxu0
    %v2042 = vadd.f32 %v1825, %v2038
    %v2043 = vadd.f32 %v1826, %v2040
    %v2044 = vsel %vm1927, %v47, 0
    %v2045 = vsel %vm1928, %v48, 0
    %v2046 = vsel %vm1927, %v49, 0
    %v2047 = vsel %vm1928, %v50, 0
    %v2048 = vunpack.c.l.bf16 %v2044
    %v2049 = vunpack.c.h.bf16 %v2044
    %v2050 = vunpack.c.l.bf16 %v2045
    %v2051 = vunpack.c.l.bf16 %v2046
    %v2052 = vunpack.c.h.bf16 %v2046
    %v2053 = vunpack.c.l.bf16 %v2047
    %2060 = vrot.lane.b32.xlu0 %v2048, 95
    %v2061 = vpop.permute.xlu0 %2060
    %2062 = vrot.lane.b32.xlu0 %v2049, 95
    %v2063 = vpop.permute.xlu0 %2062
    %2064 = vrot.lane.b32.xlu0 %v2050, 95
    %v2065 = vpop.permute.xlu0 %2064
    %2066 = vrot.lane.b32.xlu0 %v2051, 95
    %v2067 = vpop.permute.xlu0 %2066
    %2068 = vrot.lane.b32.xlu0 %v2052, 95
    %v2069 = vpop.permute.xlu0 %2068
    %2070 = vrot.lane.b32.xlu0 %v2053, 95
    %v2071 = vpop.permute.xlu0 %2070
    %v2072 = vsel %vm1957, %v2061, %v2063
    %v2073 = vsel %vm1957, %v2063, %v2065
    %v2074 = vsel %vm1957, %v2067, %v2069
    %v2075 = vsel %vm1957, %v2069, %v2071
    %v2078 = vsel %vm187, %v2074, 0
    %v2080 = vsel %vm187, %v2075, 0
    %2082 = vmatprep.subr.mxu0 0.0
    %2083 = vmatpush1.msra.mxu0 0.0
    %2084 = vmatprep.subr.mxu0 0.0
    %2085 = vmatpush1.msra.mxu0 0.0
    %2086 = vmatprep.subr.mxu0 0.0
    %2087 = vmatpush1.msra.mxu0 0.0
    %2088 = vmatprep.subr.mxu0 0.0
    %2089 = vmatpush1.msra.mxu0 0.0
    %2090 = vmatprep.subr.mxu0 0.0
    %2091 = vmatpush1.msra.mxu0 0.0
    %2092 = vmatprep.subr.mxu0 0.0
    %2093 = vmatpush1.msra.mxu0 0.0
    %2094 = vmatprep.subr.mxu0 0.0
    %2095 = vmatpush1.msra.mxu0 0.0
    %2096 = vmatprep.subr.mxu0 0.0
    %2097 = vmatpush1.msra.mxu0 0.0
    %2098 = vmatprep.subr.mxu0 0.0
    %2099 = vmatpush1.msra.mxu0 0.0
    %2100 = vmatprep.subr.mxu0 0.0
    %2101 = vmatpush1.msra.mxu0 0.0
    %2102 = vmatprep.subr.mxu0 0.0
    %2103 = vmatpush1.msra.mxu0 0.0
    %2104 = vmatprep.subr.mxu0 0.0
    %2105 = vmatpush1.msra.mxu0 0.0
    %2106 = vmatprep.subr.mxu0 0.0
    %2107 = vmatpush1.msra.mxu0 0.0
    %2108 = vmatprep.subr.mxu0 0.0
    %2109 = vmatpush1.msra.mxu0 0.0
    %2110 = vmatprep.subr.mxu0 %v2080
    %2111 = vmatpush1.msra.mxu0 %v2078
    %2112 = vmatprep.subr.mxu0 %v2073
    %2113 = vmatpush1.msra.mxu0 %v2072
    %2114 = vmatprep.subr.mxu0 0.0
    %2115 = vmatpush2.msra.mxu0 0.0
    %2116 = vmatprep.subr.mxu0 0.0
    %2117 = vmatpush2.msra.mxu0 0.0
    %2118 = vmatprep.subr.mxu0 0.0
    %2119 = vmatpush2.msra.mxu0 0.0
    %2120 = vmatprep.subr.mxu0 0.0
    %2121 = vmatpush2.msra.mxu0 0.0
    %2122 = vmatprep.subr.mxu0 0.0
    %2123 = vmatpush2.msra.mxu0 0.0
    %2124 = vmatprep.subr.mxu0 0.0
    %2125 = vmatpush2.msra.mxu0 0.0
    %2126 = vmatprep.subr.mxu0 0.0
    %2127 = vmatpush2.msra.mxu0 0.0
    %2128 = vmatprep.subr.mxu0 0.0
    %2129 = vmatpush2.msra.mxu0 0.0
    %2130 = vmatprep.subr.mxu0 0.0
    %2131 = vmatpush2.msra.mxu0 0.0
    %2132 = vmatprep.subr.mxu0 0.0
    %2133 = vmatpush2.msra.mxu0 0.0
    %2134 = vmatprep.subr.mxu0 0.0
    %2135 = vmatpush2.msra.mxu0 0.0
    %2136 = vmatprep.subr.mxu0 0.0
    %2137 = vmatpush2.msra.mxu0 0.0
    %2138 = vmatprep.subr.mxu0 0.0
    %2139 = vmatpush2.msra.mxu0 0.0
    %2140 = vmatprep.subr.mxu0 0.0
    %2141 = vmatpush2.msra.mxu0 0.0
    %2142 = vmatprep.subr.mxu0 0.0
    %2143 = vmatpush2.msra.mxu0 0.0
    %2144 = vmatprep.subr.mxu0 0.0
    %2145 = vmatpush2.msra.mxu0 0.0
    %2146 = vmatprep.mubr.f32.mxu0 0.0
    %2147 = vmatmul.mubr.f32.gmra.mxu0 %v1965
    %v2148 = vpop.f32.mrf.mxu0
    %v2149 = vadd.f32 0.0, %v2148
    %v2150 = vpop.f32.mrf.mxu0
    %v2151 = vadd.f32 0.0, %v2150
    %2152 = vdwg.mxu0
    %v2153 = vadd.f32 %v1920, %v2149
    %v2154 = vadd.f32 %v1921, %v2151
    %2155 = vrot.lane.b32.xlu0 %v1028, 34
    %v2156 = vpop.permute.xlu0 %2155
    %v2157 = vrot.slane %v2156, 4
    %vm2158 = vcmask 277504
    %v2159 = vsel %vm2158, %v2157, %v2156
    %vm2160 = vcmp.ne.s16.totalorder %v2159, 0
    %vm2161 = vcmp.ne.s16.totalorder %v2157, 0
    %v2162 = vsel %vm2160, %v43, 0
    %v2163 = vsel %vm2161, %v44, 0
    %v2164 = vsel %vm2160, %v45, 0
    %v2165 = vsel %vm2161, %v46, 0
    %v2166 = vunpack.c.l.bf16 %v2162
    %v2167 = vunpack.c.h.bf16 %v2162
    %v2168 = vunpack.c.l.bf16 %v2163
    %v2169 = vunpack.c.l.bf16 %v2164
    %v2170 = vunpack.c.h.bf16 %v2164
    %v2171 = vunpack.c.l.bf16 %v2165
    %2178 = vrot.lane.b32.xlu0 %v2166, 94
    %v2179 = vpop.permute.xlu0 %2178
    %2180 = vrot.lane.b32.xlu0 %v2167, 94
    %v2181 = vpop.permute.xlu0 %2180
    %2182 = vrot.lane.b32.xlu0 %v2168, 94
    %v2183 = vpop.permute.xlu0 %2182
    %2184 = vrot.lane.b32.xlu0 %v2169, 94
    %v2185 = vpop.permute.xlu0 %2184
    %2186 = vrot.lane.b32.xlu0 %v2170, 94
    %v2187 = vpop.permute.xlu0 %2186
    %2188 = vrot.lane.b32.xlu0 %v2171, 94
    %v2189 = vpop.permute.xlu0 %2188
    %vm2190 = vcmask 769024
    %v2191 = vsel %vm2190, %v2179, %v2181
    %v2192 = vsel %vm2190, %v2181, %v2183
    %v2193 = vsel %vm2190, %v2185, %v2187
    %v2194 = vsel %vm2190, %v2187, %v2189
    %v2198 = vsel %vm183, %v27, 0
    %v2200 = vsel %vm187, %v2193, 0
    %v2202 = vsel %vm187, %v2194, 0
    %2204 = vmatprep.subr.mxu0 0.0
    %2205 = vmatpush1.msra.mxu0 0.0
    %2206 = vmatprep.subr.mxu0 0.0
    %2207 = vmatpush1.msra.mxu0 0.0
    %2208 = vmatprep.subr.mxu0 0.0
    %2209 = vmatpush1.msra.mxu0 0.0
    %2210 = vmatprep.subr.mxu0 0.0
    %2211 = vmatpush1.msra.mxu0 0.0
    %2212 = vmatprep.subr.mxu0 0.0
    %2213 = vmatpush1.msra.mxu0 0.0
    %2214 = vmatprep.subr.mxu0 0.0
    %2215 = vmatpush1.msra.mxu0 0.0
    %2216 = vmatprep.subr.mxu0 0.0
    %2217 = vmatpush1.msra.mxu0 0.0
    %2218 = vmatprep.subr.mxu0 0.0
    %2219 = vmatpush1.msra.mxu0 0.0
    %2220 = vmatprep.subr.mxu0 0.0
    %2221 = vmatpush1.msra.mxu0 0.0
    %2222 = vmatprep.subr.mxu0 0.0
    %2223 = vmatpush1.msra.mxu0 0.0
    %2224 = vmatprep.subr.mxu0 0.0
    %2225 = vmatpush1.msra.mxu0 0.0
    %2226 = vmatprep.subr.mxu0 0.0
    %2227 = vmatpush1.msra.mxu0 0.0
    %2228 = vmatprep.subr.mxu0 0.0
    %2229 = vmatpush1.msra.mxu0 0.0
    %2230 = vmatprep.subr.mxu0 0.0
    %2231 = vmatpush1.msra.mxu0 0.0
    %2232 = vmatprep.subr.mxu0 %v2202
    %2233 = vmatpush1.msra.mxu0 %v2200
    %2234 = vmatprep.subr.mxu0 %v2192
    %2235 = vmatpush1.msra.mxu0 %v2191
    %2236 = vmatprep.subr.mxu0 0.0
    %2237 = vmatpush2.msra.mxu0 0.0
    %2238 = vmatprep.subr.mxu0 0.0
    %2239 = vmatpush2.msra.mxu0 0.0
    %2240 = vmatprep.subr.mxu0 0.0
    %2241 = vmatpush2.msra.mxu0 0.0
    %2242 = vmatprep.subr.mxu0 0.0
    %2243 = vmatpush2.msra.mxu0 0.0
    %2244 = vmatprep.subr.mxu0 0.0
    %2245 = vmatpush2.msra.mxu0 0.0
    %2246 = vmatprep.subr.mxu0 0.0
    %2247 = vmatpush2.msra.mxu0 0.0
    %2248 = vmatprep.subr.mxu0 0.0
    %2249 = vmatpush2.msra.mxu0 0.0
    %2250 = vmatprep.subr.mxu0 0.0
    %2251 = vmatpush2.msra.mxu0 0.0
    %2252 = vmatprep.subr.mxu0 0.0
    %2253 = vmatpush2.msra.mxu0 0.0
    %2254 = vmatprep.subr.mxu0 0.0
    %2255 = vmatpush2.msra.mxu0 0.0
    %2256 = vmatprep.subr.mxu0 0.0
    %2257 = vmatpush2.msra.mxu0 0.0
    %2258 = vmatprep.subr.mxu0 0.0
    %2259 = vmatpush2.msra.mxu0 0.0
    %2260 = vmatprep.subr.mxu0 0.0
    %2261 = vmatpush2.msra.mxu0 0.0
    %2262 = vmatprep.subr.mxu0 0.0
    %2263 = vmatpush2.msra.mxu0 0.0
    %2264 = vmatprep.subr.mxu0 0.0
    %2265 = vmatpush2.msra.mxu0 0.0
    %2266 = vmatprep.subr.mxu0 0.0
    %2267 = vmatpush2.msra.mxu0 0.0
    %2268 = vmatprep.mubr.f32.mxu0 0.0
    %2269 = vmatmul.mubr.f32.gmra.mxu0 %v2198
    %v2270 = vpop.f32.mrf.mxu0
    %v2271 = vadd.f32 0.0, %v2270
    %v2272 = vpop.f32.mrf.mxu0
    %v2273 = vadd.f32 0.0, %v2272
    %2274 = vdwg.mxu0
    %v2275 = vadd.f32 %v2042, %v2271
    %v2276 = vadd.f32 %v2043, %v2273
    %v2277 = vsel %vm2160, %v47, 0
    %v2278 = vsel %vm2161, %v48, 0
    %v2279 = vsel %vm2160, %v49, 0
    %v2280 = vsel %vm2161, %v50, 0
    %v2281 = vunpack.c.l.bf16 %v2277
    %v2282 = vunpack.c.h.bf16 %v2277
    %v2283 = vunpack.c.l.bf16 %v2278
    %v2284 = vunpack.c.l.bf16 %v2279
    %v2285 = vunpack.c.h.bf16 %v2279
    %v2286 = vunpack.c.l.bf16 %v2280
    %2293 = vrot.lane.b32.xlu0 %v2281, 94
    %v2294 = vpop.permute.xlu0 %2293
    %2295 = vrot.lane.b32.xlu0 %v2282, 94
    %v2296 = vpop.permute.xlu0 %2295
    %2297 = vrot.lane.b32.xlu0 %v2283, 94
    %v2298 = vpop.permute.xlu0 %2297
    %2299 = vrot.lane.b32.xlu0 %v2284, 94
    %v2300 = vpop.permute.xlu0 %2299
    %2301 = vrot.lane.b32.xlu0 %v2285, 94
    %v2302 = vpop.permute.xlu0 %2301
    %2303 = vrot.lane.b32.xlu0 %v2286, 94
    %v2304 = vpop.permute.xlu0 %2303
    %v2305 = vsel %vm2190, %v2294, %v2296
    %v2306 = vsel %vm2190, %v2296, %v2298
    %v2307 = vsel %vm2190, %v2300, %v2302
    %v2308 = vsel %vm2190, %v2302, %v2304
    %v2311 = vsel %vm187, %v2307, 0
    %v2313 = vsel %vm187, %v2308, 0
    %2315 = vmatprep.subr.mxu0 0.0
    %2316 = vmatpush1.msra.mxu0 0.0
    %2317 = vmatprep.subr.mxu0 0.0
    %2318 = vmatpush1.msra.mxu0 0.0
    %2319 = vmatprep.subr.mxu0 0.0
    %2320 = vmatpush1.msra.mxu0 0.0
    %2321 = vmatprep.subr.mxu0 0.0
    %2322 = vmatpush1.msra.mxu0 0.0
    %2323 = vmatprep.subr.mxu0 0.0
    %2324 = vmatpush1.msra.mxu0 0.0
    %2325 = vmatprep.subr.mxu0 0.0
    %2326 = vmatpush1.msra.mxu0 0.0
    %2327 = vmatprep.subr.mxu0 0.0
    %2328 = vmatpush1.msra.mxu0 0.0
    %2329 = vmatprep.subr.mxu0 0.0
    %2330 = vmatpush1.msra.mxu0 0.0
    %2331 = vmatprep.subr.mxu0 0.0
    %2332 = vmatpush1.msra.mxu0 0.0
    %2333 = vmatprep.subr.mxu0 0.0
    %2334 = vmatpush1.msra.mxu0 0.0
    %2335 = vmatprep.subr.mxu0 0.0
    %2336 = vmatpush1.msra.mxu0 0.0
    %2337 = vmatprep.subr.mxu0 0.0
    %2338 = vmatpush1.msra.mxu0 0.0
    %2339 = vmatprep.subr.mxu0 0.0
    %2340 = vmatpush1.msra.mxu0 0.0
    %2341 = vmatprep.subr.mxu0 0.0
    %2342 = vmatpush1.msra.mxu0 0.0
    %2343 = vmatprep.subr.mxu0 %v2313
    %2344 = vmatpush1.msra.mxu0 %v2311
    %2345 = vmatprep.subr.mxu0 %v2306
    %2346 = vmatpush1.msra.mxu0 %v2305
    %2347 = vmatprep.subr.mxu0 0.0
    %2348 = vmatpush2.msra.mxu0 0.0
    %2349 = vmatprep.subr.mxu0 0.0
    %2350 = vmatpush2.msra.mxu0 0.0
    %2351 = vmatprep.subr.mxu0 0.0
    %2352 = vmatpush2.msra.mxu0 0.0
    %2353 = vmatprep.subr.mxu0 0.0
    %2354 = vmatpush2.msra.mxu0 0.0
    %2355 = vmatprep.subr.mxu0 0.0
    %2356 = vmatpush2.msra.mxu0 0.0
    %2357 = vmatprep.subr.mxu0 0.0
    %2358 = vmatpush2.msra.mxu0 0.0
    %2359 = vmatprep.subr.mxu0 0.0
    %2360 = vmatpush2.msra.mxu0 0.0
    %2361 = vmatprep.subr.mxu0 0.0
    %2362 = vmatpush2.msra.mxu0 0.0
    %2363 = vmatprep.subr.mxu0 0.0
    %2364 = vmatpush2.msra.mxu0 0.0
    %2365 = vmatprep.subr.mxu0 0.0
    %2366 = vmatpush2.msra.mxu0 0.0
    %2367 = vmatprep.subr.mxu0 0.0
    %2368 = vmatpush2.msra.mxu0 0.0
    %2369 = vmatprep.subr.mxu0 0.0
    %2370 = vmatpush2.msra.mxu0 0.0
    %2371 = vmatprep.subr.mxu0 0.0
    %2372 = vmatpush2.msra.mxu0 0.0
    %2373 = vmatprep.subr.mxu0 0.0
    %2374 = vmatpush2.msra.mxu0 0.0
    %2375 = vmatprep.subr.mxu0 0.0
    %2376 = vmatpush2.msra.mxu0 0.0
    %2377 = vmatprep.subr.mxu0 0.0
    %2378 = vmatpush2.msra.mxu0 0.0
    %2379 = vmatprep.mubr.f32.mxu0 0.0
    %2380 = vmatmul.mubr.f32.gmra.mxu0 %v2198
    %v2381 = vpop.f32.mrf.mxu0
    %v2382 = vadd.f32 0.0, %v2381
    %v2383 = vpop.f32.mrf.mxu0
    %v2384 = vadd.f32 0.0, %v2383
    %2385 = vdwg.mxu0
    %v2386 = vadd.f32 %v2153, %v2382
    %v2387 = vadd.f32 %v2154, %v2384
    %2388 = vrot.lane.b32.xlu0 %v111, 46
    %v2389 = vpop.permute.xlu0 %2388
    %v2390 = vrot.slane %v2389, 4
    %vm2391 = vcmask 375808
    %v2392 = vsel %vm2391, %v2390, %v2389
    %vm2393 = vcmp.ne.s16.totalorder %v2392, 0
    %vm2394 = vcmp.ne.s16.totalorder %v2390, 0
    %v2395 = vsel %vm2393, %v43, 0
    %v2396 = vsel %vm2394, %v44, 0
    %v2397 = vsel %vm2393, %v45, 0
    %v2398 = vsel %vm2394, %v46, 0
    %v2399 = vunpack.c.l.bf16 %v2395
    %v2400 = vunpack.c.h.bf16 %v2395
    %v2401 = vunpack.c.l.bf16 %v2396
    %v2402 = vunpack.c.l.bf16 %v2397
    %v2403 = vunpack.c.h.bf16 %v2397
    %v2404 = vunpack.c.l.bf16 %v2398
    %2411 = vrot.lane.b32.xlu0 %v2399, 82
    %v2412 = vpop.permute.xlu0 %2411
    %2413 = vrot.lane.b32.xlu0 %v2400, 82
    %v2414 = vpop.permute.xlu0 %2413
    %2415 = vrot.lane.b32.xlu0 %v2401, 82
    %v2416 = vpop.permute.xlu0 %2415
    %2417 = vrot.lane.b32.xlu0 %v2402, 82
    %v2418 = vpop.permute.xlu0 %2417
    %2419 = vrot.lane.b32.xlu0 %v2403, 82
    %v2420 = vpop.permute.xlu0 %2419
    %2421 = vrot.lane.b32.xlu0 %v2404, 82
    %v2422 = vpop.permute.xlu0 %2421
    %vm2423 = vcmask 670720
    %v2424 = vsel %vm2423, %v2412, %v2414
    %v2425 = vsel %vm2423, %v2414, %v2416
    %v2426 = vsel %vm2423, %v2418, %v2420
    %v2427 = vsel %vm2423, %v2420, %v2422
    %v2431 = vsel %vm183, %v28, 0
    %v2433 = vsel %vm187, %v2426, 0
    %v2435 = vsel %vm187, %v2427, 0
    %2437 = vmatprep.subr.mxu0 0.0
    %2438 = vmatpush1.msra.mxu0 0.0
    %2439 = vmatprep.subr.mxu0 0.0
    %2440 = vmatpush1.msra.mxu0 0.0
    %2441 = vmatprep.subr.mxu0 0.0
    %2442 = vmatpush1.msra.mxu0 0.0
    %2443 = vmatprep.subr.mxu0 0.0
    %2444 = vmatpush1.msra.mxu0 0.0
    %2445 = vmatprep.subr.mxu0 0.0
    %2446 = vmatpush1.msra.mxu0 0.0
    %2447 = vmatprep.subr.mxu0 0.0
    %2448 = vmatpush1.msra.mxu0 0.0
    %2449 = vmatprep.subr.mxu0 0.0
    %2450 = vmatpush1.msra.mxu0 0.0
    %2451 = vmatprep.subr.mxu0 0.0
    %2452 = vmatpush1.msra.mxu0 0.0
    %2453 = vmatprep.subr.mxu0 0.0
    %2454 = vmatpush1.msra.mxu0 0.0
    %2455 = vmatprep.subr.mxu0 0.0
    %2456 = vmatpush1.msra.mxu0 0.0
    %2457 = vmatprep.subr.mxu0 0.0
    %2458 = vmatpush1.msra.mxu0 0.0
    %2459 = vmatprep.subr.mxu0 0.0
    %2460 = vmatpush1.msra.mxu0 0.0
    %2461 = vmatprep.subr.mxu0 0.0
    %2462 = vmatpush1.msra.mxu0 0.0
    %2463 = vmatprep.subr.mxu0 0.0
    %2464 = vmatpush1.msra.mxu0 0.0
    %2465 = vmatprep.subr.mxu0 %v2435
    %2466 = vmatpush1.msra.mxu0 %v2433
    %2467 = vmatprep.subr.mxu0 %v2425
    %2468 = vmatpush1.msra.mxu0 %v2424
    %2469 = vmatprep.subr.mxu0 0.0
    %2470 = vmatpush2.msra.mxu0 0.0
    %2471 = vmatprep.subr.mxu0 0.0
    %2472 = vmatpush2.msra.mxu0 0.0
    %2473 = vmatprep.subr.mxu0 0.0
    %2474 = vmatpush2.msra.mxu0 0.0
    %2475 = vmatprep.subr.mxu0 0.0
    %2476 = vmatpush2.msra.mxu0 0.0
    %2477 = vmatprep.subr.mxu0 0.0
    %2478 = vmatpush2.msra.mxu0 0.0
    %2479 = vmatprep.subr.mxu0 0.0
    %2480 = vmatpush2.msra.mxu0 0.0
    %2481 = vmatprep.subr.mxu0 0.0
    %2482 = vmatpush2.msra.mxu0 0.0
    %2483 = vmatprep.subr.mxu0 0.0
    %2484 = vmatpush2.msra.mxu0 0.0
    %2485 = vmatprep.subr.mxu0 0.0
    %2486 = vmatpush2.msra.mxu0 0.0
    %2487 = vmatprep.subr.mxu0 0.0
    %2488 = vmatpush2.msra.mxu0 0.0
    %2489 = vmatprep.subr.mxu0 0.0
    %2490 = vmatpush2.msra.mxu0 0.0
    %2491 = vmatprep.subr.mxu0 0.0
    %2492 = vmatpush2.msra.mxu0 0.0
    %2493 = vmatprep.subr.mxu0 0.0
    %2494 = vmatpush2.msra.mxu0 0.0
    %2495 = vmatprep.subr.mxu0 0.0
    %2496 = vmatpush2.msra.mxu0 0.0
    %2497 = vmatprep.subr.mxu0 0.0
    %2498 = vmatpush2.msra.mxu0 0.0
    %2499 = vmatprep.subr.mxu0 0.0
    %2500 = vmatpush2.msra.mxu0 0.0
    %2501 = vmatprep.mubr.f32.mxu0 0.0
    %2502 = vmatmul.mubr.f32.gmra.mxu0 %v2431
    %v2503 = vpop.f32.mrf.mxu0
    %v2504 = vadd.f32 0.0, %v2503
    %v2505 = vpop.f32.mrf.mxu0
    %v2506 = vadd.f32 0.0, %v2505
    %2507 = vdwg.mxu0
    %v2508 = vadd.f32 %v2275, %v2504
    %v2509 = vadd.f32 %v2276, %v2506
    %v2510 = vsel %vm2393, %v47, 0
    %v2511 = vsel %vm2394, %v48, 0
    %v2512 = vsel %vm2393, %v49, 0
    %v2513 = vsel %vm2394, %v50, 0
    %v2514 = vunpack.c.l.bf16 %v2510
    %v2515 = vunpack.c.h.bf16 %v2510
    %v2516 = vunpack.c.l.bf16 %v2511
    %v2517 = vunpack.c.l.bf16 %v2512
    %v2518 = vunpack.c.h.bf16 %v2512
    %v2519 = vunpack.c.l.bf16 %v2513
    %2526 = vrot.lane.b32.xlu0 %v2514, 82
    %v2527 = vpop.permute.xlu0 %2526
    %2528 = vrot.lane.b32.xlu0 %v2515, 82
    %v2529 = vpop.permute.xlu0 %2528
    %2530 = vrot.lane.b32.xlu0 %v2516, 82
    %v2531 = vpop.permute.xlu0 %2530
    %2532 = vrot.lane.b32.xlu0 %v2517, 82
    %v2533 = vpop.permute.xlu0 %2532
    %2534 = vrot.lane.b32.xlu0 %v2518, 82
    %v2535 = vpop.permute.xlu0 %2534
    %2536 = vrot.lane.b32.xlu0 %v2519, 82
    %v2537 = vpop.permute.xlu0 %2536
    %v2538 = vsel %vm2423, %v2527, %v2529
    %v2539 = vsel %vm2423, %v2529, %v2531
    %v2540 = vsel %vm2423, %v2533, %v2535
    %v2541 = vsel %vm2423, %v2535, %v2537
    %v2544 = vsel %vm187, %v2540, 0
    %v2546 = vsel %vm187, %v2541, 0
    %2548 = vmatprep.subr.mxu0 0.0
    %2549 = vmatpush1.msra.mxu0 0.0
    %2550 = vmatprep.subr.mxu0 0.0
    %2551 = vmatpush1.msra.mxu0 0.0
    %2552 = vmatprep.subr.mxu0 0.0
    %2553 = vmatpush1.msra.mxu0 0.0
    %2554 = vmatprep.subr.mxu0 0.0
    %2555 = vmatpush1.msra.mxu0 0.0
    %2556 = vmatprep.subr.mxu0 0.0
    %2557 = vmatpush1.msra.mxu0 0.0
    %2558 = vmatprep.subr.mxu0 0.0
    %2559 = vmatpush1.msra.mxu0 0.0
    %2560 = vmatprep.subr.mxu0 0.0
    %2561 = vmatpush1.msra.mxu0 0.0
    %2562 = vmatprep.subr.mxu0 0.0
    %2563 = vmatpush1.msra.mxu0 0.0
    %2564 = vmatprep.subr.mxu0 0.0
    %2565 = vmatpush1.msra.mxu0 0.0
    %2566 = vmatprep.subr.mxu0 0.0
    %2567 = vmatpush1.msra.mxu0 0.0
    %2568 = vmatprep.subr.mxu0 0.0
    %2569 = vmatpush1.msra.mxu0 0.0
    %2570 = vmatprep.subr.mxu0 0.0
    %2571 = vmatpush1.msra.mxu0 0.0
    %2572 = vmatprep.subr.mxu0 0.0
    %2573 = vmatpush1.msra.mxu0 0.0
    %2574 = vmatprep.subr.mxu0 0.0
    %2575 = vmatpush1.msra.mxu0 0.0
    %2576 = vmatprep.subr.mxu0 %v2546
    %2577 = vmatpush1.msra.mxu0 %v2544
    %2578 = vmatprep.subr.mxu0 %v2539
    %2579 = vmatpush1.msra.mxu0 %v2538
    %2580 = vmatprep.subr.mxu0 0.0
    %2581 = vmatpush2.msra.mxu0 0.0
    %2582 = vmatprep.subr.mxu0 0.0
    %2583 = vmatpush2.msra.mxu0 0.0
    %2584 = vmatprep.subr.mxu0 0.0
    %2585 = vmatpush2.msra.mxu0 0.0
    %2586 = vmatprep.subr.mxu0 0.0
    %2587 = vmatpush2.msra.mxu0 0.0
    %2588 = vmatprep.subr.mxu0 0.0
    %2589 = vmatpush2.msra.mxu0 0.0
    %2590 = vmatprep.subr.mxu0 0.0
    %2591 = vmatpush2.msra.mxu0 0.0
    %2592 = vmatprep.subr.mxu0 0.0
    %2593 = vmatpush2.msra.mxu0 0.0
    %2594 = vmatprep.subr.mxu0 0.0
    %2595 = vmatpush2.msra.mxu0 0.0
    %2596 = vmatprep.subr.mxu0 0.0
    %2597 = vmatpush2.msra.mxu0 0.0
    %2598 = vmatprep.subr.mxu0 0.0
    %2599 = vmatpush2.msra.mxu0 0.0
    %2600 = vmatprep.subr.mxu0 0.0
    %2601 = vmatpush2.msra.mxu0 0.0
    %2602 = vmatprep.subr.mxu0 0.0
    %2603 = vmatpush2.msra.mxu0 0.0
    %2604 = vmatprep.subr.mxu0 0.0
    %2605 = vmatpush2.msra.mxu0 0.0
    %2606 = vmatprep.subr.mxu0 0.0
    %2607 = vmatpush2.msra.mxu0 0.0
    %2608 = vmatprep.subr.mxu0 0.0
    %2609 = vmatpush2.msra.mxu0 0.0
    %2610 = vmatprep.subr.mxu0 0.0
    %2611 = vmatpush2.msra.mxu0 0.0
    %2612 = vmatprep.mubr.f32.mxu0 0.0
    %2613 = vmatmul.mubr.f32.gmra.mxu0 %v2431
    %v2614 = vpop.f32.mrf.mxu0
    %v2615 = vadd.f32 0.0, %v2614
    %v2616 = vpop.f32.mrf.mxu0
    %v2617 = vadd.f32 0.0, %v2616
    %2618 = vdwg.mxu0
    %v2619 = vadd.f32 %v2386, %v2615
    %v2620 = vadd.f32 %v2387, %v2617
    %2621 = vrot.lane.b32.xlu0 %v140, 47
    %v2622 = vpop.permute.xlu0 %2621
    %v2623 = vrot.slane %v2622, 4
    %vm2624 = vcmask 384000
    %v2625 = vsel %vm2624, %v2623, %v2622
    %vm2626 = vcmp.ne.s16.totalorder %v2625, 0
    %vm2627 = vcmp.ne.s16.totalorder %v2623, 0
    %v2628 = vsel %vm2626, %v43, 0
    %v2629 = vsel %vm2627, %v44, 0
    %v2630 = vsel %vm2626, %v45, 0
    %v2631 = vsel %vm2627, %v46, 0
    %v2632 = vunpack.c.l.bf16 %v2628
    %v2633 = vunpack.c.h.bf16 %v2628
    %v2634 = vunpack.c.l.bf16 %v2629
    %v2635 = vunpack.c.l.bf16 %v2630
    %v2636 = vunpack.c.h.bf16 %v2630
    %v2637 = vunpack.c.l.bf16 %v2631
    %2644 = vrot.lane.b32.xlu0 %v2632, 81
    %v2645 = vpop.permute.xlu0 %2644
    %2646 = vrot.lane.b32.xlu0 %v2633, 81
    %v2647 = vpop.permute.xlu0 %2646
    %2648 = vrot.lane.b32.xlu0 %v2634, 81
    %v2649 = vpop.permute.xlu0 %2648
    %2650 = vrot.lane.b32.xlu0 %v2635, 81
    %v2651 = vpop.permute.xlu0 %2650
    %2652 = vrot.lane.b32.xlu0 %v2636, 81
    %v2653 = vpop.permute.xlu0 %2652
    %2654 = vrot.lane.b32.xlu0 %v2637, 81
    %v2655 = vpop.permute.xlu0 %2654
    %vm2656 = vcmask 662528
    %v2657 = vsel %vm2656, %v2645, %v2647
    %v2658 = vsel %vm2656, %v2647, %v2649
    %v2659 = vsel %vm2656, %v2651, %v2653
    %v2660 = vsel %vm2656, %v2653, %v2655
    %v2664 = vsel %vm183, %v29, 0
    %v2666 = vsel %vm187, %v2659, 0
    %v2668 = vsel %vm187, %v2660, 0
    %2670 = vmatprep.subr.mxu0 0.0
    %2671 = vmatpush1.msra.mxu0 0.0
    %2672 = vmatprep.subr.mxu0 0.0
    %2673 = vmatpush1.msra.mxu0 0.0
    %2674 = vmatprep.subr.mxu0 0.0
    %2675 = vmatpush1.msra.mxu0 0.0
    %2676 = vmatprep.subr.mxu0 0.0
    %2677 = vmatpush1.msra.mxu0 0.0
    %2678 = vmatprep.subr.mxu0 0.0
    %2679 = vmatpush1.msra.mxu0 0.0
    %2680 = vmatprep.subr.mxu0 0.0
    %2681 = vmatpush1.msra.mxu0 0.0
    %2682 = vmatprep.subr.mxu0 0.0
    %2683 = vmatpush1.msra.mxu0 0.0
    %2684 = vmatprep.subr.mxu0 0.0
    %2685 = vmatpush1.msra.mxu0 0.0
    %2686 = vmatprep.subr.mxu0 0.0
    %2687 = vmatpush1.msra.mxu0 0.0
    %2688 = vmatprep.subr.mxu0 0.0
    %2689 = vmatpush1.msra.mxu0 0.0
    %2690 = vmatprep.subr.mxu0 0.0
    %2691 = vmatpush1.msra.mxu0 0.0
    %2692 = vmatprep.subr.mxu0 0.0
    %2693 = vmatpush1.msra.mxu0 0.0
    %2694 = vmatprep.subr.mxu0 0.0
    %2695 = vmatpush1.msra.mxu0 0.0
    %2696 = vmatprep.subr.mxu0 0.0
    %2697 = vmatpush1.msra.mxu0 0.0
    %2698 = vmatprep.subr.mxu0 %v2668
    %2699 = vmatpush1.msra.mxu0 %v2666
    %2700 = vmatprep.subr.mxu0 %v2658
    %2701 = vmatpush1.msra.mxu0 %v2657
    %2702 = vmatprep.subr.mxu0 0.0
    %2703 = vmatpush2.msra.mxu0 0.0
    %2704 = vmatprep.subr.mxu0 0.0
    %2705 = vmatpush2.msra.mxu0 0.0
    %2706 = vmatprep.subr.mxu0 0.0
    %2707 = vmatpush2.msra.mxu0 0.0
    %2708 = vmatprep.subr.mxu0 0.0
    %2709 = vmatpush2.msra.mxu0 0.0
    %2710 = vmatprep.subr.mxu0 0.0
    %2711 = vmatpush2.msra.mxu0 0.0
    %2712 = vmatprep.subr.mxu0 0.0
    %2713 = vmatpush2.msra.mxu0 0.0
    %2714 = vmatprep.subr.mxu0 0.0
    %2715 = vmatpush2.msra.mxu0 0.0
    %2716 = vmatprep.subr.mxu0 0.0
    %2717 = vmatpush2.msra.mxu0 0.0
    %2718 = vmatprep.subr.mxu0 0.0
    %2719 = vmatpush2.msra.mxu0 0.0
    %2720 = vmatprep.subr.mxu0 0.0
    %2721 = vmatpush2.msra.mxu0 0.0
    %2722 = vmatprep.subr.mxu0 0.0
    %2723 = vmatpush2.msra.mxu0 0.0
    %2724 = vmatprep.subr.mxu0 0.0
    %2725 = vmatpush2.msra.mxu0 0.0
    %2726 = vmatprep.subr.mxu0 0.0
    %2727 = vmatpush2.msra.mxu0 0.0
    %2728 = vmatprep.subr.mxu0 0.0
    %2729 = vmatpush2.msra.mxu0 0.0
    %2730 = vmatprep.subr.mxu0 0.0
    %2731 = vmatpush2.msra.mxu0 0.0
    %2732 = vmatprep.subr.mxu0 0.0
    %2733 = vmatpush2.msra.mxu0 0.0
    %2734 = vmatprep.mubr.f32.mxu0 0.0
    %2735 = vmatmul.mubr.f32.gmra.mxu0 %v2664
    %v2736 = vpop.f32.mrf.mxu0
    %v2737 = vadd.f32 0.0, %v2736
    %v2738 = vpop.f32.mrf.mxu0
    %v2739 = vadd.f32 0.0, %v2738
    %2740 = vdwg.mxu0
    %v2741 = vadd.f32 %v2508, %v2737
    %v2742 = vadd.f32 %v2509, %v2739
    %v2743 = vsel %vm2626, %v47, 0
    %v2744 = vsel %vm2627, %v48, 0
    %v2745 = vsel %vm2626, %v49, 0
    %v2746 = vsel %vm2627, %v50, 0
    %v2747 = vunpack.c.l.bf16 %v2743
    %v2748 = vunpack.c.h.bf16 %v2743
    %v2749 = vunpack.c.l.bf16 %v2744
    %v2750 = vunpack.c.l.bf16 %v2745
    %v2751 = vunpack.c.h.bf16 %v2745
    %v2752 = vunpack.c.l.bf16 %v2746
    %2759 = vrot.lane.b32.xlu0 %v2747, 81
    %v2760 = vpop.permute.xlu0 %2759
    %2761 = vrot.lane.b32.xlu0 %v2748, 81
    %v2762 = vpop.permute.xlu0 %2761
    %2763 = vrot.lane.b32.xlu0 %v2749, 81
    %v2764 = vpop.permute.xlu0 %2763
    %2765 = vrot.lane.b32.xlu0 %v2750, 81
    %v2766 = vpop.permute.xlu0 %2765
    %2767 = vrot.lane.b32.xlu0 %v2751, 81
    %v2768 = vpop.permute.xlu0 %2767
    %2769 = vrot.lane.b32.xlu0 %v2752, 81
    %v2770 = vpop.permute.xlu0 %2769
    %v2771 = vsel %vm2656, %v2760, %v2762
    %v2772 = vsel %vm2656, %v2762, %v2764
    %v2773 = vsel %vm2656, %v2766, %v2768
    %v2774 = vsel %vm2656, %v2768, %v2770
    %v2777 = vsel %vm187, %v2773, 0
    %v2779 = vsel %vm187, %v2774, 0
    %2781 = vmatprep.subr.mxu0 0.0
    %2782 = vmatpush1.msra.mxu0 0.0
    %2783 = vmatprep.subr.mxu0 0.0
    %2784 = vmatpush1.msra.mxu0 0.0
    %2785 = vmatprep.subr.mxu0 0.0
    %2786 = vmatpush1.msra.mxu0 0.0
    %2787 = vmatprep.subr.mxu0 0.0
    %2788 = vmatpush1.msra.mxu0 0.0
    %2789 = vmatprep.subr.mxu0 0.0
    %2790 = vmatpush1.msra.mxu0 0.0
    %2791 = vmatprep.subr.mxu0 0.0
    %2792 = vmatpush1.msra.mxu0 0.0
    %2793 = vmatprep.subr.mxu0 0.0
    %2794 = vmatpush1.msra.mxu0 0.0
    %2795 = vmatprep.subr.mxu0 0.0
    %2796 = vmatpush1.msra.mxu0 0.0
    %2797 = vmatprep.subr.mxu0 0.0
    %2798 = vmatpush1.msra.mxu0 0.0
    %2799 = vmatprep.subr.mxu0 0.0
    %2800 = vmatpush1.msra.mxu0 0.0
    %2801 = vmatprep.subr.mxu0 0.0
    %2802 = vmatpush1.msra.mxu0 0.0
    %2803 = vmatprep.subr.mxu0 0.0
    %2804 = vmatpush1.msra.mxu0 0.0
    %2805 = vmatprep.subr.mxu0 0.0
    %2806 = vmatpush1.msra.mxu0 0.0
    %2807 = vmatprep.subr.mxu0 0.0
    %2808 = vmatpush1.msra.mxu0 0.0
    %2809 = vmatprep.subr.mxu0 %v2779
    %2810 = vmatpush1.msra.mxu0 %v2777
    %2811 = vmatprep.subr.mxu0 %v2772
    %2812 = vmatpush1.msra.mxu0 %v2771
    %2813 = vmatprep.subr.mxu0 0.0
    %2814 = vmatpush2.msra.mxu0 0.0
    %2815 = vmatprep.subr.mxu0 0.0
    %2816 = vmatpush2.msra.mxu0 0.0
    %2817 = vmatprep.subr.mxu0 0.0
    %2818 = vmatpush2.msra.mxu0 0.0
    %2819 = vmatprep.subr.mxu0 0.0
    %2820 = vmatpush2.msra.mxu0 0.0
    %2821 = vmatprep.subr.mxu0 0.0
    %2822 = vmatpush2.msra.mxu0 0.0
    %2823 = vmatprep.subr.mxu0 0.0
    %2824 = vmatpush2.msra.mxu0 0.0
    %2825 = vmatprep.subr.mxu0 0.0
    %2826 = vmatpush2.msra.mxu0 0.0
    %2827 = vmatprep.subr.mxu0 0.0
    %2828 = vmatpush2.msra.mxu0 0.0
    %2829 = vmatprep.subr.mxu0 0.0
    %2830 = vmatpush2.msra.mxu0 0.0
    %2831 = vmatprep.subr.mxu0 0.0
    %2832 = vmatpush2.msra.mxu0 0.0
    %2833 = vmatprep.subr.mxu0 0.0
    %2834 = vmatpush2.msra.mxu0 0.0
    %2835 = vmatprep.subr.mxu0 0.0
    %2836 = vmatpush2.msra.mxu0 0.0
    %2837 = vmatprep.subr.mxu0 0.0
    %2838 = vmatpush2.msra.mxu0 0.0
    %2839 = vmatprep.subr.mxu0 0.0
    %2840 = vmatpush2.msra.mxu0 0.0
    %2841 = vmatprep.subr.mxu0 0.0
    %2842 = vmatpush2.msra.mxu0 0.0
    %2843 = vmatprep.subr.mxu0 0.0
    %2844 = vmatpush2.msra.mxu0 0.0
    %2845 = vmatprep.mubr.f32.mxu0 0.0
    %2846 = vmatmul.mubr.f32.gmra.mxu0 %v2664
    %v2847 = vpop.f32.mrf.mxu0
    %v2848 = vadd.f32 0.0, %v2847
    %v2849 = vpop.f32.mrf.mxu0
    %v2850 = vadd.f32 0.0, %v2849
    %2851 = vdwg.mxu0
    %v2852 = vadd.f32 %v2619, %v2848
    %v2853 = vadd.f32 %v2620, %v2850
    %2854 = vrot.lane.b32.xlu0 %v574, 80
    %v2855 = vpop.permute.xlu0 %2854
    %2856 = vrot.lane.b32.xlu0 %v575, 80
    %v2857 = vpop.permute.xlu0 %2856
    %2858 = vrot.lane.b32.xlu0 %v576, 80
    %v2859 = vpop.permute.xlu0 %2858
    %2860 = vrot.lane.b32.xlu0 %v577, 80
    %v2861 = vpop.permute.xlu0 %2860
    %2862 = vrot.lane.b32.xlu0 %v578, 80
    %v2863 = vpop.permute.xlu0 %2862
    %2864 = vrot.lane.b32.xlu0 %v579, 80
    %v2865 = vpop.permute.xlu0 %2864
    %vm2866 = vcmask 654336
    %v2867 = vsel %vm2866, %v2855, %v2857
    %v2868 = vsel %vm2866, %v2857, %v2859
    %v2869 = vsel %vm2866, %v2861, %v2863
    %v2870 = vsel %vm2866, %v2863, %v2865
    %v2874 = vsel %vm183, %v30, 0
    %v2876 = vsel %vm187, %v2869, 0
    %v2878 = vsel %vm187, %v2870, 0
    %2880 = vmatprep.subr.mxu0 0.0
    %2881 = vmatpush1.msra.mxu0 0.0
    %2882 = vmatprep.subr.mxu0 0.0
    %2883 = vmatpush1.msra.mxu0 0.0
    %2884 = vmatprep.subr.mxu0 0.0
    %2885 = vmatpush1.msra.mxu0 0.0
    %2886 = vmatprep.subr.mxu0 0.0
    %2887 = vmatpush1.msra.mxu0 0.0
    %2888 = vmatprep.subr.mxu0 0.0
    %2889 = vmatpush1.msra.mxu0 0.0
    %2890 = vmatprep.subr.mxu0 0.0
    %2891 = vmatpush1.msra.mxu0 0.0
    %2892 = vmatprep.subr.mxu0 0.0
    %2893 = vmatpush1.msra.mxu0 0.0
    %2894 = vmatprep.subr.mxu0 0.0
    %2895 = vmatpush1.msra.mxu0 0.0
    %2896 = vmatprep.subr.mxu0 0.0
    %2897 = vmatpush1.msra.mxu0 0.0
    %2898 = vmatprep.subr.mxu0 0.0
    %2899 = vmatpush1.msra.mxu0 0.0
    %2900 = vmatprep.subr.mxu0 0.0
    %2901 = vmatpush1.msra.mxu0 0.0
    %2902 = vmatprep.subr.mxu0 0.0
    %2903 = vmatpush1.msra.mxu0 0.0
    %2904 = vmatprep.subr.mxu0 0.0
    %2905 = vmatpush1.msra.mxu0 0.0
    %2906 = vmatprep.subr.mxu0 0.0
    %2907 = vmatpush1.msra.mxu0 0.0
    %2908 = vmatprep.subr.mxu0 %v2878
    %2909 = vmatpush1.msra.mxu0 %v2876
    %2910 = vmatprep.subr.mxu0 %v2868
    %2911 = vmatpush1.msra.mxu0 %v2867
    %2912 = vmatprep.subr.mxu0 0.0
    %2913 = vmatpush2.msra.mxu0 0.0
    %2914 = vmatprep.subr.mxu0 0.0
    %2915 = vmatpush2.msra.mxu0 0.0
    %2916 = vmatprep.subr.mxu0 0.0
    %2917 = vmatpush2.msra.mxu0 0.0
    %2918 = vmatprep.subr.mxu0 0.0
    %2919 = vmatpush2.msra.mxu0 0.0
    %2920 = vmatprep.subr.mxu0 0.0
    %2921 = vmatpush2.msra.mxu0 0.0
    %2922 = vmatprep.subr.mxu0 0.0
    %2923 = vmatpush2.msra.mxu0 0.0
    %2924 = vmatprep.subr.mxu0 0.0
    %2925 = vmatpush2.msra.mxu0 0.0
    %2926 = vmatprep.subr.mxu0 0.0
    %2927 = vmatpush2.msra.mxu0 0.0
    %2928 = vmatprep.subr.mxu0 0.0
    %2929 = vmatpush2.msra.mxu0 0.0
    %2930 = vmatprep.subr.mxu0 0.0
    %2931 = vmatpush2.msra.mxu0 0.0
    %2932 = vmatprep.subr.mxu0 0.0
    %2933 = vmatpush2.msra.mxu0 0.0
    %2934 = vmatprep.subr.mxu0 0.0
    %2935 = vmatpush2.msra.mxu0 0.0
    %2936 = vmatprep.subr.mxu0 0.0
    %2937 = vmatpush2.msra.mxu0 0.0
    %2938 = vmatprep.subr.mxu0 0.0
    %2939 = vmatpush2.msra.mxu0 0.0
    %2940 = vmatprep.subr.mxu0 0.0
    %2941 = vmatpush2.msra.mxu0 0.0
    %2942 = vmatprep.subr.mxu0 0.0
    %2943 = vmatpush2.msra.mxu0 0.0
    %2944 = vmatprep.mubr.f32.mxu0 0.0
    %2945 = vmatmul.mubr.f32.gmra.mxu0 %v2874
    %v2946 = vpop.f32.mrf.mxu0
    %v2947 = vadd.f32 0.0, %v2946
    %v2948 = vpop.f32.mrf.mxu0
    %v2949 = vadd.f32 0.0, %v2948
    %2950 = vdwg.mxu0
    %v2951 = vadd.f32 %v2741, %v2947
    %v2952 = vadd.f32 %v2742, %v2949
    %2953 = vrot.lane.b32.xlu0 %v685, 80
    %v2954 = vpop.permute.xlu0 %2953
    %2955 = vrot.lane.b32.xlu0 %v686, 80
    %v2956 = vpop.permute.xlu0 %2955
    %2957 = vrot.lane.b32.xlu0 %v687, 80
    %v2958 = vpop.permute.xlu0 %2957
    %2959 = vrot.lane.b32.xlu0 %v688, 80
    %v2960 = vpop.permute.xlu0 %2959
    %2961 = vrot.lane.b32.xlu0 %v689, 80
    %v2962 = vpop.permute.xlu0 %2961
    %2963 = vrot.lane.b32.xlu0 %v690, 80
    %v2964 = vpop.permute.xlu0 %2963
    %v2965 = vsel %vm2866, %v2954, %v2956
    %v2966 = vsel %vm2866, %v2956, %v2958
    %v2967 = vsel %vm2866, %v2960, %v2962
    %v2968 = vsel %vm2866, %v2962, %v2964
    %v2971 = vsel %vm187, %v2967, 0
    %v2973 = vsel %vm187, %v2968, 0
    %2975 = vmatprep.subr.mxu0 0.0
    %2976 = vmatpush1.msra.mxu0 0.0
    %2977 = vmatprep.subr.mxu0 0.0
    %2978 = vmatpush1.msra.mxu0 0.0
    %2979 = vmatprep.subr.mxu0 0.0
    %2980 = vmatpush1.msra.mxu0 0.0
    %2981 = vmatprep.subr.mxu0 0.0
    %2982 = vmatpush1.msra.mxu0 0.0
    %2983 = vmatprep.subr.mxu0 0.0
    %2984 = vmatpush1.msra.mxu0 0.0
    %2985 = vmatprep.subr.mxu0 0.0
    %2986 = vmatpush1.msra.mxu0 0.0
    %2987 = vmatprep.subr.mxu0 0.0
    %2988 = vmatpush1.msra.mxu0 0.0
    %2989 = vmatprep.subr.mxu0 0.0
    %2990 = vmatpush1.msra.mxu0 0.0
    %2991 = vmatprep.subr.mxu0 0.0
    %2992 = vmatpush1.msra.mxu0 0.0
    %2993 = vmatprep.subr.mxu0 0.0
    %2994 = vmatpush1.msra.mxu0 0.0
    %2995 = vmatprep.subr.mxu0 0.0
    %2996 = vmatpush1.msra.mxu0 0.0
    %2997 = vmatprep.subr.mxu0 0.0
    %2998 = vmatpush1.msra.mxu0 0.0
    %2999 = vmatprep.subr.mxu0 0.0
    %3000 = vmatpush1.msra.mxu0 0.0
    %3001 = vmatprep.subr.mxu0 0.0
    %3002 = vmatpush1.msra.mxu0 0.0
    %3003 = vmatprep.subr.mxu0 %v2973
    %3004 = vmatpush1.msra.mxu0 %v2971
    %3005 = vmatprep.subr.mxu0 %v2966
    %3006 = vmatpush1.msra.mxu0 %v2965
    %3007 = vmatprep.subr.mxu0 0.0
    %3008 = vmatpush2.msra.mxu0 0.0
    %3009 = vmatprep.subr.mxu0 0.0
    %3010 = vmatpush2.msra.mxu0 0.0
    %3011 = vmatprep.subr.mxu0 0.0
    %3012 = vmatpush2.msra.mxu0 0.0
    %3013 = vmatprep.subr.mxu0 0.0
    %3014 = vmatpush2.msra.mxu0 0.0
    %3015 = vmatprep.subr.mxu0 0.0
    %3016 = vmatpush2.msra.mxu0 0.0
    %3017 = vmatprep.subr.mxu0 0.0
    %3018 = vmatpush2.msra.mxu0 0.0
    %3019 = vmatprep.subr.mxu0 0.0
    %3020 = vmatpush2.msra.mxu0 0.0
    %3021 = vmatprep.subr.mxu0 0.0
    %3022 = vmatpush2.msra.mxu0 0.0
    %3023 = vmatprep.subr.mxu0 0.0
    %3024 = vmatpush2.msra.mxu0 0.0
    %3025 = vmatprep.subr.mxu0 0.0
    %3026 = vmatpush2.msra.mxu0 0.0
    %3027 = vmatprep.subr.mxu0 0.0
    %3028 = vmatpush2.msra.mxu0 0.0
    %3029 = vmatprep.subr.mxu0 0.0
    %3030 = vmatpush2.msra.mxu0 0.0
    %3031 = vmatprep.subr.mxu0 0.0
    %3032 = vmatpush2.msra.mxu0 0.0
    %3033 = vmatprep.subr.mxu0 0.0
    %3034 = vmatpush2.msra.mxu0 0.0
    %3035 = vmatprep.subr.mxu0 0.0
    %3036 = vmatpush2.msra.mxu0 0.0
    %3037 = vmatprep.subr.mxu0 0.0
    %3038 = vmatpush2.msra.mxu0 0.0
    %3039 = vmatprep.mubr.f32.mxu0 0.0
    %3040 = vmatmul.mubr.f32.gmra.mxu0 %v2874
    %v3041 = vpop.f32.mrf.mxu0
    %v3042 = vadd.f32 0.0, %v3041
    %v3043 = vpop.f32.mrf.mxu0
    %v3044 = vadd.f32 0.0, %v3043
    %3045 = vdwg.mxu0
    %v3046 = vadd.f32 %v2852, %v3042
    %v3047 = vadd.f32 %v2853, %v3044
    %3048 = vrot.lane.b32.xlu0 %v793, 49
    %v3049 = vpop.permute.xlu0 %3048
    %v3050 = vrot.slane %v3049, 4
    %vm3051 = vcmask 400384
    %v3052 = vsel %vm3051, %v3050, %v3049
    %vm3053 = vcmp.ne.s16.totalorder %v3052, 0
    %vm3054 = vcmp.ne.s16.totalorder %v3050, 0
    %v3055 = vsel %vm3053, %v43, 0
    %v3056 = vsel %vm3054, %v44, 0
    %v3057 = vsel %vm3053, %v45, 0
    %v3058 = vsel %vm3054, %v46, 0
    %v3059 = vunpack.c.l.bf16 %v3055
    %v3060 = vunpack.c.h.bf16 %v3055
    %v3061 = vunpack.c.l.bf16 %v3056
    %v3062 = vunpack.c.l.bf16 %v3057
    %v3063 = vunpack.c.h.bf16 %v3057
    %v3064 = vunpack.c.l.bf16 %v3058
    %3071 = vrot.lane.b32.xlu0 %v3059, 79
    %v3072 = vpop.permute.xlu0 %3071
    %3073 = vrot.lane.b32.xlu0 %v3060, 79
    %v3074 = vpop.permute.xlu0 %3073
    %3075 = vrot.lane.b32.xlu0 %v3061, 79
    %v3076 = vpop.permute.xlu0 %3075
    %3077 = vrot.lane.b32.xlu0 %v3062, 79
    %v3078 = vpop.permute.xlu0 %3077
    %3079 = vrot.lane.b32.xlu0 %v3063, 79
    %v3080 = vpop.permute.xlu0 %3079
    %3081 = vrot.lane.b32.xlu0 %v3064, 79
    %v3082 = vpop.permute.xlu0 %3081
    %vm3083 = vcmask 646144
    %v3084 = vsel %vm3083, %v3072, %v3074
    %v3085 = vsel %vm3083, %v3074, %v3076
    %v3086 = vsel %vm3083, %v3078, %v3080
    %v3087 = vsel %vm3083, %v3080, %v3082
    %v3091 = vsel %vm183, %v31, 0
    %v3093 = vsel %vm187, %v3086, 0
    %v3095 = vsel %vm187, %v3087, 0
    %3097 = vmatprep.subr.mxu0 0.0
    %3098 = vmatpush1.msra.mxu0 0.0
    %3099 = vmatprep.subr.mxu0 0.0
    %3100 = vmatpush1.msra.mxu0 0.0
    %3101 = vmatprep.subr.mxu0 0.0
    %3102 = vmatpush1.msra.mxu0 0.0
    %3103 = vmatprep.subr.mxu0 0.0
    %3104 = vmatpush1.msra.mxu0 0.0
    %3105 = vmatprep.subr.mxu0 0.0
    %3106 = vmatpush1.msra.mxu0 0.0
    %3107 = vmatprep.subr.mxu0 0.0
    %3108 = vmatpush1.msra.mxu0 0.0
    %3109 = vmatprep.subr.mxu0 0.0
    %3110 = vmatpush1.msra.mxu0 0.0
    %3111 = vmatprep.subr.mxu0 0.0
    %3112 = vmatpush1.msra.mxu0 0.0
    %3113 = vmatprep.subr.mxu0 0.0
    %3114 = vmatpush1.msra.mxu0 0.0
    %3115 = vmatprep.subr.mxu0 0.0
    %3116 = vmatpush1.msra.mxu0 0.0
    %3117 = vmatprep.subr.mxu0 0.0
    %3118 = vmatpush1.msra.mxu0 0.0
    %3119 = vmatprep.subr.mxu0 0.0
    %3120 = vmatpush1.msra.mxu0 0.0
    %3121 = vmatprep.subr.mxu0 0.0
    %3122 = vmatpush1.msra.mxu0 0.0
    %3123 = vmatprep.subr.mxu0 0.0
    %3124 = vmatpush1.msra.mxu0 0.0
    %3125 = vmatprep.subr.mxu0 %v3095
    %3126 = vmatpush1.msra.mxu0 %v3093
    %3127 = vmatprep.subr.mxu0 %v3085
    %3128 = vmatpush1.msra.mxu0 %v3084
    %3129 = vmatprep.subr.mxu0 0.0
    %3130 = vmatpush2.msra.mxu0 0.0
    %3131 = vmatprep.subr.mxu0 0.0
    %3132 = vmatpush2.msra.mxu0 0.0
    %3133 = vmatprep.subr.mxu0 0.0
    %3134 = vmatpush2.msra.mxu0 0.0
    %3135 = vmatprep.subr.mxu0 0.0
    %3136 = vmatpush2.msra.mxu0 0.0
    %3137 = vmatprep.subr.mxu0 0.0
    %3138 = vmatpush2.msra.mxu0 0.0
    %3139 = vmatprep.subr.mxu0 0.0
    %3140 = vmatpush2.msra.mxu0 0.0
    %3141 = vmatprep.subr.mxu0 0.0
    %3142 = vmatpush2.msra.mxu0 0.0
    %3143 = vmatprep.subr.mxu0 0.0
    %3144 = vmatpush2.msra.mxu0 0.0
    %3145 = vmatprep.subr.mxu0 0.0
    %3146 = vmatpush2.msra.mxu0 0.0
    %3147 = vmatprep.subr.mxu0 0.0
    %3148 = vmatpush2.msra.mxu0 0.0
    %3149 = vmatprep.subr.mxu0 0.0
    %3150 = vmatpush2.msra.mxu0 0.0
    %3151 = vmatprep.subr.mxu0 0.0
    %3152 = vmatpush2.msra.mxu0 0.0
    %3153 = vmatprep.subr.mxu0 0.0
    %3154 = vmatpush2.msra.mxu0 0.0
    %3155 = vmatprep.subr.mxu0 0.0
    %3156 = vmatpush2.msra.mxu0 0.0
    %3157 = vmatprep.subr.mxu0 0.0
    %3158 = vmatpush2.msra.mxu0 0.0
    %3159 = vmatprep.subr.mxu0 0.0
    %3160 = vmatpush2.msra.mxu0 0.0
    %3161 = vmatprep.mubr.f32.mxu0 0.0
    %3162 = vmatmul.mubr.f32.gmra.mxu0 %v3091
    %v3163 = vpop.f32.mrf.mxu0
    %v3164 = vadd.f32 0.0, %v3163
    %v3165 = vpop.f32.mrf.mxu0
    %v3166 = vadd.f32 0.0, %v3165
    %3167 = vdwg.mxu0
    %v3168 = vadd.f32 %v2951, %v3164
    %v3169 = vadd.f32 %v2952, %v3166
    %v3170 = vsel %vm3053, %v47, 0
    %v3171 = vsel %vm3054, %v48, 0
    %v3172 = vsel %vm3053, %v49, 0
    %v3173 = vsel %vm3054, %v50, 0
    %v3174 = vunpack.c.l.bf16 %v3170
    %v3175 = vunpack.c.h.bf16 %v3170
    %v3176 = vunpack.c.l.bf16 %v3171
    %v3177 = vunpack.c.l.bf16 %v3172
    %v3178 = vunpack.c.h.bf16 %v3172
    %v3179 = vunpack.c.l.bf16 %v3173
    %3186 = vrot.lane.b32.xlu0 %v3174, 79
    %v3187 = vpop.permute.xlu0 %3186
    %3188 = vrot.lane.b32.xlu0 %v3175, 79
    %v3189 = vpop.permute.xlu0 %3188
    %3190 = vrot.lane.b32.xlu0 %v3176, 79
    %v3191 = vpop.permute.xlu0 %3190
    %3192 = vrot.lane.b32.xlu0 %v3177, 79
    %v3193 = vpop.permute.xlu0 %3192
    %3194 = vrot.lane.b32.xlu0 %v3178, 79
    %v3195 = vpop.permute.xlu0 %3194
    %3196 = vrot.lane.b32.xlu0 %v3179, 79
    %v3197 = vpop.permute.xlu0 %3196
    %v3198 = vsel %vm3083, %v3187, %v3189
    %v3199 = vsel %vm3083, %v3189, %v3191
    %v3200 = vsel %vm3083, %v3193, %v3195
    %v3201 = vsel %vm3083, %v3195, %v3197
    %v3204 = vsel %vm187, %v3200, 0
    %v3206 = vsel %vm187, %v3201, 0
    %3208 = vmatprep.subr.mxu0 0.0
    %3209 = vmatpush1.msra.mxu0 0.0
    %3210 = vmatprep.subr.mxu0 0.0
    %3211 = vmatpush1.msra.mxu0 0.0
    %3212 = vmatprep.subr.mxu0 0.0
    %3213 = vmatpush1.msra.mxu0 0.0
    %3214 = vmatprep.subr.mxu0 0.0
    %3215 = vmatpush1.msra.mxu0 0.0
    %3216 = vmatprep.subr.mxu0 0.0
    %3217 = vmatpush1.msra.mxu0 0.0
    %3218 = vmatprep.subr.mxu0 0.0
    %3219 = vmatpush1.msra.mxu0 0.0
    %3220 = vmatprep.subr.mxu0 0.0
    %3221 = vmatpush1.msra.mxu0 0.0
    %3222 = vmatprep.subr.mxu0 0.0
    %3223 = vmatpush1.msra.mxu0 0.0
    %3224 = vmatprep.subr.mxu0 0.0
    %3225 = vmatpush1.msra.mxu0 0.0
    %3226 = vmatprep.subr.mxu0 0.0
    %3227 = vmatpush1.msra.mxu0 0.0
    %3228 = vmatprep.subr.mxu0 0.0
    %3229 = vmatpush1.msra.mxu0 0.0
    %3230 = vmatprep.subr.mxu0 0.0
    %3231 = vmatpush1.msra.mxu0 0.0
    %3232 = vmatprep.subr.mxu0 0.0
    %3233 = vmatpush1.msra.mxu0 0.0
    %3234 = vmatprep.subr.mxu0 0.0
    %3235 = vmatpush1.msra.mxu0 0.0
    %3236 = vmatprep.subr.mxu0 %v3206
    %3237 = vmatpush1.msra.mxu0 %v3204
    %3238 = vmatprep.subr.mxu0 %v3199
    %3239 = vmatpush1.msra.mxu0 %v3198
    %3240 = vmatprep.subr.mxu0 0.0
    %3241 = vmatpush2.msra.mxu0 0.0
    %3242 = vmatprep.subr.mxu0 0.0
    %3243 = vmatpush2.msra.mxu0 0.0
    %3244 = vmatprep.subr.mxu0 0.0
    %3245 = vmatpush2.msra.mxu0 0.0
    %3246 = vmatprep.subr.mxu0 0.0
    %3247 = vmatpush2.msra.mxu0 0.0
    %3248 = vmatprep.subr.mxu0 0.0
    %3249 = vmatpush2.msra.mxu0 0.0
    %3250 = vmatprep.subr.mxu0 0.0
    %3251 = vmatpush2.msra.mxu0 0.0
    %3252 = vmatprep.subr.mxu0 0.0
    %3253 = vmatpush2.msra.mxu0 0.0
    %3254 = vmatprep.subr.mxu0 0.0
    %3255 = vmatpush2.msra.mxu0 0.0
    %3256 = vmatprep.subr.mxu0 0.0
    %3257 = vmatpush2.msra.mxu0 0.0
    %3258 = vmatprep.subr.mxu0 0.0
    %3259 = vmatpush2.msra.mxu0 0.0
    %3260 = vmatprep.subr.mxu0 0.0
    %3261 = vmatpush2.msra.mxu0 0.0
    %3262 = vmatprep.subr.mxu0 0.0
    %3263 = vmatpush2.msra.mxu0 0.0
    %3264 = vmatprep.subr.mxu0 0.0
    %3265 = vmatpush2.msra.mxu0 0.0
    %3266 = vmatprep.subr.mxu0 0.0
    %3267 = vmatpush2.msra.mxu0 0.0
    %3268 = vmatprep.subr.mxu0 0.0
    %3269 = vmatpush2.msra.mxu0 0.0
    %3270 = vmatprep.subr.mxu0 0.0
    %3271 = vmatpush2.msra.mxu0 0.0
    %3272 = vmatprep.mubr.f32.mxu0 0.0
    %3273 = vmatmul.mubr.f32.gmra.mxu0 %v3091
    %v3274 = vpop.f32.mrf.mxu0
    %v3275 = vadd.f32 0.0, %v3274
    %v3276 = vpop.f32.mrf.mxu0
    %v3277 = vadd.f32 0.0, %v3276
    %3278 = vdwg.mxu0
    %v3279 = vadd.f32 %v3046, %v3275
    %v3280 = vadd.f32 %v3047, %v3277
    %3281 = vrot.lane.b32.xlu0 %v1028, 50
    %v3282 = vpop.permute.xlu0 %3281
    %v3283 = vrot.slane %v3282, 4
    %vm3284 = vcmask 408576
    %v3285 = vsel %vm3284, %v3283, %v3282
    %vm3286 = vcmp.ne.s16.totalorder %v3285, 0
    %vm3287 = vcmp.ne.s16.totalorder %v3283, 0
    %v3288 = vsel %vm3286, %v43, 0
    %v3289 = vsel %vm3287, %v44, 0
    %v3290 = vsel %vm3286, %v45, 0
    %v3291 = vsel %vm3287, %v46, 0
    %v3292 = vunpack.c.l.bf16 %v3288
    %v3293 = vunpack.c.h.bf16 %v3288
    %v3294 = vunpack.c.l.bf16 %v3289
    %v3295 = vunpack.c.l.bf16 %v3290
    %v3296 = vunpack.c.h.bf16 %v3290
    %v3297 = vunpack.c.l.bf16 %v3291
    %3304 = vrot.lane.b32.xlu0 %v3292, 78
    %v3305 = vpop.permute.xlu0 %3304
    %3306 = vrot.lane.b32.xlu0 %v3293, 78
    %v3307 = vpop.permute.xlu0 %3306
    %3308 = vrot.lane.b32.xlu0 %v3294, 78
    %v3309 = vpop.permute.xlu0 %3308
    %3310 = vrot.lane.b32.xlu0 %v3295, 78
    %v3311 = vpop.permute.xlu0 %3310
    %3312 = vrot.lane.b32.xlu0 %v3296, 78
    %v3313 = vpop.permute.xlu0 %3312
    %3314 = vrot.lane.b32.xlu0 %v3297, 78
    %v3315 = vpop.permute.xlu0 %3314
    %vm3316 = vcmask 637952
    %v3317 = vsel %vm3316, %v3305, %v3307
    %v3318 = vsel %vm3316, %v3307, %v3309
    %v3319 = vsel %vm3316, %v3311, %v3313
    %v3320 = vsel %vm3316, %v3313, %v3315
    %v3324 = vsel %vm183, %v32, 0
    %v3326 = vsel %vm187, %v3319, 0
    %v3328 = vsel %vm187, %v3320, 0
    %3330 = vmatprep.subr.mxu0 0.0
    %3331 = vmatpush1.msra.mxu0 0.0
    %3332 = vmatprep.subr.mxu0 0.0
    %3333 = vmatpush1.msra.mxu0 0.0
    %3334 = vmatprep.subr.mxu0 0.0
    %3335 = vmatpush1.msra.mxu0 0.0
    %3336 = vmatprep.subr.mxu0 0.0
    %3337 = vmatpush1.msra.mxu0 0.0
    %3338 = vmatprep.subr.mxu0 0.0
    %3339 = vmatpush1.msra.mxu0 0.0
    %3340 = vmatprep.subr.mxu0 0.0
    %3341 = vmatpush1.msra.mxu0 0.0
    %3342 = vmatprep.subr.mxu0 0.0
    %3343 = vmatpush1.msra.mxu0 0.0
    %3344 = vmatprep.subr.mxu0 0.0
    %3345 = vmatpush1.msra.mxu0 0.0
    %3346 = vmatprep.subr.mxu0 0.0
    %3347 = vmatpush1.msra.mxu0 0.0
    %3348 = vmatprep.subr.mxu0 0.0
    %3349 = vmatpush1.msra.mxu0 0.0
    %3350 = vmatprep.subr.mxu0 0.0
    %3351 = vmatpush1.msra.mxu0 0.0
    %3352 = vmatprep.subr.mxu0 0.0
    %3353 = vmatpush1.msra.mxu0 0.0
    %3354 = vmatprep.subr.mxu0 0.0
    %3355 = vmatpush1.msra.mxu0 0.0
    %3356 = vmatprep.subr.mxu0 0.0
    %3357 = vmatpush1.msra.mxu0 0.0
    %3358 = vmatprep.subr.mxu0 %v3328
    %3359 = vmatpush1.msra.mxu0 %v3326
    %3360 = vmatprep.subr.mxu0 %v3318
    %3361 = vmatpush1.msra.mxu0 %v3317
    %3362 = vmatprep.subr.mxu0 0.0
    %3363 = vmatpush2.msra.mxu0 0.0
    %3364 = vmatprep.subr.mxu0 0.0
    %3365 = vmatpush2.msra.mxu0 0.0
    %3366 = vmatprep.subr.mxu0 0.0
    %3367 = vmatpush2.msra.mxu0 0.0
    %3368 = vmatprep.subr.mxu0 0.0
    %3369 = vmatpush2.msra.mxu0 0.0
    %3370 = vmatprep.subr.mxu0 0.0
    %3371 = vmatpush2.msra.mxu0 0.0
    %3372 = vmatprep.subr.mxu0 0.0
    %3373 = vmatpush2.msra.mxu0 0.0
    %3374 = vmatprep.subr.mxu0 0.0
    %3375 = vmatpush2.msra.mxu0 0.0
    %3376 = vmatprep.subr.mxu0 0.0
    %3377 = vmatpush2.msra.mxu0 0.0
    %3378 = vmatprep.subr.mxu0 0.0
    %3379 = vmatpush2.msra.mxu0 0.0
    %3380 = vmatprep.subr.mxu0 0.0
    %3381 = vmatpush2.msra.mxu0 0.0
    %3382 = vmatprep.subr.mxu0 0.0
    %3383 = vmatpush2.msra.mxu0 0.0
    %3384 = vmatprep.subr.mxu0 0.0
    %3385 = vmatpush2.msra.mxu0 0.0
    %3386 = vmatprep.subr.mxu0 0.0
    %3387 = vmatpush2.msra.mxu0 0.0
    %3388 = vmatprep.subr.mxu0 0.0
    %3389 = vmatpush2.msra.mxu0 0.0
    %3390 = vmatprep.subr.mxu0 0.0
    %3391 = vmatpush2.msra.mxu0 0.0
    %3392 = vmatprep.subr.mxu0 0.0
    %3393 = vmatpush2.msra.mxu0 0.0
    %3394 = vmatprep.mubr.f32.mxu0 0.0
    %3395 = vmatmul.mubr.f32.gmra.mxu0 %v3324
    %v3396 = vpop.f32.mrf.mxu0
    %v3397 = vadd.f32 0.0, %v3396
    %v3398 = vpop.f32.mrf.mxu0
    %v3399 = vadd.f32 0.0, %v3398
    %3400 = vdwg.mxu0
    %v3401 = vadd.f32 %v3168, %v3397
    %v3402 = vadd.f32 %v3169, %v3399
    %v3403 = vsel %vm3286, %v47, 0
    %v3404 = vsel %vm3287, %v48, 0
    %v3405 = vsel %vm3286, %v49, 0
    %v3406 = vsel %vm3287, %v50, 0
    %v3407 = vunpack.c.l.bf16 %v3403
    %v3408 = vunpack.c.h.bf16 %v3403
    %v3409 = vunpack.c.l.bf16 %v3404
    %v3410 = vunpack.c.l.bf16 %v3405
    %v3411 = vunpack.c.h.bf16 %v3405
    %v3412 = vunpack.c.l.bf16 %v3406
    %3419 = vrot.lane.b32.xlu0 %v3407, 78
    %v3420 = vpop.permute.xlu0 %3419
    %3421 = vrot.lane.b32.xlu0 %v3408, 78
    %v3422 = vpop.permute.xlu0 %3421
    %3423 = vrot.lane.b32.xlu0 %v3409, 78
    %v3424 = vpop.permute.xlu0 %3423
    %3425 = vrot.lane.b32.xlu0 %v3410, 78
    %v3426 = vpop.permute.xlu0 %3425
    %3427 = vrot.lane.b32.xlu0 %v3411, 78
    %v3428 = vpop.permute.xlu0 %3427
    %3429 = vrot.lane.b32.xlu0 %v3412, 78
    %v3430 = vpop.permute.xlu0 %3429
    %v3431 = vsel %vm3316, %v3420, %v3422
    %v3432 = vsel %vm3316, %v3422, %v3424
    %v3433 = vsel %vm3316, %v3426, %v3428
    %v3434 = vsel %vm3316, %v3428, %v3430
    %v3437 = vsel %vm187, %v3433, 0
    %v3439 = vsel %vm187, %v3434, 0
    %3441 = vmatprep.subr.mxu0 0.0
    %3442 = vmatpush1.msra.mxu0 0.0
    %3443 = vmatprep.subr.mxu0 0.0
    %3444 = vmatpush1.msra.mxu0 0.0
    %3445 = vmatprep.subr.mxu0 0.0
    %3446 = vmatpush1.msra.mxu0 0.0
    %3447 = vmatprep.subr.mxu0 0.0
    %3448 = vmatpush1.msra.mxu0 0.0
    %3449 = vmatprep.subr.mxu0 0.0
    %3450 = vmatpush1.msra.mxu0 0.0
    %3451 = vmatprep.subr.mxu0 0.0
    %3452 = vmatpush1.msra.mxu0 0.0
    %3453 = vmatprep.subr.mxu0 0.0
    %3454 = vmatpush1.msra.mxu0 0.0
    %3455 = vmatprep.subr.mxu0 0.0
    %3456 = vmatpush1.msra.mxu0 0.0
    %3457 = vmatprep.subr.mxu0 0.0
    %3458 = vmatpush1.msra.mxu0 0.0
    %3459 = vmatprep.subr.mxu0 0.0
    %3460 = vmatpush1.msra.mxu0 0.0
    %3461 = vmatprep.subr.mxu0 0.0
    %3462 = vmatpush1.msra.mxu0 0.0
    %3463 = vmatprep.subr.mxu0 0.0
    %3464 = vmatpush1.msra.mxu0 0.0
    %3465 = vmatprep.subr.mxu0 0.0
    %3466 = vmatpush1.msra.mxu0 0.0
    %3467 = vmatprep.subr.mxu0 0.0
    %3468 = vmatpush1.msra.mxu0 0.0
    %3469 = vmatprep.subr.mxu0 %v3439
    %3470 = vmatpush1.msra.mxu0 %v3437
    %3471 = vmatprep.subr.mxu0 %v3432
    %3472 = vmatpush1.msra.mxu0 %v3431
    %3473 = vmatprep.subr.mxu0 0.0
    %3474 = vmatpush2.msra.mxu0 0.0
    %3475 = vmatprep.subr.mxu0 0.0
    %3476 = vmatpush2.msra.mxu0 0.0
    %3477 = vmatprep.subr.mxu0 0.0
    %3478 = vmatpush2.msra.mxu0 0.0
    %3479 = vmatprep.subr.mxu0 0.0
    %3480 = vmatpush2.msra.mxu0 0.0
    %3481 = vmatprep.subr.mxu0 0.0
    %3482 = vmatpush2.msra.mxu0 0.0
    %3483 = vmatprep.subr.mxu0 0.0
    %3484 = vmatpush2.msra.mxu0 0.0
    %3485 = vmatprep.subr.mxu0 0.0
    %3486 = vmatpush2.msra.mxu0 0.0
    %3487 = vmatprep.subr.mxu0 0.0
    %3488 = vmatpush2.msra.mxu0 0.0
    %3489 = vmatprep.subr.mxu0 0.0
    %3490 = vmatpush2.msra.mxu0 0.0
    %3491 = vmatprep.subr.mxu0 0.0
    %3492 = vmatpush2.msra.mxu0 0.0
    %3493 = vmatprep.subr.mxu0 0.0
    %3494 = vmatpush2.msra.mxu0 0.0
    %3495 = vmatprep.subr.mxu0 0.0
    %3496 = vmatpush2.msra.mxu0 0.0
    %3497 = vmatprep.subr.mxu0 0.0
    %3498 = vmatpush2.msra.mxu0 0.0
    %3499 = vmatprep.subr.mxu0 0.0
    %3500 = vmatpush2.msra.mxu0 0.0
    %3501 = vmatprep.subr.mxu0 0.0
    %3502 = vmatpush2.msra.mxu0 0.0
    %3503 = vmatprep.subr.mxu0 0.0
    %3504 = vmatpush2.msra.mxu0 0.0
    %3505 = vmatprep.mubr.f32.mxu0 0.0
    %3506 = vmatmul.mubr.f32.gmra.mxu0 %v3324
    %v3507 = vpop.f32.mrf.mxu0
    %v3508 = vadd.f32 0.0, %v3507
    %v3509 = vpop.f32.mrf.mxu0
    %v3510 = vadd.f32 0.0, %v3509
    %3511 = vdwg.mxu0
    %v3512 = vadd.f32 %v3279, %v3508
    %v3513 = vadd.f32 %v3280, %v3510
    %3514 = vrot.lane.b32.xlu0 %v111, 62
    %v3515 = vpop.permute.xlu0 %3514
    %v3516 = vrot.slane %v3515, 4
    %vm3517 = vcmask 506880
    %v3518 = vsel %vm3517, %v3516, %v3515
    %vm3519 = vcmp.ne.s16.totalorder %v3518, 0
    %vm3520 = vcmp.ne.s16.totalorder %v3516, 0
    %v3521 = vsel %vm3519, %v43, 0
    %v3522 = vsel %vm3520, %v44, 0
    %v3523 = vsel %vm3519, %v45, 0
    %v3524 = vsel %vm3520, %v46, 0
    %v3525 = vunpack.c.l.bf16 %v3521
    %v3526 = vunpack.c.h.bf16 %v3521
    %v3527 = vunpack.c.l.bf16 %v3522
    %v3528 = vunpack.c.l.bf16 %v3523
    %v3529 = vunpack.c.h.bf16 %v3523
    %v3530 = vunpack.c.l.bf16 %v3524
    %3537 = vrot.lane.b32.xlu0 %v3525, 66
    %v3538 = vpop.permute.xlu0 %3537
    %3539 = vrot.lane.b32.xlu0 %v3526, 66
    %v3540 = vpop.permute.xlu0 %3539
    %3541 = vrot.lane.b32.xlu0 %v3527, 66
    %v3542 = vpop.permute.xlu0 %3541
    %3543 = vrot.lane.b32.xlu0 %v3528, 66
    %v3544 = vpop.permute.xlu0 %3543
    %3545 = vrot.lane.b32.xlu0 %v3529, 66
    %v3546 = vpop.permute.xlu0 %3545
    %3547 = vrot.lane.b32.xlu0 %v3530, 66
    %v3548 = vpop.permute.xlu0 %3547
    %vm3549 = vcmask 539648
    %v3550 = vsel %vm3549, %v3538, %v3540
    %v3551 = vsel %vm3549, %v3540, %v3542
    %v3552 = vsel %vm3549, %v3544, %v3546
    %v3553 = vsel %vm3549, %v3546, %v3548
    %v3557 = vsel %vm183, %v33, 0
    %v3559 = vsel %vm187, %v3552, 0
    %v3561 = vsel %vm187, %v3553, 0
    %3563 = vmatprep.subr.mxu0 0.0
    %3564 = vmatpush1.msra.mxu0 0.0
    %3565 = vmatprep.subr.mxu0 0.0
    %3566 = vmatpush1.msra.mxu0 0.0
    %3567 = vmatprep.subr.mxu0 0.0
    %3568 = vmatpush1.msra.mxu0 0.0
    %3569 = vmatprep.subr.mxu0 0.0
    %3570 = vmatpush1.msra.mxu0 0.0
    %3571 = vmatprep.subr.mxu0 0.0
    %3572 = vmatpush1.msra.mxu0 0.0
    %3573 = vmatprep.subr.mxu0 0.0
    %3574 = vmatpush1.msra.mxu0 0.0
    %3575 = vmatprep.subr.mxu0 0.0
    %3576 = vmatpush1.msra.mxu0 0.0
    %3577 = vmatprep.subr.mxu0 0.0
    %3578 = vmatpush1.msra.mxu0 0.0
    %3579 = vmatprep.subr.mxu0 0.0
    %3580 = vmatpush1.msra.mxu0 0.0
    %3581 = vmatprep.subr.mxu0 0.0
    %3582 = vmatpush1.msra.mxu0 0.0
    %3583 = vmatprep.subr.mxu0 0.0
    %3584 = vmatpush1.msra.mxu0 0.0
    %3585 = vmatprep.subr.mxu0 0.0
    %3586 = vmatpush1.msra.mxu0 0.0
    %3587 = vmatprep.subr.mxu0 0.0
    %3588 = vmatpush1.msra.mxu0 0.0
    %3589 = vmatprep.subr.mxu0 0.0
    %3590 = vmatpush1.msra.mxu0 0.0
    %3591 = vmatprep.subr.mxu0 %v3561
    %3592 = vmatpush1.msra.mxu0 %v3559
    %3593 = vmatprep.subr.mxu0 %v3551
    %3594 = vmatpush1.msra.mxu0 %v3550
    %3595 = vmatprep.subr.mxu0 0.0
    %3596 = vmatpush2.msra.mxu0 0.0
    %3597 = vmatprep.subr.mxu0 0.0
    %3598 = vmatpush2.msra.mxu0 0.0
    %3599 = vmatprep.subr.mxu0 0.0
    %3600 = vmatpush2.msra.mxu0 0.0
    %3601 = vmatprep.subr.mxu0 0.0
    %3602 = vmatpush2.msra.mxu0 0.0
    %3603 = vmatprep.subr.mxu0 0.0
    %3604 = vmatpush2.msra.mxu0 0.0
    %3605 = vmatprep.subr.mxu0 0.0
    %3606 = vmatpush2.msra.mxu0 0.0
    %3607 = vmatprep.subr.mxu0 0.0
    %3608 = vmatpush2.msra.mxu0 0.0
    %3609 = vmatprep.subr.mxu0 0.0
    %3610 = vmatpush2.msra.mxu0 0.0
    %3611 = vmatprep.subr.mxu0 0.0
    %3612 = vmatpush2.msra.mxu0 0.0
    %3613 = vmatprep.subr.mxu0 0.0
    %3614 = vmatpush2.msra.mxu0 0.0
    %3615 = vmatprep.subr.mxu0 0.0
    %3616 = vmatpush2.msra.mxu0 0.0
    %3617 = vmatprep.subr.mxu0 0.0
    %3618 = vmatpush2.msra.mxu0 0.0
    %3619 = vmatprep.subr.mxu0 0.0
    %3620 = vmatpush2.msra.mxu0 0.0
    %3621 = vmatprep.subr.mxu0 0.0
    %3622 = vmatpush2.msra.mxu0 0.0
    %3623 = vmatprep.subr.mxu0 0.0
    %3624 = vmatpush2.msra.mxu0 0.0
    %3625 = vmatprep.subr.mxu0 0.0
    %3626 = vmatpush2.msra.mxu0 0.0
    %3627 = vmatprep.mubr.f32.mxu0 0.0
    %3628 = vmatmul.mubr.f32.gmra.mxu0 %v3557
    %v3629 = vpop.f32.mrf.mxu0
    %v3630 = vadd.f32 0.0, %v3629
    %v3631 = vpop.f32.mrf.mxu0
    %v3632 = vadd.f32 0.0, %v3631
    %3633 = vdwg.mxu0
    %v3634 = vadd.f32 %v3401, %v3630
    %v3635 = vadd.f32 %v3402, %v3632
    %v3636 = vsel %vm3519, %v47, 0
    %v3637 = vsel %vm3520, %v48, 0
    %v3638 = vsel %vm3519, %v49, 0
    %v3639 = vsel %vm3520, %v50, 0
    %v3640 = vunpack.c.l.bf16 %v3636
    %v3641 = vunpack.c.h.bf16 %v3636
    %v3642 = vunpack.c.l.bf16 %v3637
    %v3643 = vunpack.c.l.bf16 %v3638
    %v3644 = vunpack.c.h.bf16 %v3638
    %v3645 = vunpack.c.l.bf16 %v3639
    %3652 = vrot.lane.b32.xlu0 %v3640, 66
    %v3653 = vpop.permute.xlu0 %3652
    %3654 = vrot.lane.b32.xlu0 %v3641, 66
    %v3655 = vpop.permute.xlu0 %3654
    %3656 = vrot.lane.b32.xlu0 %v3642, 66
    %v3657 = vpop.permute.xlu0 %3656
    %3658 = vrot.lane.b32.xlu0 %v3643, 66
    %v3659 = vpop.permute.xlu0 %3658
    %3660 = vrot.lane.b32.xlu0 %v3644, 66
    %v3661 = vpop.permute.xlu0 %3660
    %3662 = vrot.lane.b32.xlu0 %v3645, 66
    %v3663 = vpop.permute.xlu0 %3662
    %v3664 = vsel %vm3549, %v3653, %v3655
    %v3665 = vsel %vm3549, %v3655, %v3657
    %v3666 = vsel %vm3549, %v3659, %v3661
    %v3667 = vsel %vm3549, %v3661, %v3663
    %v3670 = vsel %vm187, %v3666, 0
    %v3672 = vsel %vm187, %v3667, 0
    %3674 = vmatprep.subr.mxu0 0.0
    %3675 = vmatpush1.msra.mxu0 0.0
    %3676 = vmatprep.subr.mxu0 0.0
    %3677 = vmatpush1.msra.mxu0 0.0
    %3678 = vmatprep.subr.mxu0 0.0
    %3679 = vmatpush1.msra.mxu0 0.0
    %3680 = vmatprep.subr.mxu0 0.0
    %3681 = vmatpush1.msra.mxu0 0.0
    %3682 = vmatprep.subr.mxu0 0.0
    %3683 = vmatpush1.msra.mxu0 0.0
    %3684 = vmatprep.subr.mxu0 0.0
    %3685 = vmatpush1.msra.mxu0 0.0
    %3686 = vmatprep.subr.mxu0 0.0
    %3687 = vmatpush1.msra.mxu0 0.0
    %3688 = vmatprep.subr.mxu0 0.0
    %3689 = vmatpush1.msra.mxu0 0.0
    %3690 = vmatprep.subr.mxu0 0.0
    %3691 = vmatpush1.msra.mxu0 0.0
    %3692 = vmatprep.subr.mxu0 0.0
    %3693 = vmatpush1.msra.mxu0 0.0
    %3694 = vmatprep.subr.mxu0 0.0
    %3695 = vmatpush1.msra.mxu0 0.0
    %3696 = vmatprep.subr.mxu0 0.0
    %3697 = vmatpush1.msra.mxu0 0.0
    %3698 = vmatprep.subr.mxu0 0.0
    %3699 = vmatpush1.msra.mxu0 0.0
    %3700 = vmatprep.subr.mxu0 0.0
    %3701 = vmatpush1.msra.mxu0 0.0
    %3702 = vmatprep.subr.mxu0 %v3672
    %3703 = vmatpush1.msra.mxu0 %v3670
    %3704 = vmatprep.subr.mxu0 %v3665
    %3705 = vmatpush1.msra.mxu0 %v3664
    %3706 = vmatprep.subr.mxu0 0.0
    %3707 = vmatpush2.msra.mxu0 0.0
    %3708 = vmatprep.subr.mxu0 0.0
    %3709 = vmatpush2.msra.mxu0 0.0
    %3710 = vmatprep.subr.mxu0 0.0
    %3711 = vmatpush2.msra.mxu0 0.0
    %3712 = vmatprep.subr.mxu0 0.0
    %3713 = vmatpush2.msra.mxu0 0.0
    %3714 = vmatprep.subr.mxu0 0.0
    %3715 = vmatpush2.msra.mxu0 0.0
    %3716 = vmatprep.subr.mxu0 0.0
    %3717 = vmatpush2.msra.mxu0 0.0
    %3718 = vmatprep.subr.mxu0 0.0
    %3719 = vmatpush2.msra.mxu0 0.0
    %3720 = vmatprep.subr.mxu0 0.0
    %3721 = vmatpush2.msra.mxu0 0.0
    %3722 = vmatprep.subr.mxu0 0.0
    %3723 = vmatpush2.msra.mxu0 0.0
    %3724 = vmatprep.subr.mxu0 0.0
    %3725 = vmatpush2.msra.mxu0 0.0
    %3726 = vmatprep.subr.mxu0 0.0
    %3727 = vmatpush2.msra.mxu0 0.0
    %3728 = vmatprep.subr.mxu0 0.0
    %3729 = vmatpush2.msra.mxu0 0.0
    %3730 = vmatprep.subr.mxu0 0.0
    %3731 = vmatpush2.msra.mxu0 0.0
    %3732 = vmatprep.subr.mxu0 0.0
    %3733 = vmatpush2.msra.mxu0 0.0
    %3734 = vmatprep.subr.mxu0 0.0
    %3735 = vmatpush2.msra.mxu0 0.0
    %3736 = vmatprep.subr.mxu0 0.0
    %3737 = vmatpush2.msra.mxu0 0.0
    %3738 = vmatprep.mubr.f32.mxu0 0.0
    %3739 = vmatmul.mubr.f32.gmra.mxu0 %v3557
    %v3740 = vpop.f32.mrf.mxu0
    %v3741 = vadd.f32 0.0, %v3740
    %v3742 = vpop.f32.mrf.mxu0
    %v3743 = vadd.f32 0.0, %v3742
    %3744 = vdwg.mxu0
    %v3745 = vadd.f32 %v3512, %v3741
    %v3746 = vadd.f32 %v3513, %v3743
    %3747 = vrot.lane.b32.xlu0 %v140, 63
    %v3748 = vpop.permute.xlu0 %3747
    %v3749 = vrot.slane %v3748, 4
    %vm3750 = vcmask 515072
    %v3751 = vsel %vm3750, %v3749, %v3748
    %vm3752 = vcmp.ne.s16.totalorder %v3751, 0
    %vm3753 = vcmp.ne.s16.totalorder %v3749, 0
    %v3754 = vsel %vm3752, %v43, 0
    %v3755 = vsel %vm3753, %v44, 0
    %v3756 = vsel %vm3752, %v45, 0
    %v3757 = vsel %vm3753, %v46, 0
    %v3758 = vunpack.c.l.bf16 %v3754
    %v3759 = vunpack.c.h.bf16 %v3754
    %v3760 = vunpack.c.l.bf16 %v3755
    %v3761 = vunpack.c.l.bf16 %v3756
    %v3762 = vunpack.c.h.bf16 %v3756
    %v3763 = vunpack.c.l.bf16 %v3757
    %3770 = vrot.lane.b32.xlu0 %v3758, 65
    %v3771 = vpop.permute.xlu0 %3770
    %3772 = vrot.lane.b32.xlu0 %v3759, 65
    %v3773 = vpop.permute.xlu0 %3772
    %3774 = vrot.lane.b32.xlu0 %v3760, 65
    %v3775 = vpop.permute.xlu0 %3774
    %3776 = vrot.lane.b32.xlu0 %v3761, 65
    %v3777 = vpop.permute.xlu0 %3776
    %3778 = vrot.lane.b32.xlu0 %v3762, 65
    %v3779 = vpop.permute.xlu0 %3778
    %3780 = vrot.lane.b32.xlu0 %v3763, 65
    %v3781 = vpop.permute.xlu0 %3780
    %vm3782 = vcmask 531456
    %v3783 = vsel %vm3782, %v3771, %v3773
    %v3784 = vsel %vm3782, %v3773, %v3775
    %v3785 = vsel %vm3782, %v3777, %v3779
    %v3786 = vsel %vm3782, %v3779, %v3781
    %v3790 = vsel %vm183, %v34, 0
    %v3792 = vsel %vm187, %v3785, 0
    %v3794 = vsel %vm187, %v3786, 0
    %3796 = vmatprep.subr.mxu0 0.0
    %3797 = vmatpush1.msra.mxu0 0.0
    %3798 = vmatprep.subr.mxu0 0.0
    %3799 = vmatpush1.msra.mxu0 0.0
    %3800 = vmatprep.subr.mxu0 0.0
    %3801 = vmatpush1.msra.mxu0 0.0
    %3802 = vmatprep.subr.mxu0 0.0
    %3803 = vmatpush1.msra.mxu0 0.0
    %3804 = vmatprep.subr.mxu0 0.0
    %3805 = vmatpush1.msra.mxu0 0.0
    %3806 = vmatprep.subr.mxu0 0.0
    %3807 = vmatpush1.msra.mxu0 0.0
    %3808 = vmatprep.subr.mxu0 0.0
    %3809 = vmatpush1.msra.mxu0 0.0
    %3810 = vmatprep.subr.mxu0 0.0
    %3811 = vmatpush1.msra.mxu0 0.0
    %3812 = vmatprep.subr.mxu0 0.0
    %3813 = vmatpush1.msra.mxu0 0.0
    %3814 = vmatprep.subr.mxu0 0.0
    %3815 = vmatpush1.msra.mxu0 0.0
    %3816 = vmatprep.subr.mxu0 0.0
    %3817 = vmatpush1.msra.mxu0 0.0
    %3818 = vmatprep.subr.mxu0 0.0
    %3819 = vmatpush1.msra.mxu0 0.0
    %3820 = vmatprep.subr.mxu0 0.0
    %3821 = vmatpush1.msra.mxu0 0.0
    %3822 = vmatprep.subr.mxu0 0.0
    %3823 = vmatpush1.msra.mxu0 0.0
    %3824 = vmatprep.subr.mxu0 %v3794
    %3825 = vmatpush1.msra.mxu0 %v3792
    %3826 = vmatprep.subr.mxu0 %v3784
    %3827 = vmatpush1.msra.mxu0 %v3783
    %3828 = vmatprep.subr.mxu0 0.0
    %3829 = vmatpush2.msra.mxu0 0.0
    %3830 = vmatprep.subr.mxu0 0.0
    %3831 = vmatpush2.msra.mxu0 0.0
    %3832 = vmatprep.subr.mxu0 0.0
    %3833 = vmatpush2.msra.mxu0 0.0
    %3834 = vmatprep.subr.mxu0 0.0
    %3835 = vmatpush2.msra.mxu0 0.0
    %3836 = vmatprep.subr.mxu0 0.0
    %3837 = vmatpush2.msra.mxu0 0.0
    %3838 = vmatprep.subr.mxu0 0.0
    %3839 = vmatpush2.msra.mxu0 0.0
    %3840 = vmatprep.subr.mxu0 0.0
    %3841 = vmatpush2.msra.mxu0 0.0
    %3842 = vmatprep.subr.mxu0 0.0
    %3843 = vmatpush2.msra.mxu0 0.0
    %3844 = vmatprep.subr.mxu0 0.0
    %3845 = vmatpush2.msra.mxu0 0.0
    %3846 = vmatprep.subr.mxu0 0.0
    %3847 = vmatpush2.msra.mxu0 0.0
    %3848 = vmatprep.subr.mxu0 0.0
    %3849 = vmatpush2.msra.mxu0 0.0
    %3850 = vmatprep.subr.mxu0 0.0
    %3851 = vmatpush2.msra.mxu0 0.0
    %3852 = vmatprep.subr.mxu0 0.0
    %3853 = vmatpush2.msra.mxu0 0.0
    %3854 = vmatprep.subr.mxu0 0.0
    %3855 = vmatpush2.msra.mxu0 0.0
    %3856 = vmatprep.subr.mxu0 0.0
    %3857 = vmatpush2.msra.mxu0 0.0
    %3858 = vmatprep.subr.mxu0 0.0
    %3859 = vmatpush2.msra.mxu0 0.0
    %3860 = vmatprep.mubr.f32.mxu0 0.0
    %3861 = vmatmul.mubr.f32.gmra.mxu0 %v3790
    %v3862 = vpop.f32.mrf.mxu0
    %v3863 = vadd.f32 0.0, %v3862
    %v3864 = vpop.f32.mrf.mxu0
    %v3865 = vadd.f32 0.0, %v3864
    %3866 = vdwg.mxu0
    %v3867 = vadd.f32 %v3634, %v3863
    %v3868 = vadd.f32 %v3635, %v3865
    %v3869 = vsel %vm3752, %v47, 0
    %v3870 = vsel %vm3753, %v48, 0
    %v3871 = vsel %vm3752, %v49, 0
    %v3872 = vsel %vm3753, %v50, 0
    %v3873 = vunpack.c.l.bf16 %v3869
    %v3874 = vunpack.c.h.bf16 %v3869
    %v3875 = vunpack.c.l.bf16 %v3870
    %v3876 = vunpack.c.l.bf16 %v3871
    %v3877 = vunpack.c.h.bf16 %v3871
    %v3878 = vunpack.c.l.bf16 %v3872
    %3885 = vrot.lane.b32.xlu0 %v3873, 65
    %v3886 = vpop.permute.xlu0 %3885
    %3887 = vrot.lane.b32.xlu0 %v3874, 65
    %v3888 = vpop.permute.xlu0 %3887
    %3889 = vrot.lane.b32.xlu0 %v3875, 65
    %v3890 = vpop.permute.xlu0 %3889
    %3891 = vrot.lane.b32.xlu0 %v3876, 65
    %v3892 = vpop.permute.xlu0 %3891
    %3893 = vrot.lane.b32.xlu0 %v3877, 65
    %v3894 = vpop.permute.xlu0 %3893
    %3895 = vrot.lane.b32.xlu0 %v3878, 65
    %v3896 = vpop.permute.xlu0 %3895
    %v3897 = vsel %vm3782, %v3886, %v3888
    %v3898 = vsel %vm3782, %v3888, %v3890
    %v3899 = vsel %vm3782, %v3892, %v3894
    %v3900 = vsel %vm3782, %v3894, %v3896
    %v3903 = vsel %vm187, %v3899, 0
    %v3905 = vsel %vm187, %v3900, 0
    %3907 = vmatprep.subr.mxu0 0.0
    %3908 = vmatpush1.msra.mxu0 0.0
    %3909 = vmatprep.subr.mxu0 0.0
    %3910 = vmatpush1.msra.mxu0 0.0
    %3911 = vmatprep.subr.mxu0 0.0
    %3912 = vmatpush1.msra.mxu0 0.0
    %3913 = vmatprep.subr.mxu0 0.0
    %3914 = vmatpush1.msra.mxu0 0.0
    %3915 = vmatprep.subr.mxu0 0.0
    %3916 = vmatpush1.msra.mxu0 0.0
    %3917 = vmatprep.subr.mxu0 0.0
    %3918 = vmatpush1.msra.mxu0 0.0
    %3919 = vmatprep.subr.mxu0 0.0
    %3920 = vmatpush1.msra.mxu0 0.0
    %3921 = vmatprep.subr.mxu0 0.0
    %3922 = vmatpush1.msra.mxu0 0.0
    %3923 = vmatprep.subr.mxu0 0.0
    %3924 = vmatpush1.msra.mxu0 0.0
    %3925 = vmatprep.subr.mxu0 0.0
    %3926 = vmatpush1.msra.mxu0 0.0
    %3927 = vmatprep.subr.mxu0 0.0
    %3928 = vmatpush1.msra.mxu0 0.0
    %3929 = vmatprep.subr.mxu0 0.0
    %3930 = vmatpush1.msra.mxu0 0.0
    %3931 = vmatprep.subr.mxu0 0.0
    %3932 = vmatpush1.msra.mxu0 0.0
    %3933 = vmatprep.subr.mxu0 0.0
    %3934 = vmatpush1.msra.mxu0 0.0
    %3935 = vmatprep.subr.mxu0 %v3905
    %3936 = vmatpush1.msra.mxu0 %v3903
    %3937 = vmatprep.subr.mxu0 %v3898
    %3938 = vmatpush1.msra.mxu0 %v3897
    %3939 = vmatprep.subr.mxu0 0.0
    %3940 = vmatpush2.msra.mxu0 0.0
    %3941 = vmatprep.subr.mxu0 0.0
    %3942 = vmatpush2.msra.mxu0 0.0
    %3943 = vmatprep.subr.mxu0 0.0
    %3944 = vmatpush2.msra.mxu0 0.0
    %3945 = vmatprep.subr.mxu0 0.0
    %3946 = vmatpush2.msra.mxu0 0.0
    %3947 = vmatprep.subr.mxu0 0.0
    %3948 = vmatpush2.msra.mxu0 0.0
    %3949 = vmatprep.subr.mxu0 0.0
    %3950 = vmatpush2.msra.mxu0 0.0
    %3951 = vmatprep.subr.mxu0 0.0
    %3952 = vmatpush2.msra.mxu0 0.0
    %3953 = vmatprep.subr.mxu0 0.0
    %3954 = vmatpush2.msra.mxu0 0.0
    %3955 = vmatprep.subr.mxu0 0.0
    %3956 = vmatpush2.msra.mxu0 0.0
    %3957 = vmatprep.subr.mxu0 0.0
    %3958 = vmatpush2.msra.mxu0 0.0
    %3959 = vmatprep.subr.mxu0 0.0
    %3960 = vmatpush2.msra.mxu0 0.0
    %3961 = vmatprep.subr.mxu0 0.0
    %3962 = vmatpush2.msra.mxu0 0.0
    %3963 = vmatprep.subr.mxu0 0.0
    %3964 = vmatpush2.msra.mxu0 0.0
    %3965 = vmatprep.subr.mxu0 0.0
    %3966 = vmatpush2.msra.mxu0 0.0
    %3967 = vmatprep.subr.mxu0 0.0
    %3968 = vmatpush2.msra.mxu0 0.0
    %3969 = vmatprep.subr.mxu0 0.0
    %3970 = vmatpush2.msra.mxu0 0.0
    %3971 = vmatprep.mubr.f32.mxu0 0.0
    %3972 = vmatmul.mubr.f32.gmra.mxu0 %v3790
    %v3973 = vpop.f32.mrf.mxu0
    %v3974 = vadd.f32 0.0, %v3973
    %v3975 = vpop.f32.mrf.mxu0
    %v3976 = vadd.f32 0.0, %v3975
    %3977 = vdwg.mxu0
    %v3978 = vadd.f32 %v3745, %v3974
    %v3979 = vadd.f32 %v3746, %v3976
    %3980 = vrot.lane.b32.xlu0 %v574, 64
    %v3981 = vpop.permute.xlu0 %3980
    %3982 = vrot.lane.b32.xlu0 %v575, 64
    %v3983 = vpop.permute.xlu0 %3982
    %3984 = vrot.lane.b32.xlu0 %v576, 64
    %v3985 = vpop.permute.xlu0 %3984
    %3986 = vrot.lane.b32.xlu0 %v577, 64
    %v3987 = vpop.permute.xlu0 %3986
    %3988 = vrot.lane.b32.xlu0 %v578, 64
    %v3989 = vpop.permute.xlu0 %3988
    %3990 = vrot.lane.b32.xlu0 %v579, 64
    %v3991 = vpop.permute.xlu0 %3990
    %vm3992 = vcmask 523264
    %v3993 = vsel %vm3992, %v3981, %v3983
    %v3994 = vsel %vm3992, %v3983, %v3985
    %v3995 = vsel %vm3992, %v3987, %v3989
    %v3996 = vsel %vm3992, %v3989, %v3991
    %v4000 = vsel %vm183, %v35, 0
    %v4002 = vsel %vm187, %v3995, 0
    %v4004 = vsel %vm187, %v3996, 0
    %4006 = vmatprep.subr.mxu0 0.0
    %4007 = vmatpush1.msra.mxu0 0.0
    %4008 = vmatprep.subr.mxu0 0.0
    %4009 = vmatpush1.msra.mxu0 0.0
    %4010 = vmatprep.subr.mxu0 0.0
    %4011 = vmatpush1.msra.mxu0 0.0
    %4012 = vmatprep.subr.mxu0 0.0
    %4013 = vmatpush1.msra.mxu0 0.0
    %4014 = vmatprep.subr.mxu0 0.0
    %4015 = vmatpush1.msra.mxu0 0.0
    %4016 = vmatprep.subr.mxu0 0.0
    %4017 = vmatpush1.msra.mxu0 0.0
    %4018 = vmatprep.subr.mxu0 0.0
    %4019 = vmatpush1.msra.mxu0 0.0
    %4020 = vmatprep.subr.mxu0 0.0
    %4021 = vmatpush1.msra.mxu0 0.0
    %4022 = vmatprep.subr.mxu0 0.0
    %4023 = vmatpush1.msra.mxu0 0.0
    %4024 = vmatprep.subr.mxu0 0.0
    %4025 = vmatpush1.msra.mxu0 0.0
    %4026 = vmatprep.subr.mxu0 0.0
    %4027 = vmatpush1.msra.mxu0 0.0
    %4028 = vmatprep.subr.mxu0 0.0
    %4029 = vmatpush1.msra.mxu0 0.0
    %4030 = vmatprep.subr.mxu0 0.0
    %4031 = vmatpush1.msra.mxu0 0.0
    %4032 = vmatprep.subr.mxu0 0.0
    %4033 = vmatpush1.msra.mxu0 0.0
    %4034 = vmatprep.subr.mxu0 %v4004
    %4035 = vmatpush1.msra.mxu0 %v4002
    %4036 = vmatprep.subr.mxu0 %v3994
    %4037 = vmatpush1.msra.mxu0 %v3993
    %4038 = vmatprep.subr.mxu0 0.0
    %4039 = vmatpush2.msra.mxu0 0.0
    %4040 = vmatprep.subr.mxu0 0.0
    %4041 = vmatpush2.msra.mxu0 0.0
    %4042 = vmatprep.subr.mxu0 0.0
    %4043 = vmatpush2.msra.mxu0 0.0
    %4044 = vmatprep.subr.mxu0 0.0
    %4045 = vmatpush2.msra.mxu0 0.0
    %4046 = vmatprep.subr.mxu0 0.0
    %4047 = vmatpush2.msra.mxu0 0.0
    %4048 = vmatprep.subr.mxu0 0.0
    %4049 = vmatpush2.msra.mxu0 0.0
    %4050 = vmatprep.subr.mxu0 0.0
    %4051 = vmatpush2.msra.mxu0 0.0
    %4052 = vmatprep.subr.mxu0 0.0
    %4053 = vmatpush2.msra.mxu0 0.0
    %4054 = vmatprep.subr.mxu0 0.0
    %4055 = vmatpush2.msra.mxu0 0.0
    %4056 = vmatprep.subr.mxu0 0.0
    %4057 = vmatpush2.msra.mxu0 0.0
    %4058 = vmatprep.subr.mxu0 0.0
    %4059 = vmatpush2.msra.mxu0 0.0
    %4060 = vmatprep.subr.mxu0 0.0
    %4061 = vmatpush2.msra.mxu0 0.0
    %4062 = vmatprep.subr.mxu0 0.0
    %4063 = vmatpush2.msra.mxu0 0.0
    %4064 = vmatprep.subr.mxu0 0.0
    %4065 = vmatpush2.msra.mxu0 0.0
    %4066 = vmatprep.subr.mxu0 0.0
    %4067 = vmatpush2.msra.mxu0 0.0
    %4068 = vmatprep.subr.mxu0 0.0
    %4069 = vmatpush2.msra.mxu0 0.0
    %4070 = vmatprep.mubr.f32.mxu0 0.0
    %4071 = vmatmul.mubr.f32.gmra.mxu0 %v4000
    %v4072 = vpop.f32.mrf.mxu0
    %v4073 = vadd.f32 0.0, %v4072
    %v4074 = vpop.f32.mrf.mxu0
    %v4075 = vadd.f32 0.0, %v4074
    %4076 = vdwg.mxu0
    %v4077 = vadd.f32 %v3867, %v4073
    %v4078 = vadd.f32 %v3868, %v4075
    %4079 = vrot.lane.b32.xlu0 %v685, 64
    %v4080 = vpop.permute.xlu0 %4079
    %4081 = vrot.lane.b32.xlu0 %v686, 64
    %v4082 = vpop.permute.xlu0 %4081
    %4083 = vrot.lane.b32.xlu0 %v687, 64
    %v4084 = vpop.permute.xlu0 %4083
    %4085 = vrot.lane.b32.xlu0 %v688, 64
    %v4086 = vpop.permute.xlu0 %4085
    %4087 = vrot.lane.b32.xlu0 %v689, 64
    %v4088 = vpop.permute.xlu0 %4087
    %4089 = vrot.lane.b32.xlu0 %v690, 64
    %v4090 = vpop.permute.xlu0 %4089
    %v4091 = vsel %vm3992, %v4080, %v4082
    %v4092 = vsel %vm3992, %v4082, %v4084
    %v4093 = vsel %vm3992, %v4086, %v4088
    %v4094 = vsel %vm3992, %v4088, %v4090
    %v4097 = vsel %vm187, %v4093, 0
    %v4099 = vsel %vm187, %v4094, 0
    %4101 = vmatprep.subr.mxu0 0.0
    %4102 = vmatpush1.msra.mxu0 0.0
    %4103 = vmatprep.subr.mxu0 0.0
    %4104 = vmatpush1.msra.mxu0 0.0
    %4105 = vmatprep.subr.mxu0 0.0
    %4106 = vmatpush1.msra.mxu0 0.0
    %4107 = vmatprep.subr.mxu0 0.0
    %4108 = vmatpush1.msra.mxu0 0.0
    %4109 = vmatprep.subr.mxu0 0.0
    %4110 = vmatpush1.msra.mxu0 0.0
    %4111 = vmatprep.subr.mxu0 0.0
    %4112 = vmatpush1.msra.mxu0 0.0
    %4113 = vmatprep.subr.mxu0 0.0
    %4114 = vmatpush1.msra.mxu0 0.0
    %4115 = vmatprep.subr.mxu0 0.0
    %4116 = vmatpush1.msra.mxu0 0.0
    %4117 = vmatprep.subr.mxu0 0.0
    %4118 = vmatpush1.msra.mxu0 0.0
    %4119 = vmatprep.subr.mxu0 0.0
    %4120 = vmatpush1.msra.mxu0 0.0
    %4121 = vmatprep.subr.mxu0 0.0
    %4122 = vmatpush1.msra.mxu0 0.0
    %4123 = vmatprep.subr.mxu0 0.0
    %4124 = vmatpush1.msra.mxu0 0.0
    %4125 = vmatprep.subr.mxu0 0.0
    %4126 = vmatpush1.msra.mxu0 0.0
    %4127 = vmatprep.subr.mxu0 0.0
    %4128 = vmatpush1.msra.mxu0 0.0
    %4129 = vmatprep.subr.mxu0 %v4099
    %4130 = vmatpush1.msra.mxu0 %v4097
    %4131 = vmatprep.subr.mxu0 %v4092
    %4132 = vmatpush1.msra.mxu0 %v4091
    %4133 = vmatprep.subr.mxu0 0.0
    %4134 = vmatpush2.msra.mxu0 0.0
    %4135 = vmatprep.subr.mxu0 0.0
    %4136 = vmatpush2.msra.mxu0 0.0
    %4137 = vmatprep.subr.mxu0 0.0
    %4138 = vmatpush2.msra.mxu0 0.0
    %4139 = vmatprep.subr.mxu0 0.0
    %4140 = vmatpush2.msra.mxu0 0.0
    %4141 = vmatprep.subr.mxu0 0.0
    %4142 = vmatpush2.msra.mxu0 0.0
    %4143 = vmatprep.subr.mxu0 0.0
    %4144 = vmatpush2.msra.mxu0 0.0
    %4145 = vmatprep.subr.mxu0 0.0
    %4146 = vmatpush2.msra.mxu0 0.0
    %4147 = vmatprep.subr.mxu0 0.0
    %4148 = vmatpush2.msra.mxu0 0.0
    %4149 = vmatprep.subr.mxu0 0.0
    %4150 = vmatpush2.msra.mxu0 0.0
    %4151 = vmatprep.subr.mxu0 0.0
    %4152 = vmatpush2.msra.mxu0 0.0
    %4153 = vmatprep.subr.mxu0 0.0
    %4154 = vmatpush2.msra.mxu0 0.0
    %4155 = vmatprep.subr.mxu0 0.0
    %4156 = vmatpush2.msra.mxu0 0.0
    %4157 = vmatprep.subr.mxu0 0.0
    %4158 = vmatpush2.msra.mxu0 0.0
    %4159 = vmatprep.subr.mxu0 0.0
    %4160 = vmatpush2.msra.mxu0 0.0
    %4161 = vmatprep.subr.mxu0 0.0
    %4162 = vmatpush2.msra.mxu0 0.0
    %4163 = vmatprep.subr.mxu0 0.0
    %4164 = vmatpush2.msra.mxu0 0.0
    %4165 = vmatprep.mubr.f32.mxu0 0.0
    %4166 = vmatmul.mubr.f32.gmra.mxu0 %v4000
    %v4167 = vpop.f32.mrf.mxu0
    %v4168 = vadd.f32 0.0, %v4167
    %v4169 = vpop.f32.mrf.mxu0
    %v4170 = vadd.f32 0.0, %v4169
    %4171 = vdwg.mxu0
    %v4172 = vadd.f32 %v3978, %v4168
    %v4173 = vadd.f32 %v3979, %v4170
    %4174 = vrot.lane.b32.xlu0 %v793, 65
    %v4175 = vpop.permute.xlu0 %4174
    %v4176 = vrot.slane %v4175, 4
    %vm4177 = vcmask 531456
    %v4178 = vsel %vm4177, %v4176, %v4175
    %vm4179 = vcmp.ne.s16.totalorder %v4178, 0
    %vm4180 = vcmp.ne.s16.totalorder %v4176, 0
    %v4181 = vsel %vm4179, %v43, 0
    %v4182 = vsel %vm4180, %v44, 0
    %v4183 = vsel %vm4179, %v45, 0
    %v4184 = vsel %vm4180, %v46, 0
    %v4185 = vunpack.c.l.bf16 %v4181
    %v4186 = vunpack.c.h.bf16 %v4181
    %v4187 = vunpack.c.l.bf16 %v4182
    %v4188 = vunpack.c.l.bf16 %v4183
    %v4189 = vunpack.c.h.bf16 %v4183
    %v4190 = vunpack.c.l.bf16 %v4184
    %4197 = vrot.lane.b32.xlu0 %v4185, 63
    %v4198 = vpop.permute.xlu0 %4197
    %4199 = vrot.lane.b32.xlu0 %v4186, 63
    %v4200 = vpop.permute.xlu0 %4199
    %4201 = vrot.lane.b32.xlu0 %v4187, 63
    %v4202 = vpop.permute.xlu0 %4201
    %4203 = vrot.lane.b32.xlu0 %v4188, 63
    %v4204 = vpop.permute.xlu0 %4203
    %4205 = vrot.lane.b32.xlu0 %v4189, 63
    %v4206 = vpop.permute.xlu0 %4205
    %4207 = vrot.lane.b32.xlu0 %v4190, 63
    %v4208 = vpop.permute.xlu0 %4207
    %vm4209 = vcmask 515072
    %v4210 = vsel %vm4209, %v4198, %v4200
    %v4211 = vsel %vm4209, %v4200, %v4202
    %v4212 = vsel %vm4209, %v4204, %v4206
    %v4213 = vsel %vm4209, %v4206, %v4208
    %v4217 = vsel %vm183, %v36, 0
    %v4219 = vsel %vm187, %v4212, 0
    %v4221 = vsel %vm187, %v4213, 0
    %4223 = vmatprep.subr.mxu0 0.0
    %4224 = vmatpush1.msra.mxu0 0.0
    %4225 = vmatprep.subr.mxu0 0.0
    %4226 = vmatpush1.msra.mxu0 0.0
    %4227 = vmatprep.subr.mxu0 0.0
    %4228 = vmatpush1.msra.mxu0 0.0
    %4229 = vmatprep.subr.mxu0 0.0
    %4230 = vmatpush1.msra.mxu0 0.0
    %4231 = vmatprep.subr.mxu0 0.0
    %4232 = vmatpush1.msra.mxu0 0.0
    %4233 = vmatprep.subr.mxu0 0.0
    %4234 = vmatpush1.msra.mxu0 0.0
    %4235 = vmatprep.subr.mxu0 0.0
    %4236 = vmatpush1.msra.mxu0 0.0
    %4237 = vmatprep.subr.mxu0 0.0
    %4238 = vmatpush1.msra.mxu0 0.0
    %4239 = vmatprep.subr.mxu0 0.0
    %4240 = vmatpush1.msra.mxu0 0.0
    %4241 = vmatprep.subr.mxu0 0.0
    %4242 = vmatpush1.msra.mxu0 0.0
    %4243 = vmatprep.subr.mxu0 0.0
    %4244 = vmatpush1.msra.mxu0 0.0
    %4245 = vmatprep.subr.mxu0 0.0
    %4246 = vmatpush1.msra.mxu0 0.0
    %4247 = vmatprep.subr.mxu0 0.0
    %4248 = vmatpush1.msra.mxu0 0.0
    %4249 = vmatprep.subr.mxu0 0.0
    %4250 = vmatpush1.msra.mxu0 0.0
    %4251 = vmatprep.subr.mxu0 %v4221
    %4252 = vmatpush1.msra.mxu0 %v4219
    %4253 = vmatprep.subr.mxu0 %v4211
    %4254 = vmatpush1.msra.mxu0 %v4210
    %4255 = vmatprep.subr.mxu0 0.0
    %4256 = vmatpush2.msra.mxu0 0.0
    %4257 = vmatprep.subr.mxu0 0.0
    %4258 = vmatpush2.msra.mxu0 0.0
    %4259 = vmatprep.subr.mxu0 0.0
    %4260 = vmatpush2.msra.mxu0 0.0
    %4261 = vmatprep.subr.mxu0 0.0
    %4262 = vmatpush2.msra.mxu0 0.0
    %4263 = vmatprep.subr.mxu0 0.0
    %4264 = vmatpush2.msra.mxu0 0.0
    %4265 = vmatprep.subr.mxu0 0.0
    %4266 = vmatpush2.msra.mxu0 0.0
    %4267 = vmatprep.subr.mxu0 0.0
    %4268 = vmatpush2.msra.mxu0 0.0
    %4269 = vmatprep.subr.mxu0 0.0
    %4270 = vmatpush2.msra.mxu0 0.0
    %4271 = vmatprep.subr.mxu0 0.0
    %4272 = vmatpush2.msra.mxu0 0.0
    %4273 = vmatprep.subr.mxu0 0.0
    %4274 = vmatpush2.msra.mxu0 0.0
    %4275 = vmatprep.subr.mxu0 0.0
    %4276 = vmatpush2.msra.mxu0 0.0
    %4277 = vmatprep.subr.mxu0 0.0
    %4278 = vmatpush2.msra.mxu0 0.0
    %4279 = vmatprep.subr.mxu0 0.0
    %4280 = vmatpush2.msra.mxu0 0.0
    %4281 = vmatprep.subr.mxu0 0.0
    %4282 = vmatpush2.msra.mxu0 0.0
    %4283 = vmatprep.subr.mxu0 0.0
    %4284 = vmatpush2.msra.mxu0 0.0
    %4285 = vmatprep.subr.mxu0 0.0
    %4286 = vmatpush2.msra.mxu0 0.0
    %4287 = vmatprep.mubr.f32.mxu0 0.0
    %4288 = vmatmul.mubr.f32.gmra.mxu0 %v4217
    %v4289 = vpop.f32.mrf.mxu0
    %v4290 = vadd.f32 0.0, %v4289
    %v4291 = vpop.f32.mrf.mxu0
    %v4292 = vadd.f32 0.0, %v4291
    %4293 = vdwg.mxu0
    %v4294 = vadd.f32 %v4077, %v4290
    %v4295 = vadd.f32 %v4078, %v4292
    %v4296 = vsel %vm4179, %v47, 0
    %v4297 = vsel %vm4180, %v48, 0
    %v4298 = vsel %vm4179, %v49, 0
    %v4299 = vsel %vm4180, %v50, 0
    %v4300 = vunpack.c.l.bf16 %v4296
    %v4301 = vunpack.c.h.bf16 %v4296
    %v4302 = vunpack.c.l.bf16 %v4297
    %v4303 = vunpack.c.l.bf16 %v4298
    %v4304 = vunpack.c.h.bf16 %v4298
    %v4305 = vunpack.c.l.bf16 %v4299
    %4312 = vrot.lane.b32.xlu0 %v4300, 63
    %v4313 = vpop.permute.xlu0 %4312
    %4314 = vrot.lane.b32.xlu0 %v4301, 63
    %v4315 = vpop.permute.xlu0 %4314
    %4316 = vrot.lane.b32.xlu0 %v4302, 63
    %v4317 = vpop.permute.xlu0 %4316
    %4318 = vrot.lane.b32.xlu0 %v4303, 63
    %v4319 = vpop.permute.xlu0 %4318
    %4320 = vrot.lane.b32.xlu0 %v4304, 63
    %v4321 = vpop.permute.xlu0 %4320
    %4322 = vrot.lane.b32.xlu0 %v4305, 63
    %v4323 = vpop.permute.xlu0 %4322
    %v4324 = vsel %vm4209, %v4313, %v4315
    %v4325 = vsel %vm4209, %v4315, %v4317
    %v4326 = vsel %vm4209, %v4319, %v4321
    %v4327 = vsel %vm4209, %v4321, %v4323
    %v4330 = vsel %vm187, %v4326, 0
    %v4332 = vsel %vm187, %v4327, 0
    %4334 = vmatprep.subr.mxu0 0.0
    %4335 = vmatpush1.msra.mxu0 0.0
    %4336 = vmatprep.subr.mxu0 0.0
    %4337 = vmatpush1.msra.mxu0 0.0
    %4338 = vmatprep.subr.mxu0 0.0
    %4339 = vmatpush1.msra.mxu0 0.0
    %4340 = vmatprep.subr.mxu0 0.0
    %4341 = vmatpush1.msra.mxu0 0.0
    %4342 = vmatprep.subr.mxu0 0.0
    %4343 = vmatpush1.msra.mxu0 0.0
    %4344 = vmatprep.subr.mxu0 0.0
    %4345 = vmatpush1.msra.mxu0 0.0
    %4346 = vmatprep.subr.mxu0 0.0
    %4347 = vmatpush1.msra.mxu0 0.0
    %4348 = vmatprep.subr.mxu0 0.0
    %4349 = vmatpush1.msra.mxu0 0.0
    %4350 = vmatprep.subr.mxu0 0.0
    %4351 = vmatpush1.msra.mxu0 0.0
    %4352 = vmatprep.subr.mxu0 0.0
    %4353 = vmatpush1.msra.mxu0 0.0
    %4354 = vmatprep.subr.mxu0 0.0
    %4355 = vmatpush1.msra.mxu0 0.0
    %4356 = vmatprep.subr.mxu0 0.0
    %4357 = vmatpush1.msra.mxu0 0.0
    %4358 = vmatprep.subr.mxu0 0.0
    %4359 = vmatpush1.msra.mxu0 0.0
    %4360 = vmatprep.subr.mxu0 0.0
    %4361 = vmatpush1.msra.mxu0 0.0
    %4362 = vmatprep.subr.mxu0 %v4332
    %4363 = vmatpush1.msra.mxu0 %v4330
    %4364 = vmatprep.subr.mxu0 %v4325
    %4365 = vmatpush1.msra.mxu0 %v4324
    %4366 = vmatprep.subr.mxu0 0.0
    %4367 = vmatpush2.msra.mxu0 0.0
    %4368 = vmatprep.subr.mxu0 0.0
    %4369 = vmatpush2.msra.mxu0 0.0
    %4370 = vmatprep.subr.mxu0 0.0
    %4371 = vmatpush2.msra.mxu0 0.0
    %4372 = vmatprep.subr.mxu0 0.0
    %4373 = vmatpush2.msra.mxu0 0.0
    %4374 = vmatprep.subr.mxu0 0.0
    %4375 = vmatpush2.msra.mxu0 0.0
    %4376 = vmatprep.subr.mxu0 0.0
    %4377 = vmatpush2.msra.mxu0 0.0
    %4378 = vmatprep.subr.mxu0 0.0
    %4379 = vmatpush2.msra.mxu0 0.0
    %4380 = vmatprep.subr.mxu0 0.0
    %4381 = vmatpush2.msra.mxu0 0.0
    %4382 = vmatprep.subr.mxu0 0.0
    %4383 = vmatpush2.msra.mxu0 0.0
    %4384 = vmatprep.subr.mxu0 0.0
    %4385 = vmatpush2.msra.mxu0 0.0
    %4386 = vmatprep.subr.mxu0 0.0
    %4387 = vmatpush2.msra.mxu0 0.0
    %4388 = vmatprep.subr.mxu0 0.0
    %4389 = vmatpush2.msra.mxu0 0.0
    %4390 = vmatprep.subr.mxu0 0.0
    %4391 = vmatpush2.msra.mxu0 0.0
    %4392 = vmatprep.subr.mxu0 0.0
    %4393 = vmatpush2.msra.mxu0 0.0
    %4394 = vmatprep.subr.mxu0 0.0
    %4395 = vmatpush2.msra.mxu0 0.0
    %4396 = vmatprep.subr.mxu0 0.0
    %4397 = vmatpush2.msra.mxu0 0.0
    %4398 = vmatprep.mubr.f32.mxu0 0.0
    %4399 = vmatmul.mubr.f32.gmra.mxu0 %v4217
    %v4400 = vpop.f32.mrf.mxu0
    %v4401 = vadd.f32 0.0, %v4400
    %v4402 = vpop.f32.mrf.mxu0
    %v4403 = vadd.f32 0.0, %v4402
    %4404 = vdwg.mxu0
    %v4405 = vadd.f32 %v4172, %v4401
    %v4406 = vadd.f32 %v4173, %v4403
    %4407 = vrot.lane.b32.xlu0 %v1028, 66
    %v4408 = vpop.permute.xlu0 %4407
    %v4409 = vrot.slane %v4408, 4
    %vm4410 = vcmask 539648
    %v4411 = vsel %vm4410, %v4409, %v4408
    %vm4412 = vcmp.ne.s16.totalorder %v4411, 0
    %vm4413 = vcmp.ne.s16.totalorder %v4409, 0
    %v4414 = vsel %vm4412, %v43, 0
    %v4415 = vsel %vm4413, %v44, 0
    %v4416 = vsel %vm4412, %v45, 0
    %v4417 = vsel %vm4413, %v46, 0
    %v4418 = vunpack.c.l.bf16 %v4414
    %v4419 = vunpack.c.h.bf16 %v4414
    %v4420 = vunpack.c.l.bf16 %v4415
    %v4421 = vunpack.c.l.bf16 %v4416
    %v4422 = vunpack.c.h.bf16 %v4416
    %v4423 = vunpack.c.l.bf16 %v4417
    %4430 = vrot.lane.b32.xlu0 %v4418, 62
    %v4431 = vpop.permute.xlu0 %4430
    %4432 = vrot.lane.b32.xlu0 %v4419, 62
    %v4433 = vpop.permute.xlu0 %4432
    %4434 = vrot.lane.b32.xlu0 %v4420, 62
    %v4435 = vpop.permute.xlu0 %4434
    %4436 = vrot.lane.b32.xlu0 %v4421, 62
    %v4437 = vpop.permute.xlu0 %4436
    %4438 = vrot.lane.b32.xlu0 %v4422, 62
    %v4439 = vpop.permute.xlu0 %4438
    %4440 = vrot.lane.b32.xlu0 %v4423, 62
    %v4441 = vpop.permute.xlu0 %4440
    %vm4442 = vcmask 506880
    %v4443 = vsel %vm4442, %v4431, %v4433
    %v4444 = vsel %vm4442, %v4433, %v4435
    %v4445 = vsel %vm4442, %v4437, %v4439
    %v4446 = vsel %vm4442, %v4439, %v4441
    %v4450 = vsel %vm183, %v37, 0
    %v4452 = vsel %vm187, %v4445, 0
    %v4454 = vsel %vm187, %v4446, 0
    %4456 = vmatprep.subr.mxu0 0.0
    %4457 = vmatpush1.msra.mxu0 0.0
    %4458 = vmatprep.subr.mxu0 0.0
    %4459 = vmatpush1.msra.mxu0 0.0
    %4460 = vmatprep.subr.mxu0 0.0
    %4461 = vmatpush1.msra.mxu0 0.0
    %4462 = vmatprep.subr.mxu0 0.0
    %4463 = vmatpush1.msra.mxu0 0.0
    %4464 = vmatprep.subr.mxu0 0.0
    %4465 = vmatpush1.msra.mxu0 0.0
    %4466 = vmatprep.subr.mxu0 0.0
    %4467 = vmatpush1.msra.mxu0 0.0
    %4468 = vmatprep.subr.mxu0 0.0
    %4469 = vmatpush1.msra.mxu0 0.0
    %4470 = vmatprep.subr.mxu0 0.0
    %4471 = vmatpush1.msra.mxu0 0.0
    %4472 = vmatprep.subr.mxu0 0.0
    %4473 = vmatpush1.msra.mxu0 0.0
    %4474 = vmatprep.subr.mxu0 0.0
    %4475 = vmatpush1.msra.mxu0 0.0
    %4476 = vmatprep.subr.mxu0 0.0
    %4477 = vmatpush1.msra.mxu0 0.0
    %4478 = vmatprep.subr.mxu0 0.0
    %4479 = vmatpush1.msra.mxu0 0.0
    %4480 = vmatprep.subr.mxu0 0.0
    %4481 = vmatpush1.msra.mxu0 0.0
    %4482 = vmatprep.subr.mxu0 0.0
    %4483 = vmatpush1.msra.mxu0 0.0
    %4484 = vmatprep.subr.mxu0 %v4454
    %4485 = vmatpush1.msra.mxu0 %v4452
    %4486 = vmatprep.subr.mxu0 %v4444
    %4487 = vmatpush1.msra.mxu0 %v4443
    %4488 = vmatprep.subr.mxu0 0.0
    %4489 = vmatpush2.msra.mxu0 0.0
    %4490 = vmatprep.subr.mxu0 0.0
    %4491 = vmatpush2.msra.mxu0 0.0
    %4492 = vmatprep.subr.mxu0 0.0
    %4493 = vmatpush2.msra.mxu0 0.0
    %4494 = vmatprep.subr.mxu0 0.0
    %4495 = vmatpush2.msra.mxu0 0.0
    %4496 = vmatprep.subr.mxu0 0.0
    %4497 = vmatpush2.msra.mxu0 0.0
    %4498 = vmatprep.subr.mxu0 0.0
    %4499 = vmatpush2.msra.mxu0 0.0
    %4500 = vmatprep.subr.mxu0 0.0
    %4501 = vmatpush2.msra.mxu0 0.0
    %4502 = vmatprep.subr.mxu0 0.0
    %4503 = vmatpush2.msra.mxu0 0.0
    %4504 = vmatprep.subr.mxu0 0.0
    %4505 = vmatpush2.msra.mxu0 0.0
    %4506 = vmatprep.subr.mxu0 0.0
    %4507 = vmatpush2.msra.mxu0 0.0
    %4508 = vmatprep.subr.mxu0 0.0
    %4509 = vmatpush2.msra.mxu0 0.0
    %4510 = vmatprep.subr.mxu0 0.0
    %4511 = vmatpush2.msra.mxu0 0.0
    %4512 = vmatprep.subr.mxu0 0.0
    %4513 = vmatpush2.msra.mxu0 0.0
    %4514 = vmatprep.subr.mxu0 0.0
    %4515 = vmatpush2.msra.mxu0 0.0
    %4516 = vmatprep.subr.mxu0 0.0
    %4517 = vmatpush2.msra.mxu0 0.0
    %4518 = vmatprep.subr.mxu0 0.0
    %4519 = vmatpush2.msra.mxu0 0.0
    %4520 = vmatprep.mubr.f32.mxu0 0.0
    %4521 = vmatmul.mubr.f32.gmra.mxu0 %v4450
    %v4522 = vpop.f32.mrf.mxu0
    %v4523 = vadd.f32 0.0, %v4522
    %v4524 = vpop.f32.mrf.mxu0
    %v4525 = vadd.f32 0.0, %v4524
    %4526 = vdwg.mxu0
    %v4527 = vadd.f32 %v4294, %v4523
    %v4528 = vadd.f32 %v4295, %v4525
    %v4529 = vsel %vm4412, %v47, 0
    %v4530 = vsel %vm4413, %v48, 0
    %v4531 = vsel %vm4412, %v49, 0
    %v4532 = vsel %vm4413, %v50, 0
    %v4533 = vunpack.c.l.bf16 %v4529
    %v4534 = vunpack.c.h.bf16 %v4529
    %v4535 = vunpack.c.l.bf16 %v4530
    %v4536 = vunpack.c.l.bf16 %v4531
    %v4537 = vunpack.c.h.bf16 %v4531
    %v4538 = vunpack.c.l.bf16 %v4532
    %4545 = vrot.lane.b32.xlu0 %v4533, 62
    %v4546 = vpop.permute.xlu0 %4545
    %4547 = vrot.lane.b32.xlu0 %v4534, 62
    %v4548 = vpop.permute.xlu0 %4547
    %4549 = vrot.lane.b32.xlu0 %v4535, 62
    %v4550 = vpop.permute.xlu0 %4549
    %4551 = vrot.lane.b32.xlu0 %v4536, 62
    %v4552 = vpop.permute.xlu0 %4551
    %4553 = vrot.lane.b32.xlu0 %v4537, 62
    %v4554 = vpop.permute.xlu0 %4553
    %4555 = vrot.lane.b32.xlu0 %v4538, 62
    %v4556 = vpop.permute.xlu0 %4555
    %v4557 = vsel %vm4442, %v4546, %v4548
    %v4558 = vsel %vm4442, %v4548, %v4550
    %v4559 = vsel %vm4442, %v4552, %v4554
    %v4560 = vsel %vm4442, %v4554, %v4556
    %v4563 = vsel %vm187, %v4559, 0
    %v4565 = vsel %vm187, %v4560, 0
    %4567 = vmatprep.subr.mxu0 0.0
    %4568 = vmatpush1.msra.mxu0 0.0
    %4569 = vmatprep.subr.mxu0 0.0
    %4570 = vmatpush1.msra.mxu0 0.0
    %4571 = vmatprep.subr.mxu0 0.0
    %4572 = vmatpush1.msra.mxu0 0.0
    %4573 = vmatprep.subr.mxu0 0.0
    %4574 = vmatpush1.msra.mxu0 0.0
    %4575 = vmatprep.subr.mxu0 0.0
    %4576 = vmatpush1.msra.mxu0 0.0
    %4577 = vmatprep.subr.mxu0 0.0
    %4578 = vmatpush1.msra.mxu0 0.0
    %4579 = vmatprep.subr.mxu0 0.0
    %4580 = vmatpush1.msra.mxu0 0.0
    %4581 = vmatprep.subr.mxu0 0.0
    %4582 = vmatpush1.msra.mxu0 0.0
    %4583 = vmatprep.subr.mxu0 0.0
    %4584 = vmatpush1.msra.mxu0 0.0
    %4585 = vmatprep.subr.mxu0 0.0
    %4586 = vmatpush1.msra.mxu0 0.0
    %4587 = vmatprep.subr.mxu0 0.0
    %4588 = vmatpush1.msra.mxu0 0.0
    %4589 = vmatprep.subr.mxu0 0.0
    %4590 = vmatpush1.msra.mxu0 0.0
    %4591 = vmatprep.subr.mxu0 0.0
    %4592 = vmatpush1.msra.mxu0 0.0
    %4593 = vmatprep.subr.mxu0 0.0
    %4594 = vmatpush1.msra.mxu0 0.0
    %4595 = vmatprep.subr.mxu0 %v4565
    %4596 = vmatpush1.msra.mxu0 %v4563
    %4597 = vmatprep.subr.mxu0 %v4558
    %4598 = vmatpush1.msra.mxu0 %v4557
    %4599 = vmatprep.subr.mxu0 0.0
    %4600 = vmatpush2.msra.mxu0 0.0
    %4601 = vmatprep.subr.mxu0 0.0
    %4602 = vmatpush2.msra.mxu0 0.0
    %4603 = vmatprep.subr.mxu0 0.0
    %4604 = vmatpush2.msra.mxu0 0.0
    %4605 = vmatprep.subr.mxu0 0.0
    %4606 = vmatpush2.msra.mxu0 0.0
    %4607 = vmatprep.subr.mxu0 0.0
    %4608 = vmatpush2.msra.mxu0 0.0
    %4609 = vmatprep.subr.mxu0 0.0
    %4610 = vmatpush2.msra.mxu0 0.0
    %4611 = vmatprep.subr.mxu0 0.0
    %4612 = vmatpush2.msra.mxu0 0.0
    %4613 = vmatprep.subr.mxu0 0.0
    %4614 = vmatpush2.msra.mxu0 0.0
    %4615 = vmatprep.subr.mxu0 0.0
    %4616 = vmatpush2.msra.mxu0 0.0
    %4617 = vmatprep.subr.mxu0 0.0
    %4618 = vmatpush2.msra.mxu0 0.0
    %4619 = vmatprep.subr.mxu0 0.0
    %4620 = vmatpush2.msra.mxu0 0.0
    %4621 = vmatprep.subr.mxu0 0.0
    %4622 = vmatpush2.msra.mxu0 0.0
    %4623 = vmatprep.subr.mxu0 0.0
    %4624 = vmatpush2.msra.mxu0 0.0
    %4625 = vmatprep.subr.mxu0 0.0
    %4626 = vmatpush2.msra.mxu0 0.0
    %4627 = vmatprep.subr.mxu0 0.0
    %4628 = vmatpush2.msra.mxu0 0.0
    %4629 = vmatprep.subr.mxu0 0.0
    %4630 = vmatpush2.msra.mxu0 0.0
    %4631 = vmatprep.mubr.f32.mxu0 0.0
    %4632 = vmatmul.mubr.f32.gmra.mxu0 %v4450
    %v4633 = vpop.f32.mrf.mxu0
    %v4634 = vadd.f32 0.0, %v4633
    %v4635 = vpop.f32.mrf.mxu0
    %v4636 = vadd.f32 0.0, %v4635
    %4637 = vdwg.mxu0
    %v4638 = vadd.f32 %v4405, %v4634
    %v4639 = vadd.f32 %v4406, %v4636
    %4640 = vrot.lane.b32.xlu0 %v111, 78
    %v4641 = vpop.permute.xlu0 %4640
    %v4642 = vrot.slane %v4641, 4
    %vm4643 = vcmask 637952
    %v4644 = vsel %vm4643, %v4642, %v4641
    %vm4645 = vcmp.ne.s16.totalorder %v4644, 0
    %vm4646 = vcmp.ne.s16.totalorder %v4642, 0
    %v4647 = vsel %vm4645, %v43, 0
    %v4648 = vsel %vm4646, %v44, 0
    %v4649 = vsel %vm4645, %v45, 0
    %v4650 = vsel %vm4646, %v46, 0
    %v4651 = vunpack.c.l.bf16 %v4647
    %v4652 = vunpack.c.h.bf16 %v4647
    %v4653 = vunpack.c.l.bf16 %v4648
    %v4654 = vunpack.c.l.bf16 %v4649
    %v4655 = vunpack.c.h.bf16 %v4649
    %v4656 = vunpack.c.l.bf16 %v4650
    %4663 = vrot.lane.b32.xlu0 %v4651, 50
    %v4664 = vpop.permute.xlu0 %4663
    %4665 = vrot.lane.b32.xlu0 %v4652, 50
    %v4666 = vpop.permute.xlu0 %4665
    %4667 = vrot.lane.b32.xlu0 %v4653, 50
    %v4668 = vpop.permute.xlu0 %4667
    %4669 = vrot.lane.b32.xlu0 %v4654, 50
    %v4670 = vpop.permute.xlu0 %4669
    %4671 = vrot.lane.b32.xlu0 %v4655, 50
    %v4672 = vpop.permute.xlu0 %4671
    %4673 = vrot.lane.b32.xlu0 %v4656, 50
    %v4674 = vpop.permute.xlu0 %4673
    %vm4675 = vcmask 408576
    %v4676 = vsel %vm4675, %v4664, %v4666
    %v4677 = vsel %vm4675, %v4666, %v4668
    %v4678 = vsel %vm4675, %v4670, %v4672
    %v4679 = vsel %vm4675, %v4672, %v4674
    %v4683 = vsel %vm183, %v38, 0
    %v4685 = vsel %vm187, %v4678, 0
    %v4687 = vsel %vm187, %v4679, 0
    %4689 = vmatprep.subr.mxu0 0.0
    %4690 = vmatpush1.msra.mxu0 0.0
    %4691 = vmatprep.subr.mxu0 0.0
    %4692 = vmatpush1.msra.mxu0 0.0
    %4693 = vmatprep.subr.mxu0 0.0
    %4694 = vmatpush1.msra.mxu0 0.0
    %4695 = vmatprep.subr.mxu0 0.0
    %4696 = vmatpush1.msra.mxu0 0.0
    %4697 = vmatprep.subr.mxu0 0.0
    %4698 = vmatpush1.msra.mxu0 0.0
    %4699 = vmatprep.subr.mxu0 0.0
    %4700 = vmatpush1.msra.mxu0 0.0
    %4701 = vmatprep.subr.mxu0 0.0
    %4702 = vmatpush1.msra.mxu0 0.0
    %4703 = vmatprep.subr.mxu0 0.0
    %4704 = vmatpush1.msra.mxu0 0.0
    %4705 = vmatprep.subr.mxu0 0.0
    %4706 = vmatpush1.msra.mxu0 0.0
    %4707 = vmatprep.subr.mxu0 0.0
    %4708 = vmatpush1.msra.mxu0 0.0
    %4709 = vmatprep.subr.mxu0 0.0
    %4710 = vmatpush1.msra.mxu0 0.0
    %4711 = vmatprep.subr.mxu0 0.0
    %4712 = vmatpush1.msra.mxu0 0.0
    %4713 = vmatprep.subr.mxu0 0.0
    %4714 = vmatpush1.msra.mxu0 0.0
    %4715 = vmatprep.subr.mxu0 0.0
    %4716 = vmatpush1.msra.mxu0 0.0
    %4717 = vmatprep.subr.mxu0 %v4687
    %4718 = vmatpush1.msra.mxu0 %v4685
    %4719 = vmatprep.subr.mxu0 %v4677
    %4720 = vmatpush1.msra.mxu0 %v4676
    %4721 = vmatprep.subr.mxu0 0.0
    %4722 = vmatpush2.msra.mxu0 0.0
    %4723 = vmatprep.subr.mxu0 0.0
    %4724 = vmatpush2.msra.mxu0 0.0
    %4725 = vmatprep.subr.mxu0 0.0
    %4726 = vmatpush2.msra.mxu0 0.0
    %4727 = vmatprep.subr.mxu0 0.0
    %4728 = vmatpush2.msra.mxu0 0.0
    %4729 = vmatprep.subr.mxu0 0.0
    %4730 = vmatpush2.msra.mxu0 0.0
    %4731 = vmatprep.subr.mxu0 0.0
    %4732 = vmatpush2.msra.mxu0 0.0
    %4733 = vmatprep.subr.mxu0 0.0
    %4734 = vmatpush2.msra.mxu0 0.0
    %4735 = vmatprep.subr.mxu0 0.0
    %4736 = vmatpush2.msra.mxu0 0.0
    %4737 = vmatprep.subr.mxu0 0.0
    %4738 = vmatpush2.msra.mxu0 0.0
    %4739 = vmatprep.subr.mxu0 0.0
    %4740 = vmatpush2.msra.mxu0 0.0
    %4741 = vmatprep.subr.mxu0 0.0
    %4742 = vmatpush2.msra.mxu0 0.0
    %4743 = vmatprep.subr.mxu0 0.0
    %4744 = vmatpush2.msra.mxu0 0.0
    %4745 = vmatprep.subr.mxu0 0.0
    %4746 = vmatpush2.msra.mxu0 0.0
    %4747 = vmatprep.subr.mxu0 0.0
    %4748 = vmatpush2.msra.mxu0 0.0
    %4749 = vmatprep.subr.mxu0 0.0
    %4750 = vmatpush2.msra.mxu0 0.0
    %4751 = vmatprep.subr.mxu0 0.0
    %4752 = vmatpush2.msra.mxu0 0.0
    %4753 = vmatprep.mubr.f32.mxu0 0.0
    %4754 = vmatmul.mubr.f32.gmra.mxu0 %v4683
    %v4755 = vpop.f32.mrf.mxu0
    %v4756 = vadd.f32 0.0, %v4755
    %v4757 = vpop.f32.mrf.mxu0
    %v4758 = vadd.f32 0.0, %v4757
    %4759 = vdwg.mxu0
    %v4760 = vadd.f32 %v4527, %v4756
    %v4761 = vadd.f32 %v4528, %v4758
    %v4762 = vsel %vm4645, %v47, 0
    %v4763 = vsel %vm4646, %v48, 0
    %v4764 = vsel %vm4645, %v49, 0
    %v4765 = vsel %vm4646, %v50, 0
    %v4766 = vunpack.c.l.bf16 %v4762
    %v4767 = vunpack.c.h.bf16 %v4762
    %v4768 = vunpack.c.l.bf16 %v4763
    %v4769 = vunpack.c.l.bf16 %v4764
    %v4770 = vunpack.c.h.bf16 %v4764
    %v4771 = vunpack.c.l.bf16 %v4765
    %4778 = vrot.lane.b32.xlu0 %v4766, 50
    %v4779 = vpop.permute.xlu0 %4778
    %4780 = vrot.lane.b32.xlu0 %v4767, 50
    %v4781 = vpop.permute.xlu0 %4780
    %4782 = vrot.lane.b32.xlu0 %v4768, 50
    %v4783 = vpop.permute.xlu0 %4782
    %4784 = vrot.lane.b32.xlu0 %v4769, 50
    %v4785 = vpop.permute.xlu0 %4784
    %4786 = vrot.lane.b32.xlu0 %v4770, 50
    %v4787 = vpop.permute.xlu0 %4786
    %4788 = vrot.lane.b32.xlu0 %v4771, 50
    %v4789 = vpop.permute.xlu0 %4788
    %v4790 = vsel %vm4675, %v4779, %v4781
    %v4791 = vsel %vm4675, %v4781, %v4783
    %v4792 = vsel %vm4675, %v4785, %v4787
    %v4793 = vsel %vm4675, %v4787, %v4789
    %v4796 = vsel %vm187, %v4792, 0
    %v4798 = vsel %vm187, %v4793, 0
    %4800 = vmatprep.subr.mxu0 0.0
    %4801 = vmatpush1.msra.mxu0 0.0
    %4802 = vmatprep.subr.mxu0 0.0
    %4803 = vmatpush1.msra.mxu0 0.0
    %4804 = vmatprep.subr.mxu0 0.0
    %4805 = vmatpush1.msra.mxu0 0.0
    %4806 = vmatprep.subr.mxu0 0.0
    %4807 = vmatpush1.msra.mxu0 0.0
    %4808 = vmatprep.subr.mxu0 0.0
    %4809 = vmatpush1.msra.mxu0 0.0
    %4810 = vmatprep.subr.mxu0 0.0
    %4811 = vmatpush1.msra.mxu0 0.0
    %4812 = vmatprep.subr.mxu0 0.0
    %4813 = vmatpush1.msra.mxu0 0.0
    %4814 = vmatprep.subr.mxu0 0.0
    %4815 = vmatpush1.msra.mxu0 0.0
    %4816 = vmatprep.subr.mxu0 0.0
    %4817 = vmatpush1.msra.mxu0 0.0
    %4818 = vmatprep.subr.mxu0 0.0
    %4819 = vmatpush1.msra.mxu0 0.0
    %4820 = vmatprep.subr.mxu0 0.0
    %4821 = vmatpush1.msra.mxu0 0.0
    %4822 = vmatprep.subr.mxu0 0.0
    %4823 = vmatpush1.msra.mxu0 0.0
    %4824 = vmatprep.subr.mxu0 0.0
    %4825 = vmatpush1.msra.mxu0 0.0
    %4826 = vmatprep.subr.mxu0 0.0
    %4827 = vmatpush1.msra.mxu0 0.0
    %4828 = vmatprep.subr.mxu0 %v4798
    %4829 = vmatpush1.msra.mxu0 %v4796
    %4830 = vmatprep.subr.mxu0 %v4791
    %4831 = vmatpush1.msra.mxu0 %v4790
    %4832 = vmatprep.subr.mxu0 0.0
    %4833 = vmatpush2.msra.mxu0 0.0
    %4834 = vmatprep.subr.mxu0 0.0
    %4835 = vmatpush2.msra.mxu0 0.0
    %4836 = vmatprep.subr.mxu0 0.0
    %4837 = vmatpush2.msra.mxu0 0.0
    %4838 = vmatprep.subr.mxu0 0.0
    %4839 = vmatpush2.msra.mxu0 0.0
    %4840 = vmatprep.subr.mxu0 0.0
    %4841 = vmatpush2.msra.mxu0 0.0
    %4842 = vmatprep.subr.mxu0 0.0
    %4843 = vmatpush2.msra.mxu0 0.0
    %4844 = vmatprep.subr.mxu0 0.0
    %4845 = vmatpush2.msra.mxu0 0.0
    %4846 = vmatprep.subr.mxu0 0.0
    %4847 = vmatpush2.msra.mxu0 0.0
    %4848 = vmatprep.subr.mxu0 0.0
    %4849 = vmatpush2.msra.mxu0 0.0
    %4850 = vmatprep.subr.mxu0 0.0
    %4851 = vmatpush2.msra.mxu0 0.0
    %4852 = vmatprep.subr.mxu0 0.0
    %4853 = vmatpush2.msra.mxu0 0.0
    %4854 = vmatprep.subr.mxu0 0.0
    %4855 = vmatpush2.msra.mxu0 0.0
    %4856 = vmatprep.subr.mxu0 0.0
    %4857 = vmatpush2.msra.mxu0 0.0
    %4858 = vmatprep.subr.mxu0 0.0
    %4859 = vmatpush2.msra.mxu0 0.0
    %4860 = vmatprep.subr.mxu0 0.0
    %4861 = vmatpush2.msra.mxu0 0.0
    %4862 = vmatprep.subr.mxu0 0.0
    %4863 = vmatpush2.msra.mxu0 0.0
    %4864 = vmatprep.mubr.f32.mxu0 0.0
    %4865 = vmatmul.mubr.f32.gmra.mxu0 %v4683
    %v4866 = vpop.f32.mrf.mxu0
    %v4867 = vadd.f32 0.0, %v4866
    %v4868 = vpop.f32.mrf.mxu0
    %v4869 = vadd.f32 0.0, %v4868
    %4870 = vdwg.mxu0
    %v4871 = vadd.f32 %v4638, %v4867
    %v4872 = vadd.f32 %v4639, %v4869
    %4873 = vrot.lane.b32.xlu0 %v140, 79
    %v4874 = vpop.permute.xlu0 %4873
    %v4875 = vrot.slane %v4874, 4
    %vm4876 = vcmask 646144
    %v4877 = vsel %vm4876, %v4875, %v4874
    %vm4878 = vcmp.ne.s16.totalorder %v4877, 0
    %vm4879 = vcmp.ne.s16.totalorder %v4875, 0
    %v4880 = vsel %vm4878, %v43, 0
    %v4881 = vsel %vm4879, %v44, 0
    %v4882 = vsel %vm4878, %v45, 0
    %v4883 = vsel %vm4879, %v46, 0
    %v4884 = vunpack.c.l.bf16 %v4880
    %v4885 = vunpack.c.h.bf16 %v4880
    %v4886 = vunpack.c.l.bf16 %v4881
    %v4887 = vunpack.c.l.bf16 %v4882
    %v4888 = vunpack.c.h.bf16 %v4882
    %v4889 = vunpack.c.l.bf16 %v4883
    %4896 = vrot.lane.b32.xlu0 %v4884, 49
    %v4897 = vpop.permute.xlu0 %4896
    %4898 = vrot.lane.b32.xlu0 %v4885, 49
    %v4899 = vpop.permute.xlu0 %4898
    %4900 = vrot.lane.b32.xlu0 %v4886, 49
    %v4901 = vpop.permute.xlu0 %4900
    %4902 = vrot.lane.b32.xlu0 %v4887, 49
    %v4903 = vpop.permute.xlu0 %4902
    %4904 = vrot.lane.b32.xlu0 %v4888, 49
    %v4905 = vpop.permute.xlu0 %4904
    %4906 = vrot.lane.b32.xlu0 %v4889, 49
    %v4907 = vpop.permute.xlu0 %4906
    %vm4908 = vcmask 400384
    %v4909 = vsel %vm4908, %v4897, %v4899
    %v4910 = vsel %vm4908, %v4899, %v4901
    %v4911 = vsel %vm4908, %v4903, %v4905
    %v4912 = vsel %vm4908, %v4905, %v4907
    %v4916 = vsel %vm183, %v39, 0
    %v4918 = vsel %vm187, %v4911, 0
    %v4920 = vsel %vm187, %v4912, 0
    %4922 = vmatprep.subr.mxu0 0.0
    %4923 = vmatpush1.msra.mxu0 0.0
    %4924 = vmatprep.subr.mxu0 0.0
    %4925 = vmatpush1.msra.mxu0 0.0
    %4926 = vmatprep.subr.mxu0 0.0
    %4927 = vmatpush1.msra.mxu0 0.0
    %4928 = vmatprep.subr.mxu0 0.0
    %4929 = vmatpush1.msra.mxu0 0.0
    %4930 = vmatprep.subr.mxu0 0.0
    %4931 = vmatpush1.msra.mxu0 0.0
    %4932 = vmatprep.subr.mxu0 0.0
    %4933 = vmatpush1.msra.mxu0 0.0
    %4934 = vmatprep.subr.mxu0 0.0
    %4935 = vmatpush1.msra.mxu0 0.0
    %4936 = vmatprep.subr.mxu0 0.0
    %4937 = vmatpush1.msra.mxu0 0.0
    %4938 = vmatprep.subr.mxu0 0.0
    %4939 = vmatpush1.msra.mxu0 0.0
    %4940 = vmatprep.subr.mxu0 0.0
    %4941 = vmatpush1.msra.mxu0 0.0
    %4942 = vmatprep.subr.mxu0 0.0
    %4943 = vmatpush1.msra.mxu0 0.0
    %4944 = vmatprep.subr.mxu0 0.0
    %4945 = vmatpush1.msra.mxu0 0.0
    %4946 = vmatprep.subr.mxu0 0.0
    %4947 = vmatpush1.msra.mxu0 0.0
    %4948 = vmatprep.subr.mxu0 0.0
    %4949 = vmatpush1.msra.mxu0 0.0
    %4950 = vmatprep.subr.mxu0 %v4920
    %4951 = vmatpush1.msra.mxu0 %v4918
    %4952 = vmatprep.subr.mxu0 %v4910
    %4953 = vmatpush1.msra.mxu0 %v4909
    %4954 = vmatprep.subr.mxu0 0.0
    %4955 = vmatpush2.msra.mxu0 0.0
    %4956 = vmatprep.subr.mxu0 0.0
    %4957 = vmatpush2.msra.mxu0 0.0
    %4958 = vmatprep.subr.mxu0 0.0
    %4959 = vmatpush2.msra.mxu0 0.0
    %4960 = vmatprep.subr.mxu0 0.0
    %4961 = vmatpush2.msra.mxu0 0.0
    %4962 = vmatprep.subr.mxu0 0.0
    %4963 = vmatpush2.msra.mxu0 0.0
    %4964 = vmatprep.subr.mxu0 0.0
    %4965 = vmatpush2.msra.mxu0 0.0
    %4966 = vmatprep.subr.mxu0 0.0
    %4967 = vmatpush2.msra.mxu0 0.0
    %4968 = vmatprep.subr.mxu0 0.0
    %4969 = vmatpush2.msra.mxu0 0.0
    %4970 = vmatprep.subr.mxu0 0.0
    %4971 = vmatpush2.msra.mxu0 0.0
    %4972 = vmatprep.subr.mxu0 0.0
    %4973 = vmatpush2.msra.mxu0 0.0
    %4974 = vmatprep.subr.mxu0 0.0
    %4975 = vmatpush2.msra.mxu0 0.0
    %4976 = vmatprep.subr.mxu0 0.0
    %4977 = vmatpush2.msra.mxu0 0.0
    %4978 = vmatprep.subr.mxu0 0.0
    %4979 = vmatpush2.msra.mxu0 0.0
    %4980 = vmatprep.subr.mxu0 0.0
    %4981 = vmatpush2.msra.mxu0 0.0
    %4982 = vmatprep.subr.mxu0 0.0
    %4983 = vmatpush2.msra.mxu0 0.0
    %4984 = vmatprep.subr.mxu0 0.0
    %4985 = vmatpush2.msra.mxu0 0.0
    %4986 = vmatprep.mubr.f32.mxu0 0.0
    %4987 = vmatmul.mubr.f32.gmra.mxu0 %v4916
    %v4988 = vpop.f32.mrf.mxu0
    %v4989 = vadd.f32 0.0, %v4988
    %v4990 = vpop.f32.mrf.mxu0
    %v4991 = vadd.f32 0.0, %v4990
    %4992 = vdwg.mxu0
    %v4993 = vadd.f32 %v4760, %v4989
    %v4994 = vadd.f32 %v4761, %v4991
    %v4995 = vsel %vm4878, %v47, 0
    %v4996 = vsel %vm4879, %v48, 0
    %v4997 = vsel %vm4878, %v49, 0
    %v4998 = vsel %vm4879, %v50, 0
    %v4999 = vunpack.c.l.bf16 %v4995
    %v5000 = vunpack.c.h.bf16 %v4995
    %v5001 = vunpack.c.l.bf16 %v4996
    %v5002 = vunpack.c.l.bf16 %v4997
    %v5003 = vunpack.c.h.bf16 %v4997
    %v5004 = vunpack.c.l.bf16 %v4998
    %5011 = vrot.lane.b32.xlu0 %v4999, 49
    %v5012 = vpop.permute.xlu0 %5011
    %5013 = vrot.lane.b32.xlu0 %v5000, 49
    %v5014 = vpop.permute.xlu0 %5013
    %5015 = vrot.lane.b32.xlu0 %v5001, 49
    %v5016 = vpop.permute.xlu0 %5015
    %5017 = vrot.lane.b32.xlu0 %v5002, 49
    %v5018 = vpop.permute.xlu0 %5017
    %5019 = vrot.lane.b32.xlu0 %v5003, 49
    %v5020 = vpop.permute.xlu0 %5019
    %5021 = vrot.lane.b32.xlu0 %v5004, 49
    %v5022 = vpop.permute.xlu0 %5021
    %v5023 = vsel %vm4908, %v5012, %v5014
    %v5024 = vsel %vm4908, %v5014, %v5016
    %v5025 = vsel %vm4908, %v5018, %v5020
    %v5026 = vsel %vm4908, %v5020, %v5022
    %v5029 = vsel %vm187, %v5025, 0
    %v5031 = vsel %vm187, %v5026, 0
    %5033 = vmatprep.subr.mxu0 0.0
    %5034 = vmatpush1.msra.mxu0 0.0
    %5035 = vmatprep.subr.mxu0 0.0
    %5036 = vmatpush1.msra.mxu0 0.0
    %5037 = vmatprep.subr.mxu0 0.0
    %5038 = vmatpush1.msra.mxu0 0.0
    %5039 = vmatprep.subr.mxu0 0.0
    %5040 = vmatpush1.msra.mxu0 0.0
    %5041 = vmatprep.subr.mxu0 0.0
    %5042 = vmatpush1.msra.mxu0 0.0
    %5043 = vmatprep.subr.mxu0 0.0
    %5044 = vmatpush1.msra.mxu0 0.0
    %5045 = vmatprep.subr.mxu0 0.0
    %5046 = vmatpush1.msra.mxu0 0.0
    %5047 = vmatprep.subr.mxu0 0.0
    %5048 = vmatpush1.msra.mxu0 0.0
    %5049 = vmatprep.subr.mxu0 0.0
    %5050 = vmatpush1.msra.mxu0 0.0
    %5051 = vmatprep.subr.mxu0 0.0
    %5052 = vmatpush1.msra.mxu0 0.0
    %5053 = vmatprep.subr.mxu0 0.0
    %5054 = vmatpush1.msra.mxu0 0.0
    %5055 = vmatprep.subr.mxu0 0.0
    %5056 = vmatpush1.msra.mxu0 0.0
    %5057 = vmatprep.subr.mxu0 0.0
    %5058 = vmatpush1.msra.mxu0 0.0
    %5059 = vmatprep.subr.mxu0 0.0
    %5060 = vmatpush1.msra.mxu0 0.0
    %5061 = vmatprep.subr.mxu0 %v5031
    %5062 = vmatpush1.msra.mxu0 %v5029
    %5063 = vmatprep.subr.mxu0 %v5024
    %5064 = vmatpush1.msra.mxu0 %v5023
    %5065 = vmatprep.subr.mxu0 0.0
    %5066 = vmatpush2.msra.mxu0 0.0
    %5067 = vmatprep.subr.mxu0 0.0
    %5068 = vmatpush2.msra.mxu0 0.0
    %5069 = vmatprep.subr.mxu0 0.0
    %5070 = vmatpush2.msra.mxu0 0.0
    %5071 = vmatprep.subr.mxu0 0.0
    %5072 = vmatpush2.msra.mxu0 0.0
    %5073 = vmatprep.subr.mxu0 0.0
    %5074 = vmatpush2.msra.mxu0 0.0
    %5075 = vmatprep.subr.mxu0 0.0
    %5076 = vmatpush2.msra.mxu0 0.0
    %5077 = vmatprep.subr.mxu0 0.0
    %5078 = vmatpush2.msra.mxu0 0.0
    %5079 = vmatprep.subr.mxu0 0.0
    %5080 = vmatpush2.msra.mxu0 0.0
    %5081 = vmatprep.subr.mxu0 0.0
    %5082 = vmatpush2.msra.mxu0 0.0
    %5083 = vmatprep.subr.mxu0 0.0
    %5084 = vmatpush2.msra.mxu0 0.0
    %5085 = vmatprep.subr.mxu0 0.0
    %5086 = vmatpush2.msra.mxu0 0.0
    %5087 = vmatprep.subr.mxu0 0.0
    %5088 = vmatpush2.msra.mxu0 0.0
    %5089 = vmatprep.subr.mxu0 0.0
    %5090 = vmatpush2.msra.mxu0 0.0
    %5091 = vmatprep.subr.mxu0 0.0
    %5092 = vmatpush2.msra.mxu0 0.0
    %5093 = vmatprep.subr.mxu0 0.0
    %5094 = vmatpush2.msra.mxu0 0.0
    %5095 = vmatprep.subr.mxu0 0.0
    %5096 = vmatpush2.msra.mxu0 0.0
    %5097 = vmatprep.mubr.f32.mxu0 0.0
    %5098 = vmatmul.mubr.f32.gmra.mxu0 %v4916
    %v5099 = vpop.f32.mrf.mxu0
    %v5100 = vadd.f32 0.0, %v5099
    %v5101 = vpop.f32.mrf.mxu0
    %v5102 = vadd.f32 0.0, %v5101
    %5103 = vdwg.mxu0
    %v5104 = vadd.f32 %v4871, %v5100
    %v5105 = vadd.f32 %v4872, %v5102
    %5106 = vrot.lane.b32.xlu0 %v574, 48
    %v5107 = vpop.permute.xlu0 %5106
    %5108 = vrot.lane.b32.xlu0 %v575, 48
    %v5109 = vpop.permute.xlu0 %5108
    %5110 = vrot.lane.b32.xlu0 %v576, 48
    %v5111 = vpop.permute.xlu0 %5110
    %5112 = vrot.lane.b32.xlu0 %v577, 48
    %v5113 = vpop.permute.xlu0 %5112
    %5114 = vrot.lane.b32.xlu0 %v578, 48
    %v5115 = vpop.permute.xlu0 %5114
    %5116 = vrot.lane.b32.xlu0 %v579, 48
    %v5117 = vpop.permute.xlu0 %5116
    %vm5118 = vcmask 392192
    %v5119 = vsel %vm5118, %v5107, %v5109
    %v5120 = vsel %vm5118, %v5109, %v5111
    %v5121 = vsel %vm5118, %v5113, %v5115
    %v5122 = vsel %vm5118, %v5115, %v5117
    %v5126 = vsel %vm183, %v40, 0
    %v5128 = vsel %vm187, %v5121, 0
    %v5130 = vsel %vm187, %v5122, 0
    %5132 = vmatprep.subr.mxu0 0.0
    %5133 = vmatpush1.msra.mxu0 0.0
    %5134 = vmatprep.subr.mxu0 0.0
    %5135 = vmatpush1.msra.mxu0 0.0
    %5136 = vmatprep.subr.mxu0 0.0
    %5137 = vmatpush1.msra.mxu0 0.0
    %5138 = vmatprep.subr.mxu0 0.0
    %5139 = vmatpush1.msra.mxu0 0.0
    %5140 = vmatprep.subr.mxu0 0.0
    %5141 = vmatpush1.msra.mxu0 0.0
    %5142 = vmatprep.subr.mxu0 0.0
    %5143 = vmatpush1.msra.mxu0 0.0
    %5144 = vmatprep.subr.mxu0 0.0
    %5145 = vmatpush1.msra.mxu0 0.0
    %5146 = vmatprep.subr.mxu0 0.0
    %5147 = vmatpush1.msra.mxu0 0.0
    %5148 = vmatprep.subr.mxu0 0.0
    %5149 = vmatpush1.msra.mxu0 0.0
    %5150 = vmatprep.subr.mxu0 0.0
    %5151 = vmatpush1.msra.mxu0 0.0
    %5152 = vmatprep.subr.mxu0 0.0
    %5153 = vmatpush1.msra.mxu0 0.0
    %5154 = vmatprep.subr.mxu0 0.0
    %5155 = vmatpush1.msra.mxu0 0.0
    %5156 = vmatprep.subr.mxu0 0.0
    %5157 = vmatpush1.msra.mxu0 0.0
    %5158 = vmatprep.subr.mxu0 0.0
    %5159 = vmatpush1.msra.mxu0 0.0
    %5160 = vmatprep.subr.mxu0 %v5130
    %5161 = vmatpush1.msra.mxu0 %v5128
    %5162 = vmatprep.subr.mxu0 %v5120
    %5163 = vmatpush1.msra.mxu0 %v5119
    %5164 = vmatprep.subr.mxu0 0.0
    %5165 = vmatpush2.msra.mxu0 0.0
    %5166 = vmatprep.subr.mxu0 0.0
    %5167 = vmatpush2.msra.mxu0 0.0
    %5168 = vmatprep.subr.mxu0 0.0
    %5169 = vmatpush2.msra.mxu0 0.0
    %5170 = vmatprep.subr.mxu0 0.0
    %5171 = vmatpush2.msra.mxu0 0.0
    %5172 = vmatprep.subr.mxu0 0.0
    %5173 = vmatpush2.msra.mxu0 0.0
    %5174 = vmatprep.subr.mxu0 0.0
    %5175 = vmatpush2.msra.mxu0 0.0
    %5176 = vmatprep.subr.mxu0 0.0
    %5177 = vmatpush2.msra.mxu0 0.0
    %5178 = vmatprep.subr.mxu0 0.0
    %5179 = vmatpush2.msra.mxu0 0.0
    %5180 = vmatprep.subr.mxu0 0.0
    %5181 = vmatpush2.msra.mxu0 0.0
    %5182 = vmatprep.subr.mxu0 0.0
    %5183 = vmatpush2.msra.mxu0 0.0
    %5184 = vmatprep.subr.mxu0 0.0
    %5185 = vmatpush2.msra.mxu0 0.0
    %5186 = vmatprep.subr.mxu0 0.0
    %5187 = vmatpush2.msra.mxu0 0.0
    %5188 = vmatprep.subr.mxu0 0.0
    %5189 = vmatpush2.msra.mxu0 0.0
    %5190 = vmatprep.subr.mxu0 0.0
    %5191 = vmatpush2.msra.mxu0 0.0
    %5192 = vmatprep.subr.mxu0 0.0
    %5193 = vmatpush2.msra.mxu0 0.0
    %5194 = vmatprep.subr.mxu0 0.0
    %5195 = vmatpush2.msra.mxu0 0.0
    %5196 = vmatprep.mubr.f32.mxu0 0.0
    %5197 = vmatmul.mubr.f32.gmra.mxu0 %v5126
    %v5198 = vpop.f32.mrf.mxu0
    %v5199 = vadd.f32 0.0, %v5198
    %v5200 = vpop.f32.mrf.mxu0
    %v5201 = vadd.f32 0.0, %v5200
    %5202 = vdwg.mxu0
    %v5203 = vadd.f32 %v4993, %v5199
    %v5204 = vadd.f32 %v4994, %v5201
    %5205 = vrot.lane.b32.xlu0 %v685, 48
    %v5206 = vpop.permute.xlu0 %5205
    %5207 = vrot.lane.b32.xlu0 %v686, 48
    %v5208 = vpop.permute.xlu0 %5207
    %5209 = vrot.lane.b32.xlu0 %v687, 48
    %v5210 = vpop.permute.xlu0 %5209
    %5211 = vrot.lane.b32.xlu0 %v688, 48
    %v5212 = vpop.permute.xlu0 %5211
    %5213 = vrot.lane.b32.xlu0 %v689, 48
    %v5214 = vpop.permute.xlu0 %5213
    %5215 = vrot.lane.b32.xlu0 %v690, 48
    %v5216 = vpop.permute.xlu0 %5215
    %v5217 = vsel %vm5118, %v5206, %v5208
    %v5218 = vsel %vm5118, %v5208, %v5210
    %v5219 = vsel %vm5118, %v5212, %v5214
    %v5220 = vsel %vm5118, %v5214, %v5216
    %v5223 = vsel %vm187, %v5219, 0
    %v5225 = vsel %vm187, %v5220, 0
    %5227 = vmatprep.subr.mxu0 0.0
    %5228 = vmatpush1.msra.mxu0 0.0
    %5229 = vmatprep.subr.mxu0 0.0
    %5230 = vmatpush1.msra.mxu0 0.0
    %5231 = vmatprep.subr.mxu0 0.0
    %5232 = vmatpush1.msra.mxu0 0.0
    %5233 = vmatprep.subr.mxu0 0.0
    %5234 = vmatpush1.msra.mxu0 0.0
    %5235 = vmatprep.subr.mxu0 0.0
    %5236 = vmatpush1.msra.mxu0 0.0
    %5237 = vmatprep.subr.mxu0 0.0
    %5238 = vmatpush1.msra.mxu0 0.0
    %5239 = vmatprep.subr.mxu0 0.0
    %5240 = vmatpush1.msra.mxu0 0.0
    %5241 = vmatprep.subr.mxu0 0.0
    %5242 = vmatpush1.msra.mxu0 0.0
    %5243 = vmatprep.subr.mxu0 0.0
    %5244 = vmatpush1.msra.mxu0 0.0
    %5245 = vmatprep.subr.mxu0 0.0
    %5246 = vmatpush1.msra.mxu0 0.0
    %5247 = vmatprep.subr.mxu0 0.0
    %5248 = vmatpush1.msra.mxu0 0.0
    %5249 = vmatprep.subr.mxu0 0.0
    %5250 = vmatpush1.msra.mxu0 0.0
    %5251 = vmatprep.subr.mxu0 0.0
    %5252 = vmatpush1.msra.mxu0 0.0
    %5253 = vmatprep.subr.mxu0 0.0
    %5254 = vmatpush1.msra.mxu0 0.0
    %5255 = vmatprep.subr.mxu0 %v5225
    %5256 = vmatpush1.msra.mxu0 %v5223
    %5257 = vmatprep.subr.mxu0 %v5218
    %5258 = vmatpush1.msra.mxu0 %v5217
    %5259 = vmatprep.subr.mxu0 0.0
    %5260 = vmatpush2.msra.mxu0 0.0
    %5261 = vmatprep.subr.mxu0 0.0
    %5262 = vmatpush2.msra.mxu0 0.0
    %5263 = vmatprep.subr.mxu0 0.0
    %5264 = vmatpush2.msra.mxu0 0.0
    %5265 = vmatprep.subr.mxu0 0.0
    %5266 = vmatpush2.msra.mxu0 0.0
    %5267 = vmatprep.subr.mxu0 0.0
    %5268 = vmatpush2.msra.mxu0 0.0
    %5269 = vmatprep.subr.mxu0 0.0
    %5270 = vmatpush2.msra.mxu0 0.0
    %5271 = vmatprep.subr.mxu0 0.0
    %5272 = vmatpush2.msra.mxu0 0.0
    %5273 = vmatprep.subr.mxu0 0.0
    %5274 = vmatpush2.msra.mxu0 0.0
    %5275 = vmatprep.subr.mxu0 0.0
    %5276 = vmatpush2.msra.mxu0 0.0
    %5277 = vmatprep.subr.mxu0 0.0
    %5278 = vmatpush2.msra.mxu0 0.0
    %5279 = vmatprep.subr.mxu0 0.0
    %5280 = vmatpush2.msra.mxu0 0.0
    %5281 = vmatprep.subr.mxu0 0.0
    %5282 = vmatpush2.msra.mxu0 0.0
    %5283 = vmatprep.subr.mxu0 0.0
    %5284 = vmatpush2.msra.mxu0 0.0
    %5285 = vmatprep.subr.mxu0 0.0
    %5286 = vmatpush2.msra.mxu0 0.0
    %5287 = vmatprep.subr.mxu0 0.0
    %5288 = vmatpush2.msra.mxu0 0.0
    %5289 = vmatprep.subr.mxu0 0.0
    %5290 = vmatpush2.msra.mxu0 0.0
    %5291 = vmatprep.mubr.f32.mxu0 0.0
    %5292 = vmatmul.mubr.f32.gmra.mxu0 %v5126
    %v5293 = vpop.f32.mrf.mxu0
    %v5294 = vadd.f32 0.0, %v5293
    %v5295 = vpop.f32.mrf.mxu0
    %v5296 = vadd.f32 0.0, %v5295
    %5297 = vdwg.mxu0
    %v5298 = vadd.f32 %v5104, %v5294
    %v5299 = vadd.f32 %v5105, %v5296
    %5300 = vrot.lane.b32.xlu0 %v793, 81
    %v5301 = vpop.permute.xlu0 %5300
    %v5302 = vrot.slane %v5301, 4
    %vm5303 = vcmask 662528
    %v5304 = vsel %vm5303, %v5302, %v5301
    %vm5305 = vcmp.ne.s16.totalorder %v5304, 0
    %vm5306 = vcmp.ne.s16.totalorder %v5302, 0
    %v5307 = vsel %vm5305, %v43, 0
    %v5308 = vsel %vm5306, %v44, 0
    %v5309 = vsel %vm5305, %v45, 0
    %v5310 = vsel %vm5306, %v46, 0
    %v5311 = vunpack.c.l.bf16 %v5307
    %v5312 = vunpack.c.h.bf16 %v5307
    %v5313 = vunpack.c.l.bf16 %v5308
    %v5314 = vunpack.c.l.bf16 %v5309
    %v5315 = vunpack.c.h.bf16 %v5309
    %v5316 = vunpack.c.l.bf16 %v5310
    %5323 = vrot.lane.b32.xlu0 %v5311, 47
    %v5324 = vpop.permute.xlu0 %5323
    %5325 = vrot.lane.b32.xlu0 %v5312, 47
    %v5326 = vpop.permute.xlu0 %5325
    %5327 = vrot.lane.b32.xlu0 %v5313, 47
    %v5328 = vpop.permute.xlu0 %5327
    %5329 = vrot.lane.b32.xlu0 %v5314, 47
    %v5330 = vpop.permute.xlu0 %5329
    %5331 = vrot.lane.b32.xlu0 %v5315, 47
    %v5332 = vpop.permute.xlu0 %5331
    %5333 = vrot.lane.b32.xlu0 %v5316, 47
    %v5334 = vpop.permute.xlu0 %5333
    %vm5335 = vcmask 384000
    %v5336 = vsel %vm5335, %v5324, %v5326
    %v5337 = vsel %vm5335, %v5326, %v5328
    %v5338 = vsel %vm5335, %v5330, %v5332
    %v5339 = vsel %vm5335, %v5332, %v5334
    %v5343 = vsel %vm183, %v41, 0
    %v5345 = vsel %vm187, %v5338, 0
    %v5347 = vsel %vm187, %v5339, 0
    %5349 = vmatprep.subr.mxu0 0.0
    %5350 = vmatpush1.msra.mxu0 0.0
    %5351 = vmatprep.subr.mxu0 0.0
    %5352 = vmatpush1.msra.mxu0 0.0
    %5353 = vmatprep.subr.mxu0 0.0
    %5354 = vmatpush1.msra.mxu0 0.0
    %5355 = vmatprep.subr.mxu0 0.0
    %5356 = vmatpush1.msra.mxu0 0.0
    %5357 = vmatprep.subr.mxu0 0.0
    %5358 = vmatpush1.msra.mxu0 0.0
    %5359 = vmatprep.subr.mxu0 0.0
    %5360 = vmatpush1.msra.mxu0 0.0
    %5361 = vmatprep.subr.mxu0 0.0
    %5362 = vmatpush1.msra.mxu0 0.0
    %5363 = vmatprep.subr.mxu0 0.0
    %5364 = vmatpush1.msra.mxu0 0.0
    %5365 = vmatprep.subr.mxu0 0.0
    %5366 = vmatpush1.msra.mxu0 0.0
    %5367 = vmatprep.subr.mxu0 0.0
    %5368 = vmatpush1.msra.mxu0 0.0
    %5369 = vmatprep.subr.mxu0 0.0
    %5370 = vmatpush1.msra.mxu0 0.0
    %5371 = vmatprep.subr.mxu0 0.0
    %5372 = vmatpush1.msra.mxu0 0.0
    %5373 = vmatprep.subr.mxu0 0.0
    %5374 = vmatpush1.msra.mxu0 0.0
    %5375 = vmatprep.subr.mxu0 0.0
    %5376 = vmatpush1.msra.mxu0 0.0
    %5377 = vmatprep.subr.mxu0 %v5347
    %5378 = vmatpush1.msra.mxu0 %v5345
    %5379 = vmatprep.subr.mxu0 %v5337
    %5380 = vmatpush1.msra.mxu0 %v5336
    %5381 = vmatprep.subr.mxu0 0.0
    %5382 = vmatpush2.msra.mxu0 0.0
    %5383 = vmatprep.subr.mxu0 0.0
    %5384 = vmatpush2.msra.mxu0 0.0
    %5385 = vmatprep.subr.mxu0 0.0
    %5386 = vmatpush2.msra.mxu0 0.0
    %5387 = vmatprep.subr.mxu0 0.0
    %5388 = vmatpush2.msra.mxu0 0.0
    %5389 = vmatprep.subr.mxu0 0.0
    %5390 = vmatpush2.msra.mxu0 0.0
    %5391 = vmatprep.subr.mxu0 0.0
    %5392 = vmatpush2.msra.mxu0 0.0
    %5393 = vmatprep.subr.mxu0 0.0
    %5394 = vmatpush2.msra.mxu0 0.0
    %5395 = vmatprep.subr.mxu0 0.0
    %5396 = vmatpush2.msra.mxu0 0.0
    %5397 = vmatprep.subr.mxu0 0.0
    %5398 = vmatpush2.msra.mxu0 0.0
    %5399 = vmatprep.subr.mxu0 0.0
    %5400 = vmatpush2.msra.mxu0 0.0
    %5401 = vmatprep.subr.mxu0 0.0
    %5402 = vmatpush2.msra.mxu0 0.0
    %5403 = vmatprep.subr.mxu0 0.0
    %5404 = vmatpush2.msra.mxu0 0.0
    %5405 = vmatprep.subr.mxu0 0.0
    %5406 = vmatpush2.msra.mxu0 0.0
    %5407 = vmatprep.subr.mxu0 0.0
    %5408 = vmatpush2.msra.mxu0 0.0
    %5409 = vmatprep.subr.mxu0 0.0
    %5410 = vmatpush2.msra.mxu0 0.0
    %5411 = vmatprep.subr.mxu0 0.0
    %5412 = vmatpush2.msra.mxu0 0.0
    %5413 = vmatprep.mubr.f32.mxu0 0.0
    %5414 = vmatmul.mubr.f32.gmra.mxu0 %v5343
    %v5415 = vpop.f32.mrf.mxu0
    %v5416 = vadd.f32 0.0, %v5415
    %v5417 = vpop.f32.mrf.mxu0
    %v5418 = vadd.f32 0.0, %v5417
    %5419 = vdwg.mxu0
    %v5420 = vadd.f32 %v5203, %v5416
    %v5421 = vadd.f32 %v5204, %v5418
    %v5422 = vsel %vm5305, %v47, 0
    %v5423 = vsel %vm5306, %v48, 0
    %v5424 = vsel %vm5305, %v49, 0
    %v5425 = vsel %vm5306, %v50, 0
    %v5426 = vunpack.c.l.bf16 %v5422
    %v5427 = vunpack.c.h.bf16 %v5422
    %v5428 = vunpack.c.l.bf16 %v5423
    %v5429 = vunpack.c.l.bf16 %v5424
    %v5430 = vunpack.c.h.bf16 %v5424
    %v5431 = vunpack.c.l.bf16 %v5425
    %5438 = vrot.lane.b32.xlu0 %v5426, 47
    %v5439 = vpop.permute.xlu0 %5438
    %5440 = vrot.lane.b32.xlu0 %v5427, 47
    %v5441 = vpop.permute.xlu0 %5440
    %5442 = vrot.lane.b32.xlu0 %v5428, 47
    %v5443 = vpop.permute.xlu0 %5442
    %5444 = vrot.lane.b32.xlu0 %v5429, 47
    %v5445 = vpop.permute.xlu0 %5444
    %5446 = vrot.lane.b32.xlu0 %v5430, 47
    %v5447 = vpop.permute.xlu0 %5446
    %5448 = vrot.lane.b32.xlu0 %v5431, 47
    %v5449 = vpop.permute.xlu0 %5448
    %v5450 = vsel %vm5335, %v5439, %v5441
    %v5451 = vsel %vm5335, %v5441, %v5443
    %v5452 = vsel %vm5335, %v5445, %v5447
    %v5453 = vsel %vm5335, %v5447, %v5449
    %v5456 = vsel %vm187, %v5452, 0
    %v5458 = vsel %vm187, %v5453, 0
    %5460 = vmatprep.subr.mxu0 0.0
    %5461 = vmatpush1.msra.mxu0 0.0
    %5462 = vmatprep.subr.mxu0 0.0
    %5463 = vmatpush1.msra.mxu0 0.0
    %5464 = vmatprep.subr.mxu0 0.0
    %5465 = vmatpush1.msra.mxu0 0.0
    %5466 = vmatprep.subr.mxu0 0.0
    %5467 = vmatpush1.msra.mxu0 0.0
    %5468 = vmatprep.subr.mxu0 0.0
    %5469 = vmatpush1.msra.mxu0 0.0
    %5470 = vmatprep.subr.mxu0 0.0
    %5471 = vmatpush1.msra.mxu0 0.0
    %5472 = vmatprep.subr.mxu0 0.0
    %5473 = vmatpush1.msra.mxu0 0.0
    %5474 = vmatprep.subr.mxu0 0.0
    %5475 = vmatpush1.msra.mxu0 0.0
    %5476 = vmatprep.subr.mxu0 0.0
    %5477 = vmatpush1.msra.mxu0 0.0
    %5478 = vmatprep.subr.mxu0 0.0
    %5479 = vmatpush1.msra.mxu0 0.0
    %5480 = vmatprep.subr.mxu0 0.0
    %5481 = vmatpush1.msra.mxu0 0.0
    %5482 = vmatprep.subr.mxu0 0.0
    %5483 = vmatpush1.msra.mxu0 0.0
    %5484 = vmatprep.subr.mxu0 0.0
    %5485 = vmatpush1.msra.mxu0 0.0
    %5486 = vmatprep.subr.mxu0 0.0
    %5487 = vmatpush1.msra.mxu0 0.0
    %5488 = vmatprep.subr.mxu0 %v5458
    %5489 = vmatpush1.msra.mxu0 %v5456
    %5490 = vmatprep.subr.mxu0 %v5451
    %5491 = vmatpush1.msra.mxu0 %v5450
    %5492 = vmatprep.subr.mxu0 0.0
    %5493 = vmatpush2.msra.mxu0 0.0
    %5494 = vmatprep.subr.mxu0 0.0
    %5495 = vmatpush2.msra.mxu0 0.0
    %5496 = vmatprep.subr.mxu0 0.0
    %5497 = vmatpush2.msra.mxu0 0.0
    %5498 = vmatprep.subr.mxu0 0.0
    %5499 = vmatpush2.msra.mxu0 0.0
    %5500 = vmatprep.subr.mxu0 0.0
    %5501 = vmatpush2.msra.mxu0 0.0
    %5502 = vmatprep.subr.mxu0 0.0
    %5503 = vmatpush2.msra.mxu0 0.0
    %5504 = vmatprep.subr.mxu0 0.0
    %5505 = vmatpush2.msra.mxu0 0.0
    %5506 = vmatprep.subr.mxu0 0.0
    %5507 = vmatpush2.msra.mxu0 0.0
    %5508 = vmatprep.subr.mxu0 0.0
    %5509 = vmatpush2.msra.mxu0 0.0
    %5510 = vmatprep.subr.mxu0 0.0
    %5511 = vmatpush2.msra.mxu0 0.0
    %5512 = vmatprep.subr.mxu0 0.0
    %5513 = vmatpush2.msra.mxu0 0.0
    %5514 = vmatprep.subr.mxu0 0.0
    %5515 = vmatpush2.msra.mxu0 0.0
    %5516 = vmatprep.subr.mxu0 0.0
    %5517 = vmatpush2.msra.mxu0 0.0
    %5518 = vmatprep.subr.mxu0 0.0
    %5519 = vmatpush2.msra.mxu0 0.0
    %5520 = vmatprep.subr.mxu0 0.0
    %5521 = vmatpush2.msra.mxu0 0.0
    %5522 = vmatprep.subr.mxu0 0.0
    %5523 = vmatpush2.msra.mxu0 0.0
    %5524 = vmatprep.mubr.f32.mxu0 0.0
    %5525 = vmatmul.mubr.f32.gmra.mxu0 %v5343
    %v5526 = vpop.f32.mrf.mxu0
    %v5527 = vadd.f32 0.0, %v5526
    %v5528 = vpop.f32.mrf.mxu0
    %v5529 = vadd.f32 0.0, %v5528
    %5530 = vdwg.mxu0
    %v5531 = vadd.f32 %v5298, %v5527
    %v5532 = vadd.f32 %v5299, %v5529
    %5533 = vrot.lane.b32.xlu0 %v1028, 82
    %v5534 = vpop.permute.xlu0 %5533
    %v5535 = vrot.slane %v5534, 4
    %vm5536 = vcmask 670720
    %v5537 = vsel %vm5536, %v5535, %v5534
    %vm5538 = vcmp.ne.s16.totalorder %v5537, 0
    %vm5539 = vcmp.ne.s16.totalorder %v5535, 0
    %v5540 = vsel %vm5538, %v43, 0
    %v5541 = vsel %vm5539, %v44, 0
    %v5542 = vsel %vm5538, %v45, 0
    %v5543 = vsel %vm5539, %v46, 0
    %v5544 = vunpack.c.l.bf16 %v5540
    %v5545 = vunpack.c.h.bf16 %v5540
    %v5546 = vunpack.c.l.bf16 %v5541
    %v5547 = vunpack.c.l.bf16 %v5542
    %v5548 = vunpack.c.h.bf16 %v5542
    %v5549 = vunpack.c.l.bf16 %v5543
    %5556 = vrot.lane.b32.xlu0 %v5544, 46
    %v5557 = vpop.permute.xlu0 %5556
    %5558 = vrot.lane.b32.xlu0 %v5545, 46
    %v5559 = vpop.permute.xlu0 %5558
    %5560 = vrot.lane.b32.xlu0 %v5546, 46
    %v5561 = vpop.permute.xlu0 %5560
    %5562 = vrot.lane.b32.xlu0 %v5547, 46
    %v5563 = vpop.permute.xlu0 %5562
    %5564 = vrot.lane.b32.xlu0 %v5548, 46
    %v5565 = vpop.permute.xlu0 %5564
    %5566 = vrot.lane.b32.xlu0 %v5549, 46
    %v5567 = vpop.permute.xlu0 %5566
    %vm5568 = vcmask 375808
    %v5569 = vsel %vm5568, %v5557, %v5559
    %v5570 = vsel %vm5568, %v5559, %v5561
    %v5571 = vsel %vm5568, %v5563, %v5565
    %v5572 = vsel %vm5568, %v5565, %v5567
    %v5576 = vsel %vm183, %v42, 0
    %v5578 = vsel %vm187, %v5571, 0
    %v5580 = vsel %vm187, %v5572, 0
    %5582 = vmatprep.subr.mxu0 0.0
    %5583 = vmatpush1.msra.mxu0 0.0
    %5584 = vmatprep.subr.mxu0 0.0
    %5585 = vmatpush1.msra.mxu0 0.0
    %5586 = vmatprep.subr.mxu0 0.0
    %5587 = vmatpush1.msra.mxu0 0.0
    %5588 = vmatprep.subr.mxu0 0.0
    %5589 = vmatpush1.msra.mxu0 0.0
    %5590 = vmatprep.subr.mxu0 0.0
    %5591 = vmatpush1.msra.mxu0 0.0
    %5592 = vmatprep.subr.mxu0 0.0
    %5593 = vmatpush1.msra.mxu0 0.0
    %5594 = vmatprep.subr.mxu0 0.0
    %5595 = vmatpush1.msra.mxu0 0.0
    %5596 = vmatprep.subr.mxu0 0.0
    %5597 = vmatpush1.msra.mxu0 0.0
    %5598 = vmatprep.subr.mxu0 0.0
    %5599 = vmatpush1.msra.mxu0 0.0
    %5600 = vmatprep.subr.mxu0 0.0
    %5601 = vmatpush1.msra.mxu0 0.0
    %5602 = vmatprep.subr.mxu0 0.0
    %5603 = vmatpush1.msra.mxu0 0.0
    %5604 = vmatprep.subr.mxu0 0.0
    %5605 = vmatpush1.msra.mxu0 0.0
    %5606 = vmatprep.subr.mxu0 0.0
    %5607 = vmatpush1.msra.mxu0 0.0
    %5608 = vmatprep.subr.mxu0 0.0
    %5609 = vmatpush1.msra.mxu0 0.0
    %5610 = vmatprep.subr.mxu0 %v5580
    %5611 = vmatpush1.msra.mxu0 %v5578
    %5612 = vmatprep.subr.mxu0 %v5570
    %5613 = vmatpush1.msra.mxu0 %v5569
    %5614 = vmatprep.subr.mxu0 0.0
    %5615 = vmatpush2.msra.mxu0 0.0
    %5616 = vmatprep.subr.mxu0 0.0
    %5617 = vmatpush2.msra.mxu0 0.0
    %5618 = vmatprep.subr.mxu0 0.0
    %5619 = vmatpush2.msra.mxu0 0.0
    %5620 = vmatprep.subr.mxu0 0.0
    %5621 = vmatpush2.msra.mxu0 0.0
    %5622 = vmatprep.subr.mxu0 0.0
    %5623 = vmatpush2.msra.mxu0 0.0
    %5624 = vmatprep.subr.mxu0 0.0
    %5625 = vmatpush2.msra.mxu0 0.0
    %5626 = vmatprep.subr.mxu0 0.0
    %5627 = vmatpush2.msra.mxu0 0.0
    %5628 = vmatprep.subr.mxu0 0.0
    %5629 = vmatpush2.msra.mxu0 0.0
    %5630 = vmatprep.subr.mxu0 0.0
    %5631 = vmatpush2.msra.mxu0 0.0
    %5632 = vmatprep.subr.mxu0 0.0
    %5633 = vmatpush2.msra.mxu0 0.0
    %5634 = vmatprep.subr.mxu0 0.0
    %5635 = vmatpush2.msra.mxu0 0.0
    %5636 = vmatprep.subr.mxu0 0.0
    %5637 = vmatpush2.msra.mxu0 0.0
    %5638 = vmatprep.subr.mxu0 0.0
    %5639 = vmatpush2.msra.mxu0 0.0
    %5640 = vmatprep.subr.mxu0 0.0
    %5641 = vmatpush2.msra.mxu0 0.0
    %5642 = vmatprep.subr.mxu0 0.0
    %5643 = vmatpush2.msra.mxu0 0.0
    %5644 = vmatprep.subr.mxu0 0.0
    %5645 = vmatpush2.msra.mxu0 0.0
    %5646 = vmatprep.mubr.f32.mxu0 0.0
    %5647 = vmatmul.mubr.f32.gmra.mxu0 %v5576
    %v5648 = vpop.f32.mrf.mxu0
    %v5649 = vadd.f32 0.0, %v5648
    %v5650 = vpop.f32.mrf.mxu0
    %v5651 = vadd.f32 0.0, %v5650
    %5652 = vdwg.mxu0
    %v5653 = vadd.f32 %v5420, %v5649
    %v5654 = vadd.f32 %v5421, %v5651
    %v5655 = vsel %vm5538, %v47, 0
    %v5656 = vsel %vm5539, %v48, 0
    %v5657 = vsel %vm5538, %v49, 0
    %v5658 = vsel %vm5539, %v50, 0
    %v5659 = vunpack.c.l.bf16 %v5655
    %v5660 = vunpack.c.h.bf16 %v5655
    %v5661 = vunpack.c.l.bf16 %v5656
    %v5662 = vunpack.c.l.bf16 %v5657
    %v5663 = vunpack.c.h.bf16 %v5657
    %v5664 = vunpack.c.l.bf16 %v5658
    %5671 = vrot.lane.b32.xlu0 %v5659, 46
    %v5672 = vpop.permute.xlu0 %5671
    %5673 = vrot.lane.b32.xlu0 %v5660, 46
    %v5674 = vpop.permute.xlu0 %5673
    %5675 = vrot.lane.b32.xlu0 %v5661, 46
    %v5676 = vpop.permute.xlu0 %5675
    %5677 = vrot.lane.b32.xlu0 %v5662, 46
    %v5678 = vpop.permute.xlu0 %5677
    %5679 = vrot.lane.b32.xlu0 %v5663, 46
    %v5680 = vpop.permute.xlu0 %5679
    %5681 = vrot.lane.b32.xlu0 %v5664, 46
    %v5682 = vpop.permute.xlu0 %5681
    %v5683 = vsel %vm5568, %v5672, %v5674
    %v5684 = vsel %vm5568, %v5674, %v5676
    %v5685 = vsel %vm5568, %v5678, %v5680
    %v5686 = vsel %vm5568, %v5680, %v5682
    %v5689 = vsel %vm187, %v5685, 0
    %v5691 = vsel %vm187, %v5686, 0
    %5693 = vmatprep.subr.mxu0 0.0
    %5694 = vmatpush1.msra.mxu0 0.0
    %5695 = vmatprep.subr.mxu0 0.0
    %5696 = vmatpush1.msra.mxu0 0.0
    %5697 = vmatprep.subr.mxu0 0.0
    %5698 = vmatpush1.msra.mxu0 0.0
    %5699 = vmatprep.subr.mxu0 0.0
    %5700 = vmatpush1.msra.mxu0 0.0
    %5701 = vmatprep.subr.mxu0 0.0
    %5702 = vmatpush1.msra.mxu0 0.0
    %5703 = vmatprep.subr.mxu0 0.0
    %5704 = vmatpush1.msra.mxu0 0.0
    %5705 = vmatprep.subr.mxu0 0.0
    %5706 = vmatpush1.msra.mxu0 0.0
    %5707 = vmatprep.subr.mxu0 0.0
    %5708 = vmatpush1.msra.mxu0 0.0
    %5709 = vmatprep.subr.mxu0 0.0
    %5710 = vmatpush1.msra.mxu0 0.0
    %5711 = vmatprep.subr.mxu0 0.0
    %5712 = vmatpush1.msra.mxu0 0.0
    %5713 = vmatprep.subr.mxu0 0.0
    %5714 = vmatpush1.msra.mxu0 0.0
    %5715 = vmatprep.subr.mxu0 0.0
    %5716 = vmatpush1.msra.mxu0 0.0
    %5717 = vmatprep.subr.mxu0 0.0
    %5718 = vmatpush1.msra.mxu0 0.0
    %5719 = vmatprep.subr.mxu0 0.0
    %5720 = vmatpush1.msra.mxu0 0.0
    %5721 = vmatprep.subr.mxu0 %v5691
    %5722 = vmatpush1.msra.mxu0 %v5689
    %5723 = vmatprep.subr.mxu0 %v5684
    %5724 = vmatpush1.msra.mxu0 %v5683
    %5725 = vmatprep.subr.mxu0 0.0
    %5726 = vmatpush2.msra.mxu0 0.0
    %5727 = vmatprep.subr.mxu0 0.0
    %5728 = vmatpush2.msra.mxu0 0.0
    %5729 = vmatprep.subr.mxu0 0.0
    %5730 = vmatpush2.msra.mxu0 0.0
    %5731 = vmatprep.subr.mxu0 0.0
    %5732 = vmatpush2.msra.mxu0 0.0
    %5733 = vmatprep.subr.mxu0 0.0
    %5734 = vmatpush2.msra.mxu0 0.0
    %5735 = vmatprep.subr.mxu0 0.0
    %5736 = vmatpush2.msra.mxu0 0.0
    %5737 = vmatprep.subr.mxu0 0.0
    %5738 = vmatpush2.msra.mxu0 0.0
    %5739 = vmatprep.subr.mxu0 0.0
    %5740 = vmatpush2.msra.mxu0 0.0
    %5741 = vmatprep.subr.mxu0 0.0
    %5742 = vmatpush2.msra.mxu0 0.0
    %5743 = vmatprep.subr.mxu0 0.0
    %5744 = vmatpush2.msra.mxu0 0.0
    %5745 = vmatprep.subr.mxu0 0.0
    %5746 = vmatpush2.msra.mxu0 0.0
    %5747 = vmatprep.subr.mxu0 0.0
    %5748 = vmatpush2.msra.mxu0 0.0
    %5749 = vmatprep.subr.mxu0 0.0
    %5750 = vmatpush2.msra.mxu0 0.0
    %5751 = vmatprep.subr.mxu0 0.0
    %5752 = vmatpush2.msra.mxu0 0.0
    %5753 = vmatprep.subr.mxu0 0.0
    %5754 = vmatpush2.msra.mxu0 0.0
    %5755 = vmatprep.subr.mxu0 0.0
    %5756 = vmatpush2.msra.mxu0 0.0
    %5757 = vmatprep.mubr.f32.mxu0 0.0
    %5758 = vmatmul.mubr.f32.gmra.mxu0 %v5576
    %v5759 = vpop.f32.mrf.mxu0
    %v5760 = vadd.f32 0.0, %v5759
    %v5761 = vpop.f32.mrf.mxu0
    %v5762 = vadd.f32 0.0, %v5761
    %5763 = vdwg.mxu0
    %v5764 = vadd.f32 %v5531, %v5760
    %v5765 = vadd.f32 %v5532, %v5762
    %vm5766 = vcmp.lt.f32.partialorder %v5653, 6.5
    %vm5767 = vcmp.lt.f32.partialorder %v5654, 6.5
    %v5768 = vsub.f32 %v5653, 6.5
    %v5769 = vsub.f32 %v5654, 6.5
    %v5770 = vmul.f32 %v5768, 0.5
    %v5771 = vmul.f32 %v5769, 0.5
    %v5772 = vsub.f32 6.5, %v5770
    %v5773 = vsub.f32 6.5, %v5771
    %v5774 = vsel %vm5766, %v5653, %v5772
    %v5775 = vsel %vm5767, %v5654, %v5773
    %v5776 = vmax.f32 %v5774, %v5775
    %5777 = vmax.xlane.f32.xlu0 %v5776
    %v5778 = vpop.xlane.xlu0 %5777
    %v5779 = vadd.f32 %v5778, 1e-10
    %v5780 = vrcp.pop %v5779
    %v5781 = vmul.f32 %v5779, %v5780
    %v5782 = vsub.f32 2.0, %v5781
    %v5783 = vmul.f32 %v5780, %v5782
    %v5784 = vmul.f32 %v5774, %v5783
    %v5785 = vmul.f32 %v5775, %v5783
    %5786 = vst [vmem:[#allocation2] sm:$0xff] %v5784
    %5787 = vst [vmem:[#allocation2 + $0x8] sm:$0xff] %v5785
    %vm5788 = vcmp.ge.f32.partialorder %v5784, 0.561231
    %vm5789 = vcmp.ge.f32.partialorder %v5785, 0.561231
    %v5790 = vsel %vm5788, 1, 0
    %v5791 = vsel %vm5789, 1, 0
    %v5792 = vcvt.s32.f32 %v5790
    %v5793 = vcvt.s32.f32 %v5791
    %v5794 = vpack.c.bf16 %v5792, %v5792
    %v5795 = vpack.c.bf16 %v5793, %v5793
    %v5798 = vunpack.c.l.b16 %v5794
    %v5799 = vunpack.c.l.b16 %v5795
    %v5800 = vpack.c.b16 %v5799, %v5798
    %5802 = vst [vmem:[#allocation4] sm:$0xff] %v5800
    %vm5803 = vcmp.lt.f32.partialorder %v5764, 6.5
    %vm5804 = vcmp.lt.f32.partialorder %v5765, 6.5
    %v5805 = vsub.f32 %v5764, 6.5
    %v5806 = vsub.f32 %v5765, 6.5
    %v5807 = vmul.f32 %v5805, 0.5
    %v5808 = vmul.f32 %v5806, 0.5
    %v5809 = vsub.f32 6.5, %v5807
    %v5810 = vsub.f32 6.5, %v5808
    %v5811 = vsel %vm5803, %v5764, %v5809
    %v5812 = vsel %vm5804, %v5765, %v5810
    %v5813 = vmax.f32 %v5811, %v5812
    %5814 = vmax.xlane.f32.xlu0 %v5813
    %v5815 = vpop.xlane.xlu0 %5814
    %v5816 = vadd.f32 %v5815, 1e-10
    %v5817 = vrcp.pop %v5816
    %v5818 = vmul.f32 %v5816, %v5817
    %v5819 = vsub.f32 2.0, %v5818
    %v5820 = vmul.f32 %v5817, %v5819
    %v5821 = vmul.f32 %v5811, %v5820
    %v5822 = vmul.f32 %v5812, %v5820
    %s5823 = scalar_lea.vmem [#allocation2], 16
    %5824 = vst [vmem:[%s5823] sm:$0xff] %v5821
    %5825 = vst [vmem:[%s5823 + $0x8] sm:$0xff] %v5822
    %vm5826 = vcmp.ge.f32.partialorder %v5821, 0.561231
    %vm5827 = vcmp.ge.f32.partialorder %v5822, 0.561231
    %v5828 = vsel %vm5826, 1, 0
    %v5829 = vsel %vm5827, 1, 0
    %v5830 = vcvt.s32.f32 %v5828
    %v5831 = vcvt.s32.f32 %v5829
    %v5832 = vpack.c.bf16 %v5830, %v5830
    %v5833 = vpack.c.bf16 %v5831, %v5831
    %v5836 = vunpack.c.l.b16 %v5832
    %v5837 = vunpack.c.l.b16 %v5833
    %v5838 = vpack.c.b16 %v5837, %v5836
    %s5840 = scalar_lea.vmem [#allocation4], 8
    %5841 = vst [vmem:[%s5840] sm:$0xff] %v5838
    // Predicated region
    $region10: #{tpu_custom_call.1} parent=1 // pred_check
      _
    $region11: #{tpu_custom_call.1} parent=1 // pred_check_branch
      %5843 = sbr.rel (0) target = $region13
    $region12: #{tpu_custom_call.1} parent=1 // pred_region
      %s5845 = ssub.s32 512, 512
      %5846 = vsyncadd [#allocation3], %s5845
      %s5847 = sshll.u32 [#allocation2], 4
      %s5848 = int_to_ptr.vmem [resolvable:$true] %s5847
      %5853 = dma.vmem_to_hbm [thread:$0]  %s5848, 512, %s2, [#allocation3], 256, 256, 16
    $region13: #{tpu_custom_call.1} parent=1 // pred_fallthru
      _
    // Predicated region
    $region14: #{tpu_custom_call.1} parent=1 // pred_check
      _
    $region15: #{tpu_custom_call.1} parent=1 // pred_check_branch
      %5855 = sbr.rel (0) target = $region17
    $region16: #{tpu_custom_call.1} parent=1 // pred_region
      %s5857 = ssub.s32 256, 256
      %5858 = vsyncadd [#allocation5], %s5857
      %s5859 = sshll.u32 [#allocation4], 4
      %s5860 = int_to_ptr.vmem [resolvable:$true] %s5859
      %5865 = dma.vmem_to_hbm [thread:$0]  %s5860, 256, %s3, [#allocation5], 128, 128, 8
    $region17: #{tpu_custom_call.1} parent=1 // pred_fallthru
      _
    // Predicated region
    $region18: #{tpu_custom_call.1} parent=1 // pred_check
      _
    $region19: #{tpu_custom_call.1} parent=1 // pred_check_branch
      %5867 = sbr.rel (0) target = $region21
    $region20: #{tpu_custom_call.1} parent=1 // pred_region
      %5868 = dma.done [#allocation3], 512
    $region21: #{tpu_custom_call.1} parent=1 // pred_fallthru
      _
    // Predicated region
    $region22: #{tpu_custom_call.1} parent=1 // pred_check
      _
    $region23: #{tpu_custom_call.1} parent=1 // pred_check_branch
      %5870 = sbr.rel (0) target = $region25
    $region24: #{tpu_custom_call.1} parent=1 // pred_region
      %5871 = dma.done [#allocation5], 256
    $region25: #{tpu_custom_call.1} parent=1 // pred_fallthru
      _
    %5872 = vsyncpa [#allocation3], 1
    %5873 = vsyncpa [#allocation5], 1

</llo_original>
